<compile_context>
chip_gen: v5e
topology: v5e:2x2
jax: 0.10.0
libtpu: 0.0.40
codegen_flags: <defaults>
</compile_context>

<pallas_src>
import math

import jax
import jax.numpy as jnp
from jax import lax
from jax.experimental import pallas as pl
from jax.experimental.pallas import tpu as pltpu

INPUT_SIZE = 2
HIDDEN = 10
NL = 3                       # num_layers
HPAD = 128                   # per-layer / per-gate lane padding (one vreg of lanes)
S = NL * HPAD                # fused state width (h0|h1|h2)            = 384
COLS = 4 * NL * HPAD         # fused gate width  (i0 i1 i2|f..|o..|g..) = 1536
SIGW = 3 * NL * HPAD         # i/f/o (sigmoid) region width             = 1152
CROWS = 16                   # compact rows per layer block in shipped weights (mult. of 8)


def lstm_mean_var_kernel(x_ref, wih0_ref, wcmp_ref, b_ref, wlin_ref, wout_ref, hb_ref,
                         out_ref, wblk_ref, gx_ref, seq2_ref):
    T = x_ref.shape[0]
    P = HPAD

    # ---- prologue: expand row-compact fused weights into the (384, 1536) block matrix ----
    # (ships ~0.3 MB from HBM instead of 2.4 MB of zero-padded f32; zero-fill is VMEM vst)
    for l in range(NL):
        wblk_ref[l * P:l * P + CROWS, :] = wcmp_ref[l * CROWS:(l + 1) * CROWS, :]
        wblk_ref[l * P + CROWS:(l + 1) * P, :] = jnp.zeros((P - CROWS, COLS), jnp.float32)

    # ---- hoisted input projection + all-layer biases for the whole sequence (VPU only:
    #      input_size=2, so two broadcast-FMAs instead of a tiny-K matmul) ----
    gx_ref[...] = (x_ref[:, 0:1] * wih0_ref[0:1, :]
                   + x_ref[:, 1:2] * wih0_ref[1:2, :]
                   + b_ref[...])                                   # (T, 1536)

    # Hoist the fused recurrent RHS out of the time loop (single load, reused every step).
    # TODO(synk): explicit pltpu.matmul_push_rhs staging not used; relying on Mosaic to keep
    #             the RHS resident across the unrolled steps.
    wblk = wblk_ref[...]                                           # (384, 1536)

    lane = lax.broadcasted_iota(jnp.int32, (1, S), 1)

    s = jnp.zeros((1, S), jnp.float32)                             # [h0 | h1 | h2]
    c = jnp.zeros((1, S), jnp.float32)                             # [c0 | c1 | c2]

    # ---- wavefront: diagonal step d updates layer0@t=d, layer1@t=d-1, layer2@t=d-2 ----
    for d in range(T + NL - 1):
        # additive part: x_d @ W_ih^0 + b^0 in layer-0 columns, b^1/b^2 elsewhere.
        add = gx_ref[pl.ds(d, 1), :] if d < T else b_ref[...]
        if d == 0:
            gates = add                                            # state is all zeros
        else:
            gates = add + jnp.dot(s, wblk, preferred_element_type=jnp.float32)

        # one EUP pass: the 0.5 input scale for i/f/o is folded into the packed weights,
        # so sigmoid(x) == 0.5 * tanh(gate) + 0.5 on those lanes.
        t_all = jnp.tanh(gates)                                    # (1, 1536)
        ifo = 0.5 * t_all[:, :SIGW] + 0.5
        i_all = ifo[:, 0:S]
        f_all = ifo[:, S:2 * S]
        o_all = ifo[:, 2 * S:3 * S]
        g_all = t_all[:, SIGW:]

        ig = i_all * g_all
        if d < NL - 1:            # mask layers that have not started yet (keep their c at 0)
            ig = jnp.where(lane < (d + 1) * P, ig, 0.0)
        c = f_all * c + ig
        s = o_all * jnp.tanh(c)   # pad lanes & not-yet-started layers stay exactly 0

        if d >= NL - 1:           # layer-2 output h^2_{d-2} is ready -> stash for the head
            seq2_ref[pl.ds(d - (NL - 1), 1), :] = s[:, (NL - 1) * P:]

    # ---- MLP head over all timesteps at once (lane-dense (T, 128) output) ----
    y = jnp.maximum(
        jnp.dot(seq2_ref[...], wlin_ref[...], preferred_element_type=jnp.float32)
        + hb_ref[0:1, :], 0.0)                                     # (T, 128)
    z = (jnp.dot(y, wout_ref[...], preferred_element_type=jnp.float32)
         + hb_ref[1:2, :])                                         # (T, 128); cols 0,1 real

    # out[:, 0] = mean = z[:, 0]; out[:, 1] = var = z[:, 1] ** 2; pad cols stay 0.
    col = lax.broadcasted_iota(jnp.int32, z.shape, 1)
    out_ref[...] = jnp.where(col == 1, z * z, z)


def lstm_mean_var_forward(x, kernel_params):
    """x: (T, INPUT_SIZE) float32 (unbatched sequence).  Returns (T, 2) float32:
    column 0 = predicted mean, column 1 = predicted var (= std**2)."""
    T = x.shape[0]
    vmem = pl.BlockSpec(memory_space=pltpu.MemorySpace.VMEM)
    n_in = 1 + len(kernel_params)
    out = pl.pallas_call(
        lstm_mean_var_kernel,
        out_shape=jax.ShapeDtypeStruct((T, HPAD), jnp.float32),
        in_specs=[vmem] * n_in,
        out_specs=vmem,
        scratch_shapes=[
            pltpu.VMEM((S, COLS), jnp.float32),     # expanded fused block weights
            pltpu.VMEM((T, COLS), jnp.float32),     # hoisted x-projection + biases
            pltpu.VMEM((T, HPAD), jnp.float32),     # layer-2 hidden sequence (head input)
        ],
    )(x, *kernel_params)
    return out[:, :2]


def _place_gates(dst, w_t, layer, row0):
    """w_t: (rows, 4*HIDDEN) with columns in PyTorch gate order (i, f, g, o).
    Scatter into the fused gate-type-major layout [i0 i1 i2 | f.. | o.. | g..] at row
    offset `row0`, pre-scaling the i/f/o blocks by 0.5 (sigmoid-as-tanh fold)."""
    rows = w_t.shape[0]
    for q, src in enumerate((0, 1, 3, 2)):              # fused (i, f, o, g) <- torch (i, f, g, o)
        blk = w_t[:, src * HIDDEN:(src + 1) * HIDDEN]
        if q < 3:
            blk = 0.5 * blk
        c0 = q * (NL * HPAD) + layer * HPAD
        dst = dst.at[row0:row0 + rows, c0:c0 + HIDDEN].set(blk)
    return dst


def init_params(key):
    """Deterministic params in PyTorch layout, plus kernel-ready packed versions."""
    bound = 1.0 / math.sqrt(HIDDEN)

    def u(k, shape):
        return jax.random.uniform(k, shape, jnp.float32, -bound, bound)

    keys = iter(jax.random.split(key, 4 * NL + 4))

    raw_lstm = []
    for layer in range(NL):
        in_dim = INPUT_SIZE if layer == 0 else HIDDEN
        w_ih = u(next(keys), (4 * HIDDEN, in_dim))
        w_hh = u(next(keys), (4 * HIDDEN, HIDDEN))
        b_ih = u(next(keys), (4 * HIDDEN,))
        b_hh = u(next(keys), (4 * HIDDEN,))
        raw_lstm.append((w_ih, w_hh, b_ih, b_hh))

    w_lin = u(next(keys), (HIDDEN, HIDDEN))
    b_lin = u(next(keys), (HIDDEN,))
    w_out = u(next(keys), (2, HIDDEN))
    b_out = u(next(keys), (2,))

    # -------- kernel-ready packed params --------
    # layer-0 input projection (2 rows, fused columns)
    wih0 = _place_gates(jnp.zeros((INPUT_SIZE, COLS), jnp.float32),
                        raw_lstm[0][0].T, layer=0, row0=0)

    # row-compact fused recurrent / inter-layer weights:
    #   row-block l (CROWS rows) = contributions of h^l: W_hh^l -> layer-l columns,
    #                                                     W_ih^{l+1} -> layer-(l+1) columns.
    wcmp = jnp.zeros((NL * CROWS, COLS), jnp.float32)
    for l in range(NL):
        wcmp = _place_gates(wcmp, raw_lstm[l][1].T, layer=l, row0=l * CROWS)
        if l + 1 < NL:
            wcmp = _place_gates(wcmp, raw_lstm[l + 1][0].T, layer=l + 1, row0=l * CROWS)

    # combined (b_ih + b_hh) per layer, fused columns
    bias = jnp.zeros((1, COLS), jnp.float32)
    for l in range(NL):
        bias = _place_gates(bias, (raw_lstm[l][2] + raw_lstm[l][3])[None, :],
                            layer=l, row0=0)

    # MLP head (lane-dense padded)
    w_lin_p = jnp.zeros((HPAD, HPAD), jnp.float32).at[:HIDDEN, :HIDDEN].set(w_lin.T)
    w_out_p = jnp.zeros((HPAD, HPAD), jnp.float32).at[:HIDDEN, :2].set(w_out.T)
    head_b = (jnp.zeros((2, HPAD), jnp.float32)
              .at[0, :HIDDEN].set(b_lin)
              .at[1, :2].set(b_out))

    kernel_params = [wih0, wcmp, bias, w_lin_p, w_out_p, head_b]
    raw = dict(lstm=raw_lstm, w_lin=w_lin, b_lin=b_lin, w_out=w_out, b_out=b_out)
    return raw, kernel_params


def reference_forward(x, raw):
    """Pure-JAX reference matching PyTorch eval-mode semantics (unbatched x: (T, 2))."""
    T = x.shape[0]
    seq = x
    for layer in range(NL):
        w_ih, w_hh, b_ih, b_hh = raw["lstm"][layer]
        h = jnp.zeros((HIDDEN,), jnp.float32)
        c = jnp.zeros((HIDDEN,), jnp.float32)
        outs = []
        for t in range(T):
            gates = seq[t] @ w_ih.T + b_ih + h @ w_hh.T + b_hh
            i, f, g, o = jnp.split(gates, 4)
            i, f, g, o = (jax.nn.sigmoid(i), jax.nn.sigmoid(f),
                          jnp.tanh(g), jax.nn.sigmoid(o))
            c = f * c + i * g
            h = o * jnp.tanh(c)
            outs.append(h)
        seq = jnp.stack(outs)                           # (T, HIDDEN)
    z = jnp.maximum(seq @ raw["w_lin"].T + raw["b_lin"], 0.0) @ raw["w_out"].T + raw["b_out"]
    mean = z[:, 0]
    var = jnp.square(z[:, 1])
    return jnp.stack((mean, var), axis=1)


if __name__ == "__main__":
    T = 8  # seq_len=8, unbatched, input_size=2
    key = jax.random.PRNGKey(0)
    k_x, k_p = jax.random.split(key)
    x = jax.random.normal(k_x, (T, INPUT_SIZE), jnp.float32)

    raw, kernel_params = init_params(k_p)

    out = lstm_mean_var_forward(x, kernel_params)
    out = jax.block_until_ready(out)

    ref = reference_forward(x, raw)
    assert out.shape == (T, 2)
    assert jnp.allclose(out, ref, atol=1e-4, rtol=1e-4), "mismatch vs reference"

    print("KERNEL_OK")
</pallas_src>

<mosaic_0001>
module attributes {stable_mosaic.version = 11 : i64} {
  func.func @lstm_mean_var_kernel(%arg0: memref<8x2xf32, #tpu.memory_space<vmem>>, %arg1: memref<2x1536xf32, #tpu.memory_space<vmem>>, %arg2: memref<48x1536xf32, #tpu.memory_space<vmem>>, %arg3: memref<1x1536xf32, #tpu.memory_space<vmem>>, %arg4: memref<128x128xf32, #tpu.memory_space<vmem>>, %arg5: memref<128x128xf32, #tpu.memory_space<vmem>>, %arg6: memref<2x128xf32, #tpu.memory_space<vmem>>, %arg7: memref<8x128xf32, #tpu.memory_space<vmem>>, %arg8: memref<384x1536xf32, #tpu.memory_space<vmem>>, %arg9: memref<8x1536xf32, #tpu.memory_space<vmem>>, %arg10: memref<8x128xf32, #tpu.memory_space<vmem>>) attributes {dimension_semantics = [], scalar_prefetch = 0 : i64, scratch_operands = 3 : i64, tpu.core_type = #tpu.core_type<tc>} {
    %c0 = arith.constant 0 : index
    %c0_0 = arith.constant 0 : index
    %0 = vector.load %arg2[%c0, %c0_0] : memref<48x1536xf32, #tpu.memory_space<vmem>>, vector<16x1536xf32>
    %c0_1 = arith.constant 0 : index
    %c0_2 = arith.constant 0 : index
    %1 = vector.load %arg8[%c0_1, %c0_2] : memref<384x1536xf32, #tpu.memory_space<vmem>>, vector<16x1536xf32>
    tpu.vector_store %arg8[%c0_1, %c0_2], %0 {strides = array<i32>} : memref<384x1536xf32, #tpu.memory_space<vmem>>, vector<16x1536xf32>,
    %cst = arith.constant 0.000000e+00 : f32
    %2 = vector.broadcast %cst : f32 to vector<112x1536xf32>
    %c16 = arith.constant 16 : index
    %c0_3 = arith.constant 0 : index
    %3 = vector.load %arg8[%c16, %c0_3] : memref<384x1536xf32, #tpu.memory_space<vmem>>, vector<112x1536xf32>
    tpu.vector_store %arg8[%c16, %c0_3], %2 {strides = array<i32>} : memref<384x1536xf32, #tpu.memory_space<vmem>>, vector<112x1536xf32>,
    %c16_4 = arith.constant 16 : index
    %c0_5 = arith.constant 0 : index
    %4 = vector.load %arg2[%c16_4, %c0_5] : memref<48x1536xf32, #tpu.memory_space<vmem>>, vector<16x1536xf32>
    %c128 = arith.constant 128 : index
    %c0_6 = arith.constant 0 : index
    %5 = vector.load %arg8[%c128, %c0_6] : memref<384x1536xf32, #tpu.memory_space<vmem>>, vector<16x1536xf32>
    tpu.vector_store %arg8[%c128, %c0_6], %4 {strides = array<i32>} : memref<384x1536xf32, #tpu.memory_space<vmem>>, vector<16x1536xf32>,
    %cst_7 = arith.constant 0.000000e+00 : f32
    %6 = vector.broadcast %cst_7 : f32 to vector<112x1536xf32>
    %c144 = arith.constant 144 : index
    %c0_8 = arith.constant 0 : index
    %7 = vector.load %arg8[%c144, %c0_8] : memref<384x1536xf32, #tpu.memory_space<vmem>>, vector<112x1536xf32>
    tpu.vector_store %arg8[%c144, %c0_8], %6 {strides = array<i32>} : memref<384x1536xf32, #tpu.memory_space<vmem>>, vector<112x1536xf32>,
    %c32 = arith.constant 32 : index
    %c0_9 = arith.constant 0 : index
    %8 = vector.load %arg2[%c32, %c0_9] : memref<48x1536xf32, #tpu.memory_space<vmem>>, vector<16x1536xf32>
    %c256 = arith.constant 256 : index
    %c0_10 = arith.constant 0 : index
    %9 = vector.load %arg8[%c256, %c0_10] : memref<384x1536xf32, #tpu.memory_space<vmem>>, vector<16x1536xf32>
    tpu.vector_store %arg8[%c256, %c0_10], %8 {strides = array<i32>} : memref<384x1536xf32, #tpu.memory_space<vmem>>, vector<16x1536xf32>,
    %cst_11 = arith.constant 0.000000e+00 : f32
    %10 = vector.broadcast %cst_11 : f32 to vector<112x1536xf32>
    %c272 = arith.constant 272 : index
    %c0_12 = arith.constant 0 : index
    %11 = vector.load %arg8[%c272, %c0_12] : memref<384x1536xf32, #tpu.memory_space<vmem>>, vector<112x1536xf32>
    tpu.vector_store %arg8[%c272, %c0_12], %10 {strides = array<i32>} : memref<384x1536xf32, #tpu.memory_space<vmem>>, vector<112x1536xf32>,
    %c0_13 = arith.constant 0 : index
    %c0_14 = arith.constant 0 : index
    %12 = vector.load %arg0[%c0_13, %c0_14] : memref<8x2xf32, #tpu.memory_space<vmem>>, vector<8x1xf32>
    %c0_15 = arith.constant 0 : index
    %c0_16 = arith.constant 0 : index
    %13 = vector.load %arg1[%c0_15, %c0_16] : memref<2x1536xf32, #tpu.memory_space<vmem>>, vector<1x1536xf32>
    %14 = vector.broadcast %12 : vector<8x1xf32> to vector<8x1536xf32>
    %15 = vector.broadcast %13 : vector<1x1536xf32> to vector<8x1536xf32>
    %16 = arith.mulf %14, %15 : vector<8x1536xf32>
    %c0_17 = arith.constant 0 : index
    %c1 = arith.constant 1 : index
    %17 = vector.load %arg0[%c0_17, %c1] : memref<8x2xf32, #tpu.memory_space<vmem>>, vector<8x1xf32>
    %c1_18 = arith.constant 1 : index
    %c0_19 = arith.constant 0 : index
    %18 = vector.load %arg1[%c1_18, %c0_19] : memref<2x1536xf32, #tpu.memory_space<vmem>>, vector<1x1536xf32>
    %19 = vector.broadcast %17 : vector<8x1xf32> to vector<8x1536xf32>
    %20 = vector.broadcast %18 : vector<1x1536xf32> to vector<8x1536xf32>
    %21 = arith.mulf %19, %20 : vector<8x1536xf32>
    %22 = arith.addf %16, %21 : vector<8x1536xf32>
    %c0_20 = arith.constant 0 : index
    %c0_21 = arith.constant 0 : index
    %23 = vector.load %arg3[%c0_20, %c0_21] : memref<1x1536xf32, #tpu.memory_space<vmem>>, vector<1x1536xf32>
    %24 = vector.broadcast %23 : vector<1x1536xf32> to vector<8x1536xf32>
    %25 = arith.addf %22, %24 : vector<8x1536xf32>
    %c0_22 = arith.constant 0 : index
    %c0_23 = arith.constant 0 : index
    %26 = vector.load %arg9[%c0_22, %c0_23] : memref<8x1536xf32, #tpu.memory_space<vmem>>, vector<8x1536xf32>
    tpu.vector_store %arg9[%c0_22, %c0_23], %25 {strides = array<i32>} : memref<8x1536xf32, #tpu.memory_space<vmem>>, vector<8x1536xf32>,
    %c0_24 = arith.constant 0 : index
    %c0_25 = arith.constant 0 : index
    %27 = vector.load %arg8[%c0_24, %c0_25] : memref<384x1536xf32, #tpu.memory_space<vmem>>, vector<384x1536xf32>
    %28 = tpu.iota {dimensions = array<i32: 1>} : vector<1x384xi32>
    %cst_26 = arith.constant 0.000000e+00 : f32
    %29 = vector.broadcast %cst_26 : f32 to vector<1x384xf32>
    %c0_27 = arith.constant 0 : index
    %c0_28 = arith.constant 0 : index
    %30 = vector.load %arg9[%c0_27, %c0_28] : memref<8x1536xf32, #tpu.memory_space<vmem>>, vector<1x1536xf32>
    %31 = math.tanh %30 : vector<1x1536xf32>
    %32 = vector.extract_strided_slice %31 {offsets = [0, 0], sizes = [1, 1152], strides = [1, 1]} : vector<1x1536xf32> to vector<1x1152xf32>
    %cst_29 = arith.constant 5.000000e-01 : f32
    %33 = vector.broadcast %cst_29 : f32 to vector<1x1152xf32>
    %34 = arith.mulf %33, %32 : vector<1x1152xf32>
    %cst_30 = arith.constant 5.000000e-01 : f32
    %35 = vector.broadcast %cst_30 : f32 to vector<1x1152xf32>
    %36 = arith.addf %34, %35 : vector<1x1152xf32>
    %37 = vector.extract_strided_slice %36 {offsets = [0, 0], sizes = [1, 384], strides = [1, 1]} : vector<1x1152xf32> to vector<1x384xf32>
    %38 = vector.extract_strided_slice %36 {offsets = [0, 384], sizes = [1, 384], strides = [1, 1]} : vector<1x1152xf32> to vector<1x384xf32>
    %39 = vector.extract_strided_slice %36 {offsets = [0, 768], sizes = [1, 384], strides = [1, 1]} : vector<1x1152xf32> to vector<1x384xf32>
    %40 = vector.extract_strided_slice %31 {offsets = [0, 1152], sizes = [1, 384], strides = [1, 1]} : vector<1x1536xf32> to vector<1x384xf32>
    %41 = arith.mulf %37, %40 : vector<1x384xf32>
    %c128_i32 = arith.constant 128 : i32
    %42 = vector.broadcast %c128_i32 : i32 to vector<1x384xi32>
    %43 = arith.cmpi slt, %28, %42 : vector<1x384xi32>
    %cst_31 = arith.constant 0.000000e+00 : f32
    %44 = vector.broadcast %cst_31 : f32 to vector<1x384xf32>
    %45 = arith.select %43, %41, %44 : vector<1x384xi1>, vector<1x384xf32>
    %46 = arith.mulf %38, %29 : vector<1x384xf32>
    %47 = arith.addf %46, %45 : vector<1x384xf32>
    %48 = math.tanh %47 : vector<1x384xf32>
    %49 = arith.mulf %39, %48 : vector<1x384xf32>
    %c1_32 = arith.constant 1 : index
    %c0_33 = arith.constant 0 : index
    %50 = vector.load %arg9[%c1_32, %c0_33] : memref<8x1536xf32, #tpu.memory_space<vmem>>, vector<1x1536xf32>
    %cst_34 = arith.constant dense<0.000000e+00> : vector<1x1536xf32>
    %51 = tpu.matmul %49, %27, %cst_34 {dimension_numbers = #tpu.dot_dimension_numbers<[1], [0], [0], [1], [0, 0, 1, 1], [], []>} : vector<1x384xf32>, vector<384x1536xf32>, vector<1x1536xf32> -> vector<1x1536xf32>
    %52 = arith.addf %50, %51 : vector<1x1536xf32>
    %53 = math.tanh %52 : vector<1x1536xf32>
    %54 = vector.extract_strided_slice %53 {offsets = [0, 0], sizes = [1, 1152], strides = [1, 1]} : vector<1x1536xf32> to vector<1x1152xf32>
    %cst_35 = arith.constant 5.000000e-01 : f32
    %55 = vector.broadcast %cst_35 : f32 to vector<1x1152xf32>
    %56 = arith.mulf %55, %54 : vector<1x1152xf32>
    %cst_36 = arith.constant 5.000000e-01 : f32
    %57 = vector.broadcast %cst_36 : f32 to vector<1x1152xf32>
    %58 = arith.addf %56, %57 : vector<1x1152xf32>
    %59 = vector.extract_strided_slice %58 {offsets = [0, 0], sizes = [1, 384], strides = [1, 1]} : vector<1x1152xf32> to vector<1x384xf32>
    %60 = vector.extract_strided_slice %58 {offsets = [0, 384], sizes = [1, 384], strides = [1, 1]} : vector<1x1152xf32> to vector<1x384xf32>
    %61 = vector.extract_strided_slice %58 {offsets = [0, 768], sizes = [1, 384], strides = [1, 1]} : vector<1x1152xf32> to vector<1x384xf32>
    %62 = vector.extract_strided_slice %53 {offsets = [0, 1152], sizes = [1, 384], strides = [1, 1]} : vector<1x1536xf32> to vector<1x384xf32>
    %63 = arith.mulf %59, %62 : vector<1x384xf32>
    %c256_i32 = arith.constant 256 : i32
    %64 = vector.broadcast %c256_i32 : i32 to vector<1x384xi32>
    %65 = arith.cmpi slt, %28, %64 : vector<1x384xi32>
    %cst_37 = arith.constant 0.000000e+00 : f32
    %66 = vector.broadcast %cst_37 : f32 to vector<1x384xf32>
    %67 = arith.select %65, %63, %66 : vector<1x384xi1>, vector<1x384xf32>
    %68 = arith.mulf %60, %47 : vector<1x384xf32>
    %69 = arith.addf %68, %67 : vector<1x384xf32>
    %70 = math.tanh %69 : vector<1x384xf32>
    %71 = arith.mulf %61, %70 : vector<1x384xf32>
    %c2 = arith.constant 2 : index
    %c0_38 = arith.constant 0 : index
    %72 = vector.load %arg9[%c2, %c0_38] : memref<8x1536xf32, #tpu.memory_space<vmem>>, vector<1x1536xf32>
    %cst_39 = arith.constant dense<0.000000e+00> : vector<1x1536xf32>
    %73 = tpu.matmul %71, %27, %cst_39 {dimension_numbers = #tpu.dot_dimension_numbers<[1], [0], [0], [1], [0, 0, 1, 1], [], []>} : vector<1x384xf32>, vector<384x1536xf32>, vector<1x1536xf32> -> vector<1x1536xf32>
    %74 = arith.addf %72, %73 : vector<1x1536xf32>
    %75 = math.tanh %74 : vector<1x1536xf32>
    %76 = vector.extract_strided_slice %75 {offsets = [0, 0], sizes = [1, 1152], strides = [1, 1]} : vector<1x1536xf32> to vector<1x1152xf32>
    %cst_40 = arith.constant 5.000000e-01 : f32
    %77 = vector.broadcast %cst_40 : f32 to vector<1x1152xf32>
    %78 = arith.mulf %77, %76 : vector<1x1152xf32>
    %cst_41 = arith.constant 5.000000e-01 : f32
    %79 = vector.broadcast %cst_41 : f32 to vector<1x1152xf32>
    %80 = arith.addf %78, %79 : vector<1x1152xf32>
    %81 = vector.extract_strided_slice %80 {offsets = [0, 0], sizes = [1, 384], strides = [1, 1]} : vector<1x1152xf32> to vector<1x384xf32>
    %82 = vector.extract_strided_slice %80 {offsets = [0, 384], sizes = [1, 384], strides = [1, 1]} : vector<1x1152xf32> to vector<1x384xf32>
    %83 = vector.extract_strided_slice %80 {offsets = [0, 768], sizes = [1, 384], strides = [1, 1]} : vector<1x1152xf32> to vector<1x384xf32>
    %84 = vector.extract_strided_slice %75 {offsets = [0, 1152], sizes = [1, 384], strides = [1, 1]} : vector<1x1536xf32> to vector<1x384xf32>
    %85 = arith.mulf %81, %84 : vector<1x384xf32>
    %86 = arith.mulf %82, %69 : vector<1x384xf32>
    %87 = arith.addf %86, %85 : vector<1x384xf32>
    %88 = math.tanh %87 : vector<1x384xf32>
    %89 = arith.mulf %83, %88 : vector<1x384xf32>
    %90 = vector.extract_strided_slice %89 {offsets = [0, 256], sizes = [1, 128], strides = [1, 1]} : vector<1x384xf32> to vector<1x128xf32>
    %c0_42 = arith.constant 0 : index
    %c0_43 = arith.constant 0 : index
    %91 = vector.load %arg10[%c0_42, %c0_43] : memref<8x128xf32, #tpu.memory_space<vmem>>, vector<1x128xf32>
    tpu.vector_store %arg10[%c0_42, %c0_43], %90 {strides = array<i32>} : memref<8x128xf32, #tpu.memory_space<vmem>>, vector<1x128xf32>,
    %c3 = arith.constant 3 : index
    %c0_44 = arith.constant 0 : index
    %92 = vector.load %arg9[%c3, %c0_44] : memref<8x1536xf32, #tpu.memory_space<vmem>>, vector<1x1536xf32>
    %cst_45 = arith.constant dense<0.000000e+00> : vector<1x1536xf32>
    %93 = tpu.matmul %89, %27, %cst_45 {dimension_numbers = #tpu.dot_dimension_numbers<[1], [0], [0], [1], [0, 0, 1, 1], [], []>} : vector<1x384xf32>, vector<384x1536xf32>, vector<1x1536xf32> -> vector<1x1536xf32>
    %94 = arith.addf %92, %93 : vector<1x1536xf32>
    %95 = math.tanh %94 : vector<1x1536xf32>
    %96 = vector.extract_strided_slice %95 {offsets = [0, 0], sizes = [1, 1152], strides = [1, 1]} : vector<1x1536xf32> to vector<1x1152xf32>
    %cst_46 = arith.constant 5.000000e-01 : f32
    %97 = vector.broadcast %cst_46 : f32 to vector<1x1152xf32>
    %98 = arith.mulf %97, %96 : vector<1x1152xf32>
    %cst_47 = arith.constant 5.000000e-01 : f32
    %99 = vector.broadcast %cst_47 : f32 to vector<1x1152xf32>
    %100 = arith.addf %98, %99 : vector<1x1152xf32>
    %101 = vector.extract_strided_slice %100 {offsets = [0, 0], sizes = [1, 384], strides = [1, 1]} : vector<1x1152xf32> to vector<1x384xf32>
    %102 = vector.extract_strided_slice %100 {offsets = [0, 384], sizes = [1, 384], strides = [1, 1]} : vector<1x1152xf32> to vector<1x384xf32>
    %103 = vector.extract_strided_slice %100 {offsets = [0, 768], sizes = [1, 384], strides = [1, 1]} : vector<1x1152xf32> to vector<1x384xf32>
    %104 = vector.extract_strided_slice %95 {offsets = [0, 1152], sizes = [1, 384], strides = [1, 1]} : vector<1x1536xf32> to vector<1x384xf32>
    %105 = arith.mulf %101, %104 : vector<1x384xf32>
    %106 = arith.mulf %102, %87 : vector<1x384xf32>
    %107 = arith.addf %106, %105 : vector<1x384xf32>
    %108 = math.tanh %107 : vector<1x384xf32>
    %109 = arith.mulf %103, %108 : vector<1x384xf32>
    %110 = vector.extract_strided_slice %109 {offsets = [0, 256], sizes = [1, 128], strides = [1, 1]} : vector<1x384xf32> to vector<1x128xf32>
    %c1_48 = arith.constant 1 : index
    %c0_49 = arith.constant 0 : index
    %111 = vector.load %arg10[%c1_48, %c0_49] : memref<8x128xf32, #tpu.memory_space<vmem>>, vector<1x128xf32>
    tpu.vector_store %arg10[%c1_48, %c0_49], %110 {strides = array<i32>} : memref<8x128xf32, #tpu.memory_space<vmem>>, vector<1x128xf32>,
    %c4 = arith.constant 4 : index
    %c0_50 = arith.constant 0 : index
    %112 = vector.load %arg9[%c4, %c0_50] : memref<8x1536xf32, #tpu.memory_space<vmem>>, vector<1x1536xf32>
    %cst_51 = arith.constant dense<0.000000e+00> : vector<1x1536xf32>
    %113 = tpu.matmul %109, %27, %cst_51 {dimension_numbers = #tpu.dot_dimension_numbers<[1], [0], [0], [1], [0, 0, 1, 1], [], []>} : vector<1x384xf32>, vector<384x1536xf32>, vector<1x1536xf32> -> vector<1x1536xf32>
    %114 = arith.addf %112, %113 : vector<1x1536xf32>
    %115 = math.tanh %114 : vector<1x1536xf32>
    %116 = vector.extract_strided_slice %115 {offsets = [0, 0], sizes = [1, 1152], strides = [1, 1]} : vector<1x1536xf32> to vector<1x1152xf32>
    %cst_52 = arith.constant 5.000000e-01 : f32
    %117 = vector.broadcast %cst_52 : f32 to vector<1x1152xf32>
    %118 = arith.mulf %117, %116 : vector<1x1152xf32>
    %cst_53 = arith.constant 5.000000e-01 : f32
    %119 = vector.broadcast %cst_53 : f32 to vector<1x1152xf32>
    %120 = arith.addf %118, %119 : vector<1x1152xf32>
    %121 = vector.extract_strided_slice %120 {offsets = [0, 0], sizes = [1, 384], strides = [1, 1]} : vector<1x1152xf32> to vector<1x384xf32>
    %122 = vector.extract_strided_slice %120 {offsets = [0, 384], sizes = [1, 384], strides = [1, 1]} : vector<1x1152xf32> to vector<1x384xf32>
    %123 = vector.extract_strided_slice %120 {offsets = [0, 768], sizes = [1, 384], strides = [1, 1]} : vector<1x1152xf32> to vector<1x384xf32>
    %124 = vector.extract_strided_slice %115 {offsets = [0, 1152], sizes = [1, 384], strides = [1, 1]} : vector<1x1536xf32> to vector<1x384xf32>
    %125 = arith.mulf %121, %124 : vector<1x384xf32>
    %126 = arith.mulf %122, %107 : vector<1x384xf32>
    %127 = arith.addf %126, %125 : vector<1x384xf32>
    %128 = math.tanh %127 : vector<1x384xf32>
    %129 = arith.mulf %123, %128 : vector<1x384xf32>
    %130 = vector.extract_strided_slice %129 {offsets = [0, 256], sizes = [1, 128], strides = [1, 1]} : vector<1x384xf32> to vector<1x128xf32>
    %c2_54 = arith.constant 2 : index
    %c0_55 = arith.constant 0 : index
    %131 = vector.load %arg10[%c2_54, %c0_55] : memref<8x128xf32, #tpu.memory_space<vmem>>, vector<1x128xf32>
    tpu.vector_store %arg10[%c2_54, %c0_55], %130 {strides = array<i32>} : memref<8x128xf32, #tpu.memory_space<vmem>>, vector<1x128xf32>,
    %c5 = arith.constant 5 : index
    %c0_56 = arith.constant 0 : index
    %132 = vector.load %arg9[%c5, %c0_56] : memref<8x1536xf32, #tpu.memory_space<vmem>>, vector<1x1536xf32>
    %cst_57 = arith.constant dense<0.000000e+00> : vector<1x1536xf32>
    %133 = tpu.matmul %129, %27, %cst_57 {dimension_numbers = #tpu.dot_dimension_numbers<[1], [0], [0], [1], [0, 0, 1, 1], [], []>} : vector<1x384xf32>, vector<384x1536xf32>, vector<1x1536xf32> -> vector<1x1536xf32>
    %134 = arith.addf %132, %133 : vector<1x1536xf32>
    %135 = math.tanh %134 : vector<1x1536xf32>
    %136 = vector.extract_strided_slice %135 {offsets = [0, 0], sizes = [1, 1152], strides = [1, 1]} : vector<1x1536xf32> to vector<1x1152xf32>
    %cst_58 = arith.constant 5.000000e-01 : f32
    %137 = vector.broadcast %cst_58 : f32 to vector<1x1152xf32>
    %138 = arith.mulf %137, %136 : vector<1x1152xf32>
    %cst_59 = arith.constant 5.000000e-01 : f32
    %139 = vector.broadcast %cst_59 : f32 to vector<1x1152xf32>
    %140 = arith.addf %138, %139 : vector<1x1152xf32>
    %141 = vector.extract_strided_slice %140 {offsets = [0, 0], sizes = [1, 384], strides = [1, 1]} : vector<1x1152xf32> to vector<1x384xf32>
    %142 = vector.extract_strided_slice %140 {offsets = [0, 384], sizes = [1, 384], strides = [1, 1]} : vector<1x1152xf32> to vector<1x384xf32>
    %143 = vector.extract_strided_slice %140 {offsets = [0, 768], sizes = [1, 384], strides = [1, 1]} : vector<1x1152xf32> to vector<1x384xf32>
    %144 = vector.extract_strided_slice %135 {offsets = [0, 1152], sizes = [1, 384], strides = [1, 1]} : vector<1x1536xf32> to vector<1x384xf32>
    %145 = arith.mulf %141, %144 : vector<1x384xf32>
    %146 = arith.mulf %142, %127 : vector<1x384xf32>
    %147 = arith.addf %146, %145 : vector<1x384xf32>
    %148 = math.tanh %147 : vector<1x384xf32>
    %149 = arith.mulf %143, %148 : vector<1x384xf32>
    %150 = vector.extract_strided_slice %149 {offsets = [0, 256], sizes = [1, 128], strides = [1, 1]} : vector<1x384xf32> to vector<1x128xf32>
    %c3_60 = arith.constant 3 : index
    %c0_61 = arith.constant 0 : index
    %151 = vector.load %arg10[%c3_60, %c0_61] : memref<8x128xf32, #tpu.memory_space<vmem>>, vector<1x128xf32>
    tpu.vector_store %arg10[%c3_60, %c0_61], %150 {strides = array<i32>} : memref<8x128xf32, #tpu.memory_space<vmem>>, vector<1x128xf32>,
    %c6 = arith.constant 6 : index
    %c0_62 = arith.constant 0 : index
    %152 = vector.load %arg9[%c6, %c0_62] : memref<8x1536xf32, #tpu.memory_space<vmem>>, vector<1x1536xf32>
    %cst_63 = arith.constant dense<0.000000e+00> : vector<1x1536xf32>
    %153 = tpu.matmul %149, %27, %cst_63 {dimension_numbers = #tpu.dot_dimension_numbers<[1], [0], [0], [1], [0, 0, 1, 1], [], []>} : vector<1x384xf32>, vector<384x1536xf32>, vector<1x1536xf32> -> vector<1x1536xf32>
    %154 = arith.addf %152, %153 : vector<1x1536xf32>
    %155 = math.tanh %154 : vector<1x1536xf32>
    %156 = vector.extract_strided_slice %155 {offsets = [0, 0], sizes = [1, 1152], strides = [1, 1]} : vector<1x1536xf32> to vector<1x1152xf32>
    %cst_64 = arith.constant 5.000000e-01 : f32
    %157 = vector.broadcast %cst_64 : f32 to vector<1x1152xf32>
    %158 = arith.mulf %157, %156 : vector<1x1152xf32>
    %cst_65 = arith.constant 5.000000e-01 : f32
    %159 = vector.broadcast %cst_65 : f32 to vector<1x1152xf32>
    %160 = arith.addf %158, %159 : vector<1x1152xf32>
    %161 = vector.extract_strided_slice %160 {offsets = [0, 0], sizes = [1, 384], strides = [1, 1]} : vector<1x1152xf32> to vector<1x384xf32>
    %162 = vector.extract_strided_slice %160 {offsets = [0, 384], sizes = [1, 384], strides = [1, 1]} : vector<1x1152xf32> to vector<1x384xf32>
    %163 = vector.extract_strided_slice %160 {offsets = [0, 768], sizes = [1, 384], strides = [1, 1]} : vector<1x1152xf32> to vector<1x384xf32>
    %164 = vector.extract_strided_slice %155 {offsets = [0, 1152], sizes = [1, 384], strides = [1, 1]} : vector<1x1536xf32> to vector<1x384xf32>
    %165 = arith.mulf %161, %164 : vector<1x384xf32>
    %166 = arith.mulf %162, %147 : vector<1x384xf32>
    %167 = arith.addf %166, %165 : vector<1x384xf32>
    %168 = math.tanh %167 : vector<1x384xf32>
    %169 = arith.mulf %163, %168 : vector<1x384xf32>
    %170 = vector.extract_strided_slice %169 {offsets = [0, 256], sizes = [1, 128], strides = [1, 1]} : vector<1x384xf32> to vector<1x128xf32>
    %c4_66 = arith.constant 4 : index
    %c0_67 = arith.constant 0 : index
    %171 = vector.load %arg10[%c4_66, %c0_67] : memref<8x128xf32, #tpu.memory_space<vmem>>, vector<1x128xf32>
    tpu.vector_store %arg10[%c4_66, %c0_67], %170 {strides = array<i32>} : memref<8x128xf32, #tpu.memory_space<vmem>>, vector<1x128xf32>,
    %c7 = arith.constant 7 : index
    %c0_68 = arith.constant 0 : index
    %172 = vector.load %arg9[%c7, %c0_68] : memref<8x1536xf32, #tpu.memory_space<vmem>>, vector<1x1536xf32>
    %cst_69 = arith.constant dense<0.000000e+00> : vector<1x1536xf32>
    %173 = tpu.matmul %169, %27, %cst_69 {dimension_numbers = #tpu.dot_dimension_numbers<[1], [0], [0], [1], [0, 0, 1, 1], [], []>} : vector<1x384xf32>, vector<384x1536xf32>, vector<1x1536xf32> -> vector<1x1536xf32>
    %174 = arith.addf %172, %173 : vector<1x1536xf32>
    %175 = math.tanh %174 : vector<1x1536xf32>
    %176 = vector.extract_strided_slice %175 {offsets = [0, 0], sizes = [1, 1152], strides = [1, 1]} : vector<1x1536xf32> to vector<1x1152xf32>
    %cst_70 = arith.constant 5.000000e-01 : f32
    %177 = vector.broadcast %cst_70 : f32 to vector<1x1152xf32>
    %178 = arith.mulf %177, %176 : vector<1x1152xf32>
    %cst_71 = arith.constant 5.000000e-01 : f32
    %179 = vector.broadcast %cst_71 : f32 to vector<1x1152xf32>
    %180 = arith.addf %178, %179 : vector<1x1152xf32>
    %181 = vector.extract_strided_slice %180 {offsets = [0, 0], sizes = [1, 384], strides = [1, 1]} : vector<1x1152xf32> to vector<1x384xf32>
    %182 = vector.extract_strided_slice %180 {offsets = [0, 384], sizes = [1, 384], strides = [1, 1]} : vector<1x1152xf32> to vector<1x384xf32>
    %183 = vector.extract_strided_slice %180 {offsets = [0, 768], sizes = [1, 384], strides = [1, 1]} : vector<1x1152xf32> to vector<1x384xf32>
    %184 = vector.extract_strided_slice %175 {offsets = [0, 1152], sizes = [1, 384], strides = [1, 1]} : vector<1x1536xf32> to vector<1x384xf32>
    %185 = arith.mulf %181, %184 : vector<1x384xf32>
    %186 = arith.mulf %182, %167 : vector<1x384xf32>
    %187 = arith.addf %186, %185 : vector<1x384xf32>
    %188 = math.tanh %187 : vector<1x384xf32>
    %189 = arith.mulf %183, %188 : vector<1x384xf32>
    %190 = vector.extract_strided_slice %189 {offsets = [0, 256], sizes = [1, 128], strides = [1, 1]} : vector<1x384xf32> to vector<1x128xf32>
    %c5_72 = arith.constant 5 : index
    %c0_73 = arith.constant 0 : index
    %191 = vector.load %arg10[%c5_72, %c0_73] : memref<8x128xf32, #tpu.memory_space<vmem>>, vector<1x128xf32>
    tpu.vector_store %arg10[%c5_72, %c0_73], %190 {strides = array<i32>} : memref<8x128xf32, #tpu.memory_space<vmem>>, vector<1x128xf32>,
    %c0_74 = arith.constant 0 : index
    %c0_75 = arith.constant 0 : index
    %192 = vector.load %arg3[%c0_74, %c0_75] : memref<1x1536xf32, #tpu.memory_space<vmem>>, vector<1x1536xf32>
    %cst_76 = arith.constant dense<0.000000e+00> : vector<1x1536xf32>
    %193 = tpu.matmul %189, %27, %cst_76 {dimension_numbers = #tpu.dot_dimension_numbers<[1], [0], [0], [1], [0, 0, 1, 1], [], []>} : vector<1x384xf32>, vector<384x1536xf32>, vector<1x1536xf32> -> vector<1x1536xf32>
    %194 = arith.addf %192, %193 : vector<1x1536xf32>
    %195 = math.tanh %194 : vector<1x1536xf32>
    %196 = vector.extract_strided_slice %195 {offsets = [0, 0], sizes = [1, 1152], strides = [1, 1]} : vector<1x1536xf32> to vector<1x1152xf32>
    %cst_77 = arith.constant 5.000000e-01 : f32
    %197 = vector.broadcast %cst_77 : f32 to vector<1x1152xf32>
    %198 = arith.mulf %197, %196 : vector<1x1152xf32>
    %cst_78 = arith.constant 5.000000e-01 : f32
    %199 = vector.broadcast %cst_78 : f32 to vector<1x1152xf32>
    %200 = arith.addf %198, %199 : vector<1x1152xf32>
    %201 = vector.extract_strided_slice %200 {offsets = [0, 0], sizes = [1, 384], strides = [1, 1]} : vector<1x1152xf32> to vector<1x384xf32>
    %202 = vector.extract_strided_slice %200 {offsets = [0, 384], sizes = [1, 384], strides = [1, 1]} : vector<1x1152xf32> to vector<1x384xf32>
    %203 = vector.extract_strided_slice %200 {offsets = [0, 768], sizes = [1, 384], strides = [1, 1]} : vector<1x1152xf32> to vector<1x384xf32>
    %204 = vector.extract_strided_slice %195 {offsets = [0, 1152], sizes = [1, 384], strides = [1, 1]} : vector<1x1536xf32> to vector<1x384xf32>
    %205 = arith.mulf %201, %204 : vector<1x384xf32>
    %206 = arith.mulf %202, %187 : vector<1x384xf32>
    %207 = arith.addf %206, %205 : vector<1x384xf32>
    %208 = math.tanh %207 : vector<1x384xf32>
    %209 = arith.mulf %203, %208 : vector<1x384xf32>
    %210 = vector.extract_strided_slice %209 {offsets = [0, 256], sizes = [1, 128], strides = [1, 1]} : vector<1x384xf32> to vector<1x128xf32>
    %c6_79 = arith.constant 6 : index
    %c0_80 = arith.constant 0 : index
    %211 = vector.load %arg10[%c6_79, %c0_80] : memref<8x128xf32, #tpu.memory_space<vmem>>, vector<1x128xf32>
    tpu.vector_store %arg10[%c6_79, %c0_80], %210 {strides = array<i32>} : memref<8x128xf32, #tpu.memory_space<vmem>>, vector<1x128xf32>,
    %c0_81 = arith.constant 0 : index
    %c0_82 = arith.constant 0 : index
    %212 = vector.load %arg3[%c0_81, %c0_82] : memref<1x1536xf32, #tpu.memory_space<vmem>>, vector<1x1536xf32>
    %cst_83 = arith.constant dense<0.000000e+00> : vector<1x1536xf32>
    %213 = tpu.matmul %209, %27, %cst_83 {dimension_numbers = #tpu.dot_dimension_numbers<[1], [0], [0], [1], [0, 0, 1, 1], [], []>} : vector<1x384xf32>, vector<384x1536xf32>, vector<1x1536xf32> -> vector<1x1536xf32>
    %214 = arith.addf %212, %213 : vector<1x1536xf32>
    %215 = math.tanh %214 : vector<1x1536xf32>
    %216 = vector.extract_strided_slice %215 {offsets = [0, 0], sizes = [1, 1152], strides = [1, 1]} : vector<1x1536xf32> to vector<1x1152xf32>
    %cst_84 = arith.constant 5.000000e-01 : f32
    %217 = vector.broadcast %cst_84 : f32 to vector<1x1152xf32>
    %218 = arith.mulf %217, %216 : vector<1x1152xf32>
    %cst_85 = arith.constant 5.000000e-01 : f32
    %219 = vector.broadcast %cst_85 : f32 to vector<1x1152xf32>
    %220 = arith.addf %218, %219 : vector<1x1152xf32>
    %221 = vector.extract_strided_slice %220 {offsets = [0, 0], sizes = [1, 384], strides = [1, 1]} : vector<1x1152xf32> to vector<1x384xf32>
    %222 = vector.extract_strided_slice %220 {offsets = [0, 384], sizes = [1, 384], strides = [1, 1]} : vector<1x1152xf32> to vector<1x384xf32>
    %223 = vector.extract_strided_slice %220 {offsets = [0, 768], sizes = [1, 384], strides = [1, 1]} : vector<1x1152xf32> to vector<1x384xf32>
    %224 = vector.extract_strided_slice %215 {offsets = [0, 1152], sizes = [1, 384], strides = [1, 1]} : vector<1x1536xf32> to vector<1x384xf32>
    %225 = arith.mulf %221, %224 : vector<1x384xf32>
    %226 = arith.mulf %222, %207 : vector<1x384xf32>
    %227 = arith.addf %226, %225 : vector<1x384xf32>
    %228 = math.tanh %227 : vector<1x384xf32>
    %229 = arith.mulf %223, %228 : vector<1x384xf32>
    %230 = vector.extract_strided_slice %229 {offsets = [0, 256], sizes = [1, 128], strides = [1, 1]} : vector<1x384xf32> to vector<1x128xf32>
    %c7_86 = arith.constant 7 : index
    %c0_87 = arith.constant 0 : index
    %231 = vector.load %arg10[%c7_86, %c0_87] : memref<8x128xf32, #tpu.memory_space<vmem>>, vector<1x128xf32>
    tpu.vector_store %arg10[%c7_86, %c0_87], %230 {strides = array<i32>} : memref<8x128xf32, #tpu.memory_space<vmem>>, vector<1x128xf32>,
    %c0_88 = arith.constant 0 : index
    %c0_89 = arith.constant 0 : index
    %232 = vector.load %arg10[%c0_88, %c0_89] : memref<8x128xf32, #tpu.memory_space<vmem>>, vector<8x128xf32>
    %c0_90 = arith.constant 0 : index
    %c0_91 = arith.constant 0 : index
    %233 = vector.load %arg4[%c0_90, %c0_91] : memref<128x128xf32, #tpu.memory_space<vmem>>, vector<128x128xf32>
    %cst_92 = arith.constant dense<0.000000e+00> : vector<8x128xf32>
    %234 = tpu.matmul %232, %233, %cst_92 {dimension_numbers = #tpu.dot_dimension_numbers<[1], [0], [0], [1], [0, 0, 1, 1], [], []>} : vector<8x128xf32>, vector<128x128xf32>, vector<8x128xf32> -> vector<8x128xf32>
    %c0_93 = arith.constant 0 : index
    %c0_94 = arith.constant 0 : index
    %235 = vector.load %arg6[%c0_93, %c0_94] : memref<2x128xf32, #tpu.memory_space<vmem>>, vector<1x128xf32>
    %236 = vector.broadcast %235 : vector<1x128xf32> to vector<8x128xf32>
    %237 = arith.addf %234, %236 : vector<8x128xf32>
    %cst_95 = arith.constant 0.000000e+00 : f32
    %238 = vector.broadcast %cst_95 : f32 to vector<8x128xf32>
    %239 = arith.maximumf %237, %238 : vector<8x128xf32>
    %c0_96 = arith.constant 0 : index
    %c0_97 = arith.constant 0 : index
    %240 = vector.load %arg5[%c0_96, %c0_97] : memref<128x128xf32, #tpu.memory_space<vmem>>, vector<128x128xf32>
    %cst_98 = arith.constant dense<0.000000e+00> : vector<8x128xf32>
    %241 = tpu.matmul %239, %240, %cst_98 {dimension_numbers = #tpu.dot_dimension_numbers<[1], [0], [0], [1], [0, 0, 1, 1], [], []>} : vector<8x128xf32>, vector<128x128xf32>, vector<8x128xf32> -> vector<8x128xf32>
    %c1_99 = arith.constant 1 : index
    %c0_100 = arith.constant 0 : index
    %242 = vector.load %arg6[%c1_99, %c0_100] : memref<2x128xf32, #tpu.memory_space<vmem>>, vector<1x128xf32>
    %243 = vector.broadcast %242 : vector<1x128xf32> to vector<8x128xf32>
    %244 = arith.addf %241, %243 : vector<8x128xf32>
    %245 = tpu.iota {dimensions = array<i32: 1>} : vector<8x128xi32>
    %c1_i32 = arith.constant 1 : i32
    %246 = vector.broadcast %c1_i32 : i32 to vector<8x128xi32>
    %247 = arith.cmpi eq, %245, %246 : vector<8x128xi32>
    %248 = arith.mulf %244, %244 : vector<8x128xf32>
    %249 = arith.select %247, %248, %244 : vector<8x128xi1>, vector<8x128xf32>
    %c0_101 = arith.constant 0 : index
    %c0_102 = arith.constant 0 : index
    %250 = vector.load %arg7[%c0_101, %c0_102] : memref<8x128xf32, #tpu.memory_space<vmem>>, vector<8x128xf32>
    tpu.vector_store %arg7[%c0_101, %c0_102], %249 {strides = array<i32>} : memref<8x128xf32, #tpu.memory_space<vmem>>, vector<8x128xf32>,
    return
  }
}

</mosaic_0001>

<llo_original>
// kernel: tpu_custom_call.1
$region0: #{tpu_custom_call.1}
  #allocation0 [shape = 'u32[]', space=smem, size = 0x4, offset = 0x4, fixed_abs, tag = 'smem constant byte address 0x4 - core index']
  #allocation1 [shape = 'u32[72,128]{1,0:T(1,128)}', space=vmem, size = 0x9000, scoped, tag = 'internal scratch']
  #allocation2 [shape = 'f32[384,1536]{1,0:T(8,128)}', space=vmem, size = 0x240000, scoped, tag = 'scratch operand']
  #allocation3 [shape = 'f32[8,1536]{1,0:T(8,128)}', space=vmem, size = 0xc000, scoped, tag = 'scratch operand']
  #allocation4 [shape = 'f32[8,128]{1,0:T(8,128)}', space=vmem, size = 0x1000, scoped, tag = 'scratch operand']
  %s0 = inlined_call_operand.vmem [shape: f32[8,2], index: 0, kind: input, shape index: {}]
  %s1 = inlined_call_operand.hbm [shape: f32[2,1536], index: 1, kind: input, shape index: {}]
  %s2 = inlined_call_operand.hbm [shape: f32[48,1536], index: 2, kind: input, shape index: {}]
  %s3 = inlined_call_operand.vmem [shape: f32[1,1536], index: 3, kind: input, shape index: {}]
  %s4 = inlined_call_operand.hbm [shape: f32[128,128], index: 4, kind: input, shape index: {}]
  %s5 = inlined_call_operand.hbm [shape: f32[128,128], index: 5, kind: input, shape index: {}]
  %s6 = inlined_call_operand.vmem [shape: f32[2,128], index: 6, kind: input, shape index: {}]
  %s7 = inlined_call_operand.hbm [shape: f32[8,128], index: 7, kind: output, shape index: {}]
  %s8 = sld [smem:[#allocation0]]
  $region54: #{tpu_custom_call.1} parent=0
    _
  %s10 = ssub.s32 1, %s8
  %s11 = scalar_select 0, %s10, %s8
  $region1: #{tpu_custom_call.1} parent=0
    #allocation5 [shape = 'u8[12288]{0}', space=vmem, size = 0x3000, scoped, tag = 'input window, operand 1, single buffered']
    #allocation6 [shape = 's32[1]{0}', space=sflag, size = 0x4, scoped, tag = 'scoped memory for tpu_custom_call.1']
    #allocation7 [shape = 's32[1]{0}', space=sflag, size = 0x4, scoped, tag = 'scoped memory for tpu_custom_call.1']
    #allocation8 [shape = 'u8[294912]{0}', space=vmem, size = 0x48000, scoped, tag = 'input window, operand 2, single buffered']
    #allocation9 [shape = 's32[1]{0}', space=sflag, size = 0x4, scoped, tag = 'scoped memory for tpu_custom_call.1']
    #allocation10 [shape = 'u8[65536]{0}', space=vmem, size = 0x10000, scoped, tag = 'input window, operand 4, single buffered']
    #allocation11 [shape = 'u8[65536]{0}', space=vmem, size = 0x10000, scoped, tag = 'input window, operand 5, single buffered']
    #allocation12 [shape = 's32[1]{0}', space=sflag, size = 0x4, scoped, tag = 'scoped memory for tpu_custom_call.1']
    #allocation13 [shape = 'u8[4096]{0}', space=vmem, size = 0x1000, scoped, tag = 'output window, operand 0, single buffered']
    %12 = vsyncpa [#allocation6], 0
    %13 = vsyncpa [#allocation9], 0
    %14 = vsyncpa [#allocation12], 0
    %15 = vsyncpa [#allocation7], 0
    // Predicated region
    $region2: #{tpu_custom_call.1} parent=1 // pred_check
      _
    $region3: #{tpu_custom_call.1} parent=1 // pred_check_branch
      %17 = sbr.rel (0) target = $region5
    $region4: #{tpu_custom_call.1} parent=1 // pred_region
      _
    $region5: #{tpu_custom_call.1} parent=1 // pred_fallthru
      _
    // Predicated region
    $region6: #{tpu_custom_call.1} parent=1 // pred_check
      _
    $region7: #{tpu_custom_call.1} parent=1 // pred_check_branch
      %19 = sbr.rel (0) target = $region9
    $region8: #{tpu_custom_call.1} parent=1 // pred_region
      %21 = vsyncadd [#allocation6], 0
      %s23 = sshll.u32 %s1, 4
      %s24 = int_to_ptr.hbm [resolvable:$true] %s23
      %s25 = sshll.u32 [#allocation5], 4
      %s26 = int_to_ptr.vmem [resolvable:$true] %s25
      %28 = dma.hbm_to_vmem [thread:$0]  %s24, 384, %s26, [#allocation6]
    $region9: #{tpu_custom_call.1} parent=1 // pred_fallthru
      _
    // Predicated region
    $region10: #{tpu_custom_call.1} parent=1 // pred_check
      _
    $region11: #{tpu_custom_call.1} parent=1 // pred_check_branch
      %30 = sbr.rel (0) target = $region13
    $region12: #{tpu_custom_call.1} parent=1 // pred_region
      %32 = vsyncadd [#allocation9], 0
      %s33 = sshll.u32 %s2, 4
      %s34 = int_to_ptr.hbm [resolvable:$true] %s33
      %s35 = sshll.u32 [#allocation8], 4
      %s36 = int_to_ptr.vmem [resolvable:$true] %s35
      %41 = dma.hbm_to_vmem [thread:$0]  %s34, 9216, %s36, [#allocation9], 1536, 1536, 96
    $region13: #{tpu_custom_call.1} parent=1 // pred_fallthru
      _
    // Predicated region
    $region14: #{tpu_custom_call.1} parent=1 // pred_check
      _
    $region15: #{tpu_custom_call.1} parent=1 // pred_check_branch
      %43 = sbr.rel (0) target = $region17
    $region16: #{tpu_custom_call.1} parent=1 // pred_region
      _
    $region17: #{tpu_custom_call.1} parent=1 // pred_fallthru
      _
    // Predicated region
    $region18: #{tpu_custom_call.1} parent=1 // pred_check
      _
    $region19: #{tpu_custom_call.1} parent=1 // pred_check_branch
      %45 = sbr.rel (0) target = $region21
    $region20: #{tpu_custom_call.1} parent=1 // pred_region
      %47 = vsyncadd [#allocation9], 0
      %s48 = sshll.u32 %s4, 4
      %s49 = int_to_ptr.hbm [resolvable:$true] %s48
      %s50 = sshll.u32 [#allocation10], 4
      %s51 = int_to_ptr.vmem [resolvable:$true] %s50
      %56 = dma.hbm_to_vmem [thread:$0]  %s49, 2048, %s51, [#allocation9], 128, 128, 8
    $region21: #{tpu_custom_call.1} parent=1 // pred_fallthru
      _
    // Predicated region
    $region22: #{tpu_custom_call.1} parent=1 // pred_check
      _
    $region23: #{tpu_custom_call.1} parent=1 // pred_check_branch
      %58 = sbr.rel (0) target = $region25
    $region24: #{tpu_custom_call.1} parent=1 // pred_region
      %60 = vsyncadd [#allocation12], 0
      %s61 = sshll.u32 %s5, 4
      %s62 = int_to_ptr.hbm [resolvable:$true] %s61
      %s63 = sshll.u32 [#allocation11], 4
      %s64 = int_to_ptr.vmem [resolvable:$true] %s63
      %69 = dma.hbm_to_vmem [thread:$0]  %s62, 2048, %s64, [#allocation12], 128, 128, 8
    $region25: #{tpu_custom_call.1} parent=1 // pred_fallthru
      _
    // Predicated region
    $region26: #{tpu_custom_call.1} parent=1 // pred_check
      _
    $region27: #{tpu_custom_call.1} parent=1 // pred_check_branch
      %71 = sbr.rel (0) target = $region29
    $region28: #{tpu_custom_call.1} parent=1 // pred_region
      _
    $region29: #{tpu_custom_call.1} parent=1 // pred_fallthru
      _
    // Predicated region
    $region30: #{tpu_custom_call.1} parent=1 // pred_check
      _
    $region31: #{tpu_custom_call.1} parent=1 // pred_check_branch
      %73 = sbr.rel (0) target = $region33
    $region32: #{tpu_custom_call.1} parent=1 // pred_region
      %75 = dma.done [#allocation6], 384
    $region33: #{tpu_custom_call.1} parent=1 // pred_fallthru
      _
    // Predicated region
    $region34: #{tpu_custom_call.1} parent=1 // pred_check
      _
    $region35: #{tpu_custom_call.1} parent=1 // pred_check_branch
      %77 = sbr.rel (0) target = $region37
    $region36: #{tpu_custom_call.1} parent=1 // pred_region
      %79 = dma.done [#allocation9], 9216
    $region37: #{tpu_custom_call.1} parent=1 // pred_fallthru
      _
    // Predicated region
    $region38: #{tpu_custom_call.1} parent=1 // pred_check
      _
    $region39: #{tpu_custom_call.1} parent=1 // pred_check_branch
      %81 = sbr.rel (0) target = $region41
    $region40: #{tpu_custom_call.1} parent=1 // pred_region
      %83 = dma.done [#allocation9], 2048
    $region41: #{tpu_custom_call.1} parent=1 // pred_fallthru
      _
    // Predicated region
    $region42: #{tpu_custom_call.1} parent=1 // pred_check
      _
    $region43: #{tpu_custom_call.1} parent=1 // pred_check_branch
      %85 = sbr.rel (0) target = $region45
    $region44: #{tpu_custom_call.1} parent=1 // pred_region
      %87 = dma.done [#allocation12], 2048
    $region45: #{tpu_custom_call.1} parent=1 // pred_fallthru
      _
    %v88 = vld [vmem:[#allocation8] sm:$0xff]
    %v89 = vld [vmem:[#allocation8 + $0x8] sm:$0xff]
    %v90 = vld [vmem:[#allocation8 + $0x10] sm:$0xff]
    %v91 = vld [vmem:[#allocation8 + $0x18] sm:$0xff]
    %v92 = vld [vmem:[#allocation8 + $0x20] sm:$0xff]
    %v93 = vld [vmem:[#allocation8 + $0x28] sm:$0xff]
    %v94 = vld [vmem:[#allocation8 + $0x30] sm:$0xff]
    %v95 = vld [vmem:[#allocation8 + $0x38] sm:$0xff]
    %v96 = vld [vmem:[#allocation8 + $0x40] sm:$0xff]
    %v97 = vld [vmem:[#allocation8 + $0x48] sm:$0xff]
    %v98 = vld [vmem:[#allocation8 + $0x50] sm:$0xff]
    %v99 = vld [vmem:[#allocation8 + $0x58] sm:$0xff]
    %v100 = vld [vmem:[#allocation8 + $0x60] sm:$0xff]
    %v101 = vld [vmem:[#allocation8 + $0x68] sm:$0xff]
    %v102 = vld [vmem:[#allocation8 + $0x70] sm:$0xff]
    %v103 = vld [vmem:[#allocation8 + $0x78] sm:$0xff]
    %v104 = vld [vmem:[#allocation8 + $0x80] sm:$0xff]
    %v105 = vld [vmem:[#allocation8 + $0x88] sm:$0xff]
    %v106 = vld [vmem:[#allocation8 + $0x90] sm:$0xff]
    %v107 = vld [vmem:[#allocation8 + $0x98] sm:$0xff]
    %v108 = vld [vmem:[#allocation8 + $0xa0] sm:$0xff]
    %v109 = vld [vmem:[#allocation8 + $0xa8] sm:$0xff]
    %v110 = vld [vmem:[#allocation8 + $0xb0] sm:$0xff]
    %v111 = vld [vmem:[#allocation8 + $0xb8] sm:$0xff]
    %112 = vst [vmem:[#allocation2] sm:$0xff] %v88
    %113 = vst [vmem:[#allocation2 + $0x8] sm:$0xff] %v89
    %114 = vst [vmem:[#allocation2 + $0x10] sm:$0xff] %v90
    %115 = vst [vmem:[#allocation2 + $0x18] sm:$0xff] %v91
    %116 = vst [vmem:[#allocation2 + $0x20] sm:$0xff] %v92
    %117 = vst [vmem:[#allocation2 + $0x28] sm:$0xff] %v93
    %118 = vst [vmem:[#allocation2 + $0x30] sm:$0xff] %v94
    %119 = vst [vmem:[#allocation2 + $0x38] sm:$0xff] %v95
    %120 = vst [vmem:[#allocation2 + $0x40] sm:$0xff] %v96
    %121 = vst [vmem:[#allocation2 + $0x48] sm:$0xff] %v97
    %122 = vst [vmem:[#allocation2 + $0x50] sm:$0xff] %v98
    %123 = vst [vmem:[#allocation2 + $0x58] sm:$0xff] %v99
    %124 = vst [vmem:[#allocation2 + $0x60] sm:$0xff] %v100
    %125 = vst [vmem:[#allocation2 + $0x68] sm:$0xff] %v101
    %126 = vst [vmem:[#allocation2 + $0x70] sm:$0xff] %v102
    %127 = vst [vmem:[#allocation2 + $0x78] sm:$0xff] %v103
    %128 = vst [vmem:[#allocation2 + $0x80] sm:$0xff] %v104
    %129 = vst [vmem:[#allocation2 + $0x88] sm:$0xff] %v105
    %130 = vst [vmem:[#allocation2 + $0x90] sm:$0xff] %v106
    %131 = vst [vmem:[#allocation2 + $0x98] sm:$0xff] %v107
    %132 = vst [vmem:[#allocation2 + $0xa0] sm:$0xff] %v108
    %133 = vst [vmem:[#allocation2 + $0xa8] sm:$0xff] %v109
    %134 = vst [vmem:[#allocation2 + $0xb0] sm:$0xff] %v110
    %135 = vst [vmem:[#allocation2 + $0xb8] sm:$0xff] %v111
    %136 = vst [vmem:[#allocation2 + $0xc0] sm:$0xff] 0.0
    %137 = vst [vmem:[#allocation2 + $0xc8] sm:$0xff] 0.0
    %138 = vst [vmem:[#allocation2 + $0xd0] sm:$0xff] 0.0
    %139 = vst [vmem:[#allocation2 + $0xd8] sm:$0xff] 0.0
    %140 = vst [vmem:[#allocation2 + $0xe0] sm:$0xff] 0.0
    %141 = vst [vmem:[#allocation2 + $0xe8] sm:$0xff] 0.0
    %142 = vst [vmem:[#allocation2 + $0xf0] sm:$0xff] 0.0
    %143 = vst [vmem:[#allocation2 + $0xf8] sm:$0xff] 0.0
    %144 = vst [vmem:[#allocation2 + $0x100] sm:$0xff] 0.0
    %145 = vst [vmem:[#allocation2 + $0x108] sm:$0xff] 0.0
    %146 = vst [vmem:[#allocation2 + $0x110] sm:$0xff] 0.0
    %147 = vst [vmem:[#allocation2 + $0x118] sm:$0xff] 0.0
    %148 = vst [vmem:[#allocation2 + $0x120] sm:$0xff] 0.0
    %149 = vst [vmem:[#allocation2 + $0x128] sm:$0xff] 0.0
    %150 = vst [vmem:[#allocation2 + $0x130] sm:$0xff] 0.0
    %151 = vst [vmem:[#allocation2 + $0x138] sm:$0xff] 0.0
    %152 = vst [vmem:[#allocation2 + $0x140] sm:$0xff] 0.0
    %153 = vst [vmem:[#allocation2 + $0x148] sm:$0xff] 0.0
    %154 = vst [vmem:[#allocation2 + $0x150] sm:$0xff] 0.0
    %155 = vst [vmem:[#allocation2 + $0x158] sm:$0xff] 0.0
    %156 = vst [vmem:[#allocation2 + $0x160] sm:$0xff] 0.0
    %157 = vst [vmem:[#allocation2 + $0x168] sm:$0xff] 0.0
    %158 = vst [vmem:[#allocation2 + $0x170] sm:$0xff] 0.0
    %159 = vst [vmem:[#allocation2 + $0x178] sm:$0xff] 0.0
    %160 = vst [vmem:[#allocation2 + $0x180] sm:$0xff] 0.0
    %161 = vst [vmem:[#allocation2 + $0x188] sm:$0xff] 0.0
    %162 = vst [vmem:[#allocation2 + $0x190] sm:$0xff] 0.0
    %163 = vst [vmem:[#allocation2 + $0x198] sm:$0xff] 0.0
    %164 = vst [vmem:[#allocation2 + $0x1a0] sm:$0xff] 0.0
    %165 = vst [vmem:[#allocation2 + $0x1a8] sm:$0xff] 0.0
    %166 = vst [vmem:[#allocation2 + $0x1b0] sm:$0xff] 0.0
    %167 = vst [vmem:[#allocation2 + $0x1b8] sm:$0xff] 0.0
    %168 = vst [vmem:[#allocation2 + $0x1c0] sm:$0xff] 0.0
    %169 = vst [vmem:[#allocation2 + $0x1c8] sm:$0xff] 0.0
    %170 = vst [vmem:[#allocation2 + $0x1d0] sm:$0xff] 0.0
    %171 = vst [vmem:[#allocation2 + $0x1d8] sm:$0xff] 0.0
    %172 = vst [vmem:[#allocation2 + $0x1e0] sm:$0xff] 0.0
    %173 = vst [vmem:[#allocation2 + $0x1e8] sm:$0xff] 0.0
    %174 = vst [vmem:[#allocation2 + $0x1f0] sm:$0xff] 0.0
    %175 = vst [vmem:[#allocation2 + $0x1f8] sm:$0xff] 0.0
    %176 = vst [vmem:[#allocation2 + $0x200] sm:$0xff] 0.0
    %177 = vst [vmem:[#allocation2 + $0x208] sm:$0xff] 0.0
    %178 = vst [vmem:[#allocation2 + $0x210] sm:$0xff] 0.0
    %179 = vst [vmem:[#allocation2 + $0x218] sm:$0xff] 0.0
    %180 = vst [vmem:[#allocation2 + $0x220] sm:$0xff] 0.0
    %181 = vst [vmem:[#allocation2 + $0x228] sm:$0xff] 0.0
    %182 = vst [vmem:[#allocation2 + $0x230] sm:$0xff] 0.0
    %183 = vst [vmem:[#allocation2 + $0x238] sm:$0xff] 0.0
    %184 = vst [vmem:[#allocation2 + $0x240] sm:$0xff] 0.0
    %185 = vst [vmem:[#allocation2 + $0x248] sm:$0xff] 0.0
    %186 = vst [vmem:[#allocation2 + $0x250] sm:$0xff] 0.0
    %187 = vst [vmem:[#allocation2 + $0x258] sm:$0xff] 0.0
    %188 = vst [vmem:[#allocation2 + $0x260] sm:$0xff] 0.0
    %189 = vst [vmem:[#allocation2 + $0x268] sm:$0xff] 0.0
    %190 = vst [vmem:[#allocation2 + $0x270] sm:$0xff] 0.0
    %191 = vst [vmem:[#allocation2 + $0x278] sm:$0xff] 0.0
    %192 = vst [vmem:[#allocation2 + $0x280] sm:$0xff] 0.0
    %193 = vst [vmem:[#allocation2 + $0x288] sm:$0xff] 0.0
    %194 = vst [vmem:[#allocation2 + $0x290] sm:$0xff] 0.0
    %195 = vst [vmem:[#allocation2 + $0x298] sm:$0xff] 0.0
    %196 = vst [vmem:[#allocation2 + $0x2a0] sm:$0xff] 0.0
    %197 = vst [vmem:[#allocation2 + $0x2a8] sm:$0xff] 0.0
    %198 = vst [vmem:[#allocation2 + $0x2b0] sm:$0xff] 0.0
    %199 = vst [vmem:[#allocation2 + $0x2b8] sm:$0xff] 0.0
    %200 = vst [vmem:[#allocation2 + $0x2c0] sm:$0xff] 0.0
    %201 = vst [vmem:[#allocation2 + $0x2c8] sm:$0xff] 0.0
    %202 = vst [vmem:[#allocation2 + $0x2d0] sm:$0xff] 0.0
    %203 = vst [vmem:[#allocation2 + $0x2d8] sm:$0xff] 0.0
    %204 = vst [vmem:[#allocation2 + $0x2e0] sm:$0xff] 0.0
    %205 = vst [vmem:[#allocation2 + $0x2e8] sm:$0xff] 0.0
    %206 = vst [vmem:[#allocation2 + $0x2f0] sm:$0xff] 0.0
    %207 = vst [vmem:[#allocation2 + $0x2f8] sm:$0xff] 0.0
    %208 = vst [vmem:[#allocation2 + $0x300] sm:$0xff] 0.0
    %209 = vst [vmem:[#allocation2 + $0x308] sm:$0xff] 0.0
    %210 = vst [vmem:[#allocation2 + $0x310] sm:$0xff] 0.0
    %211 = vst [vmem:[#allocation2 + $0x318] sm:$0xff] 0.0
    %212 = vst [vmem:[#allocation2 + $0x320] sm:$0xff] 0.0
    %213 = vst [vmem:[#allocation2 + $0x328] sm:$0xff] 0.0
    %214 = vst [vmem:[#allocation2 + $0x330] sm:$0xff] 0.0
    %215 = vst [vmem:[#allocation2 + $0x338] sm:$0xff] 0.0
    %216 = vst [vmem:[#allocation2 + $0x340] sm:$0xff] 0.0
    %217 = vst [vmem:[#allocation2 + $0x348] sm:$0xff] 0.0
    %218 = vst [vmem:[#allocation2 + $0x350] sm:$0xff] 0.0
    %219 = vst [vmem:[#allocation2 + $0x358] sm:$0xff] 0.0
    %220 = vst [vmem:[#allocation2 + $0x360] sm:$0xff] 0.0
    %221 = vst [vmem:[#allocation2 + $0x368] sm:$0xff] 0.0
    %222 = vst [vmem:[#allocation2 + $0x370] sm:$0xff] 0.0
    %223 = vst [vmem:[#allocation2 + $0x378] sm:$0xff] 0.0
    %224 = vst [vmem:[#allocation2 + $0x380] sm:$0xff] 0.0
    %225 = vst [vmem:[#allocation2 + $0x388] sm:$0xff] 0.0
    %226 = vst [vmem:[#allocation2 + $0x390] sm:$0xff] 0.0
    %227 = vst [vmem:[#allocation2 + $0x398] sm:$0xff] 0.0
    %228 = vst [vmem:[#allocation2 + $0x3a0] sm:$0xff] 0.0
    %229 = vst [vmem:[#allocation2 + $0x3a8] sm:$0xff] 0.0
    %230 = vst [vmem:[#allocation2 + $0x3b0] sm:$0xff] 0.0
    %231 = vst [vmem:[#allocation2 + $0x3b8] sm:$0xff] 0.0
    %232 = vst [vmem:[#allocation2 + $0x3c0] sm:$0xff] 0.0
    %233 = vst [vmem:[#allocation2 + $0x3c8] sm:$0xff] 0.0
    %234 = vst [vmem:[#allocation2 + $0x3d0] sm:$0xff] 0.0
    %235 = vst [vmem:[#allocation2 + $0x3d8] sm:$0xff] 0.0
    %236 = vst [vmem:[#allocation2 + $0x3e0] sm:$0xff] 0.0
    %237 = vst [vmem:[#allocation2 + $0x3e8] sm:$0xff] 0.0
    %238 = vst [vmem:[#allocation2 + $0x3f0] sm:$0xff] 0.0
    %239 = vst [vmem:[#allocation2 + $0x3f8] sm:$0xff] 0.0
    %240 = vst [vmem:[#allocation2 + $0x400] sm:$0xff] 0.0
    %241 = vst [vmem:[#allocation2 + $0x408] sm:$0xff] 0.0
    %242 = vst [vmem:[#allocation2 + $0x410] sm:$0xff] 0.0
    %243 = vst [vmem:[#allocation2 + $0x418] sm:$0xff] 0.0
    %244 = vst [vmem:[#allocation2 + $0x420] sm:$0xff] 0.0
    %245 = vst [vmem:[#allocation2 + $0x428] sm:$0xff] 0.0
    %246 = vst [vmem:[#allocation2 + $0x430] sm:$0xff] 0.0
    %247 = vst [vmem:[#allocation2 + $0x438] sm:$0xff] 0.0
    %248 = vst [vmem:[#allocation2 + $0x440] sm:$0xff] 0.0
    %249 = vst [vmem:[#allocation2 + $0x448] sm:$0xff] 0.0
    %250 = vst [vmem:[#allocation2 + $0x450] sm:$0xff] 0.0
    %251 = vst [vmem:[#allocation2 + $0x458] sm:$0xff] 0.0
    %252 = vst [vmem:[#allocation2 + $0x460] sm:$0xff] 0.0
    %253 = vst [vmem:[#allocation2 + $0x468] sm:$0xff] 0.0
    %254 = vst [vmem:[#allocation2 + $0x470] sm:$0xff] 0.0
    %255 = vst [vmem:[#allocation2 + $0x478] sm:$0xff] 0.0
    %256 = vst [vmem:[#allocation2 + $0x480] sm:$0xff] 0.0
    %257 = vst [vmem:[#allocation2 + $0x488] sm:$0xff] 0.0
    %258 = vst [vmem:[#allocation2 + $0x490] sm:$0xff] 0.0
    %259 = vst [vmem:[#allocation2 + $0x498] sm:$0xff] 0.0
    %260 = vst [vmem:[#allocation2 + $0x4a0] sm:$0xff] 0.0
    %261 = vst [vmem:[#allocation2 + $0x4a8] sm:$0xff] 0.0
    %262 = vst [vmem:[#allocation2 + $0x4b0] sm:$0xff] 0.0
    %263 = vst [vmem:[#allocation2 + $0x4b8] sm:$0xff] 0.0
    %264 = vst [vmem:[#allocation2 + $0x4c0] sm:$0xff] 0.0
    %265 = vst [vmem:[#allocation2 + $0x4c8] sm:$0xff] 0.0
    %266 = vst [vmem:[#allocation2 + $0x4d0] sm:$0xff] 0.0
    %267 = vst [vmem:[#allocation2 + $0x4d8] sm:$0xff] 0.0
    %268 = vst [vmem:[#allocation2 + $0x4e0] sm:$0xff] 0.0
    %269 = vst [vmem:[#allocation2 + $0x4e8] sm:$0xff] 0.0
    %270 = vst [vmem:[#allocation2 + $0x4f0] sm:$0xff] 0.0
    %271 = vst [vmem:[#allocation2 + $0x4f8] sm:$0xff] 0.0
    %272 = vst [vmem:[#allocation2 + $0x500] sm:$0xff] 0.0
    %273 = vst [vmem:[#allocation2 + $0x508] sm:$0xff] 0.0
    %274 = vst [vmem:[#allocation2 + $0x510] sm:$0xff] 0.0
    %275 = vst [vmem:[#allocation2 + $0x518] sm:$0xff] 0.0
    %276 = vst [vmem:[#allocation2 + $0x520] sm:$0xff] 0.0
    %277 = vst [vmem:[#allocation2 + $0x528] sm:$0xff] 0.0
    %278 = vst [vmem:[#allocation2 + $0x530] sm:$0xff] 0.0
    %279 = vst [vmem:[#allocation2 + $0x538] sm:$0xff] 0.0
    %280 = vst [vmem:[#allocation2 + $0x540] sm:$0xff] 0.0
    %281 = vst [vmem:[#allocation2 + $0x548] sm:$0xff] 0.0
    %282 = vst [vmem:[#allocation2 + $0x550] sm:$0xff] 0.0
    %283 = vst [vmem:[#allocation2 + $0x558] sm:$0xff] 0.0
    %284 = vst [vmem:[#allocation2 + $0x560] sm:$0xff] 0.0
    %285 = vst [vmem:[#allocation2 + $0x568] sm:$0xff] 0.0
    %286 = vst [vmem:[#allocation2 + $0x570] sm:$0xff] 0.0
    %287 = vst [vmem:[#allocation2 + $0x578] sm:$0xff] 0.0
    %288 = vst [vmem:[#allocation2 + $0x580] sm:$0xff] 0.0
    %289 = vst [vmem:[#allocation2 + $0x588] sm:$0xff] 0.0
    %290 = vst [vmem:[#allocation2 + $0x590] sm:$0xff] 0.0
    %291 = vst [vmem:[#allocation2 + $0x598] sm:$0xff] 0.0
    %292 = vst [vmem:[#allocation2 + $0x5a0] sm:$0xff] 0.0
    %293 = vst [vmem:[#allocation2 + $0x5a8] sm:$0xff] 0.0
    %294 = vst [vmem:[#allocation2 + $0x5b0] sm:$0xff] 0.0
    %295 = vst [vmem:[#allocation2 + $0x5b8] sm:$0xff] 0.0
    %296 = vst [vmem:[#allocation2 + $0x5c0] sm:$0xff] 0.0
    %297 = vst [vmem:[#allocation2 + $0x5c8] sm:$0xff] 0.0
    %298 = vst [vmem:[#allocation2 + $0x5d0] sm:$0xff] 0.0
    %299 = vst [vmem:[#allocation2 + $0x5d8] sm:$0xff] 0.0
    %300 = vst [vmem:[#allocation2 + $0x5e0] sm:$0xff] 0.0
    %301 = vst [vmem:[#allocation2 + $0x5e8] sm:$0xff] 0.0
    %302 = vst [vmem:[#allocation2 + $0x5f0] sm:$0xff] 0.0
    %303 = vst [vmem:[#allocation2 + $0x5f8] sm:$0xff] 0.0
    %v304 = vld [vmem:[#allocation8 + $0xc0] sm:$0xff]
    %v305 = vld [vmem:[#allocation8 + $0xc8] sm:$0xff]
    %v306 = vld [vmem:[#allocation8 + $0xd0] sm:$0xff]
    %v307 = vld [vmem:[#allocation8 + $0xd8] sm:$0xff]
    %v308 = vld [vmem:[#allocation8 + $0xe0] sm:$0xff]
    %v309 = vld [vmem:[#allocation8 + $0xe8] sm:$0xff]
    %v310 = vld [vmem:[#allocation8 + $0xf0] sm:$0xff]
    %v311 = vld [vmem:[#allocation8 + $0xf8] sm:$0xff]
    %v312 = vld [vmem:[#allocation8 + $0x100] sm:$0xff]
    %v313 = vld [vmem:[#allocation8 + $0x108] sm:$0xff]
    %v314 = vld [vmem:[#allocation8 + $0x110] sm:$0xff]
    %v315 = vld [vmem:[#allocation8 + $0x118] sm:$0xff]
    %v316 = vld [vmem:[#allocation8 + $0x120] sm:$0xff]
    %v317 = vld [vmem:[#allocation8 + $0x128] sm:$0xff]
    %v318 = vld [vmem:[#allocation8 + $0x130] sm:$0xff]
    %v319 = vld [vmem:[#allocation8 + $0x138] sm:$0xff]
    %v320 = vld [vmem:[#allocation8 + $0x140] sm:$0xff]
    %v321 = vld [vmem:[#allocation8 + $0x148] sm:$0xff]
    %v322 = vld [vmem:[#allocation8 + $0x150] sm:$0xff]
    %v323 = vld [vmem:[#allocation8 + $0x158] sm:$0xff]
    %v324 = vld [vmem:[#allocation8 + $0x160] sm:$0xff]
    %v325 = vld [vmem:[#allocation8 + $0x168] sm:$0xff]
    %v326 = vld [vmem:[#allocation8 + $0x170] sm:$0xff]
    %v327 = vld [vmem:[#allocation8 + $0x178] sm:$0xff]
    %328 = vst [vmem:[#allocation2 + $0x600] sm:$0xff] %v304
    %329 = vst [vmem:[#allocation2 + $0x608] sm:$0xff] %v305
    %330 = vst [vmem:[#allocation2 + $0x610] sm:$0xff] %v306
    %331 = vst [vmem:[#allocation2 + $0x618] sm:$0xff] %v307
    %332 = vst [vmem:[#allocation2 + $0x620] sm:$0xff] %v308
    %333 = vst [vmem:[#allocation2 + $0x628] sm:$0xff] %v309
    %334 = vst [vmem:[#allocation2 + $0x630] sm:$0xff] %v310
    %335 = vst [vmem:[#allocation2 + $0x638] sm:$0xff] %v311
    %336 = vst [vmem:[#allocation2 + $0x640] sm:$0xff] %v312
    %337 = vst [vmem:[#allocation2 + $0x648] sm:$0xff] %v313
    %338 = vst [vmem:[#allocation2 + $0x650] sm:$0xff] %v314
    %339 = vst [vmem:[#allocation2 + $0x658] sm:$0xff] %v315
    %340 = vst [vmem:[#allocation2 + $0x660] sm:$0xff] %v316
    %341 = vst [vmem:[#allocation2 + $0x668] sm:$0xff] %v317
    %342 = vst [vmem:[#allocation2 + $0x670] sm:$0xff] %v318
    %343 = vst [vmem:[#allocation2 + $0x678] sm:$0xff] %v319
    %344 = vst [vmem:[#allocation2 + $0x680] sm:$0xff] %v320
    %345 = vst [vmem:[#allocation2 + $0x688] sm:$0xff] %v321
    %346 = vst [vmem:[#allocation2 + $0x690] sm:$0xff] %v322
    %347 = vst [vmem:[#allocation2 + $0x698] sm:$0xff] %v323
    %348 = vst [vmem:[#allocation2 + $0x6a0] sm:$0xff] %v324
    %349 = vst [vmem:[#allocation2 + $0x6a8] sm:$0xff] %v325
    %350 = vst [vmem:[#allocation2 + $0x6b0] sm:$0xff] %v326
    %351 = vst [vmem:[#allocation2 + $0x6b8] sm:$0xff] %v327
    %352 = vst [vmem:[#allocation2 + $0x6c0] sm:$0xff] 0.0
    %353 = vst [vmem:[#allocation2 + $0x6c8] sm:$0xff] 0.0
    %354 = vst [vmem:[#allocation2 + $0x6d0] sm:$0xff] 0.0
    %355 = vst [vmem:[#allocation2 + $0x6d8] sm:$0xff] 0.0
    %356 = vst [vmem:[#allocation2 + $0x6e0] sm:$0xff] 0.0
    %357 = vst [vmem:[#allocation2 + $0x6e8] sm:$0xff] 0.0
    %358 = vst [vmem:[#allocation2 + $0x6f0] sm:$0xff] 0.0
    %359 = vst [vmem:[#allocation2 + $0x6f8] sm:$0xff] 0.0
    %360 = vst [vmem:[#allocation2 + $0x700] sm:$0xff] 0.0
    %361 = vst [vmem:[#allocation2 + $0x708] sm:$0xff] 0.0
    %362 = vst [vmem:[#allocation2 + $0x710] sm:$0xff] 0.0
    %363 = vst [vmem:[#allocation2 + $0x718] sm:$0xff] 0.0
    %364 = vst [vmem:[#allocation2 + $0x720] sm:$0xff] 0.0
    %365 = vst [vmem:[#allocation2 + $0x728] sm:$0xff] 0.0
    %366 = vst [vmem:[#allocation2 + $0x730] sm:$0xff] 0.0
    %367 = vst [vmem:[#allocation2 + $0x738] sm:$0xff] 0.0
    %368 = vst [vmem:[#allocation2 + $0x740] sm:$0xff] 0.0
    %369 = vst [vmem:[#allocation2 + $0x748] sm:$0xff] 0.0
    %370 = vst [vmem:[#allocation2 + $0x750] sm:$0xff] 0.0
    %371 = vst [vmem:[#allocation2 + $0x758] sm:$0xff] 0.0
    %372 = vst [vmem:[#allocation2 + $0x760] sm:$0xff] 0.0
    %373 = vst [vmem:[#allocation2 + $0x768] sm:$0xff] 0.0
    %374 = vst [vmem:[#allocation2 + $0x770] sm:$0xff] 0.0
    %375 = vst [vmem:[#allocation2 + $0x778] sm:$0xff] 0.0
    %376 = vst [vmem:[#allocation2 + $0x780] sm:$0xff] 0.0
    %377 = vst [vmem:[#allocation2 + $0x788] sm:$0xff] 0.0
    %378 = vst [vmem:[#allocation2 + $0x790] sm:$0xff] 0.0
    %379 = vst [vmem:[#allocation2 + $0x798] sm:$0xff] 0.0
    %380 = vst [vmem:[#allocation2 + $0x7a0] sm:$0xff] 0.0
    %381 = vst [vmem:[#allocation2 + $0x7a8] sm:$0xff] 0.0
    %382 = vst [vmem:[#allocation2 + $0x7b0] sm:$0xff] 0.0
    %383 = vst [vmem:[#allocation2 + $0x7b8] sm:$0xff] 0.0
    %384 = vst [vmem:[#allocation2 + $0x7c0] sm:$0xff] 0.0
    %385 = vst [vmem:[#allocation2 + $0x7c8] sm:$0xff] 0.0
    %386 = vst [vmem:[#allocation2 + $0x7d0] sm:$0xff] 0.0
    %387 = vst [vmem:[#allocation2 + $0x7d8] sm:$0xff] 0.0
    %388 = vst [vmem:[#allocation2 + $0x7e0] sm:$0xff] 0.0
    %389 = vst [vmem:[#allocation2 + $0x7e8] sm:$0xff] 0.0
    %390 = vst [vmem:[#allocation2 + $0x7f0] sm:$0xff] 0.0
    %391 = vst [vmem:[#allocation2 + $0x7f8] sm:$0xff] 0.0
    %392 = vst [vmem:[#allocation2 + $0x800] sm:$0xff] 0.0
    %393 = vst [vmem:[#allocation2 + $0x808] sm:$0xff] 0.0
    %394 = vst [vmem:[#allocation2 + $0x810] sm:$0xff] 0.0
    %395 = vst [vmem:[#allocation2 + $0x818] sm:$0xff] 0.0
    %396 = vst [vmem:[#allocation2 + $0x820] sm:$0xff] 0.0
    %397 = vst [vmem:[#allocation2 + $0x828] sm:$0xff] 0.0
    %398 = vst [vmem:[#allocation2 + $0x830] sm:$0xff] 0.0
    %399 = vst [vmem:[#allocation2 + $0x838] sm:$0xff] 0.0
    %400 = vst [vmem:[#allocation2 + $0x840] sm:$0xff] 0.0
    %401 = vst [vmem:[#allocation2 + $0x848] sm:$0xff] 0.0
    %402 = vst [vmem:[#allocation2 + $0x850] sm:$0xff] 0.0
    %403 = vst [vmem:[#allocation2 + $0x858] sm:$0xff] 0.0
    %404 = vst [vmem:[#allocation2 + $0x860] sm:$0xff] 0.0
    %405 = vst [vmem:[#allocation2 + $0x868] sm:$0xff] 0.0
    %406 = vst [vmem:[#allocation2 + $0x870] sm:$0xff] 0.0
    %407 = vst [vmem:[#allocation2 + $0x878] sm:$0xff] 0.0
    %408 = vst [vmem:[#allocation2 + $0x880] sm:$0xff] 0.0
    %409 = vst [vmem:[#allocation2 + $0x888] sm:$0xff] 0.0
    %410 = vst [vmem:[#allocation2 + $0x890] sm:$0xff] 0.0
    %411 = vst [vmem:[#allocation2 + $0x898] sm:$0xff] 0.0
    %412 = vst [vmem:[#allocation2 + $0x8a0] sm:$0xff] 0.0
    %413 = vst [vmem:[#allocation2 + $0x8a8] sm:$0xff] 0.0
    %414 = vst [vmem:[#allocation2 + $0x8b0] sm:$0xff] 0.0
    %415 = vst [vmem:[#allocation2 + $0x8b8] sm:$0xff] 0.0
    %416 = vst [vmem:[#allocation2 + $0x8c0] sm:$0xff] 0.0
    %417 = vst [vmem:[#allocation2 + $0x8c8] sm:$0xff] 0.0
    %418 = vst [vmem:[#allocation2 + $0x8d0] sm:$0xff] 0.0
    %419 = vst [vmem:[#allocation2 + $0x8d8] sm:$0xff] 0.0
    %420 = vst [vmem:[#allocation2 + $0x8e0] sm:$0xff] 0.0
    %421 = vst [vmem:[#allocation2 + $0x8e8] sm:$0xff] 0.0
    %422 = vst [vmem:[#allocation2 + $0x8f0] sm:$0xff] 0.0
    %423 = vst [vmem:[#allocation2 + $0x8f8] sm:$0xff] 0.0
    %424 = vst [vmem:[#allocation2 + $0x900] sm:$0xff] 0.0
    %425 = vst [vmem:[#allocation2 + $0x908] sm:$0xff] 0.0
    %426 = vst [vmem:[#allocation2 + $0x910] sm:$0xff] 0.0
    %427 = vst [vmem:[#allocation2 + $0x918] sm:$0xff] 0.0
    %428 = vst [vmem:[#allocation2 + $0x920] sm:$0xff] 0.0
    %429 = vst [vmem:[#allocation2 + $0x928] sm:$0xff] 0.0
    %430 = vst [vmem:[#allocation2 + $0x930] sm:$0xff] 0.0
    %431 = vst [vmem:[#allocation2 + $0x938] sm:$0xff] 0.0
    %432 = vst [vmem:[#allocation2 + $0x940] sm:$0xff] 0.0
    %433 = vst [vmem:[#allocation2 + $0x948] sm:$0xff] 0.0
    %434 = vst [vmem:[#allocation2 + $0x950] sm:$0xff] 0.0
    %435 = vst [vmem:[#allocation2 + $0x958] sm:$0xff] 0.0
    %436 = vst [vmem:[#allocation2 + $0x960] sm:$0xff] 0.0
    %437 = vst [vmem:[#allocation2 + $0x968] sm:$0xff] 0.0
    %438 = vst [vmem:[#allocation2 + $0x970] sm:$0xff] 0.0
    %439 = vst [vmem:[#allocation2 + $0x978] sm:$0xff] 0.0
    %440 = vst [vmem:[#allocation2 + $0x980] sm:$0xff] 0.0
    %441 = vst [vmem:[#allocation2 + $0x988] sm:$0xff] 0.0
    %442 = vst [vmem:[#allocation2 + $0x990] sm:$0xff] 0.0
    %443 = vst [vmem:[#allocation2 + $0x998] sm:$0xff] 0.0
    %444 = vst [vmem:[#allocation2 + $0x9a0] sm:$0xff] 0.0
    %445 = vst [vmem:[#allocation2 + $0x9a8] sm:$0xff] 0.0
    %446 = vst [vmem:[#allocation2 + $0x9b0] sm:$0xff] 0.0
    %447 = vst [vmem:[#allocation2 + $0x9b8] sm:$0xff] 0.0
    %448 = vst [vmem:[#allocation2 + $0x9c0] sm:$0xff] 0.0
    %449 = vst [vmem:[#allocation2 + $0x9c8] sm:$0xff] 0.0
    %450 = vst [vmem:[#allocation2 + $0x9d0] sm:$0xff] 0.0
    %451 = vst [vmem:[#allocation2 + $0x9d8] sm:$0xff] 0.0
    %452 = vst [vmem:[#allocation2 + $0x9e0] sm:$0xff] 0.0
    %453 = vst [vmem:[#allocation2 + $0x9e8] sm:$0xff] 0.0
    %454 = vst [vmem:[#allocation2 + $0x9f0] sm:$0xff] 0.0
    %455 = vst [vmem:[#allocation2 + $0x9f8] sm:$0xff] 0.0
    %456 = vst [vmem:[#allocation2 + $0xa00] sm:$0xff] 0.0
    %457 = vst [vmem:[#allocation2 + $0xa08] sm:$0xff] 0.0
    %458 = vst [vmem:[#allocation2 + $0xa10] sm:$0xff] 0.0
    %459 = vst [vmem:[#allocation2 + $0xa18] sm:$0xff] 0.0
    %460 = vst [vmem:[#allocation2 + $0xa20] sm:$0xff] 0.0
    %461 = vst [vmem:[#allocation2 + $0xa28] sm:$0xff] 0.0
    %462 = vst [vmem:[#allocation2 + $0xa30] sm:$0xff] 0.0
    %463 = vst [vmem:[#allocation2 + $0xa38] sm:$0xff] 0.0
    %464 = vst [vmem:[#allocation2 + $0xa40] sm:$0xff] 0.0
    %465 = vst [vmem:[#allocation2 + $0xa48] sm:$0xff] 0.0
    %466 = vst [vmem:[#allocation2 + $0xa50] sm:$0xff] 0.0
    %467 = vst [vmem:[#allocation2 + $0xa58] sm:$0xff] 0.0
    %468 = vst [vmem:[#allocation2 + $0xa60] sm:$0xff] 0.0
    %469 = vst [vmem:[#allocation2 + $0xa68] sm:$0xff] 0.0
    %470 = vst [vmem:[#allocation2 + $0xa70] sm:$0xff] 0.0
    %471 = vst [vmem:[#allocation2 + $0xa78] sm:$0xff] 0.0
    %472 = vst [vmem:[#allocation2 + $0xa80] sm:$0xff] 0.0
    %473 = vst [vmem:[#allocation2 + $0xa88] sm:$0xff] 0.0
    %474 = vst [vmem:[#allocation2 + $0xa90] sm:$0xff] 0.0
    %475 = vst [vmem:[#allocation2 + $0xa98] sm:$0xff] 0.0
    %476 = vst [vmem:[#allocation2 + $0xaa0] sm:$0xff] 0.0
    %477 = vst [vmem:[#allocation2 + $0xaa8] sm:$0xff] 0.0
    %478 = vst [vmem:[#allocation2 + $0xab0] sm:$0xff] 0.0
    %479 = vst [vmem:[#allocation2 + $0xab8] sm:$0xff] 0.0
    %480 = vst [vmem:[#allocation2 + $0xac0] sm:$0xff] 0.0
    %481 = vst [vmem:[#allocation2 + $0xac8] sm:$0xff] 0.0
    %482 = vst [vmem:[#allocation2 + $0xad0] sm:$0xff] 0.0
    %483 = vst [vmem:[#allocation2 + $0xad8] sm:$0xff] 0.0
    %484 = vst [vmem:[#allocation2 + $0xae0] sm:$0xff] 0.0
    %485 = vst [vmem:[#allocation2 + $0xae8] sm:$0xff] 0.0
    %486 = vst [vmem:[#allocation2 + $0xaf0] sm:$0xff] 0.0
    %487 = vst [vmem:[#allocation2 + $0xaf8] sm:$0xff] 0.0
    %488 = vst [vmem:[#allocation2 + $0xb00] sm:$0xff] 0.0
    %489 = vst [vmem:[#allocation2 + $0xb08] sm:$0xff] 0.0
    %490 = vst [vmem:[#allocation2 + $0xb10] sm:$0xff] 0.0
    %491 = vst [vmem:[#allocation2 + $0xb18] sm:$0xff] 0.0
    %492 = vst [vmem:[#allocation2 + $0xb20] sm:$0xff] 0.0
    %493 = vst [vmem:[#allocation2 + $0xb28] sm:$0xff] 0.0
    %494 = vst [vmem:[#allocation2 + $0xb30] sm:$0xff] 0.0
    %495 = vst [vmem:[#allocation2 + $0xb38] sm:$0xff] 0.0
    %496 = vst [vmem:[#allocation2 + $0xb40] sm:$0xff] 0.0
    %497 = vst [vmem:[#allocation2 + $0xb48] sm:$0xff] 0.0
    %498 = vst [vmem:[#allocation2 + $0xb50] sm:$0xff] 0.0
    %499 = vst [vmem:[#allocation2 + $0xb58] sm:$0xff] 0.0
    %500 = vst [vmem:[#allocation2 + $0xb60] sm:$0xff] 0.0
    %501 = vst [vmem:[#allocation2 + $0xb68] sm:$0xff] 0.0
    %502 = vst [vmem:[#allocation2 + $0xb70] sm:$0xff] 0.0
    %503 = vst [vmem:[#allocation2 + $0xb78] sm:$0xff] 0.0
    %504 = vst [vmem:[#allocation2 + $0xb80] sm:$0xff] 0.0
    %505 = vst [vmem:[#allocation2 + $0xb88] sm:$0xff] 0.0
    %506 = vst [vmem:[#allocation2 + $0xb90] sm:$0xff] 0.0
    %507 = vst [vmem:[#allocation2 + $0xb98] sm:$0xff] 0.0
    %508 = vst [vmem:[#allocation2 + $0xba0] sm:$0xff] 0.0
    %509 = vst [vmem:[#allocation2 + $0xba8] sm:$0xff] 0.0
    %510 = vst [vmem:[#allocation2 + $0xbb0] sm:$0xff] 0.0
    %511 = vst [vmem:[#allocation2 + $0xbb8] sm:$0xff] 0.0
    %512 = vst [vmem:[#allocation2 + $0xbc0] sm:$0xff] 0.0
    %513 = vst [vmem:[#allocation2 + $0xbc8] sm:$0xff] 0.0
    %514 = vst [vmem:[#allocation2 + $0xbd0] sm:$0xff] 0.0
    %515 = vst [vmem:[#allocation2 + $0xbd8] sm:$0xff] 0.0
    %516 = vst [vmem:[#allocation2 + $0xbe0] sm:$0xff] 0.0
    %517 = vst [vmem:[#allocation2 + $0xbe8] sm:$0xff] 0.0
    %518 = vst [vmem:[#allocation2 + $0xbf0] sm:$0xff] 0.0
    %519 = vst [vmem:[#allocation2 + $0xbf8] sm:$0xff] 0.0
    %v520 = vld [vmem:[#allocation8 + $0x180] sm:$0xff]
    %v521 = vld [vmem:[#allocation8 + $0x188] sm:$0xff]
    %v522 = vld [vmem:[#allocation8 + $0x190] sm:$0xff]
    %v523 = vld [vmem:[#allocation8 + $0x198] sm:$0xff]
    %v524 = vld [vmem:[#allocation8 + $0x1a0] sm:$0xff]
    %v525 = vld [vmem:[#allocation8 + $0x1a8] sm:$0xff]
    %v526 = vld [vmem:[#allocation8 + $0x1b0] sm:$0xff]
    %v527 = vld [vmem:[#allocation8 + $0x1b8] sm:$0xff]
    %v528 = vld [vmem:[#allocation8 + $0x1c0] sm:$0xff]
    %v529 = vld [vmem:[#allocation8 + $0x1c8] sm:$0xff]
    %v530 = vld [vmem:[#allocation8 + $0x1d0] sm:$0xff]
    %v531 = vld [vmem:[#allocation8 + $0x1d8] sm:$0xff]
    %v532 = vld [vmem:[#allocation8 + $0x1e0] sm:$0xff]
    %v533 = vld [vmem:[#allocation8 + $0x1e8] sm:$0xff]
    %v534 = vld [vmem:[#allocation8 + $0x1f0] sm:$0xff]
    %v535 = vld [vmem:[#allocation8 + $0x1f8] sm:$0xff]
    %v536 = vld [vmem:[#allocation8 + $0x200] sm:$0xff]
    %v537 = vld [vmem:[#allocation8 + $0x208] sm:$0xff]
    %v538 = vld [vmem:[#allocation8 + $0x210] sm:$0xff]
    %v539 = vld [vmem:[#allocation8 + $0x218] sm:$0xff]
    %v540 = vld [vmem:[#allocation8 + $0x220] sm:$0xff]
    %v541 = vld [vmem:[#allocation8 + $0x228] sm:$0xff]
    %v542 = vld [vmem:[#allocation8 + $0x230] sm:$0xff]
    %v543 = vld [vmem:[#allocation8 + $0x238] sm:$0xff]
    %544 = vst [vmem:[#allocation2 + $0xc00] sm:$0xff] %v520
    %545 = vst [vmem:[#allocation2 + $0xc08] sm:$0xff] %v521
    %546 = vst [vmem:[#allocation2 + $0xc10] sm:$0xff] %v522
    %547 = vst [vmem:[#allocation2 + $0xc18] sm:$0xff] %v523
    %548 = vst [vmem:[#allocation2 + $0xc20] sm:$0xff] %v524
    %549 = vst [vmem:[#allocation2 + $0xc28] sm:$0xff] %v525
    %550 = vst [vmem:[#allocation2 + $0xc30] sm:$0xff] %v526
    %551 = vst [vmem:[#allocation2 + $0xc38] sm:$0xff] %v527
    %552 = vst [vmem:[#allocation2 + $0xc40] sm:$0xff] %v528
    %553 = vst [vmem:[#allocation2 + $0xc48] sm:$0xff] %v529
    %554 = vst [vmem:[#allocation2 + $0xc50] sm:$0xff] %v530
    %555 = vst [vmem:[#allocation2 + $0xc58] sm:$0xff] %v531
    %556 = vst [vmem:[#allocation2 + $0xc60] sm:$0xff] %v532
    %557 = vst [vmem:[#allocation2 + $0xc68] sm:$0xff] %v533
    %558 = vst [vmem:[#allocation2 + $0xc70] sm:$0xff] %v534
    %559 = vst [vmem:[#allocation2 + $0xc78] sm:$0xff] %v535
    %560 = vst [vmem:[#allocation2 + $0xc80] sm:$0xff] %v536
    %561 = vst [vmem:[#allocation2 + $0xc88] sm:$0xff] %v537
    %562 = vst [vmem:[#allocation2 + $0xc90] sm:$0xff] %v538
    %563 = vst [vmem:[#allocation2 + $0xc98] sm:$0xff] %v539
    %564 = vst [vmem:[#allocation2 + $0xca0] sm:$0xff] %v540
    %565 = vst [vmem:[#allocation2 + $0xca8] sm:$0xff] %v541
    %566 = vst [vmem:[#allocation2 + $0xcb0] sm:$0xff] %v542
    %567 = vst [vmem:[#allocation2 + $0xcb8] sm:$0xff] %v543
    %568 = vst [vmem:[#allocation2 + $0xcc0] sm:$0xff] 0.0
    %569 = vst [vmem:[#allocation2 + $0xcc8] sm:$0xff] 0.0
    %570 = vst [vmem:[#allocation2 + $0xcd0] sm:$0xff] 0.0
    %571 = vst [vmem:[#allocation2 + $0xcd8] sm:$0xff] 0.0
    %572 = vst [vmem:[#allocation2 + $0xce0] sm:$0xff] 0.0
    %573 = vst [vmem:[#allocation2 + $0xce8] sm:$0xff] 0.0
    %574 = vst [vmem:[#allocation2 + $0xcf0] sm:$0xff] 0.0
    %575 = vst [vmem:[#allocation2 + $0xcf8] sm:$0xff] 0.0
    %576 = vst [vmem:[#allocation2 + $0xd00] sm:$0xff] 0.0
    %577 = vst [vmem:[#allocation2 + $0xd08] sm:$0xff] 0.0
    %578 = vst [vmem:[#allocation2 + $0xd10] sm:$0xff] 0.0
    %579 = vst [vmem:[#allocation2 + $0xd18] sm:$0xff] 0.0
    %580 = vst [vmem:[#allocation2 + $0xd20] sm:$0xff] 0.0
    %581 = vst [vmem:[#allocation2 + $0xd28] sm:$0xff] 0.0
    %582 = vst [vmem:[#allocation2 + $0xd30] sm:$0xff] 0.0
    %583 = vst [vmem:[#allocation2 + $0xd38] sm:$0xff] 0.0
    %584 = vst [vmem:[#allocation2 + $0xd40] sm:$0xff] 0.0
    %585 = vst [vmem:[#allocation2 + $0xd48] sm:$0xff] 0.0
    %586 = vst [vmem:[#allocation2 + $0xd50] sm:$0xff] 0.0
    %587 = vst [vmem:[#allocation2 + $0xd58] sm:$0xff] 0.0
    %588 = vst [vmem:[#allocation2 + $0xd60] sm:$0xff] 0.0
    %589 = vst [vmem:[#allocation2 + $0xd68] sm:$0xff] 0.0
    %590 = vst [vmem:[#allocation2 + $0xd70] sm:$0xff] 0.0
    %591 = vst [vmem:[#allocation2 + $0xd78] sm:$0xff] 0.0
    %592 = vst [vmem:[#allocation2 + $0xd80] sm:$0xff] 0.0
    %593 = vst [vmem:[#allocation2 + $0xd88] sm:$0xff] 0.0
    %594 = vst [vmem:[#allocation2 + $0xd90] sm:$0xff] 0.0
    %595 = vst [vmem:[#allocation2 + $0xd98] sm:$0xff] 0.0
    %596 = vst [vmem:[#allocation2 + $0xda0] sm:$0xff] 0.0
    %597 = vst [vmem:[#allocation2 + $0xda8] sm:$0xff] 0.0
    %598 = vst [vmem:[#allocation2 + $0xdb0] sm:$0xff] 0.0
    %599 = vst [vmem:[#allocation2 + $0xdb8] sm:$0xff] 0.0
    %600 = vst [vmem:[#allocation2 + $0xdc0] sm:$0xff] 0.0
    %601 = vst [vmem:[#allocation2 + $0xdc8] sm:$0xff] 0.0
    %602 = vst [vmem:[#allocation2 + $0xdd0] sm:$0xff] 0.0
    %603 = vst [vmem:[#allocation2 + $0xdd8] sm:$0xff] 0.0
    %604 = vst [vmem:[#allocation2 + $0xde0] sm:$0xff] 0.0
    %605 = vst [vmem:[#allocation2 + $0xde8] sm:$0xff] 0.0
    %606 = vst [vmem:[#allocation2 + $0xdf0] sm:$0xff] 0.0
    %607 = vst [vmem:[#allocation2 + $0xdf8] sm:$0xff] 0.0
    %608 = vst [vmem:[#allocation2 + $0xe00] sm:$0xff] 0.0
    %609 = vst [vmem:[#allocation2 + $0xe08] sm:$0xff] 0.0
    %610 = vst [vmem:[#allocation2 + $0xe10] sm:$0xff] 0.0
    %611 = vst [vmem:[#allocation2 + $0xe18] sm:$0xff] 0.0
    %612 = vst [vmem:[#allocation2 + $0xe20] sm:$0xff] 0.0
    %613 = vst [vmem:[#allocation2 + $0xe28] sm:$0xff] 0.0
    %614 = vst [vmem:[#allocation2 + $0xe30] sm:$0xff] 0.0
    %615 = vst [vmem:[#allocation2 + $0xe38] sm:$0xff] 0.0
    %616 = vst [vmem:[#allocation2 + $0xe40] sm:$0xff] 0.0
    %617 = vst [vmem:[#allocation2 + $0xe48] sm:$0xff] 0.0
    %618 = vst [vmem:[#allocation2 + $0xe50] sm:$0xff] 0.0
    %619 = vst [vmem:[#allocation2 + $0xe58] sm:$0xff] 0.0
    %620 = vst [vmem:[#allocation2 + $0xe60] sm:$0xff] 0.0
    %621 = vst [vmem:[#allocation2 + $0xe68] sm:$0xff] 0.0
    %622 = vst [vmem:[#allocation2 + $0xe70] sm:$0xff] 0.0
    %623 = vst [vmem:[#allocation2 + $0xe78] sm:$0xff] 0.0
    %624 = vst [vmem:[#allocation2 + $0xe80] sm:$0xff] 0.0
    %625 = vst [vmem:[#allocation2 + $0xe88] sm:$0xff] 0.0
    %626 = vst [vmem:[#allocation2 + $0xe90] sm:$0xff] 0.0
    %627 = vst [vmem:[#allocation2 + $0xe98] sm:$0xff] 0.0
    %628 = vst [vmem:[#allocation2 + $0xea0] sm:$0xff] 0.0
    %629 = vst [vmem:[#allocation2 + $0xea8] sm:$0xff] 0.0
    %630 = vst [vmem:[#allocation2 + $0xeb0] sm:$0xff] 0.0
    %631 = vst [vmem:[#allocation2 + $0xeb8] sm:$0xff] 0.0
    %632 = vst [vmem:[#allocation2 + $0xec0] sm:$0xff] 0.0
    %633 = vst [vmem:[#allocation2 + $0xec8] sm:$0xff] 0.0
    %634 = vst [vmem:[#allocation2 + $0xed0] sm:$0xff] 0.0
    %635 = vst [vmem:[#allocation2 + $0xed8] sm:$0xff] 0.0
    %636 = vst [vmem:[#allocation2 + $0xee0] sm:$0xff] 0.0
    %637 = vst [vmem:[#allocation2 + $0xee8] sm:$0xff] 0.0
    %638 = vst [vmem:[#allocation2 + $0xef0] sm:$0xff] 0.0
    %639 = vst [vmem:[#allocation2 + $0xef8] sm:$0xff] 0.0
    %640 = vst [vmem:[#allocation2 + $0xf00] sm:$0xff] 0.0
    %641 = vst [vmem:[#allocation2 + $0xf08] sm:$0xff] 0.0
    %642 = vst [vmem:[#allocation2 + $0xf10] sm:$0xff] 0.0
    %643 = vst [vmem:[#allocation2 + $0xf18] sm:$0xff] 0.0
    %644 = vst [vmem:[#allocation2 + $0xf20] sm:$0xff] 0.0
    %645 = vst [vmem:[#allocation2 + $0xf28] sm:$0xff] 0.0
    %646 = vst [vmem:[#allocation2 + $0xf30] sm:$0xff] 0.0
    %647 = vst [vmem:[#allocation2 + $0xf38] sm:$0xff] 0.0
    %648 = vst [vmem:[#allocation2 + $0xf40] sm:$0xff] 0.0
    %649 = vst [vmem:[#allocation2 + $0xf48] sm:$0xff] 0.0
    %650 = vst [vmem:[#allocation2 + $0xf50] sm:$0xff] 0.0
    %651 = vst [vmem:[#allocation2 + $0xf58] sm:$0xff] 0.0
    %652 = vst [vmem:[#allocation2 + $0xf60] sm:$0xff] 0.0
    %653 = vst [vmem:[#allocation2 + $0xf68] sm:$0xff] 0.0
    %654 = vst [vmem:[#allocation2 + $0xf70] sm:$0xff] 0.0
    %655 = vst [vmem:[#allocation2 + $0xf78] sm:$0xff] 0.0
    %656 = vst [vmem:[#allocation2 + $0xf80] sm:$0xff] 0.0
    %657 = vst [vmem:[#allocation2 + $0xf88] sm:$0xff] 0.0
    %658 = vst [vmem:[#allocation2 + $0xf90] sm:$0xff] 0.0
    %659 = vst [vmem:[#allocation2 + $0xf98] sm:$0xff] 0.0
    %660 = vst [vmem:[#allocation2 + $0xfa0] sm:$0xff] 0.0
    %661 = vst [vmem:[#allocation2 + $0xfa8] sm:$0xff] 0.0
    %662 = vst [vmem:[#allocation2 + $0xfb0] sm:$0xff] 0.0
    %663 = vst [vmem:[#allocation2 + $0xfb8] sm:$0xff] 0.0
    %664 = vst [vmem:[#allocation2 + $0xfc0] sm:$0xff] 0.0
    %665 = vst [vmem:[#allocation2 + $0xfc8] sm:$0xff] 0.0
    %666 = vst [vmem:[#allocation2 + $0xfd0] sm:$0xff] 0.0
    %667 = vst [vmem:[#allocation2 + $0xfd8] sm:$0xff] 0.0
    %668 = vst [vmem:[#allocation2 + $0xfe0] sm:$0xff] 0.0
    %669 = vst [vmem:[#allocation2 + $0xfe8] sm:$0xff] 0.0
    %670 = vst [vmem:[#allocation2 + $0xff0] sm:$0xff] 0.0
    %671 = vst [vmem:[#allocation2 + $0xff8] sm:$0xff] 0.0
    %672 = vst [vmem:[#allocation2 + $0x1000] sm:$0xff] 0.0
    %673 = vst [vmem:[#allocation2 + $0x1008] sm:$0xff] 0.0
    %674 = vst [vmem:[#allocation2 + $0x1010] sm:$0xff] 0.0
    %675 = vst [vmem:[#allocation2 + $0x1018] sm:$0xff] 0.0
    %676 = vst [vmem:[#allocation2 + $0x1020] sm:$0xff] 0.0
    %677 = vst [vmem:[#allocation2 + $0x1028] sm:$0xff] 0.0
    %678 = vst [vmem:[#allocation2 + $0x1030] sm:$0xff] 0.0
    %679 = vst [vmem:[#allocation2 + $0x1038] sm:$0xff] 0.0
    %680 = vst [vmem:[#allocation2 + $0x1040] sm:$0xff] 0.0
    %681 = vst [vmem:[#allocation2 + $0x1048] sm:$0xff] 0.0
    %682 = vst [vmem:[#allocation2 + $0x1050] sm:$0xff] 0.0
    %683 = vst [vmem:[#allocation2 + $0x1058] sm:$0xff] 0.0
    %684 = vst [vmem:[#allocation2 + $0x1060] sm:$0xff] 0.0
    %685 = vst [vmem:[#allocation2 + $0x1068] sm:$0xff] 0.0
    %686 = vst [vmem:[#allocation2 + $0x1070] sm:$0xff] 0.0
    %687 = vst [vmem:[#allocation2 + $0x1078] sm:$0xff] 0.0
    %688 = vst [vmem:[#allocation2 + $0x1080] sm:$0xff] 0.0
    %689 = vst [vmem:[#allocation2 + $0x1088] sm:$0xff] 0.0
    %690 = vst [vmem:[#allocation2 + $0x1090] sm:$0xff] 0.0
    %691 = vst [vmem:[#allocation2 + $0x1098] sm:$0xff] 0.0
    %692 = vst [vmem:[#allocation2 + $0x10a0] sm:$0xff] 0.0
    %693 = vst [vmem:[#allocation2 + $0x10a8] sm:$0xff] 0.0
    %694 = vst [vmem:[#allocation2 + $0x10b0] sm:$0xff] 0.0
    %695 = vst [vmem:[#allocation2 + $0x10b8] sm:$0xff] 0.0
    %696 = vst [vmem:[#allocation2 + $0x10c0] sm:$0xff] 0.0
    %697 = vst [vmem:[#allocation2 + $0x10c8] sm:$0xff] 0.0
    %698 = vst [vmem:[#allocation2 + $0x10d0] sm:$0xff] 0.0
    %699 = vst [vmem:[#allocation2 + $0x10d8] sm:$0xff] 0.0
    %700 = vst [vmem:[#allocation2 + $0x10e0] sm:$0xff] 0.0
    %701 = vst [vmem:[#allocation2 + $0x10e8] sm:$0xff] 0.0
    %702 = vst [vmem:[#allocation2 + $0x10f0] sm:$0xff] 0.0
    %703 = vst [vmem:[#allocation2 + $0x10f8] sm:$0xff] 0.0
    %704 = vst [vmem:[#allocation2 + $0x1100] sm:$0xff] 0.0
    %705 = vst [vmem:[#allocation2 + $0x1108] sm:$0xff] 0.0
    %706 = vst [vmem:[#allocation2 + $0x1110] sm:$0xff] 0.0
    %707 = vst [vmem:[#allocation2 + $0x1118] sm:$0xff] 0.0
    %708 = vst [vmem:[#allocation2 + $0x1120] sm:$0xff] 0.0
    %709 = vst [vmem:[#allocation2 + $0x1128] sm:$0xff] 0.0
    %710 = vst [vmem:[#allocation2 + $0x1130] sm:$0xff] 0.0
    %711 = vst [vmem:[#allocation2 + $0x1138] sm:$0xff] 0.0
    %712 = vst [vmem:[#allocation2 + $0x1140] sm:$0xff] 0.0
    %713 = vst [vmem:[#allocation2 + $0x1148] sm:$0xff] 0.0
    %714 = vst [vmem:[#allocation2 + $0x1150] sm:$0xff] 0.0
    %715 = vst [vmem:[#allocation2 + $0x1158] sm:$0xff] 0.0
    %716 = vst [vmem:[#allocation2 + $0x1160] sm:$0xff] 0.0
    %717 = vst [vmem:[#allocation2 + $0x1168] sm:$0xff] 0.0
    %718 = vst [vmem:[#allocation2 + $0x1170] sm:$0xff] 0.0
    %719 = vst [vmem:[#allocation2 + $0x1178] sm:$0xff] 0.0
    %720 = vst [vmem:[#allocation2 + $0x1180] sm:$0xff] 0.0
    %721 = vst [vmem:[#allocation2 + $0x1188] sm:$0xff] 0.0
    %722 = vst [vmem:[#allocation2 + $0x1190] sm:$0xff] 0.0
    %723 = vst [vmem:[#allocation2 + $0x1198] sm:$0xff] 0.0
    %724 = vst [vmem:[#allocation2 + $0x11a0] sm:$0xff] 0.0
    %725 = vst [vmem:[#allocation2 + $0x11a8] sm:$0xff] 0.0
    %726 = vst [vmem:[#allocation2 + $0x11b0] sm:$0xff] 0.0
    %727 = vst [vmem:[#allocation2 + $0x11b8] sm:$0xff] 0.0
    %728 = vst [vmem:[#allocation2 + $0x11c0] sm:$0xff] 0.0
    %729 = vst [vmem:[#allocation2 + $0x11c8] sm:$0xff] 0.0
    %730 = vst [vmem:[#allocation2 + $0x11d0] sm:$0xff] 0.0
    %731 = vst [vmem:[#allocation2 + $0x11d8] sm:$0xff] 0.0
    %732 = vst [vmem:[#allocation2 + $0x11e0] sm:$0xff] 0.0
    %733 = vst [vmem:[#allocation2 + $0x11e8] sm:$0xff] 0.0
    %734 = vst [vmem:[#allocation2 + $0x11f0] sm:$0xff] 0.0
    %735 = vst [vmem:[#allocation2 + $0x11f8] sm:$0xff] 0.0
    %v736 = vld [vmem:[%s0] sm:$0xff]
    %v737 = vld [vmem:[#allocation5] ss:$2 sm:$0xff]
    %s738 = scalar_lea.vmem [#allocation5], 16
    %v739 = vld [vmem:[%s738] ss:$2 sm:$0xf]
    %741 = vset.pattern.permute.xlu0 0
    %742 = vperm.xlu0 %741, %v736
    %v743 = vpop.permute.xlu0 %742
    %v747 = vperm.slane %v737, 0
    %v748 = vperm.slane %v737, 1
    %v749 = vperm.slane %v737, 2
    %v750 = vperm.slane %v737, 3
    %v751 = vperm.slane %v737, 4
    %v752 = vperm.slane %v737, 5
    %v753 = vperm.slane %v737, 6
    %v754 = vperm.slane %v737, 7
    %v755 = vperm.slane %v739, 0
    %v756 = vperm.slane %v739, 1
    %v757 = vperm.slane %v739, 2
    %v758 = vperm.slane %v739, 3
    %v771 = vmul.f32 %v743, %v747
    %v772 = vmul.f32 %v743, %v748
    %v773 = vmul.f32 %v743, %v749
    %v774 = vmul.f32 %v743, %v750
    %v775 = vmul.f32 %v743, %v751
    %v776 = vmul.f32 %v743, %v752
    %v777 = vmul.f32 %v743, %v753
    %v778 = vmul.f32 %v743, %v754
    %v779 = vmul.f32 %v743, %v755
    %v780 = vmul.f32 %v743, %v756
    %v781 = vmul.f32 %v743, %v757
    %v782 = vmul.f32 %v743, %v758
    %s783 = scalar_lea.vmem [#allocation5], 1
    %v784 = vld [vmem:[%s783] ss:$2 sm:$0xff]
    %s785 = scalar_lea.vmem [#allocation5], 17
    %v786 = vld [vmem:[%s785] ss:$2 sm:$0xf]
    %787 = vset.pattern.permute.xlu0 1
    %788 = vperm.xlu0 %787, %v736
    %v789 = vpop.permute.xlu0 %788
    %v793 = vperm.slane %v784, 0
    %v794 = vperm.slane %v784, 1
    %v795 = vperm.slane %v784, 2
    %v796 = vperm.slane %v784, 3
    %v797 = vperm.slane %v784, 4
    %v798 = vperm.slane %v784, 5
    %v799 = vperm.slane %v784, 6
    %v800 = vperm.slane %v784, 7
    %v801 = vperm.slane %v786, 0
    %v802 = vperm.slane %v786, 1
    %v803 = vperm.slane %v786, 2
    %v804 = vperm.slane %v786, 3
    %v817 = vmul.f32 %v789, %v793
    %v818 = vmul.f32 %v789, %v794
    %v819 = vmul.f32 %v789, %v795
    %v820 = vmul.f32 %v789, %v796
    %v821 = vmul.f32 %v789, %v797
    %v822 = vmul.f32 %v789, %v798
    %v823 = vmul.f32 %v789, %v799
    %v824 = vmul.f32 %v789, %v800
    %v825 = vmul.f32 %v789, %v801
    %v826 = vmul.f32 %v789, %v802
    %v827 = vmul.f32 %v789, %v803
    %v828 = vmul.f32 %v789, %v804
    %v829 = vadd.f32 %v771, %v817
    %v830 = vadd.f32 %v772, %v818
    %v831 = vadd.f32 %v773, %v819
    %v832 = vadd.f32 %v774, %v820
    %v833 = vadd.f32 %v775, %v821
    %v834 = vadd.f32 %v776, %v822
    %v835 = vadd.f32 %v777, %v823
    %v836 = vadd.f32 %v778, %v824
    %v837 = vadd.f32 %v779, %v825
    %v838 = vadd.f32 %v780, %v826
    %v839 = vadd.f32 %v781, %v827
    %v840 = vadd.f32 %v782, %v828
    %v841 = vld [vmem:[%s3] sm:$0xff]
    %v842 = vld [vmem:[%s3 + $0x8] sm:$0xf]
    %v845 = vperm.slane %v841, 0
    %v846 = vperm.slane %v841, 1
    %v847 = vperm.slane %v841, 2
    %v848 = vperm.slane %v841, 3
    %v849 = vperm.slane %v841, 4
    %v850 = vperm.slane %v841, 5
    %v851 = vperm.slane %v841, 6
    %v852 = vperm.slane %v841, 7
    %v853 = vperm.slane %v842, 0
    %v854 = vperm.slane %v842, 1
    %v855 = vperm.slane %v842, 2
    %v856 = vperm.slane %v842, 3
    %v869 = vadd.f32 %v829, %v845
    %v870 = vadd.f32 %v830, %v846
    %v871 = vadd.f32 %v831, %v847
    %v872 = vadd.f32 %v832, %v848
    %v873 = vadd.f32 %v833, %v849
    %v874 = vadd.f32 %v834, %v850
    %v875 = vadd.f32 %v835, %v851
    %v876 = vadd.f32 %v836, %v852
    %v877 = vadd.f32 %v837, %v853
    %v878 = vadd.f32 %v838, %v854
    %v879 = vadd.f32 %v839, %v855
    %v880 = vadd.f32 %v840, %v856
    %881 = vst [vmem:[#allocation3] sm:$0xff] %v869
    %882 = vst [vmem:[#allocation3 + $0x8] sm:$0xff] %v870
    %883 = vst [vmem:[#allocation3 + $0x10] sm:$0xff] %v871
    %884 = vst [vmem:[#allocation3 + $0x18] sm:$0xff] %v872
    %885 = vst [vmem:[#allocation3 + $0x20] sm:$0xff] %v873
    %886 = vst [vmem:[#allocation3 + $0x28] sm:$0xff] %v874
    %887 = vst [vmem:[#allocation3 + $0x30] sm:$0xff] %v875
    %888 = vst [vmem:[#allocation3 + $0x38] sm:$0xff] %v876
    %889 = vst [vmem:[#allocation3 + $0x40] sm:$0xff] %v877
    %890 = vst [vmem:[#allocation3 + $0x48] sm:$0xff] %v878
    %891 = vst [vmem:[#allocation3 + $0x50] sm:$0xff] %v879
    %892 = vst [vmem:[#allocation3 + $0x58] sm:$0xff] %v880
    %v893 = vld [vmem:[#allocation2] sm:$0xff]
    %v894 = vld [vmem:[#allocation2 + $0x8] sm:$0xff]
    %v895 = vld [vmem:[#allocation2 + $0x10] sm:$0xff]
    %v896 = vld [vmem:[#allocation2 + $0x18] sm:$0xff]
    %v897 = vld [vmem:[#allocation2 + $0x20] sm:$0xff]
    %v898 = vld [vmem:[#allocation2 + $0x28] sm:$0xff]
    %v899 = vld [vmem:[#allocation2 + $0x30] sm:$0xff]
    %v900 = vld [vmem:[#allocation2 + $0x38] sm:$0xff]
    %v901 = vld [vmem:[#allocation2 + $0x40] sm:$0xff]
    %v902 = vld [vmem:[#allocation2 + $0x48] sm:$0xff]
    %v903 = vld [vmem:[#allocation2 + $0x50] sm:$0xff]
    %v904 = vld [vmem:[#allocation2 + $0x58] sm:$0xff]
    %v905 = vld [vmem:[#allocation2 + $0x60] sm:$0xff]
    %v906 = vld [vmem:[#allocation2 + $0x68] sm:$0xff]
    %v907 = vld [vmem:[#allocation2 + $0x70] sm:$0xff]
    %v908 = vld [vmem:[#allocation2 + $0x78] sm:$0xff]
    %v909 = vld [vmem:[#allocation2 + $0x80] sm:$0xff]
    %v910 = vld [vmem:[#allocation2 + $0x88] sm:$0xff]
    %v911 = vld [vmem:[#allocation2 + $0x90] sm:$0xff]
    %v912 = vld [vmem:[#allocation2 + $0x98] sm:$0xff]
    %v913 = vld [vmem:[#allocation2 + $0xa0] sm:$0xff]
    %v914 = vld [vmem:[#allocation2 + $0xa8] sm:$0xff]
    %v915 = vld [vmem:[#allocation2 + $0xb0] sm:$0xff]
    %v916 = vld [vmem:[#allocation2 + $0xb8] sm:$0xff]
    %v917 = vld [vmem:[#allocation2 + $0xc0] sm:$0xff]
    %v918 = vld [vmem:[#allocation2 + $0xc8] sm:$0xff]
    %v919 = vld [vmem:[#allocation2 + $0xd0] sm:$0xff]
    %v920 = vld [vmem:[#allocation2 + $0xd8] sm:$0xff]
    %v921 = vld [vmem:[#allocation2 + $0xe0] sm:$0xff]
    %v922 = vld [vmem:[#allocation2 + $0xe8] sm:$0xff]
    %v923 = vld [vmem:[#allocation2 + $0xf0] sm:$0xff]
    %v924 = vld [vmem:[#allocation2 + $0xf8] sm:$0xff]
    %v925 = vld [vmem:[#allocation2 + $0x100] sm:$0xff]
    %v926 = vld [vmem:[#allocation2 + $0x108] sm:$0xff]
    %v927 = vld [vmem:[#allocation2 + $0x110] sm:$0xff]
    %v928 = vld [vmem:[#allocation2 + $0x118] sm:$0xff]
    %v929 = vld [vmem:[#allocation2 + $0x120] sm:$0xff]
    %v930 = vld [vmem:[#allocation2 + $0x128] sm:$0xff]
    %v931 = vld [vmem:[#allocation2 + $0x130] sm:$0xff]
    %v932 = vld [vmem:[#allocation2 + $0x138] sm:$0xff]
    %v933 = vld [vmem:[#allocation2 + $0x140] sm:$0xff]
    %v934 = vld [vmem:[#allocation2 + $0x148] sm:$0xff]
    %v935 = vld [vmem:[#allocation2 + $0x150] sm:$0xff]
    %v936 = vld [vmem:[#allocation2 + $0x158] sm:$0xff]
    %v937 = vld [vmem:[#allocation2 + $0x160] sm:$0xff]
    %v938 = vld [vmem:[#allocation2 + $0x168] sm:$0xff]
    %v939 = vld [vmem:[#allocation2 + $0x170] sm:$0xff]
    %v940 = vld [vmem:[#allocation2 + $0x178] sm:$0xff]
    %v941 = vld [vmem:[#allocation2 + $0x180] sm:$0xff]
    %v942 = vld [vmem:[#allocation2 + $0x188] sm:$0xff]
    %v943 = vld [vmem:[#allocation2 + $0x190] sm:$0xff]
    %v944 = vld [vmem:[#allocation2 + $0x198] sm:$0xff]
    %v945 = vld [vmem:[#allocation2 + $0x1a0] sm:$0xff]
    %v946 = vld [vmem:[#allocation2 + $0x1a8] sm:$0xff]
    %v947 = vld [vmem:[#allocation2 + $0x1b0] sm:$0xff]
    %v948 = vld [vmem:[#allocation2 + $0x1b8] sm:$0xff]
    %v949 = vld [vmem:[#allocation2 + $0x1c0] sm:$0xff]
    %v950 = vld [vmem:[#allocation2 + $0x1c8] sm:$0xff]
    %v951 = vld [vmem:[#allocation2 + $0x1d0] sm:$0xff]
    %v952 = vld [vmem:[#allocation2 + $0x1d8] sm:$0xff]
    %v953 = vld [vmem:[#allocation2 + $0x1e0] sm:$0xff]
    %v954 = vld [vmem:[#allocation2 + $0x1e8] sm:$0xff]
    %v955 = vld [vmem:[#allocation2 + $0x1f0] sm:$0xff]
    %v956 = vld [vmem:[#allocation2 + $0x1f8] sm:$0xff]
    %v957 = vld [vmem:[#allocation2 + $0x200] sm:$0xff]
    %v958 = vld [vmem:[#allocation2 + $0x208] sm:$0xff]
    %v959 = vld [vmem:[#allocation2 + $0x210] sm:$0xff]
    %v960 = vld [vmem:[#allocation2 + $0x218] sm:$0xff]
    %v961 = vld [vmem:[#allocation2 + $0x220] sm:$0xff]
    %v962 = vld [vmem:[#allocation2 + $0x228] sm:$0xff]
    %v963 = vld [vmem:[#allocation2 + $0x230] sm:$0xff]
    %v964 = vld [vmem:[#allocation2 + $0x238] sm:$0xff]
    %v965 = vld [vmem:[#allocation2 + $0x240] sm:$0xff]
    %v966 = vld [vmem:[#allocation2 + $0x248] sm:$0xff]
    %v967 = vld [vmem:[#allocation2 + $0x250] sm:$0xff]
    %v968 = vld [vmem:[#allocation2 + $0x258] sm:$0xff]
    %v969 = vld [vmem:[#allocation2 + $0x260] sm:$0xff]
    %v970 = vld [vmem:[#allocation2 + $0x268] sm:$0xff]
    %v971 = vld [vmem:[#allocation2 + $0x270] sm:$0xff]
    %v972 = vld [vmem:[#allocation2 + $0x278] sm:$0xff]
    %v973 = vld [vmem:[#allocation2 + $0x280] sm:$0xff]
    %v974 = vld [vmem:[#allocation2 + $0x288] sm:$0xff]
    %v975 = vld [vmem:[#allocation2 + $0x290] sm:$0xff]
    %v976 = vld [vmem:[#allocation2 + $0x298] sm:$0xff]
    %v977 = vld [vmem:[#allocation2 + $0x2a0] sm:$0xff]
    %v978 = vld [vmem:[#allocation2 + $0x2a8] sm:$0xff]
    %v979 = vld [vmem:[#allocation2 + $0x2b0] sm:$0xff]
    %v980 = vld [vmem:[#allocation2 + $0x2b8] sm:$0xff]
    %v981 = vld [vmem:[#allocation2 + $0x2c0] sm:$0xff]
    %v982 = vld [vmem:[#allocation2 + $0x2c8] sm:$0xff]
    %v983 = vld [vmem:[#allocation2 + $0x2d0] sm:$0xff]
    %v984 = vld [vmem:[#allocation2 + $0x2d8] sm:$0xff]
    %v985 = vld [vmem:[#allocation2 + $0x2e0] sm:$0xff]
    %v986 = vld [vmem:[#allocation2 + $0x2e8] sm:$0xff]
    %v987 = vld [vmem:[#allocation2 + $0x2f0] sm:$0xff]
    %v988 = vld [vmem:[#allocation2 + $0x2f8] sm:$0xff]
    %v989 = vld [vmem:[#allocation2 + $0x300] sm:$0xff]
    %v990 = vld [vmem:[#allocation2 + $0x308] sm:$0xff]
    %v991 = vld [vmem:[#allocation2 + $0x310] sm:$0xff]
    %v992 = vld [vmem:[#allocation2 + $0x318] sm:$0xff]
    %v993 = vld [vmem:[#allocation2 + $0x320] sm:$0xff]
    %v994 = vld [vmem:[#allocation2 + $0x328] sm:$0xff]
    %v995 = vld [vmem:[#allocation2 + $0x330] sm:$0xff]
    %v996 = vld [vmem:[#allocation2 + $0x338] sm:$0xff]
    %v997 = vld [vmem:[#allocation2 + $0x340] sm:$0xff]
    %v998 = vld [vmem:[#allocation2 + $0x348] sm:$0xff]
    %v999 = vld [vmem:[#allocation2 + $0x350] sm:$0xff]
    %v1000 = vld [vmem:[#allocation2 + $0x358] sm:$0xff]
    %v1001 = vld [vmem:[#allocation2 + $0x360] sm:$0xff]
    %v1002 = vld [vmem:[#allocation2 + $0x368] sm:$0xff]
    %v1003 = vld [vmem:[#allocation2 + $0x370] sm:$0xff]
    %v1004 = vld [vmem:[#allocation2 + $0x378] sm:$0xff]
    %v1005 = vld [vmem:[#allocation2 + $0x380] sm:$0xff]
    %v1006 = vld [vmem:[#allocation2 + $0x388] sm:$0xff]
    %v1007 = vld [vmem:[#allocation2 + $0x390] sm:$0xff]
    %v1008 = vld [vmem:[#allocation2 + $0x398] sm:$0xff]
    %v1009 = vld [vmem:[#allocation2 + $0x3a0] sm:$0xff]
    %v1010 = vld [vmem:[#allocation2 + $0x3a8] sm:$0xff]
    %v1011 = vld [vmem:[#allocation2 + $0x3b0] sm:$0xff]
    %v1012 = vld [vmem:[#allocation2 + $0x3b8] sm:$0xff]
    %v1013 = vld [vmem:[#allocation2 + $0x3c0] sm:$0xff]
    %v1014 = vld [vmem:[#allocation2 + $0x3c8] sm:$0xff]
    %v1015 = vld [vmem:[#allocation2 + $0x3d0] sm:$0xff]
    %v1016 = vld [vmem:[#allocation2 + $0x3d8] sm:$0xff]
    %v1017 = vld [vmem:[#allocation2 + $0x3e0] sm:$0xff]
    %v1018 = vld [vmem:[#allocation2 + $0x3e8] sm:$0xff]
    %v1019 = vld [vmem:[#allocation2 + $0x3f0] sm:$0xff]
    %v1020 = vld [vmem:[#allocation2 + $0x3f8] sm:$0xff]
    %v1021 = vld [vmem:[#allocation2 + $0x400] sm:$0xff]
    %v1022 = vld [vmem:[#allocation2 + $0x408] sm:$0xff]
    %v1023 = vld [vmem:[#allocation2 + $0x410] sm:$0xff]
    %v1024 = vld [vmem:[#allocation2 + $0x418] sm:$0xff]
    %v1025 = vld [vmem:[#allocation2 + $0x420] sm:$0xff]
    %v1026 = vld [vmem:[#allocation2 + $0x428] sm:$0xff]
    %v1027 = vld [vmem:[#allocation2 + $0x430] sm:$0xff]
    %v1028 = vld [vmem:[#allocation2 + $0x438] sm:$0xff]
    %v1029 = vld [vmem:[#allocation2 + $0x440] sm:$0xff]
    %v1030 = vld [vmem:[#allocation2 + $0x448] sm:$0xff]
    %v1031 = vld [vmem:[#allocation2 + $0x450] sm:$0xff]
    %v1032 = vld [vmem:[#allocation2 + $0x458] sm:$0xff]
    %v1033 = vld [vmem:[#allocation2 + $0x460] sm:$0xff]
    %v1034 = vld [vmem:[#allocation2 + $0x468] sm:$0xff]
    %v1035 = vld [vmem:[#allocation2 + $0x470] sm:$0xff]
    %v1036 = vld [vmem:[#allocation2 + $0x478] sm:$0xff]
    %v1037 = vld [vmem:[#allocation2 + $0x480] sm:$0xff]
    %v1038 = vld [vmem:[#allocation2 + $0x488] sm:$0xff]
    %v1039 = vld [vmem:[#allocation2 + $0x490] sm:$0xff]
    %v1040 = vld [vmem:[#allocation2 + $0x498] sm:$0xff]
    %v1041 = vld [vmem:[#allocation2 + $0x4a0] sm:$0xff]
    %v1042 = vld [vmem:[#allocation2 + $0x4a8] sm:$0xff]
    %v1043 = vld [vmem:[#allocation2 + $0x4b0] sm:$0xff]
    %v1044 = vld [vmem:[#allocation2 + $0x4b8] sm:$0xff]
    %v1045 = vld [vmem:[#allocation2 + $0x4c0] sm:$0xff]
    %v1046 = vld [vmem:[#allocation2 + $0x4c8] sm:$0xff]
    %v1047 = vld [vmem:[#allocation2 + $0x4d0] sm:$0xff]
    %v1048 = vld [vmem:[#allocation2 + $0x4d8] sm:$0xff]
    %v1049 = vld [vmem:[#allocation2 + $0x4e0] sm:$0xff]
    %v1050 = vld [vmem:[#allocation2 + $0x4e8] sm:$0xff]
    %v1051 = vld [vmem:[#allocation2 + $0x4f0] sm:$0xff]
    %v1052 = vld [vmem:[#allocation2 + $0x4f8] sm:$0xff]
    %v1053 = vld [vmem:[#allocation2 + $0x500] sm:$0xff]
    %v1054 = vld [vmem:[#allocation2 + $0x508] sm:$0xff]
    %v1055 = vld [vmem:[#allocation2 + $0x510] sm:$0xff]
    %v1056 = vld [vmem:[#allocation2 + $0x518] sm:$0xff]
    %v1057 = vld [vmem:[#allocation2 + $0x520] sm:$0xff]
    %v1058 = vld [vmem:[#allocation2 + $0x528] sm:$0xff]
    %v1059 = vld [vmem:[#allocation2 + $0x530] sm:$0xff]
    %v1060 = vld [vmem:[#allocation2 + $0x538] sm:$0xff]
    %v1061 = vld [vmem:[#allocation2 + $0x540] sm:$0xff]
    %v1062 = vld [vmem:[#allocation2 + $0x548] sm:$0xff]
    %v1063 = vld [vmem:[#allocation2 + $0x550] sm:$0xff]
    %v1064 = vld [vmem:[#allocation2 + $0x558] sm:$0xff]
    %v1065 = vld [vmem:[#allocation2 + $0x560] sm:$0xff]
    %v1066 = vld [vmem:[#allocation2 + $0x568] sm:$0xff]
    %v1067 = vld [vmem:[#allocation2 + $0x570] sm:$0xff]
    %v1068 = vld [vmem:[#allocation2 + $0x578] sm:$0xff]
    %v1069 = vld [vmem:[#allocation2 + $0x580] sm:$0xff]
    %v1070 = vld [vmem:[#allocation2 + $0x588] sm:$0xff]
    %v1071 = vld [vmem:[#allocation2 + $0x590] sm:$0xff]
    %v1072 = vld [vmem:[#allocation2 + $0x598] sm:$0xff]
    %v1073 = vld [vmem:[#allocation2 + $0x5a0] sm:$0xff]
    %v1074 = vld [vmem:[#allocation2 + $0x5a8] sm:$0xff]
    %v1075 = vld [vmem:[#allocation2 + $0x5b0] sm:$0xff]
    %v1076 = vld [vmem:[#allocation2 + $0x5b8] sm:$0xff]
    %v1077 = vld [vmem:[#allocation2 + $0x5c0] sm:$0xff]
    %v1078 = vld [vmem:[#allocation2 + $0x5c8] sm:$0xff]
    %v1079 = vld [vmem:[#allocation2 + $0x5d0] sm:$0xff]
    %v1080 = vld [vmem:[#allocation2 + $0x5d8] sm:$0xff]
    %v1081 = vld [vmem:[#allocation2 + $0x5e0] sm:$0xff]
    %v1082 = vld [vmem:[#allocation2 + $0x5e8] sm:$0xff]
    %v1083 = vld [vmem:[#allocation2 + $0x5f0] sm:$0xff]
    %v1084 = vld [vmem:[#allocation2 + $0x5f8] sm:$0xff]
    %v1085 = vld [vmem:[#allocation2 + $0x600] sm:$0xff]
    %v1086 = vld [vmem:[#allocation2 + $0x608] sm:$0xff]
    %v1087 = vld [vmem:[#allocation2 + $0x610] sm:$0xff]
    %v1088 = vld [vmem:[#allocation2 + $0x618] sm:$0xff]
    %v1089 = vld [vmem:[#allocation2 + $0x620] sm:$0xff]
    %v1090 = vld [vmem:[#allocation2 + $0x628] sm:$0xff]
    %v1091 = vld [vmem:[#allocation2 + $0x630] sm:$0xff]
    %v1092 = vld [vmem:[#allocation2 + $0x638] sm:$0xff]
    %v1093 = vld [vmem:[#allocation2 + $0x640] sm:$0xff]
    %v1094 = vld [vmem:[#allocation2 + $0x648] sm:$0xff]
    %v1095 = vld [vmem:[#allocation2 + $0x650] sm:$0xff]
    %v1096 = vld [vmem:[#allocation2 + $0x658] sm:$0xff]
    %v1097 = vld [vmem:[#allocation2 + $0x660] sm:$0xff]
    %v1098 = vld [vmem:[#allocation2 + $0x668] sm:$0xff]
    %v1099 = vld [vmem:[#allocation2 + $0x670] sm:$0xff]
    %v1100 = vld [vmem:[#allocation2 + $0x678] sm:$0xff]
    %v1101 = vld [vmem:[#allocation2 + $0x680] sm:$0xff]
    %v1102 = vld [vmem:[#allocation2 + $0x688] sm:$0xff]
    %v1103 = vld [vmem:[#allocation2 + $0x690] sm:$0xff]
    %v1104 = vld [vmem:[#allocation2 + $0x698] sm:$0xff]
    %v1105 = vld [vmem:[#allocation2 + $0x6a0] sm:$0xff]
    %v1106 = vld [vmem:[#allocation2 + $0x6a8] sm:$0xff]
    %v1107 = vld [vmem:[#allocation2 + $0x6b0] sm:$0xff]
    %v1108 = vld [vmem:[#allocation2 + $0x6b8] sm:$0xff]
    %v1109 = vld [vmem:[#allocation2 + $0x6c0] sm:$0xff]
    %v1110 = vld [vmem:[#allocation2 + $0x6c8] sm:$0xff]
    %v1111 = vld [vmem:[#allocation2 + $0x6d0] sm:$0xff]
    %v1112 = vld [vmem:[#allocation2 + $0x6d8] sm:$0xff]
    %v1113 = vld [vmem:[#allocation2 + $0x6e0] sm:$0xff]
    %v1114 = vld [vmem:[#allocation2 + $0x6e8] sm:$0xff]
    %v1115 = vld [vmem:[#allocation2 + $0x6f0] sm:$0xff]
    %v1116 = vld [vmem:[#allocation2 + $0x6f8] sm:$0xff]
    %v1117 = vld [vmem:[#allocation2 + $0x700] sm:$0xff]
    %v1118 = vld [vmem:[#allocation2 + $0x708] sm:$0xff]
    %v1119 = vld [vmem:[#allocation2 + $0x710] sm:$0xff]
    %v1120 = vld [vmem:[#allocation2 + $0x718] sm:$0xff]
    %v1121 = vld [vmem:[#allocation2 + $0x720] sm:$0xff]
    %v1122 = vld [vmem:[#allocation2 + $0x728] sm:$0xff]
    %v1123 = vld [vmem:[#allocation2 + $0x730] sm:$0xff]
    %v1124 = vld [vmem:[#allocation2 + $0x738] sm:$0xff]
    %v1125 = vld [vmem:[#allocation2 + $0x740] sm:$0xff]
    %v1126 = vld [vmem:[#allocation2 + $0x748] sm:$0xff]
    %v1127 = vld [vmem:[#allocation2 + $0x750] sm:$0xff]
    %v1128 = vld [vmem:[#allocation2 + $0x758] sm:$0xff]
    %v1129 = vld [vmem:[#allocation2 + $0x760] sm:$0xff]
    %v1130 = vld [vmem:[#allocation2 + $0x768] sm:$0xff]
    %v1131 = vld [vmem:[#allocation2 + $0x770] sm:$0xff]
    %v1132 = vld [vmem:[#allocation2 + $0x778] sm:$0xff]
    %v1133 = vld [vmem:[#allocation2 + $0x780] sm:$0xff]
    %v1134 = vld [vmem:[#allocation2 + $0x788] sm:$0xff]
    %v1135 = vld [vmem:[#allocation2 + $0x790] sm:$0xff]
    %v1136 = vld [vmem:[#allocation2 + $0x798] sm:$0xff]
    %v1137 = vld [vmem:[#allocation2 + $0x7a0] sm:$0xff]
    %v1138 = vld [vmem:[#allocation2 + $0x7a8] sm:$0xff]
    %v1139 = vld [vmem:[#allocation2 + $0x7b0] sm:$0xff]
    %v1140 = vld [vmem:[#allocation2 + $0x7b8] sm:$0xff]
    %v1141 = vld [vmem:[#allocation2 + $0x7c0] sm:$0xff]
    %v1142 = vld [vmem:[#allocation2 + $0x7c8] sm:$0xff]
    %v1143 = vld [vmem:[#allocation2 + $0x7d0] sm:$0xff]
    %v1144 = vld [vmem:[#allocation2 + $0x7d8] sm:$0xff]
    %v1145 = vld [vmem:[#allocation2 + $0x7e0] sm:$0xff]
    %v1146 = vld [vmem:[#allocation2 + $0x7e8] sm:$0xff]
    %v1147 = vld [vmem:[#allocation2 + $0x7f0] sm:$0xff]
    %v1148 = vld [vmem:[#allocation2 + $0x7f8] sm:$0xff]
    %v1149 = vld [vmem:[#allocation2 + $0x800] sm:$0xff]
    %v1150 = vld [vmem:[#allocation2 + $0x808] sm:$0xff]
    %v1151 = vld [vmem:[#allocation2 + $0x810] sm:$0xff]
    %v1152 = vld [vmem:[#allocation2 + $0x818] sm:$0xff]
    %v1153 = vld [vmem:[#allocation2 + $0x820] sm:$0xff]
    %v1154 = vld [vmem:[#allocation2 + $0x828] sm:$0xff]
    %v1155 = vld [vmem:[#allocation2 + $0x830] sm:$0xff]
    %v1156 = vld [vmem:[#allocation2 + $0x838] sm:$0xff]
    %v1157 = vld [vmem:[#allocation2 + $0x840] sm:$0xff]
    %v1158 = vld [vmem:[#allocation2 + $0x848] sm:$0xff]
    %v1159 = vld [vmem:[#allocation2 + $0x850] sm:$0xff]
    %v1160 = vld [vmem:[#allocation2 + $0x858] sm:$0xff]
    %v1161 = vld [vmem:[#allocation2 + $0x860] sm:$0xff]
    %v1162 = vld [vmem:[#allocation2 + $0x868] sm:$0xff]
    %v1163 = vld [vmem:[#allocation2 + $0x870] sm:$0xff]
    %v1164 = vld [vmem:[#allocation2 + $0x878] sm:$0xff]
    %v1165 = vld [vmem:[#allocation2 + $0x880] sm:$0xff]
    %v1166 = vld [vmem:[#allocation2 + $0x888] sm:$0xff]
    %v1167 = vld [vmem:[#allocation2 + $0x890] sm:$0xff]
    %v1168 = vld [vmem:[#allocation2 + $0x898] sm:$0xff]
    %v1169 = vld [vmem:[#allocation2 + $0x8a0] sm:$0xff]
    %v1170 = vld [vmem:[#allocation2 + $0x8a8] sm:$0xff]
    %v1171 = vld [vmem:[#allocation2 + $0x8b0] sm:$0xff]
    %v1172 = vld [vmem:[#allocation2 + $0x8b8] sm:$0xff]
    %v1173 = vld [vmem:[#allocation2 + $0x8c0] sm:$0xff]
    %v1174 = vld [vmem:[#allocation2 + $0x8c8] sm:$0xff]
    %v1175 = vld [vmem:[#allocation2 + $0x8d0] sm:$0xff]
    %v1176 = vld [vmem:[#allocation2 + $0x8d8] sm:$0xff]
    %v1177 = vld [vmem:[#allocation2 + $0x8e0] sm:$0xff]
    %v1178 = vld [vmem:[#allocation2 + $0x8e8] sm:$0xff]
    %v1179 = vld [vmem:[#allocation2 + $0x8f0] sm:$0xff]
    %v1180 = vld [vmem:[#allocation2 + $0x8f8] sm:$0xff]
    %v1181 = vld [vmem:[#allocation2 + $0x900] sm:$0xff]
    %v1182 = vld [vmem:[#allocation2 + $0x908] sm:$0xff]
    %v1183 = vld [vmem:[#allocation2 + $0x910] sm:$0xff]
    %v1184 = vld [vmem:[#allocation2 + $0x918] sm:$0xff]
    %v1185 = vld [vmem:[#allocation2 + $0x920] sm:$0xff]
    %v1186 = vld [vmem:[#allocation2 + $0x928] sm:$0xff]
    %v1187 = vld [vmem:[#allocation2 + $0x930] sm:$0xff]
    %v1188 = vld [vmem:[#allocation2 + $0x938] sm:$0xff]
    %v1189 = vld [vmem:[#allocation2 + $0x940] sm:$0xff]
    %v1190 = vld [vmem:[#allocation2 + $0x948] sm:$0xff]
    %v1191 = vld [vmem:[#allocation2 + $0x950] sm:$0xff]
    %v1192 = vld [vmem:[#allocation2 + $0x958] sm:$0xff]
    %v1193 = vld [vmem:[#allocation2 + $0x960] sm:$0xff]
    %v1194 = vld [vmem:[#allocation2 + $0x968] sm:$0xff]
    %v1195 = vld [vmem:[#allocation2 + $0x970] sm:$0xff]
    %v1196 = vld [vmem:[#allocation2 + $0x978] sm:$0xff]
    %v1197 = vld [vmem:[#allocation2 + $0x980] sm:$0xff]
    %v1198 = vld [vmem:[#allocation2 + $0x988] sm:$0xff]
    %v1199 = vld [vmem:[#allocation2 + $0x990] sm:$0xff]
    %v1200 = vld [vmem:[#allocation2 + $0x998] sm:$0xff]
    %v1201 = vld [vmem:[#allocation2 + $0x9a0] sm:$0xff]
    %v1202 = vld [vmem:[#allocation2 + $0x9a8] sm:$0xff]
    %v1203 = vld [vmem:[#allocation2 + $0x9b0] sm:$0xff]
    %v1204 = vld [vmem:[#allocation2 + $0x9b8] sm:$0xff]
    %v1205 = vld [vmem:[#allocation2 + $0x9c0] sm:$0xff]
    %v1206 = vld [vmem:[#allocation2 + $0x9c8] sm:$0xff]
    %v1207 = vld [vmem:[#allocation2 + $0x9d0] sm:$0xff]
    %v1208 = vld [vmem:[#allocation2 + $0x9d8] sm:$0xff]
    %v1209 = vld [vmem:[#allocation2 + $0x9e0] sm:$0xff]
    %v1210 = vld [vmem:[#allocation2 + $0x9e8] sm:$0xff]
    %v1211 = vld [vmem:[#allocation2 + $0x9f0] sm:$0xff]
    %v1212 = vld [vmem:[#allocation2 + $0x9f8] sm:$0xff]
    %v1213 = vld [vmem:[#allocation2 + $0xa00] sm:$0xff]
    %v1214 = vld [vmem:[#allocation2 + $0xa08] sm:$0xff]
    %v1215 = vld [vmem:[#allocation2 + $0xa10] sm:$0xff]
    %v1216 = vld [vmem:[#allocation2 + $0xa18] sm:$0xff]
    %v1217 = vld [vmem:[#allocation2 + $0xa20] sm:$0xff]
    %v1218 = vld [vmem:[#allocation2 + $0xa28] sm:$0xff]
    %v1219 = vld [vmem:[#allocation2 + $0xa30] sm:$0xff]
    %v1220 = vld [vmem:[#allocation2 + $0xa38] sm:$0xff]
    %v1221 = vld [vmem:[#allocation2 + $0xa40] sm:$0xff]
    %v1222 = vld [vmem:[#allocation2 + $0xa48] sm:$0xff]
    %v1223 = vld [vmem:[#allocation2 + $0xa50] sm:$0xff]
    %v1224 = vld [vmem:[#allocation2 + $0xa58] sm:$0xff]
    %v1225 = vld [vmem:[#allocation2 + $0xa60] sm:$0xff]
    %v1226 = vld [vmem:[#allocation2 + $0xa68] sm:$0xff]
    %v1227 = vld [vmem:[#allocation2 + $0xa70] sm:$0xff]
    %v1228 = vld [vmem:[#allocation2 + $0xa78] sm:$0xff]
    %v1229 = vld [vmem:[#allocation2 + $0xa80] sm:$0xff]
    %v1230 = vld [vmem:[#allocation2 + $0xa88] sm:$0xff]
    %v1231 = vld [vmem:[#allocation2 + $0xa90] sm:$0xff]
    %v1232 = vld [vmem:[#allocation2 + $0xa98] sm:$0xff]
    %v1233 = vld [vmem:[#allocation2 + $0xaa0] sm:$0xff]
    %v1234 = vld [vmem:[#allocation2 + $0xaa8] sm:$0xff]
    %v1235 = vld [vmem:[#allocation2 + $0xab0] sm:$0xff]
    %v1236 = vld [vmem:[#allocation2 + $0xab8] sm:$0xff]
    %v1237 = vld [vmem:[#allocation2 + $0xac0] sm:$0xff]
    %v1238 = vld [vmem:[#allocation2 + $0xac8] sm:$0xff]
    %v1239 = vld [vmem:[#allocation2 + $0xad0] sm:$0xff]
    %v1240 = vld [vmem:[#allocation2 + $0xad8] sm:$0xff]
    %v1241 = vld [vmem:[#allocation2 + $0xae0] sm:$0xff]
    %v1242 = vld [vmem:[#allocation2 + $0xae8] sm:$0xff]
    %v1243 = vld [vmem:[#allocation2 + $0xaf0] sm:$0xff]
    %v1244 = vld [vmem:[#allocation2 + $0xaf8] sm:$0xff]
    %v1245 = vld [vmem:[#allocation2 + $0xb00] sm:$0xff]
    %v1246 = vld [vmem:[#allocation2 + $0xb08] sm:$0xff]
    %v1247 = vld [vmem:[#allocation2 + $0xb10] sm:$0xff]
    %v1248 = vld [vmem:[#allocation2 + $0xb18] sm:$0xff]
    %v1249 = vld [vmem:[#allocation2 + $0xb20] sm:$0xff]
    %v1250 = vld [vmem:[#allocation2 + $0xb28] sm:$0xff]
    %v1251 = vld [vmem:[#allocation2 + $0xb30] sm:$0xff]
    %v1252 = vld [vmem:[#allocation2 + $0xb38] sm:$0xff]
    %v1253 = vld [vmem:[#allocation2 + $0xb40] sm:$0xff]
    %v1254 = vld [vmem:[#allocation2 + $0xb48] sm:$0xff]
    %v1255 = vld [vmem:[#allocation2 + $0xb50] sm:$0xff]
    %v1256 = vld [vmem:[#allocation2 + $0xb58] sm:$0xff]
    %v1257 = vld [vmem:[#allocation2 + $0xb60] sm:$0xff]
    %v1258 = vld [vmem:[#allocation2 + $0xb68] sm:$0xff]
    %v1259 = vld [vmem:[#allocation2 + $0xb70] sm:$0xff]
    %v1260 = vld [vmem:[#allocation2 + $0xb78] sm:$0xff]
    %v1261 = vld [vmem:[#allocation2 + $0xb80] sm:$0xff]
    %v1262 = vld [vmem:[#allocation2 + $0xb88] sm:$0xff]
    %v1263 = vld [vmem:[#allocation2 + $0xb90] sm:$0xff]
    %v1264 = vld [vmem:[#allocation2 + $0xb98] sm:$0xff]
    %v1265 = vld [vmem:[#allocation2 + $0xba0] sm:$0xff]
    %v1266 = vld [vmem:[#allocation2 + $0xba8] sm:$0xff]
    %v1267 = vld [vmem:[#allocation2 + $0xbb0] sm:$0xff]
    %v1268 = vld [vmem:[#allocation2 + $0xbb8] sm:$0xff]
    %v1269 = vld [vmem:[#allocation2 + $0xbc0] sm:$0xff]
    %v1270 = vld [vmem:[#allocation2 + $0xbc8] sm:$0xff]
    %v1271 = vld [vmem:[#allocation2 + $0xbd0] sm:$0xff]
    %v1272 = vld [vmem:[#allocation2 + $0xbd8] sm:$0xff]
    %v1273 = vld [vmem:[#allocation2 + $0xbe0] sm:$0xff]
    %v1274 = vld [vmem:[#allocation2 + $0xbe8] sm:$0xff]
    %v1275 = vld [vmem:[#allocation2 + $0xbf0] sm:$0xff]
    %v1276 = vld [vmem:[#allocation2 + $0xbf8] sm:$0xff]
    %v1277 = vld [vmem:[#allocation2 + $0xc00] sm:$0xff]
    %v1278 = vld [vmem:[#allocation2 + $0xc08] sm:$0xff]
    %v1279 = vld [vmem:[#allocation2 + $0xc10] sm:$0xff]
    %v1280 = vld [vmem:[#allocation2 + $0xc18] sm:$0xff]
    %v1281 = vld [vmem:[#allocation2 + $0xc20] sm:$0xff]
    %v1282 = vld [vmem:[#allocation2 + $0xc28] sm:$0xff]
    %v1283 = vld [vmem:[#allocation2 + $0xc30] sm:$0xff]
    %v1284 = vld [vmem:[#allocation2 + $0xc38] sm:$0xff]
    %v1285 = vld [vmem:[#allocation2 + $0xc40] sm:$0xff]
    %v1286 = vld [vmem:[#allocation2 + $0xc48] sm:$0xff]
    %v1287 = vld [vmem:[#allocation2 + $0xc50] sm:$0xff]
    %v1288 = vld [vmem:[#allocation2 + $0xc58] sm:$0xff]
    %v1289 = vld [vmem:[#allocation2 + $0xc60] sm:$0xff]
    %v1290 = vld [vmem:[#allocation2 + $0xc68] sm:$0xff]
    %v1291 = vld [vmem:[#allocation2 + $0xc70] sm:$0xff]
    %v1292 = vld [vmem:[#allocation2 + $0xc78] sm:$0xff]
    %v1293 = vld [vmem:[#allocation2 + $0xc80] sm:$0xff]
    %v1294 = vld [vmem:[#allocation2 + $0xc88] sm:$0xff]
    %v1295 = vld [vmem:[#allocation2 + $0xc90] sm:$0xff]
    %v1296 = vld [vmem:[#allocation2 + $0xc98] sm:$0xff]
    %v1297 = vld [vmem:[#allocation2 + $0xca0] sm:$0xff]
    %v1298 = vld [vmem:[#allocation2 + $0xca8] sm:$0xff]
    %v1299 = vld [vmem:[#allocation2 + $0xcb0] sm:$0xff]
    %v1300 = vld [vmem:[#allocation2 + $0xcb8] sm:$0xff]
    %v1301 = vld [vmem:[#allocation2 + $0xcc0] sm:$0xff]
    %v1302 = vld [vmem:[#allocation2 + $0xcc8] sm:$0xff]
    %v1303 = vld [vmem:[#allocation2 + $0xcd0] sm:$0xff]
    %v1304 = vld [vmem:[#allocation2 + $0xcd8] sm:$0xff]
    %v1305 = vld [vmem:[#allocation2 + $0xce0] sm:$0xff]
    %v1306 = vld [vmem:[#allocation2 + $0xce8] sm:$0xff]
    %v1307 = vld [vmem:[#allocation2 + $0xcf0] sm:$0xff]
    %v1308 = vld [vmem:[#allocation2 + $0xcf8] sm:$0xff]
    %v1309 = vld [vmem:[#allocation2 + $0xd00] sm:$0xff]
    %v1310 = vld [vmem:[#allocation2 + $0xd08] sm:$0xff]
    %v1311 = vld [vmem:[#allocation2 + $0xd10] sm:$0xff]
    %v1312 = vld [vmem:[#allocation2 + $0xd18] sm:$0xff]
    %v1313 = vld [vmem:[#allocation2 + $0xd20] sm:$0xff]
    %v1314 = vld [vmem:[#allocation2 + $0xd28] sm:$0xff]
    %v1315 = vld [vmem:[#allocation2 + $0xd30] sm:$0xff]
    %v1316 = vld [vmem:[#allocation2 + $0xd38] sm:$0xff]
    %v1317 = vld [vmem:[#allocation2 + $0xd40] sm:$0xff]
    %v1318 = vld [vmem:[#allocation2 + $0xd48] sm:$0xff]
    %v1319 = vld [vmem:[#allocation2 + $0xd50] sm:$0xff]
    %v1320 = vld [vmem:[#allocation2 + $0xd58] sm:$0xff]
    %v1321 = vld [vmem:[#allocation2 + $0xd60] sm:$0xff]
    %v1322 = vld [vmem:[#allocation2 + $0xd68] sm:$0xff]
    %v1323 = vld [vmem:[#allocation2 + $0xd70] sm:$0xff]
    %v1324 = vld [vmem:[#allocation2 + $0xd78] sm:$0xff]
    %v1325 = vld [vmem:[#allocation2 + $0xd80] sm:$0xff]
    %v1326 = vld [vmem:[#allocation2 + $0xd88] sm:$0xff]
    %v1327 = vld [vmem:[#allocation2 + $0xd90] sm:$0xff]
    %v1328 = vld [vmem:[#allocation2 + $0xd98] sm:$0xff]
    %v1329 = vld [vmem:[#allocation2 + $0xda0] sm:$0xff]
    %v1330 = vld [vmem:[#allocation2 + $0xda8] sm:$0xff]
    %v1331 = vld [vmem:[#allocation2 + $0xdb0] sm:$0xff]
    %v1332 = vld [vmem:[#allocation2 + $0xdb8] sm:$0xff]
    %v1333 = vld [vmem:[#allocation2 + $0xdc0] sm:$0xff]
    %v1334 = vld [vmem:[#allocation2 + $0xdc8] sm:$0xff]
    %v1335 = vld [vmem:[#allocation2 + $0xdd0] sm:$0xff]
    %v1336 = vld [vmem:[#allocation2 + $0xdd8] sm:$0xff]
    %v1337 = vld [vmem:[#allocation2 + $0xde0] sm:$0xff]
    %v1338 = vld [vmem:[#allocation2 + $0xde8] sm:$0xff]
    %v1339 = vld [vmem:[#allocation2 + $0xdf0] sm:$0xff]
    %v1340 = vld [vmem:[#allocation2 + $0xdf8] sm:$0xff]
    %v1341 = vld [vmem:[#allocation2 + $0xe00] sm:$0xff]
    %v1342 = vld [vmem:[#allocation2 + $0xe08] sm:$0xff]
    %v1343 = vld [vmem:[#allocation2 + $0xe10] sm:$0xff]
    %v1344 = vld [vmem:[#allocation2 + $0xe18] sm:$0xff]
    %v1345 = vld [vmem:[#allocation2 + $0xe20] sm:$0xff]
    %v1346 = vld [vmem:[#allocation2 + $0xe28] sm:$0xff]
    %v1347 = vld [vmem:[#allocation2 + $0xe30] sm:$0xff]
    %v1348 = vld [vmem:[#allocation2 + $0xe38] sm:$0xff]
    %v1349 = vld [vmem:[#allocation2 + $0xe40] sm:$0xff]
    %v1350 = vld [vmem:[#allocation2 + $0xe48] sm:$0xff]
    %v1351 = vld [vmem:[#allocation2 + $0xe50] sm:$0xff]
    %v1352 = vld [vmem:[#allocation2 + $0xe58] sm:$0xff]
    %v1353 = vld [vmem:[#allocation2 + $0xe60] sm:$0xff]
    %v1354 = vld [vmem:[#allocation2 + $0xe68] sm:$0xff]
    %v1355 = vld [vmem:[#allocation2 + $0xe70] sm:$0xff]
    %v1356 = vld [vmem:[#allocation2 + $0xe78] sm:$0xff]
    %v1357 = vld [vmem:[#allocation2 + $0xe80] sm:$0xff]
    %v1358 = vld [vmem:[#allocation2 + $0xe88] sm:$0xff]
    %v1359 = vld [vmem:[#allocation2 + $0xe90] sm:$0xff]
    %v1360 = vld [vmem:[#allocation2 + $0xe98] sm:$0xff]
    %v1361 = vld [vmem:[#allocation2 + $0xea0] sm:$0xff]
    %v1362 = vld [vmem:[#allocation2 + $0xea8] sm:$0xff]
    %v1363 = vld [vmem:[#allocation2 + $0xeb0] sm:$0xff]
    %v1364 = vld [vmem:[#allocation2 + $0xeb8] sm:$0xff]
    %v1365 = vld [vmem:[#allocation2 + $0xec0] sm:$0xff]
    %v1366 = vld [vmem:[#allocation2 + $0xec8] sm:$0xff]
    %v1367 = vld [vmem:[#allocation2 + $0xed0] sm:$0xff]
    %v1368 = vld [vmem:[#allocation2 + $0xed8] sm:$0xff]
    %v1369 = vld [vmem:[#allocation2 + $0xee0] sm:$0xff]
    %v1370 = vld [vmem:[#allocation2 + $0xee8] sm:$0xff]
    %v1371 = vld [vmem:[#allocation2 + $0xef0] sm:$0xff]
    %v1372 = vld [vmem:[#allocation2 + $0xef8] sm:$0xff]
    %v1373 = vld [vmem:[#allocation2 + $0xf00] sm:$0xff]
    %v1374 = vld [vmem:[#allocation2 + $0xf08] sm:$0xff]
    %v1375 = vld [vmem:[#allocation2 + $0xf10] sm:$0xff]
    %v1376 = vld [vmem:[#allocation2 + $0xf18] sm:$0xff]
    %v1377 = vld [vmem:[#allocation2 + $0xf20] sm:$0xff]
    %v1378 = vld [vmem:[#allocation2 + $0xf28] sm:$0xff]
    %v1379 = vld [vmem:[#allocation2 + $0xf30] sm:$0xff]
    %v1380 = vld [vmem:[#allocation2 + $0xf38] sm:$0xff]
    %v1381 = vld [vmem:[#allocation2 + $0xf40] sm:$0xff]
    %v1382 = vld [vmem:[#allocation2 + $0xf48] sm:$0xff]
    %v1383 = vld [vmem:[#allocation2 + $0xf50] sm:$0xff]
    %v1384 = vld [vmem:[#allocation2 + $0xf58] sm:$0xff]
    %v1385 = vld [vmem:[#allocation2 + $0xf60] sm:$0xff]
    %v1386 = vld [vmem:[#allocation2 + $0xf68] sm:$0xff]
    %v1387 = vld [vmem:[#allocation2 + $0xf70] sm:$0xff]
    %v1388 = vld [vmem:[#allocation2 + $0xf78] sm:$0xff]
    %v1389 = vld [vmem:[#allocation2 + $0xf80] sm:$0xff]
    %v1390 = vld [vmem:[#allocation2 + $0xf88] sm:$0xff]
    %v1391 = vld [vmem:[#allocation2 + $0xf90] sm:$0xff]
    %v1392 = vld [vmem:[#allocation2 + $0xf98] sm:$0xff]
    %v1393 = vld [vmem:[#allocation2 + $0xfa0] sm:$0xff]
    %v1394 = vld [vmem:[#allocation2 + $0xfa8] sm:$0xff]
    %v1395 = vld [vmem:[#allocation2 + $0xfb0] sm:$0xff]
    %v1396 = vld [vmem:[#allocation2 + $0xfb8] sm:$0xff]
    %v1397 = vld [vmem:[#allocation2 + $0xfc0] sm:$0xff]
    %v1398 = vld [vmem:[#allocation2 + $0xfc8] sm:$0xff]
    %v1399 = vld [vmem:[#allocation2 + $0xfd0] sm:$0xff]
    %v1400 = vld [vmem:[#allocation2 + $0xfd8] sm:$0xff]
    %v1401 = vld [vmem:[#allocation2 + $0xfe0] sm:$0xff]
    %v1402 = vld [vmem:[#allocation2 + $0xfe8] sm:$0xff]
    %v1403 = vld [vmem:[#allocation2 + $0xff0] sm:$0xff]
    %v1404 = vld [vmem:[#allocation2 + $0xff8] sm:$0xff]
    %v1405 = vld [vmem:[#allocation2 + $0x1000] sm:$0xff]
    %v1406 = vld [vmem:[#allocation2 + $0x1008] sm:$0xff]
    %v1407 = vld [vmem:[#allocation2 + $0x1010] sm:$0xff]
    %v1408 = vld [vmem:[#allocation2 + $0x1018] sm:$0xff]
    %v1409 = vld [vmem:[#allocation2 + $0x1020] sm:$0xff]
    %v1410 = vld [vmem:[#allocation2 + $0x1028] sm:$0xff]
    %v1411 = vld [vmem:[#allocation2 + $0x1030] sm:$0xff]
    %v1412 = vld [vmem:[#allocation2 + $0x1038] sm:$0xff]
    %v1413 = vld [vmem:[#allocation2 + $0x1040] sm:$0xff]
    %v1414 = vld [vmem:[#allocation2 + $0x1048] sm:$0xff]
    %v1415 = vld [vmem:[#allocation2 + $0x1050] sm:$0xff]
    %v1416 = vld [vmem:[#allocation2 + $0x1058] sm:$0xff]
    %v1417 = vld [vmem:[#allocation2 + $0x1060] sm:$0xff]
    %v1418 = vld [vmem:[#allocation2 + $0x1068] sm:$0xff]
    %v1419 = vld [vmem:[#allocation2 + $0x1070] sm:$0xff]
    %v1420 = vld [vmem:[#allocation2 + $0x1078] sm:$0xff]
    %v1421 = vld [vmem:[#allocation2 + $0x1080] sm:$0xff]
    %v1422 = vld [vmem:[#allocation2 + $0x1088] sm:$0xff]
    %v1423 = vld [vmem:[#allocation2 + $0x1090] sm:$0xff]
    %v1424 = vld [vmem:[#allocation2 + $0x1098] sm:$0xff]
    %v1425 = vld [vmem:[#allocation2 + $0x10a0] sm:$0xff]
    %v1426 = vld [vmem:[#allocation2 + $0x10a8] sm:$0xff]
    %v1427 = vld [vmem:[#allocation2 + $0x10b0] sm:$0xff]
    %v1428 = vld [vmem:[#allocation2 + $0x10b8] sm:$0xff]
    %v1429 = vld [vmem:[#allocation2 + $0x10c0] sm:$0xff]
    %v1430 = vld [vmem:[#allocation2 + $0x10c8] sm:$0xff]
    %v1431 = vld [vmem:[#allocation2 + $0x10d0] sm:$0xff]
    %v1432 = vld [vmem:[#allocation2 + $0x10d8] sm:$0xff]
    %v1433 = vld [vmem:[#allocation2 + $0x10e0] sm:$0xff]
    %v1434 = vld [vmem:[#allocation2 + $0x10e8] sm:$0xff]
    %v1435 = vld [vmem:[#allocation2 + $0x10f0] sm:$0xff]
    %v1436 = vld [vmem:[#allocation2 + $0x10f8] sm:$0xff]
    %v1437 = vld [vmem:[#allocation2 + $0x1100] sm:$0xff]
    %v1438 = vld [vmem:[#allocation2 + $0x1108] sm:$0xff]
    %v1439 = vld [vmem:[#allocation2 + $0x1110] sm:$0xff]
    %v1440 = vld [vmem:[#allocation2 + $0x1118] sm:$0xff]
    %v1441 = vld [vmem:[#allocation2 + $0x1120] sm:$0xff]
    %v1442 = vld [vmem:[#allocation2 + $0x1128] sm:$0xff]
    %v1443 = vld [vmem:[#allocation2 + $0x1130] sm:$0xff]
    %v1444 = vld [vmem:[#allocation2 + $0x1138] sm:$0xff]
    %v1445 = vld [vmem:[#allocation2 + $0x1140] sm:$0xff]
    %v1446 = vld [vmem:[#allocation2 + $0x1148] sm:$0xff]
    %v1447 = vld [vmem:[#allocation2 + $0x1150] sm:$0xff]
    %v1448 = vld [vmem:[#allocation2 + $0x1158] sm:$0xff]
    %v1449 = vld [vmem:[#allocation2 + $0x1160] sm:$0xff]
    %v1450 = vld [vmem:[#allocation2 + $0x1168] sm:$0xff]
    %v1451 = vld [vmem:[#allocation2 + $0x1170] sm:$0xff]
    %v1452 = vld [vmem:[#allocation2 + $0x1178] sm:$0xff]
    %v1453 = vld [vmem:[#allocation2 + $0x1180] sm:$0xff]
    %v1454 = vld [vmem:[#allocation2 + $0x1188] sm:$0xff]
    %v1455 = vld [vmem:[#allocation2 + $0x1190] sm:$0xff]
    %v1456 = vld [vmem:[#allocation2 + $0x1198] sm:$0xff]
    %v1457 = vld [vmem:[#allocation2 + $0x11a0] sm:$0xff]
    %v1458 = vld [vmem:[#allocation2 + $0x11a8] sm:$0xff]
    %v1459 = vld [vmem:[#allocation2 + $0x11b0] sm:$0xff]
    %v1460 = vld [vmem:[#allocation2 + $0x11b8] sm:$0xff]
    %v1461 = vld [vmem:[#allocation2 + $0x11c0] sm:$0xff]
    %v1462 = vld [vmem:[#allocation2 + $0x11c8] sm:$0xff]
    %v1463 = vld [vmem:[#allocation2 + $0x11d0] sm:$0xff]
    %v1464 = vld [vmem:[#allocation2 + $0x11d8] sm:$0xff]
    %v1465 = vld [vmem:[#allocation2 + $0x11e0] sm:$0xff]
    %v1466 = vld [vmem:[#allocation2 + $0x11e8] sm:$0xff]
    %v1467 = vld [vmem:[#allocation2 + $0x11f0] sm:$0xff]
    %v1468 = vld [vmem:[#allocation2 + $0x11f8] sm:$0xff]
    %v1469 = vlaneseq
    %v1470 = vand.u32 %v1469, 127
    %v1471 = vadd.s32 %v1470, 128
    %v1472 = vadd.s32 %v1470, 256
    %v1473 = vld [vmem:[#allocation3] ss:$8 sm:$0xf]
    %v1474 = vld [vmem:[#allocation3] ss:$8 sm:$0xf0]
    %v1475 = vor.u32 %v1473, %v1474
    %s1476 = scalar_lea.vmem [#allocation3], 64
    %v1477 = vld [vmem:[%s1476] ss:$8 sm:$0xf]
    %v1478 = vtanh.pop %v1475
    %v1479 = vtanh.pop %v1477
    %v1480 = vmul.f32 %v1478, 0.5
    %v1481 = vmul.f32 %v1479, 0.5
    %v1482 = vadd.f32 %v1480, 0.5
    %v1483 = vadd.f32 %v1481, 0.5
    %v1485 = vrot.slane %v1479, 1
    %v1487 = vmul.f32 %v1482, %v1485
    %vm1488 = vcmp.lt.s32.totalorder %v1470, 128
    %vm1489 = vcmp.lt.s32.totalorder %v1471, 128
    %vm1490 = vcmp.lt.s32.totalorder %v1472, 128
    %v1492 = vperm.slane %v1487, 0
    %v1493 = vperm.slane %v1487, 1
    %v1494 = vperm.slane %v1487, 2
    %v1498 = vsel %vm1488, %v1492, 0.0
    %v1499 = vsel %vm1489, %v1493, 0.0
    %v1500 = vsel %vm1490, %v1494, 0.0
    %v1502 = vrot.slane %v1482, 3
    %v1504 = vmul.f32 %v1502, 0.0
    %v1508 = vrot.slane %v1499, 7
    %v1509 = vrot.slane %v1500, 6
    %vm1510 = vcmask 1040384
    %v1511 = vsel %vm1510, %v1498, %v1508
    %vm1512 = vcmask 1041408
    %v1513 = vsel %vm1512, %v1511, %v1509
    %v1515 = vadd.f32 %v1504, %v1513
    %v1516 = vtanh.pop %v1515
    %v1518 = vrot.slane %v1482, 6
    %v1519 = vrot.slane %v1483, 6
    %v1520 = vsel %vm1512, %v1518, %v1519
    %v1522 = vmul.f32 %v1520, %v1516
    %s1523 = scalar_lea.vmem [#allocation3], 1
    %v1524 = vld [vmem:[%s1523] ss:$8 sm:$0xf]
    %v1525 = vld [vmem:[%s1523] ss:$8 sm:$0xf0]
    %v1526 = vor.u32 %v1524, %v1525
    %s1527 = scalar_lea.vmem [#allocation3], 65
    %v1528 = vld [vmem:[%s1527] ss:$8 sm:$0xf]
    %v1530 = vperm.slane %v1522, 0
    %v1531 = vperm.slane %v1522, 1
    %v1532 = vperm.slane %v1522, 2
    %1536 = vmatpush.msra.mxu0 %v1073
    %1537 = vmatpush.msra.mxu0 %v1061
    %1538 = vmatpush.msra.mxu0 %v1049
    %1539 = vmatpush.msra.mxu0 %v1037
    %1540 = vmatpush.msra.mxu0 %v1025
    %1541 = vmatpush.msra.mxu0 %v1013
    %1542 = vmatpush.msra.mxu0 %v1001
    %1543 = vmatpush.msra.mxu0 %v989
    %1544 = vmatpush.msra.mxu0 %v977
    %1545 = vmatpush.msra.mxu0 %v965
    %1546 = vmatpush.msra.mxu0 %v953
    %1547 = vmatpush.msra.mxu0 %v941
    %1548 = vmatpush.msra.mxu0 %v929
    %1549 = vmatpush.msra.mxu0 %v917
    %1550 = vmatpush.msra.mxu0 %v905
    %1551 = vmatpush.msra.mxu0 %v893
    %1552 = vmatmul.f32.gmra.mxu0 %v1530
    %v1553 = vpop.f32.mrf.mxu0
    %v1554 = vadd.f32 0.0, %v1553
    %1555 = vdwg.mxu0
    %1556 = vmatpush.msra.mxu0 %v1265
    %1557 = vmatpush.msra.mxu0 %v1253
    %1558 = vmatpush.msra.mxu0 %v1241
    %1559 = vmatpush.msra.mxu0 %v1229
    %1560 = vmatpush.msra.mxu0 %v1217
    %1561 = vmatpush.msra.mxu0 %v1205
    %1562 = vmatpush.msra.mxu0 %v1193
    %1563 = vmatpush.msra.mxu0 %v1181
    %1564 = vmatpush.msra.mxu0 %v1169
    %1565 = vmatpush.msra.mxu0 %v1157
    %1566 = vmatpush.msra.mxu0 %v1145
    %1567 = vmatpush.msra.mxu0 %v1133
    %1568 = vmatpush.msra.mxu0 %v1121
    %1569 = vmatpush.msra.mxu0 %v1109
    %1570 = vmatpush.msra.mxu0 %v1097
    %1571 = vmatpush.msra.mxu0 %v1085
    %1572 = vmatmul.f32.gmra.mxu0 %v1531
    %v1573 = vpop.f32.mrf.mxu0
    %v1574 = vadd.f32 %v1554, %v1573
    %1575 = vdwg.mxu0
    %1576 = vmatpush.msra.mxu0 %v1457
    %1577 = vmatpush.msra.mxu0 %v1445
    %1578 = vmatpush.msra.mxu0 %v1433
    %1579 = vmatpush.msra.mxu0 %v1421
    %1580 = vmatpush.msra.mxu0 %v1409
    %1581 = vmatpush.msra.mxu0 %v1397
    %1582 = vmatpush.msra.mxu0 %v1385
    %1583 = vmatpush.msra.mxu0 %v1373
    %1584 = vmatpush.msra.mxu0 %v1361
    %1585 = vmatpush.msra.mxu0 %v1349
    %1586 = vmatpush.msra.mxu0 %v1337
    %1587 = vmatpush.msra.mxu0 %v1325
    %1588 = vmatpush.msra.mxu0 %v1313
    %1589 = vmatpush.msra.mxu0 %v1301
    %1590 = vmatpush.msra.mxu0 %v1289
    %1591 = vmatpush.msra.mxu0 %v1277
    %1592 = vmatmul.f32.gmra.mxu0 %v1532
    %v1593 = vpop.f32.mrf.mxu0
    %v1594 = vadd.f32 %v1574, %v1593
    %1595 = vdwg.mxu0
    %1596 = vmatpush.msra.mxu0 %v1074
    %1597 = vmatpush.msra.mxu0 %v1062
    %1598 = vmatpush.msra.mxu0 %v1050
    %1599 = vmatpush.msra.mxu0 %v1038
    %1600 = vmatpush.msra.mxu0 %v1026
    %1601 = vmatpush.msra.mxu0 %v1014
    %1602 = vmatpush.msra.mxu0 %v1002
    %1603 = vmatpush.msra.mxu0 %v990
    %1604 = vmatpush.msra.mxu0 %v978
    %1605 = vmatpush.msra.mxu0 %v966
    %1606 = vmatpush.msra.mxu0 %v954
    %1607 = vmatpush.msra.mxu0 %v942
    %1608 = vmatpush.msra.mxu0 %v930
    %1609 = vmatpush.msra.mxu0 %v918
    %1610 = vmatpush.msra.mxu0 %v906
    %1611 = vmatpush.msra.mxu0 %v894
    %1612 = vmatmul.f32.gmra.mxu0 %v1530
    %v1613 = vpop.f32.mrf.mxu0
    %v1614 = vadd.f32 0.0, %v1613
    %1615 = vdwg.mxu0
    %1616 = vmatpush.msra.mxu0 %v1266
    %1617 = vmatpush.msra.mxu0 %v1254
    %1618 = vmatpush.msra.mxu0 %v1242
    %1619 = vmatpush.msra.mxu0 %v1230
    %1620 = vmatpush.msra.mxu0 %v1218
    %1621 = vmatpush.msra.mxu0 %v1206
    %1622 = vmatpush.msra.mxu0 %v1194
    %1623 = vmatpush.msra.mxu0 %v1182
    %1624 = vmatpush.msra.mxu0 %v1170
    %1625 = vmatpush.msra.mxu0 %v1158
    %1626 = vmatpush.msra.mxu0 %v1146
    %1627 = vmatpush.msra.mxu0 %v1134
    %1628 = vmatpush.msra.mxu0 %v1122
    %1629 = vmatpush.msra.mxu0 %v1110
    %1630 = vmatpush.msra.mxu0 %v1098
    %1631 = vmatpush.msra.mxu0 %v1086
    %1632 = vmatmul.f32.gmra.mxu0 %v1531
    %v1633 = vpop.f32.mrf.mxu0
    %v1634 = vadd.f32 %v1614, %v1633
    %1635 = vdwg.mxu0
    %1636 = vmatpush.msra.mxu0 %v1458
    %1637 = vmatpush.msra.mxu0 %v1446
    %1638 = vmatpush.msra.mxu0 %v1434
    %1639 = vmatpush.msra.mxu0 %v1422
    %1640 = vmatpush.msra.mxu0 %v1410
    %1641 = vmatpush.msra.mxu0 %v1398
    %1642 = vmatpush.msra.mxu0 %v1386
    %1643 = vmatpush.msra.mxu0 %v1374
    %1644 = vmatpush.msra.mxu0 %v1362
    %1645 = vmatpush.msra.mxu0 %v1350
    %1646 = vmatpush.msra.mxu0 %v1338
    %1647 = vmatpush.msra.mxu0 %v1326
    %1648 = vmatpush.msra.mxu0 %v1314
    %1649 = vmatpush.msra.mxu0 %v1302
    %1650 = vmatpush.msra.mxu0 %v1290
    %1651 = vmatpush.msra.mxu0 %v1278
    %1652 = vmatmul.f32.gmra.mxu0 %v1532
    %v1653 = vpop.f32.mrf.mxu0
    %v1654 = vadd.f32 %v1634, %v1653
    %1655 = vdwg.mxu0
    %1656 = vmatpush.msra.mxu0 %v1075
    %1657 = vmatpush.msra.mxu0 %v1063
    %1658 = vmatpush.msra.mxu0 %v1051
    %1659 = vmatpush.msra.mxu0 %v1039
    %1660 = vmatpush.msra.mxu0 %v1027
    %1661 = vmatpush.msra.mxu0 %v1015
    %1662 = vmatpush.msra.mxu0 %v1003
    %1663 = vmatpush.msra.mxu0 %v991
    %1664 = vmatpush.msra.mxu0 %v979
    %1665 = vmatpush.msra.mxu0 %v967
    %1666 = vmatpush.msra.mxu0 %v955
    %1667 = vmatpush.msra.mxu0 %v943
    %1668 = vmatpush.msra.mxu0 %v931
    %1669 = vmatpush.msra.mxu0 %v919
    %1670 = vmatpush.msra.mxu0 %v907
    %1671 = vmatpush.msra.mxu0 %v895
    %1672 = vmatmul.f32.gmra.mxu0 %v1530
    %v1673 = vpop.f32.mrf.mxu0
    %v1674 = vadd.f32 0.0, %v1673
    %1675 = vdwg.mxu0
    %1676 = vmatpush.msra.mxu0 %v1267
    %1677 = vmatpush.msra.mxu0 %v1255
    %1678 = vmatpush.msra.mxu0 %v1243
    %1679 = vmatpush.msra.mxu0 %v1231
    %1680 = vmatpush.msra.mxu0 %v1219
    %1681 = vmatpush.msra.mxu0 %v1207
    %1682 = vmatpush.msra.mxu0 %v1195
    %1683 = vmatpush.msra.mxu0 %v1183
    %1684 = vmatpush.msra.mxu0 %v1171
    %1685 = vmatpush.msra.mxu0 %v1159
    %1686 = vmatpush.msra.mxu0 %v1147
    %1687 = vmatpush.msra.mxu0 %v1135
    %1688 = vmatpush.msra.mxu0 %v1123
    %1689 = vmatpush.msra.mxu0 %v1111
    %1690 = vmatpush.msra.mxu0 %v1099
    %1691 = vmatpush.msra.mxu0 %v1087
    %1692 = vmatmul.f32.gmra.mxu0 %v1531
    %v1693 = vpop.f32.mrf.mxu0
    %v1694 = vadd.f32 %v1674, %v1693
    %1695 = vdwg.mxu0
    %1696 = vmatpush.msra.mxu0 %v1459
    %1697 = vmatpush.msra.mxu0 %v1447
    %1698 = vmatpush.msra.mxu0 %v1435
    %1699 = vmatpush.msra.mxu0 %v1423
    %1700 = vmatpush.msra.mxu0 %v1411
    %1701 = vmatpush.msra.mxu0 %v1399
    %1702 = vmatpush.msra.mxu0 %v1387
    %1703 = vmatpush.msra.mxu0 %v1375
    %1704 = vmatpush.msra.mxu0 %v1363
    %1705 = vmatpush.msra.mxu0 %v1351
    %1706 = vmatpush.msra.mxu0 %v1339
    %1707 = vmatpush.msra.mxu0 %v1327
    %1708 = vmatpush.msra.mxu0 %v1315
    %1709 = vmatpush.msra.mxu0 %v1303
    %1710 = vmatpush.msra.mxu0 %v1291
    %1711 = vmatpush.msra.mxu0 %v1279
    %1712 = vmatmul.f32.gmra.mxu0 %v1532
    %v1713 = vpop.f32.mrf.mxu0
    %v1714 = vadd.f32 %v1694, %v1713
    %1715 = vdwg.mxu0
    %1716 = vmatpush.msra.mxu0 %v1076
    %1717 = vmatpush.msra.mxu0 %v1064
    %1718 = vmatpush.msra.mxu0 %v1052
    %1719 = vmatpush.msra.mxu0 %v1040
    %1720 = vmatpush.msra.mxu0 %v1028
    %1721 = vmatpush.msra.mxu0 %v1016
    %1722 = vmatpush.msra.mxu0 %v1004
    %1723 = vmatpush.msra.mxu0 %v992
    %1724 = vmatpush.msra.mxu0 %v980
    %1725 = vmatpush.msra.mxu0 %v968
    %1726 = vmatpush.msra.mxu0 %v956
    %1727 = vmatpush.msra.mxu0 %v944
    %1728 = vmatpush.msra.mxu0 %v932
    %1729 = vmatpush.msra.mxu0 %v920
    %1730 = vmatpush.msra.mxu0 %v908
    %1731 = vmatpush.msra.mxu0 %v896
    %1732 = vmatmul.f32.gmra.mxu0 %v1530
    %v1733 = vpop.f32.mrf.mxu0
    %v1734 = vadd.f32 0.0, %v1733
    %1735 = vdwg.mxu0
    %1736 = vmatpush.msra.mxu0 %v1268
    %1737 = vmatpush.msra.mxu0 %v1256
    %1738 = vmatpush.msra.mxu0 %v1244
    %1739 = vmatpush.msra.mxu0 %v1232
    %1740 = vmatpush.msra.mxu0 %v1220
    %1741 = vmatpush.msra.mxu0 %v1208
    %1742 = vmatpush.msra.mxu0 %v1196
    %1743 = vmatpush.msra.mxu0 %v1184
    %1744 = vmatpush.msra.mxu0 %v1172
    %1745 = vmatpush.msra.mxu0 %v1160
    %1746 = vmatpush.msra.mxu0 %v1148
    %1747 = vmatpush.msra.mxu0 %v1136
    %1748 = vmatpush.msra.mxu0 %v1124
    %1749 = vmatpush.msra.mxu0 %v1112
    %1750 = vmatpush.msra.mxu0 %v1100
    %1751 = vmatpush.msra.mxu0 %v1088
    %1752 = vmatmul.f32.gmra.mxu0 %v1531
    %v1753 = vpop.f32.mrf.mxu0
    %v1754 = vadd.f32 %v1734, %v1753
    %1755 = vdwg.mxu0
    %1756 = vmatpush.msra.mxu0 %v1460
    %1757 = vmatpush.msra.mxu0 %v1448
    %1758 = vmatpush.msra.mxu0 %v1436
    %1759 = vmatpush.msra.mxu0 %v1424
    %1760 = vmatpush.msra.mxu0 %v1412
    %1761 = vmatpush.msra.mxu0 %v1400
    %1762 = vmatpush.msra.mxu0 %v1388
    %1763 = vmatpush.msra.mxu0 %v1376
    %1764 = vmatpush.msra.mxu0 %v1364
    %1765 = vmatpush.msra.mxu0 %v1352
    %1766 = vmatpush.msra.mxu0 %v1340
    %1767 = vmatpush.msra.mxu0 %v1328
    %1768 = vmatpush.msra.mxu0 %v1316
    %1769 = vmatpush.msra.mxu0 %v1304
    %1770 = vmatpush.msra.mxu0 %v1292
    %1771 = vmatpush.msra.mxu0 %v1280
    %1772 = vmatmul.f32.gmra.mxu0 %v1532
    %v1773 = vpop.f32.mrf.mxu0
    %v1774 = vadd.f32 %v1754, %v1773
    %1775 = vdwg.mxu0
    %1776 = vmatpush.msra.mxu0 %v1077
    %1777 = vmatpush.msra.mxu0 %v1065
    %1778 = vmatpush.msra.mxu0 %v1053
    %1779 = vmatpush.msra.mxu0 %v1041
    %1780 = vmatpush.msra.mxu0 %v1029
    %1781 = vmatpush.msra.mxu0 %v1017
    %1782 = vmatpush.msra.mxu0 %v1005
    %1783 = vmatpush.msra.mxu0 %v993
    %1784 = vmatpush.msra.mxu0 %v981
    %1785 = vmatpush.msra.mxu0 %v969
    %1786 = vmatpush.msra.mxu0 %v957
    %1787 = vmatpush.msra.mxu0 %v945
    %1788 = vmatpush.msra.mxu0 %v933
    %1789 = vmatpush.msra.mxu0 %v921
    %1790 = vmatpush.msra.mxu0 %v909
    %1791 = vmatpush.msra.mxu0 %v897
    %1792 = vmatmul.f32.gmra.mxu0 %v1530
    %v1793 = vpop.f32.mrf.mxu0
    %v1794 = vadd.f32 0.0, %v1793
    %1795 = vdwg.mxu0
    %1796 = vmatpush.msra.mxu0 %v1269
    %1797 = vmatpush.msra.mxu0 %v1257
    %1798 = vmatpush.msra.mxu0 %v1245
    %1799 = vmatpush.msra.mxu0 %v1233
    %1800 = vmatpush.msra.mxu0 %v1221
    %1801 = vmatpush.msra.mxu0 %v1209
    %1802 = vmatpush.msra.mxu0 %v1197
    %1803 = vmatpush.msra.mxu0 %v1185
    %1804 = vmatpush.msra.mxu0 %v1173
    %1805 = vmatpush.msra.mxu0 %v1161
    %1806 = vmatpush.msra.mxu0 %v1149
    %1807 = vmatpush.msra.mxu0 %v1137
    %1808 = vmatpush.msra.mxu0 %v1125
    %1809 = vmatpush.msra.mxu0 %v1113
    %1810 = vmatpush.msra.mxu0 %v1101
    %1811 = vmatpush.msra.mxu0 %v1089
    %1812 = vmatmul.f32.gmra.mxu0 %v1531
    %v1813 = vpop.f32.mrf.mxu0
    %v1814 = vadd.f32 %v1794, %v1813
    %1815 = vdwg.mxu0
    %1816 = vmatpush.msra.mxu0 %v1461
    %1817 = vmatpush.msra.mxu0 %v1449
    %1818 = vmatpush.msra.mxu0 %v1437
    %1819 = vmatpush.msra.mxu0 %v1425
    %1820 = vmatpush.msra.mxu0 %v1413
    %1821 = vmatpush.msra.mxu0 %v1401
    %1822 = vmatpush.msra.mxu0 %v1389
    %1823 = vmatpush.msra.mxu0 %v1377
    %1824 = vmatpush.msra.mxu0 %v1365
    %1825 = vmatpush.msra.mxu0 %v1353
    %1826 = vmatpush.msra.mxu0 %v1341
    %1827 = vmatpush.msra.mxu0 %v1329
    %1828 = vmatpush.msra.mxu0 %v1317
    %1829 = vmatpush.msra.mxu0 %v1305
    %1830 = vmatpush.msra.mxu0 %v1293
    %1831 = vmatpush.msra.mxu0 %v1281
    %1832 = vmatmul.f32.gmra.mxu0 %v1532
    %v1833 = vpop.f32.mrf.mxu0
    %v1834 = vadd.f32 %v1814, %v1833
    %1835 = vdwg.mxu0
    %1836 = vmatpush.msra.mxu0 %v1078
    %1837 = vmatpush.msra.mxu0 %v1066
    %1838 = vmatpush.msra.mxu0 %v1054
    %1839 = vmatpush.msra.mxu0 %v1042
    %1840 = vmatpush.msra.mxu0 %v1030
    %1841 = vmatpush.msra.mxu0 %v1018
    %1842 = vmatpush.msra.mxu0 %v1006
    %1843 = vmatpush.msra.mxu0 %v994
    %1844 = vmatpush.msra.mxu0 %v982
    %1845 = vmatpush.msra.mxu0 %v970
    %1846 = vmatpush.msra.mxu0 %v958
    %1847 = vmatpush.msra.mxu0 %v946
    %1848 = vmatpush.msra.mxu0 %v934
    %1849 = vmatpush.msra.mxu0 %v922
    %1850 = vmatpush.msra.mxu0 %v910
    %1851 = vmatpush.msra.mxu0 %v898
    %1852 = vmatmul.f32.gmra.mxu0 %v1530
    %v1853 = vpop.f32.mrf.mxu0
    %v1854 = vadd.f32 0.0, %v1853
    %1855 = vdwg.mxu0
    %1856 = vmatpush.msra.mxu0 %v1270
    %1857 = vmatpush.msra.mxu0 %v1258
    %1858 = vmatpush.msra.mxu0 %v1246
    %1859 = vmatpush.msra.mxu0 %v1234
    %1860 = vmatpush.msra.mxu0 %v1222
    %1861 = vmatpush.msra.mxu0 %v1210
    %1862 = vmatpush.msra.mxu0 %v1198
    %1863 = vmatpush.msra.mxu0 %v1186
    %1864 = vmatpush.msra.mxu0 %v1174
    %1865 = vmatpush.msra.mxu0 %v1162
    %1866 = vmatpush.msra.mxu0 %v1150
    %1867 = vmatpush.msra.mxu0 %v1138
    %1868 = vmatpush.msra.mxu0 %v1126
    %1869 = vmatpush.msra.mxu0 %v1114
    %1870 = vmatpush.msra.mxu0 %v1102
    %1871 = vmatpush.msra.mxu0 %v1090
    %1872 = vmatmul.f32.gmra.mxu0 %v1531
    %v1873 = vpop.f32.mrf.mxu0
    %v1874 = vadd.f32 %v1854, %v1873
    %1875 = vdwg.mxu0
    %1876 = vmatpush.msra.mxu0 %v1462
    %1877 = vmatpush.msra.mxu0 %v1450
    %1878 = vmatpush.msra.mxu0 %v1438
    %1879 = vmatpush.msra.mxu0 %v1426
    %1880 = vmatpush.msra.mxu0 %v1414
    %1881 = vmatpush.msra.mxu0 %v1402
    %1882 = vmatpush.msra.mxu0 %v1390
    %1883 = vmatpush.msra.mxu0 %v1378
    %1884 = vmatpush.msra.mxu0 %v1366
    %1885 = vmatpush.msra.mxu0 %v1354
    %1886 = vmatpush.msra.mxu0 %v1342
    %1887 = vmatpush.msra.mxu0 %v1330
    %1888 = vmatpush.msra.mxu0 %v1318
    %1889 = vmatpush.msra.mxu0 %v1306
    %1890 = vmatpush.msra.mxu0 %v1294
    %1891 = vmatpush.msra.mxu0 %v1282
    %1892 = vmatmul.f32.gmra.mxu0 %v1532
    %v1893 = vpop.f32.mrf.mxu0
    %v1894 = vadd.f32 %v1874, %v1893
    %1895 = vdwg.mxu0
    %1896 = vmatpush.msra.mxu0 %v1079
    %1897 = vmatpush.msra.mxu0 %v1067
    %1898 = vmatpush.msra.mxu0 %v1055
    %1899 = vmatpush.msra.mxu0 %v1043
    %1900 = vmatpush.msra.mxu0 %v1031
    %1901 = vmatpush.msra.mxu0 %v1019
    %1902 = vmatpush.msra.mxu0 %v1007
    %1903 = vmatpush.msra.mxu0 %v995
    %1904 = vmatpush.msra.mxu0 %v983
    %1905 = vmatpush.msra.mxu0 %v971
    %1906 = vmatpush.msra.mxu0 %v959
    %1907 = vmatpush.msra.mxu0 %v947
    %1908 = vmatpush.msra.mxu0 %v935
    %1909 = vmatpush.msra.mxu0 %v923
    %1910 = vmatpush.msra.mxu0 %v911
    %1911 = vmatpush.msra.mxu0 %v899
    %1912 = vmatmul.f32.gmra.mxu0 %v1530
    %v1913 = vpop.f32.mrf.mxu0
    %v1914 = vadd.f32 0.0, %v1913
    %1915 = vdwg.mxu0
    %1916 = vmatpush.msra.mxu0 %v1271
    %1917 = vmatpush.msra.mxu0 %v1259
    %1918 = vmatpush.msra.mxu0 %v1247
    %1919 = vmatpush.msra.mxu0 %v1235
    %1920 = vmatpush.msra.mxu0 %v1223
    %1921 = vmatpush.msra.mxu0 %v1211
    %1922 = vmatpush.msra.mxu0 %v1199
    %1923 = vmatpush.msra.mxu0 %v1187
    %1924 = vmatpush.msra.mxu0 %v1175
    %1925 = vmatpush.msra.mxu0 %v1163
    %1926 = vmatpush.msra.mxu0 %v1151
    %1927 = vmatpush.msra.mxu0 %v1139
    %1928 = vmatpush.msra.mxu0 %v1127
    %1929 = vmatpush.msra.mxu0 %v1115
    %1930 = vmatpush.msra.mxu0 %v1103
    %1931 = vmatpush.msra.mxu0 %v1091
    %1932 = vmatmul.f32.gmra.mxu0 %v1531
    %v1933 = vpop.f32.mrf.mxu0
    %v1934 = vadd.f32 %v1914, %v1933
    %1935 = vdwg.mxu0
    %1936 = vmatpush.msra.mxu0 %v1463
    %1937 = vmatpush.msra.mxu0 %v1451
    %1938 = vmatpush.msra.mxu0 %v1439
    %1939 = vmatpush.msra.mxu0 %v1427
    %1940 = vmatpush.msra.mxu0 %v1415
    %1941 = vmatpush.msra.mxu0 %v1403
    %1942 = vmatpush.msra.mxu0 %v1391
    %1943 = vmatpush.msra.mxu0 %v1379
    %1944 = vmatpush.msra.mxu0 %v1367
    %1945 = vmatpush.msra.mxu0 %v1355
    %1946 = vmatpush.msra.mxu0 %v1343
    %1947 = vmatpush.msra.mxu0 %v1331
    %1948 = vmatpush.msra.mxu0 %v1319
    %1949 = vmatpush.msra.mxu0 %v1307
    %1950 = vmatpush.msra.mxu0 %v1295
    %1951 = vmatpush.msra.mxu0 %v1283
    %1952 = vmatmul.f32.gmra.mxu0 %v1532
    %v1953 = vpop.f32.mrf.mxu0
    %v1954 = vadd.f32 %v1934, %v1953
    %1955 = vdwg.mxu0
    %1956 = vmatpush.msra.mxu0 %v1080
    %1957 = vmatpush.msra.mxu0 %v1068
    %1958 = vmatpush.msra.mxu0 %v1056
    %1959 = vmatpush.msra.mxu0 %v1044
    %1960 = vmatpush.msra.mxu0 %v1032
    %1961 = vmatpush.msra.mxu0 %v1020
    %1962 = vmatpush.msra.mxu0 %v1008
    %1963 = vmatpush.msra.mxu0 %v996
    %1964 = vmatpush.msra.mxu0 %v984
    %1965 = vmatpush.msra.mxu0 %v972
    %1966 = vmatpush.msra.mxu0 %v960
    %1967 = vmatpush.msra.mxu0 %v948
    %1968 = vmatpush.msra.mxu0 %v936
    %1969 = vmatpush.msra.mxu0 %v924
    %1970 = vmatpush.msra.mxu0 %v912
    %1971 = vmatpush.msra.mxu0 %v900
    %1972 = vmatmul.f32.gmra.mxu0 %v1530
    %v1973 = vpop.f32.mrf.mxu0
    %v1974 = vadd.f32 0.0, %v1973
    %1975 = vdwg.mxu0
    %1976 = vmatpush.msra.mxu0 %v1272
    %1977 = vmatpush.msra.mxu0 %v1260
    %1978 = vmatpush.msra.mxu0 %v1248
    %1979 = vmatpush.msra.mxu0 %v1236
    %1980 = vmatpush.msra.mxu0 %v1224
    %1981 = vmatpush.msra.mxu0 %v1212
    %1982 = vmatpush.msra.mxu0 %v1200
    %1983 = vmatpush.msra.mxu0 %v1188
    %1984 = vmatpush.msra.mxu0 %v1176
    %1985 = vmatpush.msra.mxu0 %v1164
    %1986 = vmatpush.msra.mxu0 %v1152
    %1987 = vmatpush.msra.mxu0 %v1140
    %1988 = vmatpush.msra.mxu0 %v1128
    %1989 = vmatpush.msra.mxu0 %v1116
    %1990 = vmatpush.msra.mxu0 %v1104
    %1991 = vmatpush.msra.mxu0 %v1092
    %1992 = vmatmul.f32.gmra.mxu0 %v1531
    %v1993 = vpop.f32.mrf.mxu0
    %v1994 = vadd.f32 %v1974, %v1993
    %1995 = vdwg.mxu0
    %1996 = vmatpush.msra.mxu0 %v1464
    %1997 = vmatpush.msra.mxu0 %v1452
    %1998 = vmatpush.msra.mxu0 %v1440
    %1999 = vmatpush.msra.mxu0 %v1428
    %2000 = vmatpush.msra.mxu0 %v1416
    %2001 = vmatpush.msra.mxu0 %v1404
    %2002 = vmatpush.msra.mxu0 %v1392
    %2003 = vmatpush.msra.mxu0 %v1380
    %2004 = vmatpush.msra.mxu0 %v1368
    %2005 = vmatpush.msra.mxu0 %v1356
    %2006 = vmatpush.msra.mxu0 %v1344
    %2007 = vmatpush.msra.mxu0 %v1332
    %2008 = vmatpush.msra.mxu0 %v1320
    %2009 = vmatpush.msra.mxu0 %v1308
    %2010 = vmatpush.msra.mxu0 %v1296
    %2011 = vmatpush.msra.mxu0 %v1284
    %2012 = vmatmul.f32.gmra.mxu0 %v1532
    %v2013 = vpop.f32.mrf.mxu0
    %v2014 = vadd.f32 %v1994, %v2013
    %2015 = vdwg.mxu0
    %2016 = vmatpush.msra.mxu0 %v1081
    %2017 = vmatpush.msra.mxu0 %v1069
    %2018 = vmatpush.msra.mxu0 %v1057
    %2019 = vmatpush.msra.mxu0 %v1045
    %2020 = vmatpush.msra.mxu0 %v1033
    %2021 = vmatpush.msra.mxu0 %v1021
    %2022 = vmatpush.msra.mxu0 %v1009
    %2023 = vmatpush.msra.mxu0 %v997
    %2024 = vmatpush.msra.mxu0 %v985
    %2025 = vmatpush.msra.mxu0 %v973
    %2026 = vmatpush.msra.mxu0 %v961
    %2027 = vmatpush.msra.mxu0 %v949
    %2028 = vmatpush.msra.mxu0 %v937
    %2029 = vmatpush.msra.mxu0 %v925
    %2030 = vmatpush.msra.mxu0 %v913
    %2031 = vmatpush.msra.mxu0 %v901
    %2032 = vmatmul.f32.gmra.mxu0 %v1530
    %v2033 = vpop.f32.mrf.mxu0
    %v2034 = vadd.f32 0.0, %v2033
    %2035 = vdwg.mxu0
    %2036 = vmatpush.msra.mxu0 %v1273
    %2037 = vmatpush.msra.mxu0 %v1261
    %2038 = vmatpush.msra.mxu0 %v1249
    %2039 = vmatpush.msra.mxu0 %v1237
    %2040 = vmatpush.msra.mxu0 %v1225
    %2041 = vmatpush.msra.mxu0 %v1213
    %2042 = vmatpush.msra.mxu0 %v1201
    %2043 = vmatpush.msra.mxu0 %v1189
    %2044 = vmatpush.msra.mxu0 %v1177
    %2045 = vmatpush.msra.mxu0 %v1165
    %2046 = vmatpush.msra.mxu0 %v1153
    %2047 = vmatpush.msra.mxu0 %v1141
    %2048 = vmatpush.msra.mxu0 %v1129
    %2049 = vmatpush.msra.mxu0 %v1117
    %2050 = vmatpush.msra.mxu0 %v1105
    %2051 = vmatpush.msra.mxu0 %v1093
    %2052 = vmatmul.f32.gmra.mxu0 %v1531
    %v2053 = vpop.f32.mrf.mxu0
    %v2054 = vadd.f32 %v2034, %v2053
    %2055 = vdwg.mxu0
    %2056 = vmatpush.msra.mxu0 %v1465
    %2057 = vmatpush.msra.mxu0 %v1453
    %2058 = vmatpush.msra.mxu0 %v1441
    %2059 = vmatpush.msra.mxu0 %v1429
    %2060 = vmatpush.msra.mxu0 %v1417
    %2061 = vmatpush.msra.mxu0 %v1405
    %2062 = vmatpush.msra.mxu0 %v1393
    %2063 = vmatpush.msra.mxu0 %v1381
    %2064 = vmatpush.msra.mxu0 %v1369
    %2065 = vmatpush.msra.mxu0 %v1357
    %2066 = vmatpush.msra.mxu0 %v1345
    %2067 = vmatpush.msra.mxu0 %v1333
    %2068 = vmatpush.msra.mxu0 %v1321
    %2069 = vmatpush.msra.mxu0 %v1309
    %2070 = vmatpush.msra.mxu0 %v1297
    %2071 = vmatpush.msra.mxu0 %v1285
    %2072 = vmatmul.f32.gmra.mxu0 %v1532
    %v2073 = vpop.f32.mrf.mxu0
    %v2074 = vadd.f32 %v2054, %v2073
    %2075 = vdwg.mxu0
    %2076 = vmatpush.msra.mxu0 %v1082
    %2077 = vmatpush.msra.mxu0 %v1070
    %2078 = vmatpush.msra.mxu0 %v1058
    %2079 = vmatpush.msra.mxu0 %v1046
    %2080 = vmatpush.msra.mxu0 %v1034
    %2081 = vmatpush.msra.mxu0 %v1022
    %2082 = vmatpush.msra.mxu0 %v1010
    %2083 = vmatpush.msra.mxu0 %v998
    %2084 = vmatpush.msra.mxu0 %v986
    %2085 = vmatpush.msra.mxu0 %v974
    %2086 = vmatpush.msra.mxu0 %v962
    %2087 = vmatpush.msra.mxu0 %v950
    %2088 = vmatpush.msra.mxu0 %v938
    %2089 = vmatpush.msra.mxu0 %v926
    %2090 = vmatpush.msra.mxu0 %v914
    %2091 = vmatpush.msra.mxu0 %v902
    %2092 = vmatmul.f32.gmra.mxu0 %v1530
    %v2093 = vpop.f32.mrf.mxu0
    %v2094 = vadd.f32 0.0, %v2093
    %2095 = vdwg.mxu0
    %2096 = vmatpush.msra.mxu0 %v1274
    %2097 = vmatpush.msra.mxu0 %v1262
    %2098 = vmatpush.msra.mxu0 %v1250
    %2099 = vmatpush.msra.mxu0 %v1238
    %2100 = vmatpush.msra.mxu0 %v1226
    %2101 = vmatpush.msra.mxu0 %v1214
    %2102 = vmatpush.msra.mxu0 %v1202
    %2103 = vmatpush.msra.mxu0 %v1190
    %2104 = vmatpush.msra.mxu0 %v1178
    %2105 = vmatpush.msra.mxu0 %v1166
    %2106 = vmatpush.msra.mxu0 %v1154
    %2107 = vmatpush.msra.mxu0 %v1142
    %2108 = vmatpush.msra.mxu0 %v1130
    %2109 = vmatpush.msra.mxu0 %v1118
    %2110 = vmatpush.msra.mxu0 %v1106
    %2111 = vmatpush.msra.mxu0 %v1094
    %2112 = vmatmul.f32.gmra.mxu0 %v1531
    %v2113 = vpop.f32.mrf.mxu0
    %v2114 = vadd.f32 %v2094, %v2113
    %2115 = vdwg.mxu0
    %2116 = vmatpush.msra.mxu0 %v1466
    %2117 = vmatpush.msra.mxu0 %v1454
    %2118 = vmatpush.msra.mxu0 %v1442
    %2119 = vmatpush.msra.mxu0 %v1430
    %2120 = vmatpush.msra.mxu0 %v1418
    %2121 = vmatpush.msra.mxu0 %v1406
    %2122 = vmatpush.msra.mxu0 %v1394
    %2123 = vmatpush.msra.mxu0 %v1382
    %2124 = vmatpush.msra.mxu0 %v1370
    %2125 = vmatpush.msra.mxu0 %v1358
    %2126 = vmatpush.msra.mxu0 %v1346
    %2127 = vmatpush.msra.mxu0 %v1334
    %2128 = vmatpush.msra.mxu0 %v1322
    %2129 = vmatpush.msra.mxu0 %v1310
    %2130 = vmatpush.msra.mxu0 %v1298
    %2131 = vmatpush.msra.mxu0 %v1286
    %2132 = vmatmul.f32.gmra.mxu0 %v1532
    %v2133 = vpop.f32.mrf.mxu0
    %v2134 = vadd.f32 %v2114, %v2133
    %2135 = vdwg.mxu0
    %2136 = vmatpush.msra.mxu0 %v1083
    %2137 = vmatpush.msra.mxu0 %v1071
    %2138 = vmatpush.msra.mxu0 %v1059
    %2139 = vmatpush.msra.mxu0 %v1047
    %2140 = vmatpush.msra.mxu0 %v1035
    %2141 = vmatpush.msra.mxu0 %v1023
    %2142 = vmatpush.msra.mxu0 %v1011
    %2143 = vmatpush.msra.mxu0 %v999
    %2144 = vmatpush.msra.mxu0 %v987
    %2145 = vmatpush.msra.mxu0 %v975
    %2146 = vmatpush.msra.mxu0 %v963
    %2147 = vmatpush.msra.mxu0 %v951
    %2148 = vmatpush.msra.mxu0 %v939
    %2149 = vmatpush.msra.mxu0 %v927
    %2150 = vmatpush.msra.mxu0 %v915
    %2151 = vmatpush.msra.mxu0 %v903
    %2152 = vmatmul.f32.gmra.mxu0 %v1530
    %v2153 = vpop.f32.mrf.mxu0
    %v2154 = vadd.f32 0.0, %v2153
    %2155 = vdwg.mxu0
    %2156 = vmatpush.msra.mxu0 %v1275
    %2157 = vmatpush.msra.mxu0 %v1263
    %2158 = vmatpush.msra.mxu0 %v1251
    %2159 = vmatpush.msra.mxu0 %v1239
    %2160 = vmatpush.msra.mxu0 %v1227
    %2161 = vmatpush.msra.mxu0 %v1215
    %2162 = vmatpush.msra.mxu0 %v1203
    %2163 = vmatpush.msra.mxu0 %v1191
    %2164 = vmatpush.msra.mxu0 %v1179
    %2165 = vmatpush.msra.mxu0 %v1167
    %2166 = vmatpush.msra.mxu0 %v1155
    %2167 = vmatpush.msra.mxu0 %v1143
    %2168 = vmatpush.msra.mxu0 %v1131
    %2169 = vmatpush.msra.mxu0 %v1119
    %2170 = vmatpush.msra.mxu0 %v1107
    %2171 = vmatpush.msra.mxu0 %v1095
    %2172 = vmatmul.f32.gmra.mxu0 %v1531
    %v2173 = vpop.f32.mrf.mxu0
    %v2174 = vadd.f32 %v2154, %v2173
    %2175 = vdwg.mxu0
    %2176 = vmatpush.msra.mxu0 %v1467
    %2177 = vmatpush.msra.mxu0 %v1455
    %2178 = vmatpush.msra.mxu0 %v1443
    %2179 = vmatpush.msra.mxu0 %v1431
    %2180 = vmatpush.msra.mxu0 %v1419
    %2181 = vmatpush.msra.mxu0 %v1407
    %2182 = vmatpush.msra.mxu0 %v1395
    %2183 = vmatpush.msra.mxu0 %v1383
    %2184 = vmatpush.msra.mxu0 %v1371
    %2185 = vmatpush.msra.mxu0 %v1359
    %2186 = vmatpush.msra.mxu0 %v1347
    %2187 = vmatpush.msra.mxu0 %v1335
    %2188 = vmatpush.msra.mxu0 %v1323
    %2189 = vmatpush.msra.mxu0 %v1311
    %2190 = vmatpush.msra.mxu0 %v1299
    %2191 = vmatpush.msra.mxu0 %v1287
    %2192 = vmatmul.f32.gmra.mxu0 %v1532
    %v2193 = vpop.f32.mrf.mxu0
    %v2194 = vadd.f32 %v2174, %v2193
    %2195 = vdwg.mxu0
    %2196 = vmatpush.msra.mxu0 %v1084
    %2197 = vmatpush.msra.mxu0 %v1072
    %2198 = vmatpush.msra.mxu0 %v1060
    %2199 = vmatpush.msra.mxu0 %v1048
    %2200 = vmatpush.msra.mxu0 %v1036
    %2201 = vmatpush.msra.mxu0 %v1024
    %2202 = vmatpush.msra.mxu0 %v1012
    %2203 = vmatpush.msra.mxu0 %v1000
    %2204 = vmatpush.msra.mxu0 %v988
    %2205 = vmatpush.msra.mxu0 %v976
    %2206 = vmatpush.msra.mxu0 %v964
    %2207 = vmatpush.msra.mxu0 %v952
    %2208 = vmatpush.msra.mxu0 %v940
    %2209 = vmatpush.msra.mxu0 %v928
    %2210 = vmatpush.msra.mxu0 %v916
    %2211 = vmatpush.msra.mxu0 %v904
    %2212 = vmatmul.f32.gmra.mxu0 %v1530
    %v2213 = vpop.f32.mrf.mxu0
    %v2214 = vadd.f32 0.0, %v2213
    %2215 = vdwg.mxu0
    %2216 = vmatpush.msra.mxu0 %v1276
    %2217 = vmatpush.msra.mxu0 %v1264
    %2218 = vmatpush.msra.mxu0 %v1252
    %2219 = vmatpush.msra.mxu0 %v1240
    %2220 = vmatpush.msra.mxu0 %v1228
    %2221 = vmatpush.msra.mxu0 %v1216
    %2222 = vmatpush.msra.mxu0 %v1204
    %2223 = vmatpush.msra.mxu0 %v1192
    %2224 = vmatpush.msra.mxu0 %v1180
    %2225 = vmatpush.msra.mxu0 %v1168
    %2226 = vmatpush.msra.mxu0 %v1156
    %2227 = vmatpush.msra.mxu0 %v1144
    %2228 = vmatpush.msra.mxu0 %v1132
    %2229 = vmatpush.msra.mxu0 %v1120
    %2230 = vmatpush.msra.mxu0 %v1108
    %2231 = vmatpush.msra.mxu0 %v1096
    %2232 = vmatmul.f32.gmra.mxu0 %v1531
    %v2233 = vpop.f32.mrf.mxu0
    %v2234 = vadd.f32 %v2214, %v2233
    %2235 = vdwg.mxu0
    %2236 = vmatpush.msra.mxu0 %v1468
    %2237 = vmatpush.msra.mxu0 %v1456
    %2238 = vmatpush.msra.mxu0 %v1444
    %2239 = vmatpush.msra.mxu0 %v1432
    %2240 = vmatpush.msra.mxu0 %v1420
    %2241 = vmatpush.msra.mxu0 %v1408
    %2242 = vmatpush.msra.mxu0 %v1396
    %2243 = vmatpush.msra.mxu0 %v1384
    %2244 = vmatpush.msra.mxu0 %v1372
    %2245 = vmatpush.msra.mxu0 %v1360
    %2246 = vmatpush.msra.mxu0 %v1348
    %2247 = vmatpush.msra.mxu0 %v1336
    %2248 = vmatpush.msra.mxu0 %v1324
    %2249 = vmatpush.msra.mxu0 %v1312
    %2250 = vmatpush.msra.mxu0 %v1300
    %2251 = vmatpush.msra.mxu0 %v1288
    %2252 = vmatmul.f32.gmra.mxu0 %v1532
    %v2253 = vpop.f32.mrf.mxu0
    %v2254 = vadd.f32 %v2234, %v2253
    %2255 = vdwg.mxu0
    %v2268 = vrot.slane %v1654, 7
    %v2269 = vrot.slane %v1714, 6
    %v2270 = vrot.slane %v1774, 5
    %v2271 = vrot.slane %v1834, 4
    %v2272 = vrot.slane %v1894, 3
    %v2273 = vrot.slane %v1954, 2
    %v2274 = vrot.slane %v2014, 1
    %v2275 = vrot.slane %v2134, 7
    %v2276 = vrot.slane %v2194, 6
    %v2277 = vrot.slane %v2254, 5
    %v2278 = vsel %vm1510, %v1594, %v2268
    %vm2279 = vcmask 1042434
    %v2280 = vsel %vm2279, %v2269, %v2270
    %v2281 = vsel %vm1512, %v2278, %v2280
    %vm2282 = vcmask 1044484
    %v2283 = vsel %vm2282, %v2271, %v2272
    %vm2284 = vcmask 1046534
    %v2285 = vsel %vm2284, %v2273, %v2274
    %vm2286 = vcmask 1045508
    %v2287 = vsel %vm2286, %v2283, %v2285
    %vm2288 = vcmask 1043456
    %v2289 = vsel %vm2288, %v2281, %v2287
    %v2290 = vsel %vm1510, %v2074, %v2275
    %v2291 = vsel %vm2279, %v2276, %v2277
    %v2292 = vsel %vm1512, %v2290, %v2291
    %v2295 = vadd.f32 %v1526, %v2289
    %v2296 = vadd.f32 %v1528, %v2292
    %v2297 = vtanh.pop %v2295
    %v2298 = vtanh.pop %v2296
    %v2299 = vmul.f32 %v2297, 0.5
    %v2300 = vmul.f32 %v2298, 0.5
    %v2301 = vadd.f32 %v2299, 0.5
    %v2302 = vadd.f32 %v2300, 0.5
    %v2304 = vrot.slane %v2298, 1
    %v2306 = vmul.f32 %v2301, %v2304
    %vm2307 = vcmp.lt.s32.totalorder %v1470, 256
    %vm2308 = vcmp.lt.s32.totalorder %v1471, 256
    %vm2309 = vcmp.lt.s32.totalorder %v1472, 256
    %v2311 = vperm.slane %v2306, 0
    %v2312 = vperm.slane %v2306, 1
    %v2313 = vperm.slane %v2306, 2
    %v2317 = vsel %vm2307, %v2311, 0.0
    %v2318 = vsel %vm2308, %v2312, 0.0
    %v2319 = vsel %vm2309, %v2313, 0.0
    %v2321 = vrot.slane %v2301, 3
    %v2323 = vmul.f32 %v2321, %v1515
    %v2327 = vrot.slane %v2318, 7
    %v2328 = vrot.slane %v2319, 6
    %v2329 = vsel %vm1510, %v2317, %v2327
    %v2330 = vsel %vm1512, %v2329, %v2328
    %v2332 = vadd.f32 %v2323, %v2330
    %v2333 = vtanh.pop %v2332
    %v2335 = vrot.slane %v2301, 6
    %v2336 = vrot.slane %v2302, 6
    %v2337 = vsel %vm1512, %v2335, %v2336
    %v2339 = vmul.f32 %v2337, %v2333
    %s2340 = scalar_lea.vmem [#allocation3], 2
    %v2341 = vld [vmem:[%s2340] ss:$8 sm:$0xf]
    %v2342 = vld [vmem:[%s2340] ss:$8 sm:$0xf0]
    %v2343 = vor.u32 %v2341, %v2342
    %s2344 = scalar_lea.vmem [#allocation3], 66
    %v2345 = vld [vmem:[%s2344] ss:$8 sm:$0xf]
    %v2347 = vperm.slane %v2339, 0
    %v2348 = vperm.slane %v2339, 1
    %v2349 = vperm.slane %v2339, 2
    %2353 = vmatpush.msra.mxu0 %v1073
    %2354 = vmatpush.msra.mxu0 %v1061
    %2355 = vmatpush.msra.mxu0 %v1049
    %2356 = vmatpush.msra.mxu0 %v1037
    %2357 = vmatpush.msra.mxu0 %v1025
    %2358 = vmatpush.msra.mxu0 %v1013
    %2359 = vmatpush.msra.mxu0 %v1001
    %2360 = vmatpush.msra.mxu0 %v989
    %2361 = vmatpush.msra.mxu0 %v977
    %2362 = vmatpush.msra.mxu0 %v965
    %2363 = vmatpush.msra.mxu0 %v953
    %2364 = vmatpush.msra.mxu0 %v941
    %2365 = vmatpush.msra.mxu0 %v929
    %2366 = vmatpush.msra.mxu0 %v917
    %2367 = vmatpush.msra.mxu0 %v905
    %2368 = vmatpush.msra.mxu0 %v893
    %2369 = vmatmul.f32.gmra.mxu0 %v2347
    %v2370 = vpop.f32.mrf.mxu0
    %v2371 = vadd.f32 0.0, %v2370
    %2372 = vdwg.mxu0
    %2373 = vmatpush.msra.mxu0 %v1265
    %2374 = vmatpush.msra.mxu0 %v1253
    %2375 = vmatpush.msra.mxu0 %v1241
    %2376 = vmatpush.msra.mxu0 %v1229
    %2377 = vmatpush.msra.mxu0 %v1217
    %2378 = vmatpush.msra.mxu0 %v1205
    %2379 = vmatpush.msra.mxu0 %v1193
    %2380 = vmatpush.msra.mxu0 %v1181
    %2381 = vmatpush.msra.mxu0 %v1169
    %2382 = vmatpush.msra.mxu0 %v1157
    %2383 = vmatpush.msra.mxu0 %v1145
    %2384 = vmatpush.msra.mxu0 %v1133
    %2385 = vmatpush.msra.mxu0 %v1121
    %2386 = vmatpush.msra.mxu0 %v1109
    %2387 = vmatpush.msra.mxu0 %v1097
    %2388 = vmatpush.msra.mxu0 %v1085
    %2389 = vmatmul.f32.gmra.mxu0 %v2348
    %v2390 = vpop.f32.mrf.mxu0
    %v2391 = vadd.f32 %v2371, %v2390
    %2392 = vdwg.mxu0
    %2393 = vmatpush.msra.mxu0 %v1457
    %2394 = vmatpush.msra.mxu0 %v1445
    %2395 = vmatpush.msra.mxu0 %v1433
    %2396 = vmatpush.msra.mxu0 %v1421
    %2397 = vmatpush.msra.mxu0 %v1409
    %2398 = vmatpush.msra.mxu0 %v1397
    %2399 = vmatpush.msra.mxu0 %v1385
    %2400 = vmatpush.msra.mxu0 %v1373
    %2401 = vmatpush.msra.mxu0 %v1361
    %2402 = vmatpush.msra.mxu0 %v1349
    %2403 = vmatpush.msra.mxu0 %v1337
    %2404 = vmatpush.msra.mxu0 %v1325
    %2405 = vmatpush.msra.mxu0 %v1313
    %2406 = vmatpush.msra.mxu0 %v1301
    %2407 = vmatpush.msra.mxu0 %v1289
    %2408 = vmatpush.msra.mxu0 %v1277
    %2409 = vmatmul.f32.gmra.mxu0 %v2349
    %v2410 = vpop.f32.mrf.mxu0
    %v2411 = vadd.f32 %v2391, %v2410
    %2412 = vdwg.mxu0
    %2413 = vmatpush.msra.mxu0 %v1074
    %2414 = vmatpush.msra.mxu0 %v1062
    %2415 = vmatpush.msra.mxu0 %v1050
    %2416 = vmatpush.msra.mxu0 %v1038
    %2417 = vmatpush.msra.mxu0 %v1026
    %2418 = vmatpush.msra.mxu0 %v1014
    %2419 = vmatpush.msra.mxu0 %v1002
    %2420 = vmatpush.msra.mxu0 %v990
    %2421 = vmatpush.msra.mxu0 %v978
    %2422 = vmatpush.msra.mxu0 %v966
    %2423 = vmatpush.msra.mxu0 %v954
    %2424 = vmatpush.msra.mxu0 %v942
    %2425 = vmatpush.msra.mxu0 %v930
    %2426 = vmatpush.msra.mxu0 %v918
    %2427 = vmatpush.msra.mxu0 %v906
    %2428 = vmatpush.msra.mxu0 %v894
    %2429 = vmatmul.f32.gmra.mxu0 %v2347
    %v2430 = vpop.f32.mrf.mxu0
    %v2431 = vadd.f32 0.0, %v2430
    %2432 = vdwg.mxu0
    %2433 = vmatpush.msra.mxu0 %v1266
    %2434 = vmatpush.msra.mxu0 %v1254
    %2435 = vmatpush.msra.mxu0 %v1242
    %2436 = vmatpush.msra.mxu0 %v1230
    %2437 = vmatpush.msra.mxu0 %v1218
    %2438 = vmatpush.msra.mxu0 %v1206
    %2439 = vmatpush.msra.mxu0 %v1194
    %2440 = vmatpush.msra.mxu0 %v1182
    %2441 = vmatpush.msra.mxu0 %v1170
    %2442 = vmatpush.msra.mxu0 %v1158
    %2443 = vmatpush.msra.mxu0 %v1146
    %2444 = vmatpush.msra.mxu0 %v1134
    %2445 = vmatpush.msra.mxu0 %v1122
    %2446 = vmatpush.msra.mxu0 %v1110
    %2447 = vmatpush.msra.mxu0 %v1098
    %2448 = vmatpush.msra.mxu0 %v1086
    %2449 = vmatmul.f32.gmra.mxu0 %v2348
    %v2450 = vpop.f32.mrf.mxu0
    %v2451 = vadd.f32 %v2431, %v2450
    %2452 = vdwg.mxu0
    %2453 = vmatpush.msra.mxu0 %v1458
    %2454 = vmatpush.msra.mxu0 %v1446
    %2455 = vmatpush.msra.mxu0 %v1434
    %2456 = vmatpush.msra.mxu0 %v1422
    %2457 = vmatpush.msra.mxu0 %v1410
    %2458 = vmatpush.msra.mxu0 %v1398
    %2459 = vmatpush.msra.mxu0 %v1386
    %2460 = vmatpush.msra.mxu0 %v1374
    %2461 = vmatpush.msra.mxu0 %v1362
    %2462 = vmatpush.msra.mxu0 %v1350
    %2463 = vmatpush.msra.mxu0 %v1338
    %2464 = vmatpush.msra.mxu0 %v1326
    %2465 = vmatpush.msra.mxu0 %v1314
    %2466 = vmatpush.msra.mxu0 %v1302
    %2467 = vmatpush.msra.mxu0 %v1290
    %2468 = vmatpush.msra.mxu0 %v1278
    %2469 = vmatmul.f32.gmra.mxu0 %v2349
    %v2470 = vpop.f32.mrf.mxu0
    %v2471 = vadd.f32 %v2451, %v2470
    %2472 = vdwg.mxu0
    %2473 = vmatpush.msra.mxu0 %v1075
    %2474 = vmatpush.msra.mxu0 %v1063
    %2475 = vmatpush.msra.mxu0 %v1051
    %2476 = vmatpush.msra.mxu0 %v1039
    %2477 = vmatpush.msra.mxu0 %v1027
    %2478 = vmatpush.msra.mxu0 %v1015
    %2479 = vmatpush.msra.mxu0 %v1003
    %2480 = vmatpush.msra.mxu0 %v991
    %2481 = vmatpush.msra.mxu0 %v979
    %2482 = vmatpush.msra.mxu0 %v967
    %2483 = vmatpush.msra.mxu0 %v955
    %2484 = vmatpush.msra.mxu0 %v943
    %2485 = vmatpush.msra.mxu0 %v931
    %2486 = vmatpush.msra.mxu0 %v919
    %2487 = vmatpush.msra.mxu0 %v907
    %2488 = vmatpush.msra.mxu0 %v895
    %2489 = vmatmul.f32.gmra.mxu0 %v2347
    %v2490 = vpop.f32.mrf.mxu0
    %v2491 = vadd.f32 0.0, %v2490
    %2492 = vdwg.mxu0
    %2493 = vmatpush.msra.mxu0 %v1267
    %2494 = vmatpush.msra.mxu0 %v1255
    %2495 = vmatpush.msra.mxu0 %v1243
    %2496 = vmatpush.msra.mxu0 %v1231
    %2497 = vmatpush.msra.mxu0 %v1219
    %2498 = vmatpush.msra.mxu0 %v1207
    %2499 = vmatpush.msra.mxu0 %v1195
    %2500 = vmatpush.msra.mxu0 %v1183
    %2501 = vmatpush.msra.mxu0 %v1171
    %2502 = vmatpush.msra.mxu0 %v1159
    %2503 = vmatpush.msra.mxu0 %v1147
    %2504 = vmatpush.msra.mxu0 %v1135
    %2505 = vmatpush.msra.mxu0 %v1123
    %2506 = vmatpush.msra.mxu0 %v1111
    %2507 = vmatpush.msra.mxu0 %v1099
    %2508 = vmatpush.msra.mxu0 %v1087
    %2509 = vmatmul.f32.gmra.mxu0 %v2348
    %v2510 = vpop.f32.mrf.mxu0
    %v2511 = vadd.f32 %v2491, %v2510
    %2512 = vdwg.mxu0
    %2513 = vmatpush.msra.mxu0 %v1459
    %2514 = vmatpush.msra.mxu0 %v1447
    %2515 = vmatpush.msra.mxu0 %v1435
    %2516 = vmatpush.msra.mxu0 %v1423
    %2517 = vmatpush.msra.mxu0 %v1411
    %2518 = vmatpush.msra.mxu0 %v1399
    %2519 = vmatpush.msra.mxu0 %v1387
    %2520 = vmatpush.msra.mxu0 %v1375
    %2521 = vmatpush.msra.mxu0 %v1363
    %2522 = vmatpush.msra.mxu0 %v1351
    %2523 = vmatpush.msra.mxu0 %v1339
    %2524 = vmatpush.msra.mxu0 %v1327
    %2525 = vmatpush.msra.mxu0 %v1315
    %2526 = vmatpush.msra.mxu0 %v1303
    %2527 = vmatpush.msra.mxu0 %v1291
    %2528 = vmatpush.msra.mxu0 %v1279
    %2529 = vmatmul.f32.gmra.mxu0 %v2349
    %v2530 = vpop.f32.mrf.mxu0
    %v2531 = vadd.f32 %v2511, %v2530
    %2532 = vdwg.mxu0
    %2533 = vmatpush.msra.mxu0 %v1076
    %2534 = vmatpush.msra.mxu0 %v1064
    %2535 = vmatpush.msra.mxu0 %v1052
    %2536 = vmatpush.msra.mxu0 %v1040
    %2537 = vmatpush.msra.mxu0 %v1028
    %2538 = vmatpush.msra.mxu0 %v1016
    %2539 = vmatpush.msra.mxu0 %v1004
    %2540 = vmatpush.msra.mxu0 %v992
    %2541 = vmatpush.msra.mxu0 %v980
    %2542 = vmatpush.msra.mxu0 %v968
    %2543 = vmatpush.msra.mxu0 %v956
    %2544 = vmatpush.msra.mxu0 %v944
    %2545 = vmatpush.msra.mxu0 %v932
    %2546 = vmatpush.msra.mxu0 %v920
    %2547 = vmatpush.msra.mxu0 %v908
    %2548 = vmatpush.msra.mxu0 %v896
    %2549 = vmatmul.f32.gmra.mxu0 %v2347
    %v2550 = vpop.f32.mrf.mxu0
    %v2551 = vadd.f32 0.0, %v2550
    %2552 = vdwg.mxu0
    %2553 = vmatpush.msra.mxu0 %v1268
    %2554 = vmatpush.msra.mxu0 %v1256
    %2555 = vmatpush.msra.mxu0 %v1244
    %2556 = vmatpush.msra.mxu0 %v1232
    %2557 = vmatpush.msra.mxu0 %v1220
    %2558 = vmatpush.msra.mxu0 %v1208
    %2559 = vmatpush.msra.mxu0 %v1196
    %2560 = vmatpush.msra.mxu0 %v1184
    %2561 = vmatpush.msra.mxu0 %v1172
    %2562 = vmatpush.msra.mxu0 %v1160
    %2563 = vmatpush.msra.mxu0 %v1148
    %2564 = vmatpush.msra.mxu0 %v1136
    %2565 = vmatpush.msra.mxu0 %v1124
    %2566 = vmatpush.msra.mxu0 %v1112
    %2567 = vmatpush.msra.mxu0 %v1100
    %2568 = vmatpush.msra.mxu0 %v1088
    %2569 = vmatmul.f32.gmra.mxu0 %v2348
    %v2570 = vpop.f32.mrf.mxu0
    %v2571 = vadd.f32 %v2551, %v2570
    %2572 = vdwg.mxu0
    %2573 = vmatpush.msra.mxu0 %v1460
    %2574 = vmatpush.msra.mxu0 %v1448
    %2575 = vmatpush.msra.mxu0 %v1436
    %2576 = vmatpush.msra.mxu0 %v1424
    %2577 = vmatpush.msra.mxu0 %v1412
    %2578 = vmatpush.msra.mxu0 %v1400
    %2579 = vmatpush.msra.mxu0 %v1388
    %2580 = vmatpush.msra.mxu0 %v1376
    %2581 = vmatpush.msra.mxu0 %v1364
    %2582 = vmatpush.msra.mxu0 %v1352
    %2583 = vmatpush.msra.mxu0 %v1340
    %2584 = vmatpush.msra.mxu0 %v1328
    %2585 = vmatpush.msra.mxu0 %v1316
    %2586 = vmatpush.msra.mxu0 %v1304
    %2587 = vmatpush.msra.mxu0 %v1292
    %2588 = vmatpush.msra.mxu0 %v1280
    %2589 = vmatmul.f32.gmra.mxu0 %v2349
    %v2590 = vpop.f32.mrf.mxu0
    %v2591 = vadd.f32 %v2571, %v2590
    %2592 = vdwg.mxu0
    %2593 = vmatpush.msra.mxu0 %v1077
    %2594 = vmatpush.msra.mxu0 %v1065
    %2595 = vmatpush.msra.mxu0 %v1053
    %2596 = vmatpush.msra.mxu0 %v1041
    %2597 = vmatpush.msra.mxu0 %v1029
    %2598 = vmatpush.msra.mxu0 %v1017
    %2599 = vmatpush.msra.mxu0 %v1005
    %2600 = vmatpush.msra.mxu0 %v993
    %2601 = vmatpush.msra.mxu0 %v981
    %2602 = vmatpush.msra.mxu0 %v969
    %2603 = vmatpush.msra.mxu0 %v957
    %2604 = vmatpush.msra.mxu0 %v945
    %2605 = vmatpush.msra.mxu0 %v933
    %2606 = vmatpush.msra.mxu0 %v921
    %2607 = vmatpush.msra.mxu0 %v909
    %2608 = vmatpush.msra.mxu0 %v897
    %2609 = vmatmul.f32.gmra.mxu0 %v2347
    %v2610 = vpop.f32.mrf.mxu0
    %v2611 = vadd.f32 0.0, %v2610
    %2612 = vdwg.mxu0
    %2613 = vmatpush.msra.mxu0 %v1269
    %2614 = vmatpush.msra.mxu0 %v1257
    %2615 = vmatpush.msra.mxu0 %v1245
    %2616 = vmatpush.msra.mxu0 %v1233
    %2617 = vmatpush.msra.mxu0 %v1221
    %2618 = vmatpush.msra.mxu0 %v1209
    %2619 = vmatpush.msra.mxu0 %v1197
    %2620 = vmatpush.msra.mxu0 %v1185
    %2621 = vmatpush.msra.mxu0 %v1173
    %2622 = vmatpush.msra.mxu0 %v1161
    %2623 = vmatpush.msra.mxu0 %v1149
    %2624 = vmatpush.msra.mxu0 %v1137
    %2625 = vmatpush.msra.mxu0 %v1125
    %2626 = vmatpush.msra.mxu0 %v1113
    %2627 = vmatpush.msra.mxu0 %v1101
    %2628 = vmatpush.msra.mxu0 %v1089
    %2629 = vmatmul.f32.gmra.mxu0 %v2348
    %v2630 = vpop.f32.mrf.mxu0
    %v2631 = vadd.f32 %v2611, %v2630
    %2632 = vdwg.mxu0
    %2633 = vmatpush.msra.mxu0 %v1461
    %2634 = vmatpush.msra.mxu0 %v1449
    %2635 = vmatpush.msra.mxu0 %v1437
    %2636 = vmatpush.msra.mxu0 %v1425
    %2637 = vmatpush.msra.mxu0 %v1413
    %2638 = vmatpush.msra.mxu0 %v1401
    %2639 = vmatpush.msra.mxu0 %v1389
    %2640 = vmatpush.msra.mxu0 %v1377
    %2641 = vmatpush.msra.mxu0 %v1365
    %2642 = vmatpush.msra.mxu0 %v1353
    %2643 = vmatpush.msra.mxu0 %v1341
    %2644 = vmatpush.msra.mxu0 %v1329
    %2645 = vmatpush.msra.mxu0 %v1317
    %2646 = vmatpush.msra.mxu0 %v1305
    %2647 = vmatpush.msra.mxu0 %v1293
    %2648 = vmatpush.msra.mxu0 %v1281
    %2649 = vmatmul.f32.gmra.mxu0 %v2349
    %v2650 = vpop.f32.mrf.mxu0
    %v2651 = vadd.f32 %v2631, %v2650
    %2652 = vdwg.mxu0
    %2653 = vmatpush.msra.mxu0 %v1078
    %2654 = vmatpush.msra.mxu0 %v1066
    %2655 = vmatpush.msra.mxu0 %v1054
    %2656 = vmatpush.msra.mxu0 %v1042
    %2657 = vmatpush.msra.mxu0 %v1030
    %2658 = vmatpush.msra.mxu0 %v1018
    %2659 = vmatpush.msra.mxu0 %v1006
    %2660 = vmatpush.msra.mxu0 %v994
    %2661 = vmatpush.msra.mxu0 %v982
    %2662 = vmatpush.msra.mxu0 %v970
    %2663 = vmatpush.msra.mxu0 %v958
    %2664 = vmatpush.msra.mxu0 %v946
    %2665 = vmatpush.msra.mxu0 %v934
    %2666 = vmatpush.msra.mxu0 %v922
    %2667 = vmatpush.msra.mxu0 %v910
    %2668 = vmatpush.msra.mxu0 %v898
    %2669 = vmatmul.f32.gmra.mxu0 %v2347
    %v2670 = vpop.f32.mrf.mxu0
    %v2671 = vadd.f32 0.0, %v2670
    %2672 = vdwg.mxu0
    %2673 = vmatpush.msra.mxu0 %v1270
    %2674 = vmatpush.msra.mxu0 %v1258
    %2675 = vmatpush.msra.mxu0 %v1246
    %2676 = vmatpush.msra.mxu0 %v1234
    %2677 = vmatpush.msra.mxu0 %v1222
    %2678 = vmatpush.msra.mxu0 %v1210
    %2679 = vmatpush.msra.mxu0 %v1198
    %2680 = vmatpush.msra.mxu0 %v1186
    %2681 = vmatpush.msra.mxu0 %v1174
    %2682 = vmatpush.msra.mxu0 %v1162
    %2683 = vmatpush.msra.mxu0 %v1150
    %2684 = vmatpush.msra.mxu0 %v1138
    %2685 = vmatpush.msra.mxu0 %v1126
    %2686 = vmatpush.msra.mxu0 %v1114
    %2687 = vmatpush.msra.mxu0 %v1102
    %2688 = vmatpush.msra.mxu0 %v1090
    %2689 = vmatmul.f32.gmra.mxu0 %v2348
    %v2690 = vpop.f32.mrf.mxu0
    %v2691 = vadd.f32 %v2671, %v2690
    %2692 = vdwg.mxu0
    %2693 = vmatpush.msra.mxu0 %v1462
    %2694 = vmatpush.msra.mxu0 %v1450
    %2695 = vmatpush.msra.mxu0 %v1438
    %2696 = vmatpush.msra.mxu0 %v1426
    %2697 = vmatpush.msra.mxu0 %v1414
    %2698 = vmatpush.msra.mxu0 %v1402
    %2699 = vmatpush.msra.mxu0 %v1390
    %2700 = vmatpush.msra.mxu0 %v1378
    %2701 = vmatpush.msra.mxu0 %v1366
    %2702 = vmatpush.msra.mxu0 %v1354
    %2703 = vmatpush.msra.mxu0 %v1342
    %2704 = vmatpush.msra.mxu0 %v1330
    %2705 = vmatpush.msra.mxu0 %v1318
    %2706 = vmatpush.msra.mxu0 %v1306
    %2707 = vmatpush.msra.mxu0 %v1294
    %2708 = vmatpush.msra.mxu0 %v1282
    %2709 = vmatmul.f32.gmra.mxu0 %v2349
    %v2710 = vpop.f32.mrf.mxu0
    %v2711 = vadd.f32 %v2691, %v2710
    %2712 = vdwg.mxu0
    %2713 = vmatpush.msra.mxu0 %v1079
    %2714 = vmatpush.msra.mxu0 %v1067
    %2715 = vmatpush.msra.mxu0 %v1055
    %2716 = vmatpush.msra.mxu0 %v1043
    %2717 = vmatpush.msra.mxu0 %v1031
    %2718 = vmatpush.msra.mxu0 %v1019
    %2719 = vmatpush.msra.mxu0 %v1007
    %2720 = vmatpush.msra.mxu0 %v995
    %2721 = vmatpush.msra.mxu0 %v983
    %2722 = vmatpush.msra.mxu0 %v971
    %2723 = vmatpush.msra.mxu0 %v959
    %2724 = vmatpush.msra.mxu0 %v947
    %2725 = vmatpush.msra.mxu0 %v935
    %2726 = vmatpush.msra.mxu0 %v923
    %2727 = vmatpush.msra.mxu0 %v911
    %2728 = vmatpush.msra.mxu0 %v899
    %2729 = vmatmul.f32.gmra.mxu0 %v2347
    %v2730 = vpop.f32.mrf.mxu0
    %v2731 = vadd.f32 0.0, %v2730
    %2732 = vdwg.mxu0
    %2733 = vmatpush.msra.mxu0 %v1271
    %2734 = vmatpush.msra.mxu0 %v1259
    %2735 = vmatpush.msra.mxu0 %v1247
    %2736 = vmatpush.msra.mxu0 %v1235
    %2737 = vmatpush.msra.mxu0 %v1223
    %2738 = vmatpush.msra.mxu0 %v1211
    %2739 = vmatpush.msra.mxu0 %v1199
    %2740 = vmatpush.msra.mxu0 %v1187
    %2741 = vmatpush.msra.mxu0 %v1175
    %2742 = vmatpush.msra.mxu0 %v1163
    %2743 = vmatpush.msra.mxu0 %v1151
    %2744 = vmatpush.msra.mxu0 %v1139
    %2745 = vmatpush.msra.mxu0 %v1127
    %2746 = vmatpush.msra.mxu0 %v1115
    %2747 = vmatpush.msra.mxu0 %v1103
    %2748 = vmatpush.msra.mxu0 %v1091
    %2749 = vmatmul.f32.gmra.mxu0 %v2348
    %v2750 = vpop.f32.mrf.mxu0
    %v2751 = vadd.f32 %v2731, %v2750
    %2752 = vdwg.mxu0
    %2753 = vmatpush.msra.mxu0 %v1463
    %2754 = vmatpush.msra.mxu0 %v1451
    %2755 = vmatpush.msra.mxu0 %v1439
    %2756 = vmatpush.msra.mxu0 %v1427
    %2757 = vmatpush.msra.mxu0 %v1415
    %2758 = vmatpush.msra.mxu0 %v1403
    %2759 = vmatpush.msra.mxu0 %v1391
    %2760 = vmatpush.msra.mxu0 %v1379
    %2761 = vmatpush.msra.mxu0 %v1367
    %2762 = vmatpush.msra.mxu0 %v1355
    %2763 = vmatpush.msra.mxu0 %v1343
    %2764 = vmatpush.msra.mxu0 %v1331
    %2765 = vmatpush.msra.mxu0 %v1319
    %2766 = vmatpush.msra.mxu0 %v1307
    %2767 = vmatpush.msra.mxu0 %v1295
    %2768 = vmatpush.msra.mxu0 %v1283
    %2769 = vmatmul.f32.gmra.mxu0 %v2349
    %v2770 = vpop.f32.mrf.mxu0
    %v2771 = vadd.f32 %v2751, %v2770
    %2772 = vdwg.mxu0
    %2773 = vmatpush.msra.mxu0 %v1080
    %2774 = vmatpush.msra.mxu0 %v1068
    %2775 = vmatpush.msra.mxu0 %v1056
    %2776 = vmatpush.msra.mxu0 %v1044
    %2777 = vmatpush.msra.mxu0 %v1032
    %2778 = vmatpush.msra.mxu0 %v1020
    %2779 = vmatpush.msra.mxu0 %v1008
    %2780 = vmatpush.msra.mxu0 %v996
    %2781 = vmatpush.msra.mxu0 %v984
    %2782 = vmatpush.msra.mxu0 %v972
    %2783 = vmatpush.msra.mxu0 %v960
    %2784 = vmatpush.msra.mxu0 %v948
    %2785 = vmatpush.msra.mxu0 %v936
    %2786 = vmatpush.msra.mxu0 %v924
    %2787 = vmatpush.msra.mxu0 %v912
    %2788 = vmatpush.msra.mxu0 %v900
    %2789 = vmatmul.f32.gmra.mxu0 %v2347
    %v2790 = vpop.f32.mrf.mxu0
    %v2791 = vadd.f32 0.0, %v2790
    %2792 = vdwg.mxu0
    %2793 = vmatpush.msra.mxu0 %v1272
    %2794 = vmatpush.msra.mxu0 %v1260
    %2795 = vmatpush.msra.mxu0 %v1248
    %2796 = vmatpush.msra.mxu0 %v1236
    %2797 = vmatpush.msra.mxu0 %v1224
    %2798 = vmatpush.msra.mxu0 %v1212
    %2799 = vmatpush.msra.mxu0 %v1200
    %2800 = vmatpush.msra.mxu0 %v1188
    %2801 = vmatpush.msra.mxu0 %v1176
    %2802 = vmatpush.msra.mxu0 %v1164
    %2803 = vmatpush.msra.mxu0 %v1152
    %2804 = vmatpush.msra.mxu0 %v1140
    %2805 = vmatpush.msra.mxu0 %v1128
    %2806 = vmatpush.msra.mxu0 %v1116
    %2807 = vmatpush.msra.mxu0 %v1104
    %2808 = vmatpush.msra.mxu0 %v1092
    %2809 = vmatmul.f32.gmra.mxu0 %v2348
    %v2810 = vpop.f32.mrf.mxu0
    %v2811 = vadd.f32 %v2791, %v2810
    %2812 = vdwg.mxu0
    %2813 = vmatpush.msra.mxu0 %v1464
    %2814 = vmatpush.msra.mxu0 %v1452
    %2815 = vmatpush.msra.mxu0 %v1440
    %2816 = vmatpush.msra.mxu0 %v1428
    %2817 = vmatpush.msra.mxu0 %v1416
    %2818 = vmatpush.msra.mxu0 %v1404
    %2819 = vmatpush.msra.mxu0 %v1392
    %2820 = vmatpush.msra.mxu0 %v1380
    %2821 = vmatpush.msra.mxu0 %v1368
    %2822 = vmatpush.msra.mxu0 %v1356
    %2823 = vmatpush.msra.mxu0 %v1344
    %2824 = vmatpush.msra.mxu0 %v1332
    %2825 = vmatpush.msra.mxu0 %v1320
    %2826 = vmatpush.msra.mxu0 %v1308
    %2827 = vmatpush.msra.mxu0 %v1296
    %2828 = vmatpush.msra.mxu0 %v1284
    %2829 = vmatmul.f32.gmra.mxu0 %v2349
    %v2830 = vpop.f32.mrf.mxu0
    %v2831 = vadd.f32 %v2811, %v2830
    %2832 = vdwg.mxu0
    %2833 = vmatpush.msra.mxu0 %v1081
    %2834 = vmatpush.msra.mxu0 %v1069
    %2835 = vmatpush.msra.mxu0 %v1057
    %2836 = vmatpush.msra.mxu0 %v1045
    %2837 = vmatpush.msra.mxu0 %v1033
    %2838 = vmatpush.msra.mxu0 %v1021
    %2839 = vmatpush.msra.mxu0 %v1009
    %2840 = vmatpush.msra.mxu0 %v997
    %2841 = vmatpush.msra.mxu0 %v985
    %2842 = vmatpush.msra.mxu0 %v973
    %2843 = vmatpush.msra.mxu0 %v961
    %2844 = vmatpush.msra.mxu0 %v949
    %2845 = vmatpush.msra.mxu0 %v937
    %2846 = vmatpush.msra.mxu0 %v925
    %2847 = vmatpush.msra.mxu0 %v913
    %2848 = vmatpush.msra.mxu0 %v901
    %2849 = vmatmul.f32.gmra.mxu0 %v2347
    %v2850 = vpop.f32.mrf.mxu0
    %v2851 = vadd.f32 0.0, %v2850
    %2852 = vdwg.mxu0
    %2853 = vmatpush.msra.mxu0 %v1273
    %2854 = vmatpush.msra.mxu0 %v1261
    %2855 = vmatpush.msra.mxu0 %v1249
    %2856 = vmatpush.msra.mxu0 %v1237
    %2857 = vmatpush.msra.mxu0 %v1225
    %2858 = vmatpush.msra.mxu0 %v1213
    %2859 = vmatpush.msra.mxu0 %v1201
    %2860 = vmatpush.msra.mxu0 %v1189
    %2861 = vmatpush.msra.mxu0 %v1177
    %2862 = vmatpush.msra.mxu0 %v1165
    %2863 = vmatpush.msra.mxu0 %v1153
    %2864 = vmatpush.msra.mxu0 %v1141
    %2865 = vmatpush.msra.mxu0 %v1129
    %2866 = vmatpush.msra.mxu0 %v1117
    %2867 = vmatpush.msra.mxu0 %v1105
    %2868 = vmatpush.msra.mxu0 %v1093
    %2869 = vmatmul.f32.gmra.mxu0 %v2348
    %v2870 = vpop.f32.mrf.mxu0
    %v2871 = vadd.f32 %v2851, %v2870
    %2872 = vdwg.mxu0
    %2873 = vmatpush.msra.mxu0 %v1465
    %2874 = vmatpush.msra.mxu0 %v1453
    %2875 = vmatpush.msra.mxu0 %v1441
    %2876 = vmatpush.msra.mxu0 %v1429
    %2877 = vmatpush.msra.mxu0 %v1417
    %2878 = vmatpush.msra.mxu0 %v1405
    %2879 = vmatpush.msra.mxu0 %v1393
    %2880 = vmatpush.msra.mxu0 %v1381
    %2881 = vmatpush.msra.mxu0 %v1369
    %2882 = vmatpush.msra.mxu0 %v1357
    %2883 = vmatpush.msra.mxu0 %v1345
    %2884 = vmatpush.msra.mxu0 %v1333
    %2885 = vmatpush.msra.mxu0 %v1321
    %2886 = vmatpush.msra.mxu0 %v1309
    %2887 = vmatpush.msra.mxu0 %v1297
    %2888 = vmatpush.msra.mxu0 %v1285
    %2889 = vmatmul.f32.gmra.mxu0 %v2349
    %v2890 = vpop.f32.mrf.mxu0
    %v2891 = vadd.f32 %v2871, %v2890
    %2892 = vdwg.mxu0
    %2893 = vmatpush.msra.mxu0 %v1082
    %2894 = vmatpush.msra.mxu0 %v1070
    %2895 = vmatpush.msra.mxu0 %v1058
    %2896 = vmatpush.msra.mxu0 %v1046
    %2897 = vmatpush.msra.mxu0 %v1034
    %2898 = vmatpush.msra.mxu0 %v1022
    %2899 = vmatpush.msra.mxu0 %v1010
    %2900 = vmatpush.msra.mxu0 %v998
    %2901 = vmatpush.msra.mxu0 %v986
    %2902 = vmatpush.msra.mxu0 %v974
    %2903 = vmatpush.msra.mxu0 %v962
    %2904 = vmatpush.msra.mxu0 %v950
    %2905 = vmatpush.msra.mxu0 %v938
    %2906 = vmatpush.msra.mxu0 %v926
    %2907 = vmatpush.msra.mxu0 %v914
    %2908 = vmatpush.msra.mxu0 %v902
    %2909 = vmatmul.f32.gmra.mxu0 %v2347
    %v2910 = vpop.f32.mrf.mxu0
    %v2911 = vadd.f32 0.0, %v2910
    %2912 = vdwg.mxu0
    %2913 = vmatpush.msra.mxu0 %v1274
    %2914 = vmatpush.msra.mxu0 %v1262
    %2915 = vmatpush.msra.mxu0 %v1250
    %2916 = vmatpush.msra.mxu0 %v1238
    %2917 = vmatpush.msra.mxu0 %v1226
    %2918 = vmatpush.msra.mxu0 %v1214
    %2919 = vmatpush.msra.mxu0 %v1202
    %2920 = vmatpush.msra.mxu0 %v1190
    %2921 = vmatpush.msra.mxu0 %v1178
    %2922 = vmatpush.msra.mxu0 %v1166
    %2923 = vmatpush.msra.mxu0 %v1154
    %2924 = vmatpush.msra.mxu0 %v1142
    %2925 = vmatpush.msra.mxu0 %v1130
    %2926 = vmatpush.msra.mxu0 %v1118
    %2927 = vmatpush.msra.mxu0 %v1106
    %2928 = vmatpush.msra.mxu0 %v1094
    %2929 = vmatmul.f32.gmra.mxu0 %v2348
    %v2930 = vpop.f32.mrf.mxu0
    %v2931 = vadd.f32 %v2911, %v2930
    %2932 = vdwg.mxu0
    %2933 = vmatpush.msra.mxu0 %v1466
    %2934 = vmatpush.msra.mxu0 %v1454
    %2935 = vmatpush.msra.mxu0 %v1442
    %2936 = vmatpush.msra.mxu0 %v1430
    %2937 = vmatpush.msra.mxu0 %v1418
    %2938 = vmatpush.msra.mxu0 %v1406
    %2939 = vmatpush.msra.mxu0 %v1394
    %2940 = vmatpush.msra.mxu0 %v1382
    %2941 = vmatpush.msra.mxu0 %v1370
    %2942 = vmatpush.msra.mxu0 %v1358
    %2943 = vmatpush.msra.mxu0 %v1346
    %2944 = vmatpush.msra.mxu0 %v1334
    %2945 = vmatpush.msra.mxu0 %v1322
    %2946 = vmatpush.msra.mxu0 %v1310
    %2947 = vmatpush.msra.mxu0 %v1298
    %2948 = vmatpush.msra.mxu0 %v1286
    %2949 = vmatmul.f32.gmra.mxu0 %v2349
    %v2950 = vpop.f32.mrf.mxu0
    %v2951 = vadd.f32 %v2931, %v2950
    %2952 = vdwg.mxu0
    %2953 = vmatpush.msra.mxu0 %v1083
    %2954 = vmatpush.msra.mxu0 %v1071
    %2955 = vmatpush.msra.mxu0 %v1059
    %2956 = vmatpush.msra.mxu0 %v1047
    %2957 = vmatpush.msra.mxu0 %v1035
    %2958 = vmatpush.msra.mxu0 %v1023
    %2959 = vmatpush.msra.mxu0 %v1011
    %2960 = vmatpush.msra.mxu0 %v999
    %2961 = vmatpush.msra.mxu0 %v987
    %2962 = vmatpush.msra.mxu0 %v975
    %2963 = vmatpush.msra.mxu0 %v963
    %2964 = vmatpush.msra.mxu0 %v951
    %2965 = vmatpush.msra.mxu0 %v939
    %2966 = vmatpush.msra.mxu0 %v927
    %2967 = vmatpush.msra.mxu0 %v915
    %2968 = vmatpush.msra.mxu0 %v903
    %2969 = vmatmul.f32.gmra.mxu0 %v2347
    %v2970 = vpop.f32.mrf.mxu0
    %v2971 = vadd.f32 0.0, %v2970
    %2972 = vdwg.mxu0
    %2973 = vmatpush.msra.mxu0 %v1275
    %2974 = vmatpush.msra.mxu0 %v1263
    %2975 = vmatpush.msra.mxu0 %v1251
    %2976 = vmatpush.msra.mxu0 %v1239
    %2977 = vmatpush.msra.mxu0 %v1227
    %2978 = vmatpush.msra.mxu0 %v1215
    %2979 = vmatpush.msra.mxu0 %v1203
    %2980 = vmatpush.msra.mxu0 %v1191
    %2981 = vmatpush.msra.mxu0 %v1179
    %2982 = vmatpush.msra.mxu0 %v1167
    %2983 = vmatpush.msra.mxu0 %v1155
    %2984 = vmatpush.msra.mxu0 %v1143
    %2985 = vmatpush.msra.mxu0 %v1131
    %2986 = vmatpush.msra.mxu0 %v1119
    %2987 = vmatpush.msra.mxu0 %v1107
    %2988 = vmatpush.msra.mxu0 %v1095
    %2989 = vmatmul.f32.gmra.mxu0 %v2348
    %v2990 = vpop.f32.mrf.mxu0
    %v2991 = vadd.f32 %v2971, %v2990
    %2992 = vdwg.mxu0
    %2993 = vmatpush.msra.mxu0 %v1467
    %2994 = vmatpush.msra.mxu0 %v1455
    %2995 = vmatpush.msra.mxu0 %v1443
    %2996 = vmatpush.msra.mxu0 %v1431
    %2997 = vmatpush.msra.mxu0 %v1419
    %2998 = vmatpush.msra.mxu0 %v1407
    %2999 = vmatpush.msra.mxu0 %v1395
    %3000 = vmatpush.msra.mxu0 %v1383
    %3001 = vmatpush.msra.mxu0 %v1371
    %3002 = vmatpush.msra.mxu0 %v1359
    %3003 = vmatpush.msra.mxu0 %v1347
    %3004 = vmatpush.msra.mxu0 %v1335
    %3005 = vmatpush.msra.mxu0 %v1323
    %3006 = vmatpush.msra.mxu0 %v1311
    %3007 = vmatpush.msra.mxu0 %v1299
    %3008 = vmatpush.msra.mxu0 %v1287
    %3009 = vmatmul.f32.gmra.mxu0 %v2349
    %v3010 = vpop.f32.mrf.mxu0
    %v3011 = vadd.f32 %v2991, %v3010
    %3012 = vdwg.mxu0
    %3013 = vmatpush.msra.mxu0 %v1084
    %3014 = vmatpush.msra.mxu0 %v1072
    %3015 = vmatpush.msra.mxu0 %v1060
    %3016 = vmatpush.msra.mxu0 %v1048
    %3017 = vmatpush.msra.mxu0 %v1036
    %3018 = vmatpush.msra.mxu0 %v1024
    %3019 = vmatpush.msra.mxu0 %v1012
    %3020 = vmatpush.msra.mxu0 %v1000
    %3021 = vmatpush.msra.mxu0 %v988
    %3022 = vmatpush.msra.mxu0 %v976
    %3023 = vmatpush.msra.mxu0 %v964
    %3024 = vmatpush.msra.mxu0 %v952
    %3025 = vmatpush.msra.mxu0 %v940
    %3026 = vmatpush.msra.mxu0 %v928
    %3027 = vmatpush.msra.mxu0 %v916
    %3028 = vmatpush.msra.mxu0 %v904
    %3029 = vmatmul.f32.gmra.mxu0 %v2347
    %v3030 = vpop.f32.mrf.mxu0
    %v3031 = vadd.f32 0.0, %v3030
    %3032 = vdwg.mxu0
    %3033 = vmatpush.msra.mxu0 %v1276
    %3034 = vmatpush.msra.mxu0 %v1264
    %3035 = vmatpush.msra.mxu0 %v1252
    %3036 = vmatpush.msra.mxu0 %v1240
    %3037 = vmatpush.msra.mxu0 %v1228
    %3038 = vmatpush.msra.mxu0 %v1216
    %3039 = vmatpush.msra.mxu0 %v1204
    %3040 = vmatpush.msra.mxu0 %v1192
    %3041 = vmatpush.msra.mxu0 %v1180
    %3042 = vmatpush.msra.mxu0 %v1168
    %3043 = vmatpush.msra.mxu0 %v1156
    %3044 = vmatpush.msra.mxu0 %v1144
    %3045 = vmatpush.msra.mxu0 %v1132
    %3046 = vmatpush.msra.mxu0 %v1120
    %3047 = vmatpush.msra.mxu0 %v1108
    %3048 = vmatpush.msra.mxu0 %v1096
    %3049 = vmatmul.f32.gmra.mxu0 %v2348
    %v3050 = vpop.f32.mrf.mxu0
    %v3051 = vadd.f32 %v3031, %v3050
    %3052 = vdwg.mxu0
    %3053 = vmatpush.msra.mxu0 %v1468
    %3054 = vmatpush.msra.mxu0 %v1456
    %3055 = vmatpush.msra.mxu0 %v1444
    %3056 = vmatpush.msra.mxu0 %v1432
    %3057 = vmatpush.msra.mxu0 %v1420
    %3058 = vmatpush.msra.mxu0 %v1408
    %3059 = vmatpush.msra.mxu0 %v1396
    %3060 = vmatpush.msra.mxu0 %v1384
    %3061 = vmatpush.msra.mxu0 %v1372
    %3062 = vmatpush.msra.mxu0 %v1360
    %3063 = vmatpush.msra.mxu0 %v1348
    %3064 = vmatpush.msra.mxu0 %v1336
    %3065 = vmatpush.msra.mxu0 %v1324
    %3066 = vmatpush.msra.mxu0 %v1312
    %3067 = vmatpush.msra.mxu0 %v1300
    %3068 = vmatpush.msra.mxu0 %v1288
    %3069 = vmatmul.f32.gmra.mxu0 %v2349
    %v3070 = vpop.f32.mrf.mxu0
    %v3071 = vadd.f32 %v3051, %v3070
    %3072 = vdwg.mxu0
    %v3085 = vrot.slane %v2471, 7
    %v3086 = vrot.slane %v2531, 6
    %v3087 = vrot.slane %v2591, 5
    %v3088 = vrot.slane %v2651, 4
    %v3089 = vrot.slane %v2711, 3
    %v3090 = vrot.slane %v2771, 2
    %v3091 = vrot.slane %v2831, 1
    %v3092 = vrot.slane %v2951, 7
    %v3093 = vrot.slane %v3011, 6
    %v3094 = vrot.slane %v3071, 5
    %v3095 = vsel %vm1510, %v2411, %v3085
    %v3096 = vsel %vm2279, %v3086, %v3087
    %v3097 = vsel %vm1512, %v3095, %v3096
    %v3098 = vsel %vm2282, %v3088, %v3089
    %v3099 = vsel %vm2284, %v3090, %v3091
    %v3100 = vsel %vm2286, %v3098, %v3099
    %v3101 = vsel %vm2288, %v3097, %v3100
    %v3102 = vsel %vm1510, %v2891, %v3092
    %v3103 = vsel %vm2279, %v3093, %v3094
    %v3104 = vsel %vm1512, %v3102, %v3103
    %v3107 = vadd.f32 %v2343, %v3101
    %v3108 = vadd.f32 %v2345, %v3104
    %v3109 = vtanh.pop %v3107
    %v3110 = vtanh.pop %v3108
    %v3111 = vmul.f32 %v3109, 0.5
    %v3112 = vmul.f32 %v3110, 0.5
    %v3113 = vadd.f32 %v3111, 0.5
    %v3114 = vadd.f32 %v3112, 0.5
    %v3116 = vrot.slane %v3110, 1
    %v3118 = vmul.f32 %v3113, %v3116
    %v3120 = vrot.slane %v3113, 3
    %v3122 = vmul.f32 %v3120, %v2332
    %v3123 = vadd.f32 %v3122, %v3118
    %v3124 = vtanh.pop %v3123
    %v3126 = vrot.slane %v3113, 6
    %v3127 = vrot.slane %v3114, 6
    %v3128 = vsel %vm1512, %v3126, %v3127
    %v3130 = vmul.f32 %v3128, %v3124
    %v3132 = vperm.slane %v3130, 2
    %3134 = vst [vmem:[#allocation4] sm:$0x1] %v3132
    %s3135 = scalar_lea.vmem [#allocation3], 3
    %v3136 = vld [vmem:[%s3135] ss:$8 sm:$0xf]
    %v3137 = vld [vmem:[%s3135] ss:$8 sm:$0xf0]
    %v3138 = vor.u32 %v3136, %v3137
    %s3139 = scalar_lea.vmem [#allocation3], 67
    %v3140 = vld [vmem:[%s3139] ss:$8 sm:$0xf]
    %v3141 = vperm.slane %v3130, 0
    %v3142 = vperm.slane %v3130, 1
    %3145 = vmatpush.msra.mxu0 %v1073
    %3146 = vmatpush.msra.mxu0 %v1061
    %3147 = vmatpush.msra.mxu0 %v1049
    %3148 = vmatpush.msra.mxu0 %v1037
    %3149 = vmatpush.msra.mxu0 %v1025
    %3150 = vmatpush.msra.mxu0 %v1013
    %3151 = vmatpush.msra.mxu0 %v1001
    %3152 = vmatpush.msra.mxu0 %v989
    %3153 = vmatpush.msra.mxu0 %v977
    %3154 = vmatpush.msra.mxu0 %v965
    %3155 = vmatpush.msra.mxu0 %v953
    %3156 = vmatpush.msra.mxu0 %v941
    %3157 = vmatpush.msra.mxu0 %v929
    %3158 = vmatpush.msra.mxu0 %v917
    %3159 = vmatpush.msra.mxu0 %v905
    %3160 = vmatpush.msra.mxu0 %v893
    %3161 = vmatmul.f32.gmra.mxu0 %v3141
    %v3162 = vpop.f32.mrf.mxu0
    %v3163 = vadd.f32 0.0, %v3162
    %3164 = vdwg.mxu0
    %3165 = vmatpush.msra.mxu0 %v1265
    %3166 = vmatpush.msra.mxu0 %v1253
    %3167 = vmatpush.msra.mxu0 %v1241
    %3168 = vmatpush.msra.mxu0 %v1229
    %3169 = vmatpush.msra.mxu0 %v1217
    %3170 = vmatpush.msra.mxu0 %v1205
    %3171 = vmatpush.msra.mxu0 %v1193
    %3172 = vmatpush.msra.mxu0 %v1181
    %3173 = vmatpush.msra.mxu0 %v1169
    %3174 = vmatpush.msra.mxu0 %v1157
    %3175 = vmatpush.msra.mxu0 %v1145
    %3176 = vmatpush.msra.mxu0 %v1133
    %3177 = vmatpush.msra.mxu0 %v1121
    %3178 = vmatpush.msra.mxu0 %v1109
    %3179 = vmatpush.msra.mxu0 %v1097
    %3180 = vmatpush.msra.mxu0 %v1085
    %3181 = vmatmul.f32.gmra.mxu0 %v3142
    %v3182 = vpop.f32.mrf.mxu0
    %v3183 = vadd.f32 %v3163, %v3182
    %3184 = vdwg.mxu0
    %3185 = vmatpush.msra.mxu0 %v1457
    %3186 = vmatpush.msra.mxu0 %v1445
    %3187 = vmatpush.msra.mxu0 %v1433
    %3188 = vmatpush.msra.mxu0 %v1421
    %3189 = vmatpush.msra.mxu0 %v1409
    %3190 = vmatpush.msra.mxu0 %v1397
    %3191 = vmatpush.msra.mxu0 %v1385
    %3192 = vmatpush.msra.mxu0 %v1373
    %3193 = vmatpush.msra.mxu0 %v1361
    %3194 = vmatpush.msra.mxu0 %v1349
    %3195 = vmatpush.msra.mxu0 %v1337
    %3196 = vmatpush.msra.mxu0 %v1325
    %3197 = vmatpush.msra.mxu0 %v1313
    %3198 = vmatpush.msra.mxu0 %v1301
    %3199 = vmatpush.msra.mxu0 %v1289
    %3200 = vmatpush.msra.mxu0 %v1277
    %3201 = vmatmul.f32.gmra.mxu0 %v3132
    %v3202 = vpop.f32.mrf.mxu0
    %v3203 = vadd.f32 %v3183, %v3202
    %3204 = vdwg.mxu0
    %3205 = vmatpush.msra.mxu0 %v1074
    %3206 = vmatpush.msra.mxu0 %v1062
    %3207 = vmatpush.msra.mxu0 %v1050
    %3208 = vmatpush.msra.mxu0 %v1038
    %3209 = vmatpush.msra.mxu0 %v1026
    %3210 = vmatpush.msra.mxu0 %v1014
    %3211 = vmatpush.msra.mxu0 %v1002
    %3212 = vmatpush.msra.mxu0 %v990
    %3213 = vmatpush.msra.mxu0 %v978
    %3214 = vmatpush.msra.mxu0 %v966
    %3215 = vmatpush.msra.mxu0 %v954
    %3216 = vmatpush.msra.mxu0 %v942
    %3217 = vmatpush.msra.mxu0 %v930
    %3218 = vmatpush.msra.mxu0 %v918
    %3219 = vmatpush.msra.mxu0 %v906
    %3220 = vmatpush.msra.mxu0 %v894
    %3221 = vmatmul.f32.gmra.mxu0 %v3141
    %v3222 = vpop.f32.mrf.mxu0
    %v3223 = vadd.f32 0.0, %v3222
    %3224 = vdwg.mxu0
    %3225 = vmatpush.msra.mxu0 %v1266
    %3226 = vmatpush.msra.mxu0 %v1254
    %3227 = vmatpush.msra.mxu0 %v1242
    %3228 = vmatpush.msra.mxu0 %v1230
    %3229 = vmatpush.msra.mxu0 %v1218
    %3230 = vmatpush.msra.mxu0 %v1206
    %3231 = vmatpush.msra.mxu0 %v1194
    %3232 = vmatpush.msra.mxu0 %v1182
    %3233 = vmatpush.msra.mxu0 %v1170
    %3234 = vmatpush.msra.mxu0 %v1158
    %3235 = vmatpush.msra.mxu0 %v1146
    %3236 = vmatpush.msra.mxu0 %v1134
    %3237 = vmatpush.msra.mxu0 %v1122
    %3238 = vmatpush.msra.mxu0 %v1110
    %3239 = vmatpush.msra.mxu0 %v1098
    %3240 = vmatpush.msra.mxu0 %v1086
    %3241 = vmatmul.f32.gmra.mxu0 %v3142
    %v3242 = vpop.f32.mrf.mxu0
    %v3243 = vadd.f32 %v3223, %v3242
    %3244 = vdwg.mxu0
    %3245 = vmatpush.msra.mxu0 %v1458
    %3246 = vmatpush.msra.mxu0 %v1446
    %3247 = vmatpush.msra.mxu0 %v1434
    %3248 = vmatpush.msra.mxu0 %v1422
    %3249 = vmatpush.msra.mxu0 %v1410
    %3250 = vmatpush.msra.mxu0 %v1398
    %3251 = vmatpush.msra.mxu0 %v1386
    %3252 = vmatpush.msra.mxu0 %v1374
    %3253 = vmatpush.msra.mxu0 %v1362
    %3254 = vmatpush.msra.mxu0 %v1350
    %3255 = vmatpush.msra.mxu0 %v1338
    %3256 = vmatpush.msra.mxu0 %v1326
    %3257 = vmatpush.msra.mxu0 %v1314
    %3258 = vmatpush.msra.mxu0 %v1302
    %3259 = vmatpush.msra.mxu0 %v1290
    %3260 = vmatpush.msra.mxu0 %v1278
    %3261 = vmatmul.f32.gmra.mxu0 %v3132
    %v3262 = vpop.f32.mrf.mxu0
    %v3263 = vadd.f32 %v3243, %v3262
    %3264 = vdwg.mxu0
    %3265 = vmatpush.msra.mxu0 %v1075
    %3266 = vmatpush.msra.mxu0 %v1063
    %3267 = vmatpush.msra.mxu0 %v1051
    %3268 = vmatpush.msra.mxu0 %v1039
    %3269 = vmatpush.msra.mxu0 %v1027
    %3270 = vmatpush.msra.mxu0 %v1015
    %3271 = vmatpush.msra.mxu0 %v1003
    %3272 = vmatpush.msra.mxu0 %v991
    %3273 = vmatpush.msra.mxu0 %v979
    %3274 = vmatpush.msra.mxu0 %v967
    %3275 = vmatpush.msra.mxu0 %v955
    %3276 = vmatpush.msra.mxu0 %v943
    %3277 = vmatpush.msra.mxu0 %v931
    %3278 = vmatpush.msra.mxu0 %v919
    %3279 = vmatpush.msra.mxu0 %v907
    %3280 = vmatpush.msra.mxu0 %v895
    %3281 = vmatmul.f32.gmra.mxu0 %v3141
    %v3282 = vpop.f32.mrf.mxu0
    %v3283 = vadd.f32 0.0, %v3282
    %3284 = vdwg.mxu0
    %3285 = vmatpush.msra.mxu0 %v1267
    %3286 = vmatpush.msra.mxu0 %v1255
    %3287 = vmatpush.msra.mxu0 %v1243
    %3288 = vmatpush.msra.mxu0 %v1231
    %3289 = vmatpush.msra.mxu0 %v1219
    %3290 = vmatpush.msra.mxu0 %v1207
    %3291 = vmatpush.msra.mxu0 %v1195
    %3292 = vmatpush.msra.mxu0 %v1183
    %3293 = vmatpush.msra.mxu0 %v1171
    %3294 = vmatpush.msra.mxu0 %v1159
    %3295 = vmatpush.msra.mxu0 %v1147
    %3296 = vmatpush.msra.mxu0 %v1135
    %3297 = vmatpush.msra.mxu0 %v1123
    %3298 = vmatpush.msra.mxu0 %v1111
    %3299 = vmatpush.msra.mxu0 %v1099
    %3300 = vmatpush.msra.mxu0 %v1087
    %3301 = vmatmul.f32.gmra.mxu0 %v3142
    %v3302 = vpop.f32.mrf.mxu0
    %v3303 = vadd.f32 %v3283, %v3302
    %3304 = vdwg.mxu0
    %3305 = vmatpush.msra.mxu0 %v1459
    %3306 = vmatpush.msra.mxu0 %v1447
    %3307 = vmatpush.msra.mxu0 %v1435
    %3308 = vmatpush.msra.mxu0 %v1423
    %3309 = vmatpush.msra.mxu0 %v1411
    %3310 = vmatpush.msra.mxu0 %v1399
    %3311 = vmatpush.msra.mxu0 %v1387
    %3312 = vmatpush.msra.mxu0 %v1375
    %3313 = vmatpush.msra.mxu0 %v1363
    %3314 = vmatpush.msra.mxu0 %v1351
    %3315 = vmatpush.msra.mxu0 %v1339
    %3316 = vmatpush.msra.mxu0 %v1327
    %3317 = vmatpush.msra.mxu0 %v1315
    %3318 = vmatpush.msra.mxu0 %v1303
    %3319 = vmatpush.msra.mxu0 %v1291
    %3320 = vmatpush.msra.mxu0 %v1279
    %3321 = vmatmul.f32.gmra.mxu0 %v3132
    %v3322 = vpop.f32.mrf.mxu0
    %v3323 = vadd.f32 %v3303, %v3322
    %3324 = vdwg.mxu0
    %3325 = vmatpush.msra.mxu0 %v1076
    %3326 = vmatpush.msra.mxu0 %v1064
    %3327 = vmatpush.msra.mxu0 %v1052
    %3328 = vmatpush.msra.mxu0 %v1040
    %3329 = vmatpush.msra.mxu0 %v1028
    %3330 = vmatpush.msra.mxu0 %v1016
    %3331 = vmatpush.msra.mxu0 %v1004
    %3332 = vmatpush.msra.mxu0 %v992
    %3333 = vmatpush.msra.mxu0 %v980
    %3334 = vmatpush.msra.mxu0 %v968
    %3335 = vmatpush.msra.mxu0 %v956
    %3336 = vmatpush.msra.mxu0 %v944
    %3337 = vmatpush.msra.mxu0 %v932
    %3338 = vmatpush.msra.mxu0 %v920
    %3339 = vmatpush.msra.mxu0 %v908
    %3340 = vmatpush.msra.mxu0 %v896
    %3341 = vmatmul.f32.gmra.mxu0 %v3141
    %v3342 = vpop.f32.mrf.mxu0
    %v3343 = vadd.f32 0.0, %v3342
    %3344 = vdwg.mxu0
    %3345 = vmatpush.msra.mxu0 %v1268
    %3346 = vmatpush.msra.mxu0 %v1256
    %3347 = vmatpush.msra.mxu0 %v1244
    %3348 = vmatpush.msra.mxu0 %v1232
    %3349 = vmatpush.msra.mxu0 %v1220
    %3350 = vmatpush.msra.mxu0 %v1208
    %3351 = vmatpush.msra.mxu0 %v1196
    %3352 = vmatpush.msra.mxu0 %v1184
    %3353 = vmatpush.msra.mxu0 %v1172
    %3354 = vmatpush.msra.mxu0 %v1160
    %3355 = vmatpush.msra.mxu0 %v1148
    %3356 = vmatpush.msra.mxu0 %v1136
    %3357 = vmatpush.msra.mxu0 %v1124
    %3358 = vmatpush.msra.mxu0 %v1112
    %3359 = vmatpush.msra.mxu0 %v1100
    %3360 = vmatpush.msra.mxu0 %v1088
    %3361 = vmatmul.f32.gmra.mxu0 %v3142
    %v3362 = vpop.f32.mrf.mxu0
    %v3363 = vadd.f32 %v3343, %v3362
    %3364 = vdwg.mxu0
    %3365 = vmatpush.msra.mxu0 %v1460
    %3366 = vmatpush.msra.mxu0 %v1448
    %3367 = vmatpush.msra.mxu0 %v1436
    %3368 = vmatpush.msra.mxu0 %v1424
    %3369 = vmatpush.msra.mxu0 %v1412
    %3370 = vmatpush.msra.mxu0 %v1400
    %3371 = vmatpush.msra.mxu0 %v1388
    %3372 = vmatpush.msra.mxu0 %v1376
    %3373 = vmatpush.msra.mxu0 %v1364
    %3374 = vmatpush.msra.mxu0 %v1352
    %3375 = vmatpush.msra.mxu0 %v1340
    %3376 = vmatpush.msra.mxu0 %v1328
    %3377 = vmatpush.msra.mxu0 %v1316
    %3378 = vmatpush.msra.mxu0 %v1304
    %3379 = vmatpush.msra.mxu0 %v1292
    %3380 = vmatpush.msra.mxu0 %v1280
    %3381 = vmatmul.f32.gmra.mxu0 %v3132
    %v3382 = vpop.f32.mrf.mxu0
    %v3383 = vadd.f32 %v3363, %v3382
    %3384 = vdwg.mxu0
    %3385 = vmatpush.msra.mxu0 %v1077
    %3386 = vmatpush.msra.mxu0 %v1065
    %3387 = vmatpush.msra.mxu0 %v1053
    %3388 = vmatpush.msra.mxu0 %v1041
    %3389 = vmatpush.msra.mxu0 %v1029
    %3390 = vmatpush.msra.mxu0 %v1017
    %3391 = vmatpush.msra.mxu0 %v1005
    %3392 = vmatpush.msra.mxu0 %v993
    %3393 = vmatpush.msra.mxu0 %v981
    %3394 = vmatpush.msra.mxu0 %v969
    %3395 = vmatpush.msra.mxu0 %v957
    %3396 = vmatpush.msra.mxu0 %v945
    %3397 = vmatpush.msra.mxu0 %v933
    %3398 = vmatpush.msra.mxu0 %v921
    %3399 = vmatpush.msra.mxu0 %v909
    %3400 = vmatpush.msra.mxu0 %v897
    %3401 = vmatmul.f32.gmra.mxu0 %v3141
    %v3402 = vpop.f32.mrf.mxu0
    %v3403 = vadd.f32 0.0, %v3402
    %3404 = vdwg.mxu0
    %3405 = vmatpush.msra.mxu0 %v1269
    %3406 = vmatpush.msra.mxu0 %v1257
    %3407 = vmatpush.msra.mxu0 %v1245
    %3408 = vmatpush.msra.mxu0 %v1233
    %3409 = vmatpush.msra.mxu0 %v1221
    %3410 = vmatpush.msra.mxu0 %v1209
    %3411 = vmatpush.msra.mxu0 %v1197
    %3412 = vmatpush.msra.mxu0 %v1185
    %3413 = vmatpush.msra.mxu0 %v1173
    %3414 = vmatpush.msra.mxu0 %v1161
    %3415 = vmatpush.msra.mxu0 %v1149
    %3416 = vmatpush.msra.mxu0 %v1137
    %3417 = vmatpush.msra.mxu0 %v1125
    %3418 = vmatpush.msra.mxu0 %v1113
    %3419 = vmatpush.msra.mxu0 %v1101
    %3420 = vmatpush.msra.mxu0 %v1089
    %3421 = vmatmul.f32.gmra.mxu0 %v3142
    %v3422 = vpop.f32.mrf.mxu0
    %v3423 = vadd.f32 %v3403, %v3422
    %3424 = vdwg.mxu0
    %3425 = vmatpush.msra.mxu0 %v1461
    %3426 = vmatpush.msra.mxu0 %v1449
    %3427 = vmatpush.msra.mxu0 %v1437
    %3428 = vmatpush.msra.mxu0 %v1425
    %3429 = vmatpush.msra.mxu0 %v1413
    %3430 = vmatpush.msra.mxu0 %v1401
    %3431 = vmatpush.msra.mxu0 %v1389
    %3432 = vmatpush.msra.mxu0 %v1377
    %3433 = vmatpush.msra.mxu0 %v1365
    %3434 = vmatpush.msra.mxu0 %v1353
    %3435 = vmatpush.msra.mxu0 %v1341
    %3436 = vmatpush.msra.mxu0 %v1329
    %3437 = vmatpush.msra.mxu0 %v1317
    %3438 = vmatpush.msra.mxu0 %v1305
    %3439 = vmatpush.msra.mxu0 %v1293
    %3440 = vmatpush.msra.mxu0 %v1281
    %3441 = vmatmul.f32.gmra.mxu0 %v3132
    %v3442 = vpop.f32.mrf.mxu0
    %v3443 = vadd.f32 %v3423, %v3442
    %3444 = vdwg.mxu0
    %3445 = vmatpush.msra.mxu0 %v1078
    %3446 = vmatpush.msra.mxu0 %v1066
    %3447 = vmatpush.msra.mxu0 %v1054
    %3448 = vmatpush.msra.mxu0 %v1042
    %3449 = vmatpush.msra.mxu0 %v1030
    %3450 = vmatpush.msra.mxu0 %v1018
    %3451 = vmatpush.msra.mxu0 %v1006
    %3452 = vmatpush.msra.mxu0 %v994
    %3453 = vmatpush.msra.mxu0 %v982
    %3454 = vmatpush.msra.mxu0 %v970
    %3455 = vmatpush.msra.mxu0 %v958
    %3456 = vmatpush.msra.mxu0 %v946
    %3457 = vmatpush.msra.mxu0 %v934
    %3458 = vmatpush.msra.mxu0 %v922
    %3459 = vmatpush.msra.mxu0 %v910
    %3460 = vmatpush.msra.mxu0 %v898
    %3461 = vmatmul.f32.gmra.mxu0 %v3141
    %v3462 = vpop.f32.mrf.mxu0
    %v3463 = vadd.f32 0.0, %v3462
    %3464 = vdwg.mxu0
    %3465 = vmatpush.msra.mxu0 %v1270
    %3466 = vmatpush.msra.mxu0 %v1258
    %3467 = vmatpush.msra.mxu0 %v1246
    %3468 = vmatpush.msra.mxu0 %v1234
    %3469 = vmatpush.msra.mxu0 %v1222
    %3470 = vmatpush.msra.mxu0 %v1210
    %3471 = vmatpush.msra.mxu0 %v1198
    %3472 = vmatpush.msra.mxu0 %v1186
    %3473 = vmatpush.msra.mxu0 %v1174
    %3474 = vmatpush.msra.mxu0 %v1162
    %3475 = vmatpush.msra.mxu0 %v1150
    %3476 = vmatpush.msra.mxu0 %v1138
    %3477 = vmatpush.msra.mxu0 %v1126
    %3478 = vmatpush.msra.mxu0 %v1114
    %3479 = vmatpush.msra.mxu0 %v1102
    %3480 = vmatpush.msra.mxu0 %v1090
    %3481 = vmatmul.f32.gmra.mxu0 %v3142
    %v3482 = vpop.f32.mrf.mxu0
    %v3483 = vadd.f32 %v3463, %v3482
    %3484 = vdwg.mxu0
    %3485 = vmatpush.msra.mxu0 %v1462
    %3486 = vmatpush.msra.mxu0 %v1450
    %3487 = vmatpush.msra.mxu0 %v1438
    %3488 = vmatpush.msra.mxu0 %v1426
    %3489 = vmatpush.msra.mxu0 %v1414
    %3490 = vmatpush.msra.mxu0 %v1402
    %3491 = vmatpush.msra.mxu0 %v1390
    %3492 = vmatpush.msra.mxu0 %v1378
    %3493 = vmatpush.msra.mxu0 %v1366
    %3494 = vmatpush.msra.mxu0 %v1354
    %3495 = vmatpush.msra.mxu0 %v1342
    %3496 = vmatpush.msra.mxu0 %v1330
    %3497 = vmatpush.msra.mxu0 %v1318
    %3498 = vmatpush.msra.mxu0 %v1306
    %3499 = vmatpush.msra.mxu0 %v1294
    %3500 = vmatpush.msra.mxu0 %v1282
    %3501 = vmatmul.f32.gmra.mxu0 %v3132
    %v3502 = vpop.f32.mrf.mxu0
    %v3503 = vadd.f32 %v3483, %v3502
    %3504 = vdwg.mxu0
    %3505 = vmatpush.msra.mxu0 %v1079
    %3506 = vmatpush.msra.mxu0 %v1067
    %3507 = vmatpush.msra.mxu0 %v1055
    %3508 = vmatpush.msra.mxu0 %v1043
    %3509 = vmatpush.msra.mxu0 %v1031
    %3510 = vmatpush.msra.mxu0 %v1019
    %3511 = vmatpush.msra.mxu0 %v1007
    %3512 = vmatpush.msra.mxu0 %v995
    %3513 = vmatpush.msra.mxu0 %v983
    %3514 = vmatpush.msra.mxu0 %v971
    %3515 = vmatpush.msra.mxu0 %v959
    %3516 = vmatpush.msra.mxu0 %v947
    %3517 = vmatpush.msra.mxu0 %v935
    %3518 = vmatpush.msra.mxu0 %v923
    %3519 = vmatpush.msra.mxu0 %v911
    %3520 = vmatpush.msra.mxu0 %v899
    %3521 = vmatmul.f32.gmra.mxu0 %v3141
    %v3522 = vpop.f32.mrf.mxu0
    %v3523 = vadd.f32 0.0, %v3522
    %3524 = vdwg.mxu0
    %3525 = vmatpush.msra.mxu0 %v1271
    %3526 = vmatpush.msra.mxu0 %v1259
    %3527 = vmatpush.msra.mxu0 %v1247
    %3528 = vmatpush.msra.mxu0 %v1235
    %3529 = vmatpush.msra.mxu0 %v1223
    %3530 = vmatpush.msra.mxu0 %v1211
    %3531 = vmatpush.msra.mxu0 %v1199
    %3532 = vmatpush.msra.mxu0 %v1187
    %3533 = vmatpush.msra.mxu0 %v1175
    %3534 = vmatpush.msra.mxu0 %v1163
    %3535 = vmatpush.msra.mxu0 %v1151
    %3536 = vmatpush.msra.mxu0 %v1139
    %3537 = vmatpush.msra.mxu0 %v1127
    %3538 = vmatpush.msra.mxu0 %v1115
    %3539 = vmatpush.msra.mxu0 %v1103
    %3540 = vmatpush.msra.mxu0 %v1091
    %3541 = vmatmul.f32.gmra.mxu0 %v3142
    %v3542 = vpop.f32.mrf.mxu0
    %v3543 = vadd.f32 %v3523, %v3542
    %3544 = vdwg.mxu0
    %3545 = vmatpush.msra.mxu0 %v1463
    %3546 = vmatpush.msra.mxu0 %v1451
    %3547 = vmatpush.msra.mxu0 %v1439
    %3548 = vmatpush.msra.mxu0 %v1427
    %3549 = vmatpush.msra.mxu0 %v1415
    %3550 = vmatpush.msra.mxu0 %v1403
    %3551 = vmatpush.msra.mxu0 %v1391
    %3552 = vmatpush.msra.mxu0 %v1379
    %3553 = vmatpush.msra.mxu0 %v1367
    %3554 = vmatpush.msra.mxu0 %v1355
    %3555 = vmatpush.msra.mxu0 %v1343
    %3556 = vmatpush.msra.mxu0 %v1331
    %3557 = vmatpush.msra.mxu0 %v1319
    %3558 = vmatpush.msra.mxu0 %v1307
    %3559 = vmatpush.msra.mxu0 %v1295
    %3560 = vmatpush.msra.mxu0 %v1283
    %3561 = vmatmul.f32.gmra.mxu0 %v3132
    %v3562 = vpop.f32.mrf.mxu0
    %v3563 = vadd.f32 %v3543, %v3562
    %3564 = vdwg.mxu0
    %3565 = vmatpush.msra.mxu0 %v1080
    %3566 = vmatpush.msra.mxu0 %v1068
    %3567 = vmatpush.msra.mxu0 %v1056
    %3568 = vmatpush.msra.mxu0 %v1044
    %3569 = vmatpush.msra.mxu0 %v1032
    %3570 = vmatpush.msra.mxu0 %v1020
    %3571 = vmatpush.msra.mxu0 %v1008
    %3572 = vmatpush.msra.mxu0 %v996
    %3573 = vmatpush.msra.mxu0 %v984
    %3574 = vmatpush.msra.mxu0 %v972
    %3575 = vmatpush.msra.mxu0 %v960
    %3576 = vmatpush.msra.mxu0 %v948
    %3577 = vmatpush.msra.mxu0 %v936
    %3578 = vmatpush.msra.mxu0 %v924
    %3579 = vmatpush.msra.mxu0 %v912
    %3580 = vmatpush.msra.mxu0 %v900
    %3581 = vmatmul.f32.gmra.mxu0 %v3141
    %v3582 = vpop.f32.mrf.mxu0
    %v3583 = vadd.f32 0.0, %v3582
    %3584 = vdwg.mxu0
    %3585 = vmatpush.msra.mxu0 %v1272
    %3586 = vmatpush.msra.mxu0 %v1260
    %3587 = vmatpush.msra.mxu0 %v1248
    %3588 = vmatpush.msra.mxu0 %v1236
    %3589 = vmatpush.msra.mxu0 %v1224
    %3590 = vmatpush.msra.mxu0 %v1212
    %3591 = vmatpush.msra.mxu0 %v1200
    %3592 = vmatpush.msra.mxu0 %v1188
    %3593 = vmatpush.msra.mxu0 %v1176
    %3594 = vmatpush.msra.mxu0 %v1164
    %3595 = vmatpush.msra.mxu0 %v1152
    %3596 = vmatpush.msra.mxu0 %v1140
    %3597 = vmatpush.msra.mxu0 %v1128
    %3598 = vmatpush.msra.mxu0 %v1116
    %3599 = vmatpush.msra.mxu0 %v1104
    %3600 = vmatpush.msra.mxu0 %v1092
    %3601 = vmatmul.f32.gmra.mxu0 %v3142
    %v3602 = vpop.f32.mrf.mxu0
    %v3603 = vadd.f32 %v3583, %v3602
    %3604 = vdwg.mxu0
    %3605 = vmatpush.msra.mxu0 %v1464
    %3606 = vmatpush.msra.mxu0 %v1452
    %3607 = vmatpush.msra.mxu0 %v1440
    %3608 = vmatpush.msra.mxu0 %v1428
    %3609 = vmatpush.msra.mxu0 %v1416
    %3610 = vmatpush.msra.mxu0 %v1404
    %3611 = vmatpush.msra.mxu0 %v1392
    %3612 = vmatpush.msra.mxu0 %v1380
    %3613 = vmatpush.msra.mxu0 %v1368
    %3614 = vmatpush.msra.mxu0 %v1356
    %3615 = vmatpush.msra.mxu0 %v1344
    %3616 = vmatpush.msra.mxu0 %v1332
    %3617 = vmatpush.msra.mxu0 %v1320
    %3618 = vmatpush.msra.mxu0 %v1308
    %3619 = vmatpush.msra.mxu0 %v1296
    %3620 = vmatpush.msra.mxu0 %v1284
    %3621 = vmatmul.f32.gmra.mxu0 %v3132
    %v3622 = vpop.f32.mrf.mxu0
    %v3623 = vadd.f32 %v3603, %v3622
    %3624 = vdwg.mxu0
    %3625 = vmatpush.msra.mxu0 %v1081
    %3626 = vmatpush.msra.mxu0 %v1069
    %3627 = vmatpush.msra.mxu0 %v1057
    %3628 = vmatpush.msra.mxu0 %v1045
    %3629 = vmatpush.msra.mxu0 %v1033
    %3630 = vmatpush.msra.mxu0 %v1021
    %3631 = vmatpush.msra.mxu0 %v1009
    %3632 = vmatpush.msra.mxu0 %v997
    %3633 = vmatpush.msra.mxu0 %v985
    %3634 = vmatpush.msra.mxu0 %v973
    %3635 = vmatpush.msra.mxu0 %v961
    %3636 = vmatpush.msra.mxu0 %v949
    %3637 = vmatpush.msra.mxu0 %v937
    %3638 = vmatpush.msra.mxu0 %v925
    %3639 = vmatpush.msra.mxu0 %v913
    %3640 = vmatpush.msra.mxu0 %v901
    %3641 = vmatmul.f32.gmra.mxu0 %v3141
    %v3642 = vpop.f32.mrf.mxu0
    %v3643 = vadd.f32 0.0, %v3642
    %3644 = vdwg.mxu0
    %3645 = vmatpush.msra.mxu0 %v1273
    %3646 = vmatpush.msra.mxu0 %v1261
    %3647 = vmatpush.msra.mxu0 %v1249
    %3648 = vmatpush.msra.mxu0 %v1237
    %3649 = vmatpush.msra.mxu0 %v1225
    %3650 = vmatpush.msra.mxu0 %v1213
    %3651 = vmatpush.msra.mxu0 %v1201
    %3652 = vmatpush.msra.mxu0 %v1189
    %3653 = vmatpush.msra.mxu0 %v1177
    %3654 = vmatpush.msra.mxu0 %v1165
    %3655 = vmatpush.msra.mxu0 %v1153
    %3656 = vmatpush.msra.mxu0 %v1141
    %3657 = vmatpush.msra.mxu0 %v1129
    %3658 = vmatpush.msra.mxu0 %v1117
    %3659 = vmatpush.msra.mxu0 %v1105
    %3660 = vmatpush.msra.mxu0 %v1093
    %3661 = vmatmul.f32.gmra.mxu0 %v3142
    %v3662 = vpop.f32.mrf.mxu0
    %v3663 = vadd.f32 %v3643, %v3662
    %3664 = vdwg.mxu0
    %3665 = vmatpush.msra.mxu0 %v1465
    %3666 = vmatpush.msra.mxu0 %v1453
    %3667 = vmatpush.msra.mxu0 %v1441
    %3668 = vmatpush.msra.mxu0 %v1429
    %3669 = vmatpush.msra.mxu0 %v1417
    %3670 = vmatpush.msra.mxu0 %v1405
    %3671 = vmatpush.msra.mxu0 %v1393
    %3672 = vmatpush.msra.mxu0 %v1381
    %3673 = vmatpush.msra.mxu0 %v1369
    %3674 = vmatpush.msra.mxu0 %v1357
    %3675 = vmatpush.msra.mxu0 %v1345
    %3676 = vmatpush.msra.mxu0 %v1333
    %3677 = vmatpush.msra.mxu0 %v1321
    %3678 = vmatpush.msra.mxu0 %v1309
    %3679 = vmatpush.msra.mxu0 %v1297
    %3680 = vmatpush.msra.mxu0 %v1285
    %3681 = vmatmul.f32.gmra.mxu0 %v3132
    %v3682 = vpop.f32.mrf.mxu0
    %v3683 = vadd.f32 %v3663, %v3682
    %3684 = vdwg.mxu0
    %3685 = vmatpush.msra.mxu0 %v1082
    %3686 = vmatpush.msra.mxu0 %v1070
    %3687 = vmatpush.msra.mxu0 %v1058
    %3688 = vmatpush.msra.mxu0 %v1046
    %3689 = vmatpush.msra.mxu0 %v1034
    %3690 = vmatpush.msra.mxu0 %v1022
    %3691 = vmatpush.msra.mxu0 %v1010
    %3692 = vmatpush.msra.mxu0 %v998
    %3693 = vmatpush.msra.mxu0 %v986
    %3694 = vmatpush.msra.mxu0 %v974
    %3695 = vmatpush.msra.mxu0 %v962
    %3696 = vmatpush.msra.mxu0 %v950
    %3697 = vmatpush.msra.mxu0 %v938
    %3698 = vmatpush.msra.mxu0 %v926
    %3699 = vmatpush.msra.mxu0 %v914
    %3700 = vmatpush.msra.mxu0 %v902
    %3701 = vmatmul.f32.gmra.mxu0 %v3141
    %v3702 = vpop.f32.mrf.mxu0
    %v3703 = vadd.f32 0.0, %v3702
    %3704 = vdwg.mxu0
    %3705 = vmatpush.msra.mxu0 %v1274
    %3706 = vmatpush.msra.mxu0 %v1262
    %3707 = vmatpush.msra.mxu0 %v1250
    %3708 = vmatpush.msra.mxu0 %v1238
    %3709 = vmatpush.msra.mxu0 %v1226
    %3710 = vmatpush.msra.mxu0 %v1214
    %3711 = vmatpush.msra.mxu0 %v1202
    %3712 = vmatpush.msra.mxu0 %v1190
    %3713 = vmatpush.msra.mxu0 %v1178
    %3714 = vmatpush.msra.mxu0 %v1166
    %3715 = vmatpush.msra.mxu0 %v1154
    %3716 = vmatpush.msra.mxu0 %v1142
    %3717 = vmatpush.msra.mxu0 %v1130
    %3718 = vmatpush.msra.mxu0 %v1118
    %3719 = vmatpush.msra.mxu0 %v1106
    %3720 = vmatpush.msra.mxu0 %v1094
    %3721 = vmatmul.f32.gmra.mxu0 %v3142
    %v3722 = vpop.f32.mrf.mxu0
    %v3723 = vadd.f32 %v3703, %v3722
    %3724 = vdwg.mxu0
    %3725 = vmatpush.msra.mxu0 %v1466
    %3726 = vmatpush.msra.mxu0 %v1454
    %3727 = vmatpush.msra.mxu0 %v1442
    %3728 = vmatpush.msra.mxu0 %v1430
    %3729 = vmatpush.msra.mxu0 %v1418
    %3730 = vmatpush.msra.mxu0 %v1406
    %3731 = vmatpush.msra.mxu0 %v1394
    %3732 = vmatpush.msra.mxu0 %v1382
    %3733 = vmatpush.msra.mxu0 %v1370
    %3734 = vmatpush.msra.mxu0 %v1358
    %3735 = vmatpush.msra.mxu0 %v1346
    %3736 = vmatpush.msra.mxu0 %v1334
    %3737 = vmatpush.msra.mxu0 %v1322
    %3738 = vmatpush.msra.mxu0 %v1310
    %3739 = vmatpush.msra.mxu0 %v1298
    %3740 = vmatpush.msra.mxu0 %v1286
    %3741 = vmatmul.f32.gmra.mxu0 %v3132
    %v3742 = vpop.f32.mrf.mxu0
    %v3743 = vadd.f32 %v3723, %v3742
    %3744 = vdwg.mxu0
    %3745 = vmatpush.msra.mxu0 %v1083
    %3746 = vmatpush.msra.mxu0 %v1071
    %3747 = vmatpush.msra.mxu0 %v1059
    %3748 = vmatpush.msra.mxu0 %v1047
    %3749 = vmatpush.msra.mxu0 %v1035
    %3750 = vmatpush.msra.mxu0 %v1023
    %3751 = vmatpush.msra.mxu0 %v1011
    %3752 = vmatpush.msra.mxu0 %v999
    %3753 = vmatpush.msra.mxu0 %v987
    %3754 = vmatpush.msra.mxu0 %v975
    %3755 = vmatpush.msra.mxu0 %v963
    %3756 = vmatpush.msra.mxu0 %v951
    %3757 = vmatpush.msra.mxu0 %v939
    %3758 = vmatpush.msra.mxu0 %v927
    %3759 = vmatpush.msra.mxu0 %v915
    %3760 = vmatpush.msra.mxu0 %v903
    %3761 = vmatmul.f32.gmra.mxu0 %v3141
    %v3762 = vpop.f32.mrf.mxu0
    %v3763 = vadd.f32 0.0, %v3762
    %3764 = vdwg.mxu0
    %3765 = vmatpush.msra.mxu0 %v1275
    %3766 = vmatpush.msra.mxu0 %v1263
    %3767 = vmatpush.msra.mxu0 %v1251
    %3768 = vmatpush.msra.mxu0 %v1239
    %3769 = vmatpush.msra.mxu0 %v1227
    %3770 = vmatpush.msra.mxu0 %v1215
    %3771 = vmatpush.msra.mxu0 %v1203
    %3772 = vmatpush.msra.mxu0 %v1191
    %3773 = vmatpush.msra.mxu0 %v1179
    %3774 = vmatpush.msra.mxu0 %v1167
    %3775 = vmatpush.msra.mxu0 %v1155
    %3776 = vmatpush.msra.mxu0 %v1143
    %3777 = vmatpush.msra.mxu0 %v1131
    %3778 = vmatpush.msra.mxu0 %v1119
    %3779 = vmatpush.msra.mxu0 %v1107
    %3780 = vmatpush.msra.mxu0 %v1095
    %3781 = vmatmul.f32.gmra.mxu0 %v3142
    %v3782 = vpop.f32.mrf.mxu0
    %v3783 = vadd.f32 %v3763, %v3782
    %3784 = vdwg.mxu0
    %3785 = vmatpush.msra.mxu0 %v1467
    %3786 = vmatpush.msra.mxu0 %v1455
    %3787 = vmatpush.msra.mxu0 %v1443
    %3788 = vmatpush.msra.mxu0 %v1431
    %3789 = vmatpush.msra.mxu0 %v1419
    %3790 = vmatpush.msra.mxu0 %v1407
    %3791 = vmatpush.msra.mxu0 %v1395
    %3792 = vmatpush.msra.mxu0 %v1383
    %3793 = vmatpush.msra.mxu0 %v1371
    %3794 = vmatpush.msra.mxu0 %v1359
    %3795 = vmatpush.msra.mxu0 %v1347
    %3796 = vmatpush.msra.mxu0 %v1335
    %3797 = vmatpush.msra.mxu0 %v1323
    %3798 = vmatpush.msra.mxu0 %v1311
    %3799 = vmatpush.msra.mxu0 %v1299
    %3800 = vmatpush.msra.mxu0 %v1287
    %3801 = vmatmul.f32.gmra.mxu0 %v3132
    %v3802 = vpop.f32.mrf.mxu0
    %v3803 = vadd.f32 %v3783, %v3802
    %3804 = vdwg.mxu0
    %3805 = vmatpush.msra.mxu0 %v1084
    %3806 = vmatpush.msra.mxu0 %v1072
    %3807 = vmatpush.msra.mxu0 %v1060
    %3808 = vmatpush.msra.mxu0 %v1048
    %3809 = vmatpush.msra.mxu0 %v1036
    %3810 = vmatpush.msra.mxu0 %v1024
    %3811 = vmatpush.msra.mxu0 %v1012
    %3812 = vmatpush.msra.mxu0 %v1000
    %3813 = vmatpush.msra.mxu0 %v988
    %3814 = vmatpush.msra.mxu0 %v976
    %3815 = vmatpush.msra.mxu0 %v964
    %3816 = vmatpush.msra.mxu0 %v952
    %3817 = vmatpush.msra.mxu0 %v940
    %3818 = vmatpush.msra.mxu0 %v928
    %3819 = vmatpush.msra.mxu0 %v916
    %3820 = vmatpush.msra.mxu0 %v904
    %3821 = vmatmul.f32.gmra.mxu0 %v3141
    %v3822 = vpop.f32.mrf.mxu0
    %v3823 = vadd.f32 0.0, %v3822
    %3824 = vdwg.mxu0
    %3825 = vmatpush.msra.mxu0 %v1276
    %3826 = vmatpush.msra.mxu0 %v1264
    %3827 = vmatpush.msra.mxu0 %v1252
    %3828 = vmatpush.msra.mxu0 %v1240
    %3829 = vmatpush.msra.mxu0 %v1228
    %3830 = vmatpush.msra.mxu0 %v1216
    %3831 = vmatpush.msra.mxu0 %v1204
    %3832 = vmatpush.msra.mxu0 %v1192
    %3833 = vmatpush.msra.mxu0 %v1180
    %3834 = vmatpush.msra.mxu0 %v1168
    %3835 = vmatpush.msra.mxu0 %v1156
    %3836 = vmatpush.msra.mxu0 %v1144
    %3837 = vmatpush.msra.mxu0 %v1132
    %3838 = vmatpush.msra.mxu0 %v1120
    %3839 = vmatpush.msra.mxu0 %v1108
    %3840 = vmatpush.msra.mxu0 %v1096
    %3841 = vmatmul.f32.gmra.mxu0 %v3142
    %v3842 = vpop.f32.mrf.mxu0
    %v3843 = vadd.f32 %v3823, %v3842
    %3844 = vdwg.mxu0
    %3845 = vmatpush.msra.mxu0 %v1468
    %3846 = vmatpush.msra.mxu0 %v1456
    %3847 = vmatpush.msra.mxu0 %v1444
    %3848 = vmatpush.msra.mxu0 %v1432
    %3849 = vmatpush.msra.mxu0 %v1420
    %3850 = vmatpush.msra.mxu0 %v1408
    %3851 = vmatpush.msra.mxu0 %v1396
    %3852 = vmatpush.msra.mxu0 %v1384
    %3853 = vmatpush.msra.mxu0 %v1372
    %3854 = vmatpush.msra.mxu0 %v1360
    %3855 = vmatpush.msra.mxu0 %v1348
    %3856 = vmatpush.msra.mxu0 %v1336
    %3857 = vmatpush.msra.mxu0 %v1324
    %3858 = vmatpush.msra.mxu0 %v1312
    %3859 = vmatpush.msra.mxu0 %v1300
    %3860 = vmatpush.msra.mxu0 %v1288
    %3861 = vmatmul.f32.gmra.mxu0 %v3132
    %v3862 = vpop.f32.mrf.mxu0
    %v3863 = vadd.f32 %v3843, %v3862
    %3864 = vdwg.mxu0
    %v3877 = vrot.slane %v3263, 7
    %v3878 = vrot.slane %v3323, 6
    %v3879 = vrot.slane %v3383, 5
    %v3880 = vrot.slane %v3443, 4
    %v3881 = vrot.slane %v3503, 3
    %v3882 = vrot.slane %v3563, 2
    %v3883 = vrot.slane %v3623, 1
    %v3884 = vrot.slane %v3743, 7
    %v3885 = vrot.slane %v3803, 6
    %v3886 = vrot.slane %v3863, 5
    %v3887 = vsel %vm1510, %v3203, %v3877
    %v3888 = vsel %vm2279, %v3878, %v3879
    %v3889 = vsel %vm1512, %v3887, %v3888
    %v3890 = vsel %vm2282, %v3880, %v3881
    %v3891 = vsel %vm2284, %v3882, %v3883
    %v3892 = vsel %vm2286, %v3890, %v3891
    %v3893 = vsel %vm2288, %v3889, %v3892
    %v3894 = vsel %vm1510, %v3683, %v3884
    %v3895 = vsel %vm2279, %v3885, %v3886
    %v3896 = vsel %vm1512, %v3894, %v3895
    %v3899 = vadd.f32 %v3138, %v3893
    %v3900 = vadd.f32 %v3140, %v3896
    %v3901 = vtanh.pop %v3899
    %v3902 = vtanh.pop %v3900
    %v3903 = vmul.f32 %v3901, 0.5
    %v3904 = vmul.f32 %v3902, 0.5
    %v3905 = vadd.f32 %v3903, 0.5
    %v3906 = vadd.f32 %v3904, 0.5
    %v3908 = vrot.slane %v3902, 1
    %v3910 = vmul.f32 %v3905, %v3908
    %v3912 = vrot.slane %v3905, 3
    %v3914 = vmul.f32 %v3912, %v3123
    %v3915 = vadd.f32 %v3914, %v3910
    %v3916 = vtanh.pop %v3915
    %v3918 = vrot.slane %v3905, 6
    %v3919 = vrot.slane %v3906, 6
    %v3920 = vsel %vm1512, %v3918, %v3919
    %v3922 = vmul.f32 %v3920, %v3916
    %v3924 = vperm.slane %v3922, 2
    %3926 = vst [vmem:[#allocation4 + $0x1] sm:$0x1] %v3924
    %s3927 = scalar_lea.vmem [#allocation3], 4
    %v3928 = vld [vmem:[%s3927] ss:$8 sm:$0xf]
    %v3929 = vld [vmem:[%s3927] ss:$8 sm:$0xf0]
    %v3930 = vor.u32 %v3928, %v3929
    %s3931 = scalar_lea.vmem [#allocation3], 68
    %v3932 = vld [vmem:[%s3931] ss:$8 sm:$0xf]
    %v3933 = vperm.slane %v3922, 0
    %v3934 = vperm.slane %v3922, 1
    %3937 = vmatpush.msra.mxu0 %v1073
    %3938 = vmatpush.msra.mxu0 %v1061
    %3939 = vmatpush.msra.mxu0 %v1049
    %3940 = vmatpush.msra.mxu0 %v1037
    %3941 = vmatpush.msra.mxu0 %v1025
    %3942 = vmatpush.msra.mxu0 %v1013
    %3943 = vmatpush.msra.mxu0 %v1001
    %3944 = vmatpush.msra.mxu0 %v989
    %3945 = vmatpush.msra.mxu0 %v977
    %3946 = vmatpush.msra.mxu0 %v965
    %3947 = vmatpush.msra.mxu0 %v953
    %3948 = vmatpush.msra.mxu0 %v941
    %3949 = vmatpush.msra.mxu0 %v929
    %3950 = vmatpush.msra.mxu0 %v917
    %3951 = vmatpush.msra.mxu0 %v905
    %3952 = vmatpush.msra.mxu0 %v893
    %3953 = vmatmul.f32.gmra.mxu0 %v3933
    %v3954 = vpop.f32.mrf.mxu0
    %v3955 = vadd.f32 0.0, %v3954
    %3956 = vdwg.mxu0
    %3957 = vmatpush.msra.mxu0 %v1265
    %3958 = vmatpush.msra.mxu0 %v1253
    %3959 = vmatpush.msra.mxu0 %v1241
    %3960 = vmatpush.msra.mxu0 %v1229
    %3961 = vmatpush.msra.mxu0 %v1217
    %3962 = vmatpush.msra.mxu0 %v1205
    %3963 = vmatpush.msra.mxu0 %v1193
    %3964 = vmatpush.msra.mxu0 %v1181
    %3965 = vmatpush.msra.mxu0 %v1169
    %3966 = vmatpush.msra.mxu0 %v1157
    %3967 = vmatpush.msra.mxu0 %v1145
    %3968 = vmatpush.msra.mxu0 %v1133
    %3969 = vmatpush.msra.mxu0 %v1121
    %3970 = vmatpush.msra.mxu0 %v1109
    %3971 = vmatpush.msra.mxu0 %v1097
    %3972 = vmatpush.msra.mxu0 %v1085
    %3973 = vmatmul.f32.gmra.mxu0 %v3934
    %v3974 = vpop.f32.mrf.mxu0
    %v3975 = vadd.f32 %v3955, %v3974
    %3976 = vdwg.mxu0
    %3977 = vmatpush.msra.mxu0 %v1457
    %3978 = vmatpush.msra.mxu0 %v1445
    %3979 = vmatpush.msra.mxu0 %v1433
    %3980 = vmatpush.msra.mxu0 %v1421
    %3981 = vmatpush.msra.mxu0 %v1409
    %3982 = vmatpush.msra.mxu0 %v1397
    %3983 = vmatpush.msra.mxu0 %v1385
    %3984 = vmatpush.msra.mxu0 %v1373
    %3985 = vmatpush.msra.mxu0 %v1361
    %3986 = vmatpush.msra.mxu0 %v1349
    %3987 = vmatpush.msra.mxu0 %v1337
    %3988 = vmatpush.msra.mxu0 %v1325
    %3989 = vmatpush.msra.mxu0 %v1313
    %3990 = vmatpush.msra.mxu0 %v1301
    %3991 = vmatpush.msra.mxu0 %v1289
    %3992 = vmatpush.msra.mxu0 %v1277
    %3993 = vmatmul.f32.gmra.mxu0 %v3924
    %v3994 = vpop.f32.mrf.mxu0
    %v3995 = vadd.f32 %v3975, %v3994
    %3996 = vdwg.mxu0
    %3997 = vmatpush.msra.mxu0 %v1074
    %3998 = vmatpush.msra.mxu0 %v1062
    %3999 = vmatpush.msra.mxu0 %v1050
    %4000 = vmatpush.msra.mxu0 %v1038
    %4001 = vmatpush.msra.mxu0 %v1026
    %4002 = vmatpush.msra.mxu0 %v1014
    %4003 = vmatpush.msra.mxu0 %v1002
    %4004 = vmatpush.msra.mxu0 %v990
    %4005 = vmatpush.msra.mxu0 %v978
    %4006 = vmatpush.msra.mxu0 %v966
    %4007 = vmatpush.msra.mxu0 %v954
    %4008 = vmatpush.msra.mxu0 %v942
    %4009 = vmatpush.msra.mxu0 %v930
    %4010 = vmatpush.msra.mxu0 %v918
    %4011 = vmatpush.msra.mxu0 %v906
    %4012 = vmatpush.msra.mxu0 %v894
    %4013 = vmatmul.f32.gmra.mxu0 %v3933
    %v4014 = vpop.f32.mrf.mxu0
    %v4015 = vadd.f32 0.0, %v4014
    %4016 = vdwg.mxu0
    %4017 = vmatpush.msra.mxu0 %v1266
    %4018 = vmatpush.msra.mxu0 %v1254
    %4019 = vmatpush.msra.mxu0 %v1242
    %4020 = vmatpush.msra.mxu0 %v1230
    %4021 = vmatpush.msra.mxu0 %v1218
    %4022 = vmatpush.msra.mxu0 %v1206
    %4023 = vmatpush.msra.mxu0 %v1194
    %4024 = vmatpush.msra.mxu0 %v1182
    %4025 = vmatpush.msra.mxu0 %v1170
    %4026 = vmatpush.msra.mxu0 %v1158
    %4027 = vmatpush.msra.mxu0 %v1146
    %4028 = vmatpush.msra.mxu0 %v1134
    %4029 = vmatpush.msra.mxu0 %v1122
    %4030 = vmatpush.msra.mxu0 %v1110
    %4031 = vmatpush.msra.mxu0 %v1098
    %4032 = vmatpush.msra.mxu0 %v1086
    %4033 = vmatmul.f32.gmra.mxu0 %v3934
    %v4034 = vpop.f32.mrf.mxu0
    %v4035 = vadd.f32 %v4015, %v4034
    %4036 = vdwg.mxu0
    %4037 = vmatpush.msra.mxu0 %v1458
    %4038 = vmatpush.msra.mxu0 %v1446
    %4039 = vmatpush.msra.mxu0 %v1434
    %4040 = vmatpush.msra.mxu0 %v1422
    %4041 = vmatpush.msra.mxu0 %v1410
    %4042 = vmatpush.msra.mxu0 %v1398
    %4043 = vmatpush.msra.mxu0 %v1386
    %4044 = vmatpush.msra.mxu0 %v1374
    %4045 = vmatpush.msra.mxu0 %v1362
    %4046 = vmatpush.msra.mxu0 %v1350
    %4047 = vmatpush.msra.mxu0 %v1338
    %4048 = vmatpush.msra.mxu0 %v1326
    %4049 = vmatpush.msra.mxu0 %v1314
    %4050 = vmatpush.msra.mxu0 %v1302
    %4051 = vmatpush.msra.mxu0 %v1290
    %4052 = vmatpush.msra.mxu0 %v1278
    %4053 = vmatmul.f32.gmra.mxu0 %v3924
    %v4054 = vpop.f32.mrf.mxu0
    %v4055 = vadd.f32 %v4035, %v4054
    %4056 = vdwg.mxu0
    %4057 = vmatpush.msra.mxu0 %v1075
    %4058 = vmatpush.msra.mxu0 %v1063
    %4059 = vmatpush.msra.mxu0 %v1051
    %4060 = vmatpush.msra.mxu0 %v1039
    %4061 = vmatpush.msra.mxu0 %v1027
    %4062 = vmatpush.msra.mxu0 %v1015
    %4063 = vmatpush.msra.mxu0 %v1003
    %4064 = vmatpush.msra.mxu0 %v991
    %4065 = vmatpush.msra.mxu0 %v979
    %4066 = vmatpush.msra.mxu0 %v967
    %4067 = vmatpush.msra.mxu0 %v955
    %4068 = vmatpush.msra.mxu0 %v943
    %4069 = vmatpush.msra.mxu0 %v931
    %4070 = vmatpush.msra.mxu0 %v919
    %4071 = vmatpush.msra.mxu0 %v907
    %4072 = vmatpush.msra.mxu0 %v895
    %4073 = vmatmul.f32.gmra.mxu0 %v3933
    %v4074 = vpop.f32.mrf.mxu0
    %v4075 = vadd.f32 0.0, %v4074
    %4076 = vdwg.mxu0
    %4077 = vmatpush.msra.mxu0 %v1267
    %4078 = vmatpush.msra.mxu0 %v1255
    %4079 = vmatpush.msra.mxu0 %v1243
    %4080 = vmatpush.msra.mxu0 %v1231
    %4081 = vmatpush.msra.mxu0 %v1219
    %4082 = vmatpush.msra.mxu0 %v1207
    %4083 = vmatpush.msra.mxu0 %v1195
    %4084 = vmatpush.msra.mxu0 %v1183
    %4085 = vmatpush.msra.mxu0 %v1171
    %4086 = vmatpush.msra.mxu0 %v1159
    %4087 = vmatpush.msra.mxu0 %v1147
    %4088 = vmatpush.msra.mxu0 %v1135
    %4089 = vmatpush.msra.mxu0 %v1123
    %4090 = vmatpush.msra.mxu0 %v1111
    %4091 = vmatpush.msra.mxu0 %v1099
    %4092 = vmatpush.msra.mxu0 %v1087
    %4093 = vmatmul.f32.gmra.mxu0 %v3934
    %v4094 = vpop.f32.mrf.mxu0
    %v4095 = vadd.f32 %v4075, %v4094
    %4096 = vdwg.mxu0
    %4097 = vmatpush.msra.mxu0 %v1459
    %4098 = vmatpush.msra.mxu0 %v1447
    %4099 = vmatpush.msra.mxu0 %v1435
    %4100 = vmatpush.msra.mxu0 %v1423
    %4101 = vmatpush.msra.mxu0 %v1411
    %4102 = vmatpush.msra.mxu0 %v1399
    %4103 = vmatpush.msra.mxu0 %v1387
    %4104 = vmatpush.msra.mxu0 %v1375
    %4105 = vmatpush.msra.mxu0 %v1363
    %4106 = vmatpush.msra.mxu0 %v1351
    %4107 = vmatpush.msra.mxu0 %v1339
    %4108 = vmatpush.msra.mxu0 %v1327
    %4109 = vmatpush.msra.mxu0 %v1315
    %4110 = vmatpush.msra.mxu0 %v1303
    %4111 = vmatpush.msra.mxu0 %v1291
    %4112 = vmatpush.msra.mxu0 %v1279
    %4113 = vmatmul.f32.gmra.mxu0 %v3924
    %v4114 = vpop.f32.mrf.mxu0
    %v4115 = vadd.f32 %v4095, %v4114
    %4116 = vdwg.mxu0
    %4117 = vmatpush.msra.mxu0 %v1076
    %4118 = vmatpush.msra.mxu0 %v1064
    %4119 = vmatpush.msra.mxu0 %v1052
    %4120 = vmatpush.msra.mxu0 %v1040
    %4121 = vmatpush.msra.mxu0 %v1028
    %4122 = vmatpush.msra.mxu0 %v1016
    %4123 = vmatpush.msra.mxu0 %v1004
    %4124 = vmatpush.msra.mxu0 %v992
    %4125 = vmatpush.msra.mxu0 %v980
    %4126 = vmatpush.msra.mxu0 %v968
    %4127 = vmatpush.msra.mxu0 %v956
    %4128 = vmatpush.msra.mxu0 %v944
    %4129 = vmatpush.msra.mxu0 %v932
    %4130 = vmatpush.msra.mxu0 %v920
    %4131 = vmatpush.msra.mxu0 %v908
    %4132 = vmatpush.msra.mxu0 %v896
    %4133 = vmatmul.f32.gmra.mxu0 %v3933
    %v4134 = vpop.f32.mrf.mxu0
    %v4135 = vadd.f32 0.0, %v4134
    %4136 = vdwg.mxu0
    %4137 = vmatpush.msra.mxu0 %v1268
    %4138 = vmatpush.msra.mxu0 %v1256
    %4139 = vmatpush.msra.mxu0 %v1244
    %4140 = vmatpush.msra.mxu0 %v1232
    %4141 = vmatpush.msra.mxu0 %v1220
    %4142 = vmatpush.msra.mxu0 %v1208
    %4143 = vmatpush.msra.mxu0 %v1196
    %4144 = vmatpush.msra.mxu0 %v1184
    %4145 = vmatpush.msra.mxu0 %v1172
    %4146 = vmatpush.msra.mxu0 %v1160
    %4147 = vmatpush.msra.mxu0 %v1148
    %4148 = vmatpush.msra.mxu0 %v1136
    %4149 = vmatpush.msra.mxu0 %v1124
    %4150 = vmatpush.msra.mxu0 %v1112
    %4151 = vmatpush.msra.mxu0 %v1100
    %4152 = vmatpush.msra.mxu0 %v1088
    %4153 = vmatmul.f32.gmra.mxu0 %v3934
    %v4154 = vpop.f32.mrf.mxu0
    %v4155 = vadd.f32 %v4135, %v4154
    %4156 = vdwg.mxu0
    %4157 = vmatpush.msra.mxu0 %v1460
    %4158 = vmatpush.msra.mxu0 %v1448
    %4159 = vmatpush.msra.mxu0 %v1436
    %4160 = vmatpush.msra.mxu0 %v1424
    %4161 = vmatpush.msra.mxu0 %v1412
    %4162 = vmatpush.msra.mxu0 %v1400
    %4163 = vmatpush.msra.mxu0 %v1388
    %4164 = vmatpush.msra.mxu0 %v1376
    %4165 = vmatpush.msra.mxu0 %v1364
    %4166 = vmatpush.msra.mxu0 %v1352
    %4167 = vmatpush.msra.mxu0 %v1340
    %4168 = vmatpush.msra.mxu0 %v1328
    %4169 = vmatpush.msra.mxu0 %v1316
    %4170 = vmatpush.msra.mxu0 %v1304
    %4171 = vmatpush.msra.mxu0 %v1292
    %4172 = vmatpush.msra.mxu0 %v1280
    %4173 = vmatmul.f32.gmra.mxu0 %v3924
    %v4174 = vpop.f32.mrf.mxu0
    %v4175 = vadd.f32 %v4155, %v4174
    %4176 = vdwg.mxu0
    %4177 = vmatpush.msra.mxu0 %v1077
    %4178 = vmatpush.msra.mxu0 %v1065
    %4179 = vmatpush.msra.mxu0 %v1053
    %4180 = vmatpush.msra.mxu0 %v1041
    %4181 = vmatpush.msra.mxu0 %v1029
    %4182 = vmatpush.msra.mxu0 %v1017
    %4183 = vmatpush.msra.mxu0 %v1005
    %4184 = vmatpush.msra.mxu0 %v993
    %4185 = vmatpush.msra.mxu0 %v981
    %4186 = vmatpush.msra.mxu0 %v969
    %4187 = vmatpush.msra.mxu0 %v957
    %4188 = vmatpush.msra.mxu0 %v945
    %4189 = vmatpush.msra.mxu0 %v933
    %4190 = vmatpush.msra.mxu0 %v921
    %4191 = vmatpush.msra.mxu0 %v909
    %4192 = vmatpush.msra.mxu0 %v897
    %4193 = vmatmul.f32.gmra.mxu0 %v3933
    %v4194 = vpop.f32.mrf.mxu0
    %v4195 = vadd.f32 0.0, %v4194
    %4196 = vdwg.mxu0
    %4197 = vmatpush.msra.mxu0 %v1269
    %4198 = vmatpush.msra.mxu0 %v1257
    %4199 = vmatpush.msra.mxu0 %v1245
    %4200 = vmatpush.msra.mxu0 %v1233
    %4201 = vmatpush.msra.mxu0 %v1221
    %4202 = vmatpush.msra.mxu0 %v1209
    %4203 = vmatpush.msra.mxu0 %v1197
    %4204 = vmatpush.msra.mxu0 %v1185
    %4205 = vmatpush.msra.mxu0 %v1173
    %4206 = vmatpush.msra.mxu0 %v1161
    %4207 = vmatpush.msra.mxu0 %v1149
    %4208 = vmatpush.msra.mxu0 %v1137
    %4209 = vmatpush.msra.mxu0 %v1125
    %4210 = vmatpush.msra.mxu0 %v1113
    %4211 = vmatpush.msra.mxu0 %v1101
    %4212 = vmatpush.msra.mxu0 %v1089
    %4213 = vmatmul.f32.gmra.mxu0 %v3934
    %v4214 = vpop.f32.mrf.mxu0
    %v4215 = vadd.f32 %v4195, %v4214
    %4216 = vdwg.mxu0
    %4217 = vmatpush.msra.mxu0 %v1461
    %4218 = vmatpush.msra.mxu0 %v1449
    %4219 = vmatpush.msra.mxu0 %v1437
    %4220 = vmatpush.msra.mxu0 %v1425
    %4221 = vmatpush.msra.mxu0 %v1413
    %4222 = vmatpush.msra.mxu0 %v1401
    %4223 = vmatpush.msra.mxu0 %v1389
    %4224 = vmatpush.msra.mxu0 %v1377
    %4225 = vmatpush.msra.mxu0 %v1365
    %4226 = vmatpush.msra.mxu0 %v1353
    %4227 = vmatpush.msra.mxu0 %v1341
    %4228 = vmatpush.msra.mxu0 %v1329
    %4229 = vmatpush.msra.mxu0 %v1317
    %4230 = vmatpush.msra.mxu0 %v1305
    %4231 = vmatpush.msra.mxu0 %v1293
    %4232 = vmatpush.msra.mxu0 %v1281
    %4233 = vmatmul.f32.gmra.mxu0 %v3924
    %v4234 = vpop.f32.mrf.mxu0
    %v4235 = vadd.f32 %v4215, %v4234
    %4236 = vdwg.mxu0
    %4237 = vmatpush.msra.mxu0 %v1078
    %4238 = vmatpush.msra.mxu0 %v1066
    %4239 = vmatpush.msra.mxu0 %v1054
    %4240 = vmatpush.msra.mxu0 %v1042
    %4241 = vmatpush.msra.mxu0 %v1030
    %4242 = vmatpush.msra.mxu0 %v1018
    %4243 = vmatpush.msra.mxu0 %v1006
    %4244 = vmatpush.msra.mxu0 %v994
    %4245 = vmatpush.msra.mxu0 %v982
    %4246 = vmatpush.msra.mxu0 %v970
    %4247 = vmatpush.msra.mxu0 %v958
    %4248 = vmatpush.msra.mxu0 %v946
    %4249 = vmatpush.msra.mxu0 %v934
    %4250 = vmatpush.msra.mxu0 %v922
    %4251 = vmatpush.msra.mxu0 %v910
    %4252 = vmatpush.msra.mxu0 %v898
    %4253 = vmatmul.f32.gmra.mxu0 %v3933
    %v4254 = vpop.f32.mrf.mxu0
    %v4255 = vadd.f32 0.0, %v4254
    %4256 = vdwg.mxu0
    %4257 = vmatpush.msra.mxu0 %v1270
    %4258 = vmatpush.msra.mxu0 %v1258
    %4259 = vmatpush.msra.mxu0 %v1246
    %4260 = vmatpush.msra.mxu0 %v1234
    %4261 = vmatpush.msra.mxu0 %v1222
    %4262 = vmatpush.msra.mxu0 %v1210
    %4263 = vmatpush.msra.mxu0 %v1198
    %4264 = vmatpush.msra.mxu0 %v1186
    %4265 = vmatpush.msra.mxu0 %v1174
    %4266 = vmatpush.msra.mxu0 %v1162
    %4267 = vmatpush.msra.mxu0 %v1150
    %4268 = vmatpush.msra.mxu0 %v1138
    %4269 = vmatpush.msra.mxu0 %v1126
    %4270 = vmatpush.msra.mxu0 %v1114
    %4271 = vmatpush.msra.mxu0 %v1102
    %4272 = vmatpush.msra.mxu0 %v1090
    %4273 = vmatmul.f32.gmra.mxu0 %v3934
    %v4274 = vpop.f32.mrf.mxu0
    %v4275 = vadd.f32 %v4255, %v4274
    %4276 = vdwg.mxu0
    %4277 = vmatpush.msra.mxu0 %v1462
    %4278 = vmatpush.msra.mxu0 %v1450
    %4279 = vmatpush.msra.mxu0 %v1438
    %4280 = vmatpush.msra.mxu0 %v1426
    %4281 = vmatpush.msra.mxu0 %v1414
    %4282 = vmatpush.msra.mxu0 %v1402
    %4283 = vmatpush.msra.mxu0 %v1390
    %4284 = vmatpush.msra.mxu0 %v1378
    %4285 = vmatpush.msra.mxu0 %v1366
    %4286 = vmatpush.msra.mxu0 %v1354
    %4287 = vmatpush.msra.mxu0 %v1342
    %4288 = vmatpush.msra.mxu0 %v1330
    %4289 = vmatpush.msra.mxu0 %v1318
    %4290 = vmatpush.msra.mxu0 %v1306
    %4291 = vmatpush.msra.mxu0 %v1294
    %4292 = vmatpush.msra.mxu0 %v1282
    %4293 = vmatmul.f32.gmra.mxu0 %v3924
    %v4294 = vpop.f32.mrf.mxu0
    %v4295 = vadd.f32 %v4275, %v4294
    %4296 = vdwg.mxu0
    %4297 = vmatpush.msra.mxu0 %v1079
    %4298 = vmatpush.msra.mxu0 %v1067
    %4299 = vmatpush.msra.mxu0 %v1055
    %4300 = vmatpush.msra.mxu0 %v1043
    %4301 = vmatpush.msra.mxu0 %v1031
    %4302 = vmatpush.msra.mxu0 %v1019
    %4303 = vmatpush.msra.mxu0 %v1007
    %4304 = vmatpush.msra.mxu0 %v995
    %4305 = vmatpush.msra.mxu0 %v983
    %4306 = vmatpush.msra.mxu0 %v971
    %4307 = vmatpush.msra.mxu0 %v959
    %4308 = vmatpush.msra.mxu0 %v947
    %4309 = vmatpush.msra.mxu0 %v935
    %4310 = vmatpush.msra.mxu0 %v923
    %4311 = vmatpush.msra.mxu0 %v911
    %4312 = vmatpush.msra.mxu0 %v899
    %4313 = vmatmul.f32.gmra.mxu0 %v3933
    %v4314 = vpop.f32.mrf.mxu0
    %v4315 = vadd.f32 0.0, %v4314
    %4316 = vdwg.mxu0
    %4317 = vmatpush.msra.mxu0 %v1271
    %4318 = vmatpush.msra.mxu0 %v1259
    %4319 = vmatpush.msra.mxu0 %v1247
    %4320 = vmatpush.msra.mxu0 %v1235
    %4321 = vmatpush.msra.mxu0 %v1223
    %4322 = vmatpush.msra.mxu0 %v1211
    %4323 = vmatpush.msra.mxu0 %v1199
    %4324 = vmatpush.msra.mxu0 %v1187
    %4325 = vmatpush.msra.mxu0 %v1175
    %4326 = vmatpush.msra.mxu0 %v1163
    %4327 = vmatpush.msra.mxu0 %v1151
    %4328 = vmatpush.msra.mxu0 %v1139
    %4329 = vmatpush.msra.mxu0 %v1127
    %4330 = vmatpush.msra.mxu0 %v1115
    %4331 = vmatpush.msra.mxu0 %v1103
    %4332 = vmatpush.msra.mxu0 %v1091
    %4333 = vmatmul.f32.gmra.mxu0 %v3934
    %v4334 = vpop.f32.mrf.mxu0
    %v4335 = vadd.f32 %v4315, %v4334
    %4336 = vdwg.mxu0
    %4337 = vmatpush.msra.mxu0 %v1463
    %4338 = vmatpush.msra.mxu0 %v1451
    %4339 = vmatpush.msra.mxu0 %v1439
    %4340 = vmatpush.msra.mxu0 %v1427
    %4341 = vmatpush.msra.mxu0 %v1415
    %4342 = vmatpush.msra.mxu0 %v1403
    %4343 = vmatpush.msra.mxu0 %v1391
    %4344 = vmatpush.msra.mxu0 %v1379
    %4345 = vmatpush.msra.mxu0 %v1367
    %4346 = vmatpush.msra.mxu0 %v1355
    %4347 = vmatpush.msra.mxu0 %v1343
    %4348 = vmatpush.msra.mxu0 %v1331
    %4349 = vmatpush.msra.mxu0 %v1319
    %4350 = vmatpush.msra.mxu0 %v1307
    %4351 = vmatpush.msra.mxu0 %v1295
    %4352 = vmatpush.msra.mxu0 %v1283
    %4353 = vmatmul.f32.gmra.mxu0 %v3924
    %v4354 = vpop.f32.mrf.mxu0
    %v4355 = vadd.f32 %v4335, %v4354
    %4356 = vdwg.mxu0
    %4357 = vmatpush.msra.mxu0 %v1080
    %4358 = vmatpush.msra.mxu0 %v1068
    %4359 = vmatpush.msra.mxu0 %v1056
    %4360 = vmatpush.msra.mxu0 %v1044
    %4361 = vmatpush.msra.mxu0 %v1032
    %4362 = vmatpush.msra.mxu0 %v1020
    %4363 = vmatpush.msra.mxu0 %v1008
    %4364 = vmatpush.msra.mxu0 %v996
    %4365 = vmatpush.msra.mxu0 %v984
    %4366 = vmatpush.msra.mxu0 %v972
    %4367 = vmatpush.msra.mxu0 %v960
    %4368 = vmatpush.msra.mxu0 %v948
    %4369 = vmatpush.msra.mxu0 %v936
    %4370 = vmatpush.msra.mxu0 %v924
    %4371 = vmatpush.msra.mxu0 %v912
    %4372 = vmatpush.msra.mxu0 %v900
    %4373 = vmatmul.f32.gmra.mxu0 %v3933
    %v4374 = vpop.f32.mrf.mxu0
    %v4375 = vadd.f32 0.0, %v4374
    %4376 = vdwg.mxu0
    %4377 = vmatpush.msra.mxu0 %v1272
    %4378 = vmatpush.msra.mxu0 %v1260
    %4379 = vmatpush.msra.mxu0 %v1248
    %4380 = vmatpush.msra.mxu0 %v1236
    %4381 = vmatpush.msra.mxu0 %v1224
    %4382 = vmatpush.msra.mxu0 %v1212
    %4383 = vmatpush.msra.mxu0 %v1200
    %4384 = vmatpush.msra.mxu0 %v1188
    %4385 = vmatpush.msra.mxu0 %v1176
    %4386 = vmatpush.msra.mxu0 %v1164
    %4387 = vmatpush.msra.mxu0 %v1152
    %4388 = vmatpush.msra.mxu0 %v1140
    %4389 = vmatpush.msra.mxu0 %v1128
    %4390 = vmatpush.msra.mxu0 %v1116
    %4391 = vmatpush.msra.mxu0 %v1104
    %4392 = vmatpush.msra.mxu0 %v1092
    %4393 = vmatmul.f32.gmra.mxu0 %v3934
    %v4394 = vpop.f32.mrf.mxu0
    %v4395 = vadd.f32 %v4375, %v4394
    %4396 = vdwg.mxu0
    %4397 = vmatpush.msra.mxu0 %v1464
    %4398 = vmatpush.msra.mxu0 %v1452
    %4399 = vmatpush.msra.mxu0 %v1440
    %4400 = vmatpush.msra.mxu0 %v1428
    %4401 = vmatpush.msra.mxu0 %v1416
    %4402 = vmatpush.msra.mxu0 %v1404
    %4403 = vmatpush.msra.mxu0 %v1392
    %4404 = vmatpush.msra.mxu0 %v1380
    %4405 = vmatpush.msra.mxu0 %v1368
    %4406 = vmatpush.msra.mxu0 %v1356
    %4407 = vmatpush.msra.mxu0 %v1344
    %4408 = vmatpush.msra.mxu0 %v1332
    %4409 = vmatpush.msra.mxu0 %v1320
    %4410 = vmatpush.msra.mxu0 %v1308
    %4411 = vmatpush.msra.mxu0 %v1296
    %4412 = vmatpush.msra.mxu0 %v1284
    %4413 = vmatmul.f32.gmra.mxu0 %v3924
    %v4414 = vpop.f32.mrf.mxu0
    %v4415 = vadd.f32 %v4395, %v4414
    %4416 = vdwg.mxu0
    %4417 = vmatpush.msra.mxu0 %v1081
    %4418 = vmatpush.msra.mxu0 %v1069
    %4419 = vmatpush.msra.mxu0 %v1057
    %4420 = vmatpush.msra.mxu0 %v1045
    %4421 = vmatpush.msra.mxu0 %v1033
    %4422 = vmatpush.msra.mxu0 %v1021
    %4423 = vmatpush.msra.mxu0 %v1009
    %4424 = vmatpush.msra.mxu0 %v997
    %4425 = vmatpush.msra.mxu0 %v985
    %4426 = vmatpush.msra.mxu0 %v973
    %4427 = vmatpush.msra.mxu0 %v961
    %4428 = vmatpush.msra.mxu0 %v949
    %4429 = vmatpush.msra.mxu0 %v937
    %4430 = vmatpush.msra.mxu0 %v925
    %4431 = vmatpush.msra.mxu0 %v913
    %4432 = vmatpush.msra.mxu0 %v901
    %4433 = vmatmul.f32.gmra.mxu0 %v3933
    %v4434 = vpop.f32.mrf.mxu0
    %v4435 = vadd.f32 0.0, %v4434
    %4436 = vdwg.mxu0
    %4437 = vmatpush.msra.mxu0 %v1273
    %4438 = vmatpush.msra.mxu0 %v1261
    %4439 = vmatpush.msra.mxu0 %v1249
    %4440 = vmatpush.msra.mxu0 %v1237
    %4441 = vmatpush.msra.mxu0 %v1225
    %4442 = vmatpush.msra.mxu0 %v1213
    %4443 = vmatpush.msra.mxu0 %v1201
    %4444 = vmatpush.msra.mxu0 %v1189
    %4445 = vmatpush.msra.mxu0 %v1177
    %4446 = vmatpush.msra.mxu0 %v1165
    %4447 = vmatpush.msra.mxu0 %v1153
    %4448 = vmatpush.msra.mxu0 %v1141
    %4449 = vmatpush.msra.mxu0 %v1129
    %4450 = vmatpush.msra.mxu0 %v1117
    %4451 = vmatpush.msra.mxu0 %v1105
    %4452 = vmatpush.msra.mxu0 %v1093
    %4453 = vmatmul.f32.gmra.mxu0 %v3934
    %v4454 = vpop.f32.mrf.mxu0
    %v4455 = vadd.f32 %v4435, %v4454
    %4456 = vdwg.mxu0
    %4457 = vmatpush.msra.mxu0 %v1465
    %4458 = vmatpush.msra.mxu0 %v1453
    %4459 = vmatpush.msra.mxu0 %v1441
    %4460 = vmatpush.msra.mxu0 %v1429
    %4461 = vmatpush.msra.mxu0 %v1417
    %4462 = vmatpush.msra.mxu0 %v1405
    %4463 = vmatpush.msra.mxu0 %v1393
    %4464 = vmatpush.msra.mxu0 %v1381
    %4465 = vmatpush.msra.mxu0 %v1369
    %4466 = vmatpush.msra.mxu0 %v1357
    %4467 = vmatpush.msra.mxu0 %v1345
    %4468 = vmatpush.msra.mxu0 %v1333
    %4469 = vmatpush.msra.mxu0 %v1321
    %4470 = vmatpush.msra.mxu0 %v1309
    %4471 = vmatpush.msra.mxu0 %v1297
    %4472 = vmatpush.msra.mxu0 %v1285
    %4473 = vmatmul.f32.gmra.mxu0 %v3924
    %v4474 = vpop.f32.mrf.mxu0
    %v4475 = vadd.f32 %v4455, %v4474
    %4476 = vdwg.mxu0
    %4477 = vmatpush.msra.mxu0 %v1082
    %4478 = vmatpush.msra.mxu0 %v1070
    %4479 = vmatpush.msra.mxu0 %v1058
    %4480 = vmatpush.msra.mxu0 %v1046
    %4481 = vmatpush.msra.mxu0 %v1034
    %4482 = vmatpush.msra.mxu0 %v1022
    %4483 = vmatpush.msra.mxu0 %v1010
    %4484 = vmatpush.msra.mxu0 %v998
    %4485 = vmatpush.msra.mxu0 %v986
    %4486 = vmatpush.msra.mxu0 %v974
    %4487 = vmatpush.msra.mxu0 %v962
    %4488 = vmatpush.msra.mxu0 %v950
    %4489 = vmatpush.msra.mxu0 %v938
    %4490 = vmatpush.msra.mxu0 %v926
    %4491 = vmatpush.msra.mxu0 %v914
    %4492 = vmatpush.msra.mxu0 %v902
    %4493 = vmatmul.f32.gmra.mxu0 %v3933
    %v4494 = vpop.f32.mrf.mxu0
    %v4495 = vadd.f32 0.0, %v4494
    %4496 = vdwg.mxu0
    %4497 = vmatpush.msra.mxu0 %v1274
    %4498 = vmatpush.msra.mxu0 %v1262
    %4499 = vmatpush.msra.mxu0 %v1250
    %4500 = vmatpush.msra.mxu0 %v1238
    %4501 = vmatpush.msra.mxu0 %v1226
    %4502 = vmatpush.msra.mxu0 %v1214
    %4503 = vmatpush.msra.mxu0 %v1202
    %4504 = vmatpush.msra.mxu0 %v1190
    %4505 = vmatpush.msra.mxu0 %v1178
    %4506 = vmatpush.msra.mxu0 %v1166
    %4507 = vmatpush.msra.mxu0 %v1154
    %4508 = vmatpush.msra.mxu0 %v1142
    %4509 = vmatpush.msra.mxu0 %v1130
    %4510 = vmatpush.msra.mxu0 %v1118
    %4511 = vmatpush.msra.mxu0 %v1106
    %4512 = vmatpush.msra.mxu0 %v1094
    %4513 = vmatmul.f32.gmra.mxu0 %v3934
    %v4514 = vpop.f32.mrf.mxu0
    %v4515 = vadd.f32 %v4495, %v4514
    %4516 = vdwg.mxu0
    %4517 = vmatpush.msra.mxu0 %v1466
    %4518 = vmatpush.msra.mxu0 %v1454
    %4519 = vmatpush.msra.mxu0 %v1442
    %4520 = vmatpush.msra.mxu0 %v1430
    %4521 = vmatpush.msra.mxu0 %v1418
    %4522 = vmatpush.msra.mxu0 %v1406
    %4523 = vmatpush.msra.mxu0 %v1394
    %4524 = vmatpush.msra.mxu0 %v1382
    %4525 = vmatpush.msra.mxu0 %v1370
    %4526 = vmatpush.msra.mxu0 %v1358
    %4527 = vmatpush.msra.mxu0 %v1346
    %4528 = vmatpush.msra.mxu0 %v1334
    %4529 = vmatpush.msra.mxu0 %v1322
    %4530 = vmatpush.msra.mxu0 %v1310
    %4531 = vmatpush.msra.mxu0 %v1298
    %4532 = vmatpush.msra.mxu0 %v1286
    %4533 = vmatmul.f32.gmra.mxu0 %v3924
    %v4534 = vpop.f32.mrf.mxu0
    %v4535 = vadd.f32 %v4515, %v4534
    %4536 = vdwg.mxu0
    %4537 = vmatpush.msra.mxu0 %v1083
    %4538 = vmatpush.msra.mxu0 %v1071
    %4539 = vmatpush.msra.mxu0 %v1059
    %4540 = vmatpush.msra.mxu0 %v1047
    %4541 = vmatpush.msra.mxu0 %v1035
    %4542 = vmatpush.msra.mxu0 %v1023
    %4543 = vmatpush.msra.mxu0 %v1011
    %4544 = vmatpush.msra.mxu0 %v999
    %4545 = vmatpush.msra.mxu0 %v987
    %4546 = vmatpush.msra.mxu0 %v975
    %4547 = vmatpush.msra.mxu0 %v963
    %4548 = vmatpush.msra.mxu0 %v951
    %4549 = vmatpush.msra.mxu0 %v939
    %4550 = vmatpush.msra.mxu0 %v927
    %4551 = vmatpush.msra.mxu0 %v915
    %4552 = vmatpush.msra.mxu0 %v903
    %4553 = vmatmul.f32.gmra.mxu0 %v3933
    %v4554 = vpop.f32.mrf.mxu0
    %v4555 = vadd.f32 0.0, %v4554
    %4556 = vdwg.mxu0
    %4557 = vmatpush.msra.mxu0 %v1275
    %4558 = vmatpush.msra.mxu0 %v1263
    %4559 = vmatpush.msra.mxu0 %v1251
    %4560 = vmatpush.msra.mxu0 %v1239
    %4561 = vmatpush.msra.mxu0 %v1227
    %4562 = vmatpush.msra.mxu0 %v1215
    %4563 = vmatpush.msra.mxu0 %v1203
    %4564 = vmatpush.msra.mxu0 %v1191
    %4565 = vmatpush.msra.mxu0 %v1179
    %4566 = vmatpush.msra.mxu0 %v1167
    %4567 = vmatpush.msra.mxu0 %v1155
    %4568 = vmatpush.msra.mxu0 %v1143
    %4569 = vmatpush.msra.mxu0 %v1131
    %4570 = vmatpush.msra.mxu0 %v1119
    %4571 = vmatpush.msra.mxu0 %v1107
    %4572 = vmatpush.msra.mxu0 %v1095
    %4573 = vmatmul.f32.gmra.mxu0 %v3934
    %v4574 = vpop.f32.mrf.mxu0
    %v4575 = vadd.f32 %v4555, %v4574
    %4576 = vdwg.mxu0
    %4577 = vmatpush.msra.mxu0 %v1467
    %4578 = vmatpush.msra.mxu0 %v1455
    %4579 = vmatpush.msra.mxu0 %v1443
    %4580 = vmatpush.msra.mxu0 %v1431
    %4581 = vmatpush.msra.mxu0 %v1419
    %4582 = vmatpush.msra.mxu0 %v1407
    %4583 = vmatpush.msra.mxu0 %v1395
    %4584 = vmatpush.msra.mxu0 %v1383
    %4585 = vmatpush.msra.mxu0 %v1371
    %4586 = vmatpush.msra.mxu0 %v1359
    %4587 = vmatpush.msra.mxu0 %v1347
    %4588 = vmatpush.msra.mxu0 %v1335
    %4589 = vmatpush.msra.mxu0 %v1323
    %4590 = vmatpush.msra.mxu0 %v1311
    %4591 = vmatpush.msra.mxu0 %v1299
    %4592 = vmatpush.msra.mxu0 %v1287
    %4593 = vmatmul.f32.gmra.mxu0 %v3924
    %v4594 = vpop.f32.mrf.mxu0
    %v4595 = vadd.f32 %v4575, %v4594
    %4596 = vdwg.mxu0
    %4597 = vmatpush.msra.mxu0 %v1084
    %4598 = vmatpush.msra.mxu0 %v1072
    %4599 = vmatpush.msra.mxu0 %v1060
    %4600 = vmatpush.msra.mxu0 %v1048
    %4601 = vmatpush.msra.mxu0 %v1036
    %4602 = vmatpush.msra.mxu0 %v1024
    %4603 = vmatpush.msra.mxu0 %v1012
    %4604 = vmatpush.msra.mxu0 %v1000
    %4605 = vmatpush.msra.mxu0 %v988
    %4606 = vmatpush.msra.mxu0 %v976
    %4607 = vmatpush.msra.mxu0 %v964
    %4608 = vmatpush.msra.mxu0 %v952
    %4609 = vmatpush.msra.mxu0 %v940
    %4610 = vmatpush.msra.mxu0 %v928
    %4611 = vmatpush.msra.mxu0 %v916
    %4612 = vmatpush.msra.mxu0 %v904
    %4613 = vmatmul.f32.gmra.mxu0 %v3933
    %v4614 = vpop.f32.mrf.mxu0
    %v4615 = vadd.f32 0.0, %v4614
    %4616 = vdwg.mxu0
    %4617 = vmatpush.msra.mxu0 %v1276
    %4618 = vmatpush.msra.mxu0 %v1264
    %4619 = vmatpush.msra.mxu0 %v1252
    %4620 = vmatpush.msra.mxu0 %v1240
    %4621 = vmatpush.msra.mxu0 %v1228
    %4622 = vmatpush.msra.mxu0 %v1216
    %4623 = vmatpush.msra.mxu0 %v1204
    %4624 = vmatpush.msra.mxu0 %v1192
    %4625 = vmatpush.msra.mxu0 %v1180
    %4626 = vmatpush.msra.mxu0 %v1168
    %4627 = vmatpush.msra.mxu0 %v1156
    %4628 = vmatpush.msra.mxu0 %v1144
    %4629 = vmatpush.msra.mxu0 %v1132
    %4630 = vmatpush.msra.mxu0 %v1120
    %4631 = vmatpush.msra.mxu0 %v1108
    %4632 = vmatpush.msra.mxu0 %v1096
    %4633 = vmatmul.f32.gmra.mxu0 %v3934
    %v4634 = vpop.f32.mrf.mxu0
    %v4635 = vadd.f32 %v4615, %v4634
    %4636 = vdwg.mxu0
    %4637 = vmatpush.msra.mxu0 %v1468
    %4638 = vmatpush.msra.mxu0 %v1456
    %4639 = vmatpush.msra.mxu0 %v1444
    %4640 = vmatpush.msra.mxu0 %v1432
    %4641 = vmatpush.msra.mxu0 %v1420
    %4642 = vmatpush.msra.mxu0 %v1408
    %4643 = vmatpush.msra.mxu0 %v1396
    %4644 = vmatpush.msra.mxu0 %v1384
    %4645 = vmatpush.msra.mxu0 %v1372
    %4646 = vmatpush.msra.mxu0 %v1360
    %4647 = vmatpush.msra.mxu0 %v1348
    %4648 = vmatpush.msra.mxu0 %v1336
    %4649 = vmatpush.msra.mxu0 %v1324
    %4650 = vmatpush.msra.mxu0 %v1312
    %4651 = vmatpush.msra.mxu0 %v1300
    %4652 = vmatpush.msra.mxu0 %v1288
    %4653 = vmatmul.f32.gmra.mxu0 %v3924
    %v4654 = vpop.f32.mrf.mxu0
    %v4655 = vadd.f32 %v4635, %v4654
    %4656 = vdwg.mxu0
    %v4669 = vrot.slane %v4055, 7
    %v4670 = vrot.slane %v4115, 6
    %v4671 = vrot.slane %v4175, 5
    %v4672 = vrot.slane %v4235, 4
    %v4673 = vrot.slane %v4295, 3
    %v4674 = vrot.slane %v4355, 2
    %v4675 = vrot.slane %v4415, 1
    %v4676 = vrot.slane %v4535, 7
    %v4677 = vrot.slane %v4595, 6
    %v4678 = vrot.slane %v4655, 5
    %v4679 = vsel %vm1510, %v3995, %v4669
    %v4680 = vsel %vm2279, %v4670, %v4671
    %v4681 = vsel %vm1512, %v4679, %v4680
    %v4682 = vsel %vm2282, %v4672, %v4673
    %v4683 = vsel %vm2284, %v4674, %v4675
    %v4684 = vsel %vm2286, %v4682, %v4683
    %v4685 = vsel %vm2288, %v4681, %v4684
    %v4686 = vsel %vm1510, %v4475, %v4676
    %v4687 = vsel %vm2279, %v4677, %v4678
    %v4688 = vsel %vm1512, %v4686, %v4687
    %v4691 = vadd.f32 %v3930, %v4685
    %v4692 = vadd.f32 %v3932, %v4688
    %v4693 = vtanh.pop %v4691
    %v4694 = vtanh.pop %v4692
    %v4695 = vmul.f32 %v4693, 0.5
    %v4696 = vmul.f32 %v4694, 0.5
    %v4697 = vadd.f32 %v4695, 0.5
    %v4698 = vadd.f32 %v4696, 0.5
    %v4700 = vrot.slane %v4694, 1
    %v4702 = vmul.f32 %v4697, %v4700
    %v4704 = vrot.slane %v4697, 3
    %v4706 = vmul.f32 %v4704, %v3915
    %v4707 = vadd.f32 %v4706, %v4702
    %v4708 = vtanh.pop %v4707
    %v4710 = vrot.slane %v4697, 6
    %v4711 = vrot.slane %v4698, 6
    %v4712 = vsel %vm1512, %v4710, %v4711
    %v4714 = vmul.f32 %v4712, %v4708
    %v4716 = vperm.slane %v4714, 2
    %4718 = vst [vmem:[#allocation4 + $0x2] sm:$0x1] %v4716
    %s4719 = scalar_lea.vmem [#allocation3], 5
    %v4720 = vld [vmem:[%s4719] ss:$8 sm:$0xf]
    %v4721 = vld [vmem:[%s4719] ss:$8 sm:$0xf0]
    %v4722 = vor.u32 %v4720, %v4721
    %s4723 = scalar_lea.vmem [#allocation3], 69
    %v4724 = vld [vmem:[%s4723] ss:$8 sm:$0xf]
    %v4725 = vperm.slane %v4714, 0
    %v4726 = vperm.slane %v4714, 1
    %4729 = vmatpush.msra.mxu0 %v1073
    %4730 = vmatpush.msra.mxu0 %v1061
    %4731 = vmatpush.msra.mxu0 %v1049
    %4732 = vmatpush.msra.mxu0 %v1037
    %4733 = vmatpush.msra.mxu0 %v1025
    %4734 = vmatpush.msra.mxu0 %v1013
    %4735 = vmatpush.msra.mxu0 %v1001
    %4736 = vmatpush.msra.mxu0 %v989
    %4737 = vmatpush.msra.mxu0 %v977
    %4738 = vmatpush.msra.mxu0 %v965
    %4739 = vmatpush.msra.mxu0 %v953
    %4740 = vmatpush.msra.mxu0 %v941
    %4741 = vmatpush.msra.mxu0 %v929
    %4742 = vmatpush.msra.mxu0 %v917
    %4743 = vmatpush.msra.mxu0 %v905
    %4744 = vmatpush.msra.mxu0 %v893
    %4745 = vmatmul.f32.gmra.mxu0 %v4725
    %v4746 = vpop.f32.mrf.mxu0
    %v4747 = vadd.f32 0.0, %v4746
    %4748 = vdwg.mxu0
    %4749 = vmatpush.msra.mxu0 %v1265
    %4750 = vmatpush.msra.mxu0 %v1253
    %4751 = vmatpush.msra.mxu0 %v1241
    %4752 = vmatpush.msra.mxu0 %v1229
    %4753 = vmatpush.msra.mxu0 %v1217
    %4754 = vmatpush.msra.mxu0 %v1205
    %4755 = vmatpush.msra.mxu0 %v1193
    %4756 = vmatpush.msra.mxu0 %v1181
    %4757 = vmatpush.msra.mxu0 %v1169
    %4758 = vmatpush.msra.mxu0 %v1157
    %4759 = vmatpush.msra.mxu0 %v1145
    %4760 = vmatpush.msra.mxu0 %v1133
    %4761 = vmatpush.msra.mxu0 %v1121
    %4762 = vmatpush.msra.mxu0 %v1109
    %4763 = vmatpush.msra.mxu0 %v1097
    %4764 = vmatpush.msra.mxu0 %v1085
    %4765 = vmatmul.f32.gmra.mxu0 %v4726
    %v4766 = vpop.f32.mrf.mxu0
    %v4767 = vadd.f32 %v4747, %v4766
    %4768 = vdwg.mxu0
    %4769 = vmatpush.msra.mxu0 %v1457
    %4770 = vmatpush.msra.mxu0 %v1445
    %4771 = vmatpush.msra.mxu0 %v1433
    %4772 = vmatpush.msra.mxu0 %v1421
    %4773 = vmatpush.msra.mxu0 %v1409
    %4774 = vmatpush.msra.mxu0 %v1397
    %4775 = vmatpush.msra.mxu0 %v1385
    %4776 = vmatpush.msra.mxu0 %v1373
    %4777 = vmatpush.msra.mxu0 %v1361
    %4778 = vmatpush.msra.mxu0 %v1349
    %4779 = vmatpush.msra.mxu0 %v1337
    %4780 = vmatpush.msra.mxu0 %v1325
    %4781 = vmatpush.msra.mxu0 %v1313
    %4782 = vmatpush.msra.mxu0 %v1301
    %4783 = vmatpush.msra.mxu0 %v1289
    %4784 = vmatpush.msra.mxu0 %v1277
    %4785 = vmatmul.f32.gmra.mxu0 %v4716
    %v4786 = vpop.f32.mrf.mxu0
    %v4787 = vadd.f32 %v4767, %v4786
    %4788 = vdwg.mxu0
    %4789 = vmatpush.msra.mxu0 %v1074
    %4790 = vmatpush.msra.mxu0 %v1062
    %4791 = vmatpush.msra.mxu0 %v1050
    %4792 = vmatpush.msra.mxu0 %v1038
    %4793 = vmatpush.msra.mxu0 %v1026
    %4794 = vmatpush.msra.mxu0 %v1014
    %4795 = vmatpush.msra.mxu0 %v1002
    %4796 = vmatpush.msra.mxu0 %v990
    %4797 = vmatpush.msra.mxu0 %v978
    %4798 = vmatpush.msra.mxu0 %v966
    %4799 = vmatpush.msra.mxu0 %v954
    %4800 = vmatpush.msra.mxu0 %v942
    %4801 = vmatpush.msra.mxu0 %v930
    %4802 = vmatpush.msra.mxu0 %v918
    %4803 = vmatpush.msra.mxu0 %v906
    %4804 = vmatpush.msra.mxu0 %v894
    %4805 = vmatmul.f32.gmra.mxu0 %v4725
    %v4806 = vpop.f32.mrf.mxu0
    %v4807 = vadd.f32 0.0, %v4806
    %4808 = vdwg.mxu0
    %4809 = vmatpush.msra.mxu0 %v1266
    %4810 = vmatpush.msra.mxu0 %v1254
    %4811 = vmatpush.msra.mxu0 %v1242
    %4812 = vmatpush.msra.mxu0 %v1230
    %4813 = vmatpush.msra.mxu0 %v1218
    %4814 = vmatpush.msra.mxu0 %v1206
    %4815 = vmatpush.msra.mxu0 %v1194
    %4816 = vmatpush.msra.mxu0 %v1182
    %4817 = vmatpush.msra.mxu0 %v1170
    %4818 = vmatpush.msra.mxu0 %v1158
    %4819 = vmatpush.msra.mxu0 %v1146
    %4820 = vmatpush.msra.mxu0 %v1134
    %4821 = vmatpush.msra.mxu0 %v1122
    %4822 = vmatpush.msra.mxu0 %v1110
    %4823 = vmatpush.msra.mxu0 %v1098
    %4824 = vmatpush.msra.mxu0 %v1086
    %4825 = vmatmul.f32.gmra.mxu0 %v4726
    %v4826 = vpop.f32.mrf.mxu0
    %v4827 = vadd.f32 %v4807, %v4826
    %4828 = vdwg.mxu0
    %4829 = vmatpush.msra.mxu0 %v1458
    %4830 = vmatpush.msra.mxu0 %v1446
    %4831 = vmatpush.msra.mxu0 %v1434
    %4832 = vmatpush.msra.mxu0 %v1422
    %4833 = vmatpush.msra.mxu0 %v1410
    %4834 = vmatpush.msra.mxu0 %v1398
    %4835 = vmatpush.msra.mxu0 %v1386
    %4836 = vmatpush.msra.mxu0 %v1374
    %4837 = vmatpush.msra.mxu0 %v1362
    %4838 = vmatpush.msra.mxu0 %v1350
    %4839 = vmatpush.msra.mxu0 %v1338
    %4840 = vmatpush.msra.mxu0 %v1326
    %4841 = vmatpush.msra.mxu0 %v1314
    %4842 = vmatpush.msra.mxu0 %v1302
    %4843 = vmatpush.msra.mxu0 %v1290
    %4844 = vmatpush.msra.mxu0 %v1278
    %4845 = vmatmul.f32.gmra.mxu0 %v4716
    %v4846 = vpop.f32.mrf.mxu0
    %v4847 = vadd.f32 %v4827, %v4846
    %4848 = vdwg.mxu0
    %4849 = vmatpush.msra.mxu0 %v1075
    %4850 = vmatpush.msra.mxu0 %v1063
    %4851 = vmatpush.msra.mxu0 %v1051
    %4852 = vmatpush.msra.mxu0 %v1039
    %4853 = vmatpush.msra.mxu0 %v1027
    %4854 = vmatpush.msra.mxu0 %v1015
    %4855 = vmatpush.msra.mxu0 %v1003
    %4856 = vmatpush.msra.mxu0 %v991
    %4857 = vmatpush.msra.mxu0 %v979
    %4858 = vmatpush.msra.mxu0 %v967
    %4859 = vmatpush.msra.mxu0 %v955
    %4860 = vmatpush.msra.mxu0 %v943
    %4861 = vmatpush.msra.mxu0 %v931
    %4862 = vmatpush.msra.mxu0 %v919
    %4863 = vmatpush.msra.mxu0 %v907
    %4864 = vmatpush.msra.mxu0 %v895
    %4865 = vmatmul.f32.gmra.mxu0 %v4725
    %v4866 = vpop.f32.mrf.mxu0
    %v4867 = vadd.f32 0.0, %v4866
    %4868 = vdwg.mxu0
    %4869 = vmatpush.msra.mxu0 %v1267
    %4870 = vmatpush.msra.mxu0 %v1255
    %4871 = vmatpush.msra.mxu0 %v1243
    %4872 = vmatpush.msra.mxu0 %v1231
    %4873 = vmatpush.msra.mxu0 %v1219
    %4874 = vmatpush.msra.mxu0 %v1207
    %4875 = vmatpush.msra.mxu0 %v1195
    %4876 = vmatpush.msra.mxu0 %v1183
    %4877 = vmatpush.msra.mxu0 %v1171
    %4878 = vmatpush.msra.mxu0 %v1159
    %4879 = vmatpush.msra.mxu0 %v1147
    %4880 = vmatpush.msra.mxu0 %v1135
    %4881 = vmatpush.msra.mxu0 %v1123
    %4882 = vmatpush.msra.mxu0 %v1111
    %4883 = vmatpush.msra.mxu0 %v1099
    %4884 = vmatpush.msra.mxu0 %v1087
    %4885 = vmatmul.f32.gmra.mxu0 %v4726
    %v4886 = vpop.f32.mrf.mxu0
    %v4887 = vadd.f32 %v4867, %v4886
    %4888 = vdwg.mxu0
    %4889 = vmatpush.msra.mxu0 %v1459
    %4890 = vmatpush.msra.mxu0 %v1447
    %4891 = vmatpush.msra.mxu0 %v1435
    %4892 = vmatpush.msra.mxu0 %v1423
    %4893 = vmatpush.msra.mxu0 %v1411
    %4894 = vmatpush.msra.mxu0 %v1399
    %4895 = vmatpush.msra.mxu0 %v1387
    %4896 = vmatpush.msra.mxu0 %v1375
    %4897 = vmatpush.msra.mxu0 %v1363
    %4898 = vmatpush.msra.mxu0 %v1351
    %4899 = vmatpush.msra.mxu0 %v1339
    %4900 = vmatpush.msra.mxu0 %v1327
    %4901 = vmatpush.msra.mxu0 %v1315
    %4902 = vmatpush.msra.mxu0 %v1303
    %4903 = vmatpush.msra.mxu0 %v1291
    %4904 = vmatpush.msra.mxu0 %v1279
    %4905 = vmatmul.f32.gmra.mxu0 %v4716
    %v4906 = vpop.f32.mrf.mxu0
    %v4907 = vadd.f32 %v4887, %v4906
    %4908 = vdwg.mxu0
    %4909 = vmatpush.msra.mxu0 %v1076
    %4910 = vmatpush.msra.mxu0 %v1064
    %4911 = vmatpush.msra.mxu0 %v1052
    %4912 = vmatpush.msra.mxu0 %v1040
    %4913 = vmatpush.msra.mxu0 %v1028
    %4914 = vmatpush.msra.mxu0 %v1016
    %4915 = vmatpush.msra.mxu0 %v1004
    %4916 = vmatpush.msra.mxu0 %v992
    %4917 = vmatpush.msra.mxu0 %v980
    %4918 = vmatpush.msra.mxu0 %v968
    %4919 = vmatpush.msra.mxu0 %v956
    %4920 = vmatpush.msra.mxu0 %v944
    %4921 = vmatpush.msra.mxu0 %v932
    %4922 = vmatpush.msra.mxu0 %v920
    %4923 = vmatpush.msra.mxu0 %v908
    %4924 = vmatpush.msra.mxu0 %v896
    %4925 = vmatmul.f32.gmra.mxu0 %v4725
    %v4926 = vpop.f32.mrf.mxu0
    %v4927 = vadd.f32 0.0, %v4926
    %4928 = vdwg.mxu0
    %4929 = vmatpush.msra.mxu0 %v1268
    %4930 = vmatpush.msra.mxu0 %v1256
    %4931 = vmatpush.msra.mxu0 %v1244
    %4932 = vmatpush.msra.mxu0 %v1232
    %4933 = vmatpush.msra.mxu0 %v1220
    %4934 = vmatpush.msra.mxu0 %v1208
    %4935 = vmatpush.msra.mxu0 %v1196
    %4936 = vmatpush.msra.mxu0 %v1184
    %4937 = vmatpush.msra.mxu0 %v1172
    %4938 = vmatpush.msra.mxu0 %v1160
    %4939 = vmatpush.msra.mxu0 %v1148
    %4940 = vmatpush.msra.mxu0 %v1136
    %4941 = vmatpush.msra.mxu0 %v1124
    %4942 = vmatpush.msra.mxu0 %v1112
    %4943 = vmatpush.msra.mxu0 %v1100
    %4944 = vmatpush.msra.mxu0 %v1088
    %4945 = vmatmul.f32.gmra.mxu0 %v4726
    %v4946 = vpop.f32.mrf.mxu0
    %v4947 = vadd.f32 %v4927, %v4946
    %4948 = vdwg.mxu0
    %4949 = vmatpush.msra.mxu0 %v1460
    %4950 = vmatpush.msra.mxu0 %v1448
    %4951 = vmatpush.msra.mxu0 %v1436
    %4952 = vmatpush.msra.mxu0 %v1424
    %4953 = vmatpush.msra.mxu0 %v1412
    %4954 = vmatpush.msra.mxu0 %v1400
    %4955 = vmatpush.msra.mxu0 %v1388
    %4956 = vmatpush.msra.mxu0 %v1376
    %4957 = vmatpush.msra.mxu0 %v1364
    %4958 = vmatpush.msra.mxu0 %v1352
    %4959 = vmatpush.msra.mxu0 %v1340
    %4960 = vmatpush.msra.mxu0 %v1328
    %4961 = vmatpush.msra.mxu0 %v1316
    %4962 = vmatpush.msra.mxu0 %v1304
    %4963 = vmatpush.msra.mxu0 %v1292
    %4964 = vmatpush.msra.mxu0 %v1280
    %4965 = vmatmul.f32.gmra.mxu0 %v4716
    %v4966 = vpop.f32.mrf.mxu0
    %v4967 = vadd.f32 %v4947, %v4966
    %4968 = vdwg.mxu0
    %4969 = vmatpush.msra.mxu0 %v1077
    %4970 = vmatpush.msra.mxu0 %v1065
    %4971 = vmatpush.msra.mxu0 %v1053
    %4972 = vmatpush.msra.mxu0 %v1041
    %4973 = vmatpush.msra.mxu0 %v1029
    %4974 = vmatpush.msra.mxu0 %v1017
    %4975 = vmatpush.msra.mxu0 %v1005
    %4976 = vmatpush.msra.mxu0 %v993
    %4977 = vmatpush.msra.mxu0 %v981
    %4978 = vmatpush.msra.mxu0 %v969
    %4979 = vmatpush.msra.mxu0 %v957
    %4980 = vmatpush.msra.mxu0 %v945
    %4981 = vmatpush.msra.mxu0 %v933
    %4982 = vmatpush.msra.mxu0 %v921
    %4983 = vmatpush.msra.mxu0 %v909
    %4984 = vmatpush.msra.mxu0 %v897
    %4985 = vmatmul.f32.gmra.mxu0 %v4725
    %v4986 = vpop.f32.mrf.mxu0
    %v4987 = vadd.f32 0.0, %v4986
    %4988 = vdwg.mxu0
    %4989 = vmatpush.msra.mxu0 %v1269
    %4990 = vmatpush.msra.mxu0 %v1257
    %4991 = vmatpush.msra.mxu0 %v1245
    %4992 = vmatpush.msra.mxu0 %v1233
    %4993 = vmatpush.msra.mxu0 %v1221
    %4994 = vmatpush.msra.mxu0 %v1209
    %4995 = vmatpush.msra.mxu0 %v1197
    %4996 = vmatpush.msra.mxu0 %v1185
    %4997 = vmatpush.msra.mxu0 %v1173
    %4998 = vmatpush.msra.mxu0 %v1161
    %4999 = vmatpush.msra.mxu0 %v1149
    %5000 = vmatpush.msra.mxu0 %v1137
    %5001 = vmatpush.msra.mxu0 %v1125
    %5002 = vmatpush.msra.mxu0 %v1113
    %5003 = vmatpush.msra.mxu0 %v1101
    %5004 = vmatpush.msra.mxu0 %v1089
    %5005 = vmatmul.f32.gmra.mxu0 %v4726
    %v5006 = vpop.f32.mrf.mxu0
    %v5007 = vadd.f32 %v4987, %v5006
    %5008 = vdwg.mxu0
    %5009 = vmatpush.msra.mxu0 %v1461
    %5010 = vmatpush.msra.mxu0 %v1449
    %5011 = vmatpush.msra.mxu0 %v1437
    %5012 = vmatpush.msra.mxu0 %v1425
    %5013 = vmatpush.msra.mxu0 %v1413
    %5014 = vmatpush.msra.mxu0 %v1401
    %5015 = vmatpush.msra.mxu0 %v1389
    %5016 = vmatpush.msra.mxu0 %v1377
    %5017 = vmatpush.msra.mxu0 %v1365
    %5018 = vmatpush.msra.mxu0 %v1353
    %5019 = vmatpush.msra.mxu0 %v1341
    %5020 = vmatpush.msra.mxu0 %v1329
    %5021 = vmatpush.msra.mxu0 %v1317
    %5022 = vmatpush.msra.mxu0 %v1305
    %5023 = vmatpush.msra.mxu0 %v1293
    %5024 = vmatpush.msra.mxu0 %v1281
    %5025 = vmatmul.f32.gmra.mxu0 %v4716
    %v5026 = vpop.f32.mrf.mxu0
    %v5027 = vadd.f32 %v5007, %v5026
    %5028 = vdwg.mxu0
    %5029 = vmatpush.msra.mxu0 %v1078
    %5030 = vmatpush.msra.mxu0 %v1066
    %5031 = vmatpush.msra.mxu0 %v1054
    %5032 = vmatpush.msra.mxu0 %v1042
    %5033 = vmatpush.msra.mxu0 %v1030
    %5034 = vmatpush.msra.mxu0 %v1018
    %5035 = vmatpush.msra.mxu0 %v1006
    %5036 = vmatpush.msra.mxu0 %v994
    %5037 = vmatpush.msra.mxu0 %v982
    %5038 = vmatpush.msra.mxu0 %v970
    %5039 = vmatpush.msra.mxu0 %v958
    %5040 = vmatpush.msra.mxu0 %v946
    %5041 = vmatpush.msra.mxu0 %v934
    %5042 = vmatpush.msra.mxu0 %v922
    %5043 = vmatpush.msra.mxu0 %v910
    %5044 = vmatpush.msra.mxu0 %v898
    %5045 = vmatmul.f32.gmra.mxu0 %v4725
    %v5046 = vpop.f32.mrf.mxu0
    %v5047 = vadd.f32 0.0, %v5046
    %5048 = vdwg.mxu0
    %5049 = vmatpush.msra.mxu0 %v1270
    %5050 = vmatpush.msra.mxu0 %v1258
    %5051 = vmatpush.msra.mxu0 %v1246
    %5052 = vmatpush.msra.mxu0 %v1234
    %5053 = vmatpush.msra.mxu0 %v1222
    %5054 = vmatpush.msra.mxu0 %v1210
    %5055 = vmatpush.msra.mxu0 %v1198
    %5056 = vmatpush.msra.mxu0 %v1186
    %5057 = vmatpush.msra.mxu0 %v1174
    %5058 = vmatpush.msra.mxu0 %v1162
    %5059 = vmatpush.msra.mxu0 %v1150
    %5060 = vmatpush.msra.mxu0 %v1138
    %5061 = vmatpush.msra.mxu0 %v1126
    %5062 = vmatpush.msra.mxu0 %v1114
    %5063 = vmatpush.msra.mxu0 %v1102
    %5064 = vmatpush.msra.mxu0 %v1090
    %5065 = vmatmul.f32.gmra.mxu0 %v4726
    %v5066 = vpop.f32.mrf.mxu0
    %v5067 = vadd.f32 %v5047, %v5066
    %5068 = vdwg.mxu0
    %5069 = vmatpush.msra.mxu0 %v1462
    %5070 = vmatpush.msra.mxu0 %v1450
    %5071 = vmatpush.msra.mxu0 %v1438
    %5072 = vmatpush.msra.mxu0 %v1426
    %5073 = vmatpush.msra.mxu0 %v1414
    %5074 = vmatpush.msra.mxu0 %v1402
    %5075 = vmatpush.msra.mxu0 %v1390
    %5076 = vmatpush.msra.mxu0 %v1378
    %5077 = vmatpush.msra.mxu0 %v1366
    %5078 = vmatpush.msra.mxu0 %v1354
    %5079 = vmatpush.msra.mxu0 %v1342
    %5080 = vmatpush.msra.mxu0 %v1330
    %5081 = vmatpush.msra.mxu0 %v1318
    %5082 = vmatpush.msra.mxu0 %v1306
    %5083 = vmatpush.msra.mxu0 %v1294
    %5084 = vmatpush.msra.mxu0 %v1282
    %5085 = vmatmul.f32.gmra.mxu0 %v4716
    %v5086 = vpop.f32.mrf.mxu0
    %v5087 = vadd.f32 %v5067, %v5086
    %5088 = vdwg.mxu0
    %5089 = vmatpush.msra.mxu0 %v1079
    %5090 = vmatpush.msra.mxu0 %v1067
    %5091 = vmatpush.msra.mxu0 %v1055
    %5092 = vmatpush.msra.mxu0 %v1043
    %5093 = vmatpush.msra.mxu0 %v1031
    %5094 = vmatpush.msra.mxu0 %v1019
    %5095 = vmatpush.msra.mxu0 %v1007
    %5096 = vmatpush.msra.mxu0 %v995
    %5097 = vmatpush.msra.mxu0 %v983
    %5098 = vmatpush.msra.mxu0 %v971
    %5099 = vmatpush.msra.mxu0 %v959
    %5100 = vmatpush.msra.mxu0 %v947
    %5101 = vmatpush.msra.mxu0 %v935
    %5102 = vmatpush.msra.mxu0 %v923
    %5103 = vmatpush.msra.mxu0 %v911
    %5104 = vmatpush.msra.mxu0 %v899
    %5105 = vmatmul.f32.gmra.mxu0 %v4725
    %v5106 = vpop.f32.mrf.mxu0
    %v5107 = vadd.f32 0.0, %v5106
    %5108 = vdwg.mxu0
    %5109 = vmatpush.msra.mxu0 %v1271
    %5110 = vmatpush.msra.mxu0 %v1259
    %5111 = vmatpush.msra.mxu0 %v1247
    %5112 = vmatpush.msra.mxu0 %v1235
    %5113 = vmatpush.msra.mxu0 %v1223
    %5114 = vmatpush.msra.mxu0 %v1211
    %5115 = vmatpush.msra.mxu0 %v1199
    %5116 = vmatpush.msra.mxu0 %v1187
    %5117 = vmatpush.msra.mxu0 %v1175
    %5118 = vmatpush.msra.mxu0 %v1163
    %5119 = vmatpush.msra.mxu0 %v1151
    %5120 = vmatpush.msra.mxu0 %v1139
    %5121 = vmatpush.msra.mxu0 %v1127
    %5122 = vmatpush.msra.mxu0 %v1115
    %5123 = vmatpush.msra.mxu0 %v1103
    %5124 = vmatpush.msra.mxu0 %v1091
    %5125 = vmatmul.f32.gmra.mxu0 %v4726
    %v5126 = vpop.f32.mrf.mxu0
    %v5127 = vadd.f32 %v5107, %v5126
    %5128 = vdwg.mxu0
    %5129 = vmatpush.msra.mxu0 %v1463
    %5130 = vmatpush.msra.mxu0 %v1451
    %5131 = vmatpush.msra.mxu0 %v1439
    %5132 = vmatpush.msra.mxu0 %v1427
    %5133 = vmatpush.msra.mxu0 %v1415
    %5134 = vmatpush.msra.mxu0 %v1403
    %5135 = vmatpush.msra.mxu0 %v1391
    %5136 = vmatpush.msra.mxu0 %v1379
    %5137 = vmatpush.msra.mxu0 %v1367
    %5138 = vmatpush.msra.mxu0 %v1355
    %5139 = vmatpush.msra.mxu0 %v1343
    %5140 = vmatpush.msra.mxu0 %v1331
    %5141 = vmatpush.msra.mxu0 %v1319
    %5142 = vmatpush.msra.mxu0 %v1307
    %5143 = vmatpush.msra.mxu0 %v1295
    %5144 = vmatpush.msra.mxu0 %v1283
    %5145 = vmatmul.f32.gmra.mxu0 %v4716
    %v5146 = vpop.f32.mrf.mxu0
    %v5147 = vadd.f32 %v5127, %v5146
    %5148 = vdwg.mxu0
    %5149 = vmatpush.msra.mxu0 %v1080
    %5150 = vmatpush.msra.mxu0 %v1068
    %5151 = vmatpush.msra.mxu0 %v1056
    %5152 = vmatpush.msra.mxu0 %v1044
    %5153 = vmatpush.msra.mxu0 %v1032
    %5154 = vmatpush.msra.mxu0 %v1020
    %5155 = vmatpush.msra.mxu0 %v1008
    %5156 = vmatpush.msra.mxu0 %v996
    %5157 = vmatpush.msra.mxu0 %v984
    %5158 = vmatpush.msra.mxu0 %v972
    %5159 = vmatpush.msra.mxu0 %v960
    %5160 = vmatpush.msra.mxu0 %v948
    %5161 = vmatpush.msra.mxu0 %v936
    %5162 = vmatpush.msra.mxu0 %v924
    %5163 = vmatpush.msra.mxu0 %v912
    %5164 = vmatpush.msra.mxu0 %v900
    %5165 = vmatmul.f32.gmra.mxu0 %v4725
    %v5166 = vpop.f32.mrf.mxu0
    %v5167 = vadd.f32 0.0, %v5166
    %5168 = vdwg.mxu0
    %5169 = vmatpush.msra.mxu0 %v1272
    %5170 = vmatpush.msra.mxu0 %v1260
    %5171 = vmatpush.msra.mxu0 %v1248
    %5172 = vmatpush.msra.mxu0 %v1236
    %5173 = vmatpush.msra.mxu0 %v1224
    %5174 = vmatpush.msra.mxu0 %v1212
    %5175 = vmatpush.msra.mxu0 %v1200
    %5176 = vmatpush.msra.mxu0 %v1188
    %5177 = vmatpush.msra.mxu0 %v1176
    %5178 = vmatpush.msra.mxu0 %v1164
    %5179 = vmatpush.msra.mxu0 %v1152
    %5180 = vmatpush.msra.mxu0 %v1140
    %5181 = vmatpush.msra.mxu0 %v1128
    %5182 = vmatpush.msra.mxu0 %v1116
    %5183 = vmatpush.msra.mxu0 %v1104
    %5184 = vmatpush.msra.mxu0 %v1092
    %5185 = vmatmul.f32.gmra.mxu0 %v4726
    %v5186 = vpop.f32.mrf.mxu0
    %v5187 = vadd.f32 %v5167, %v5186
    %5188 = vdwg.mxu0
    %5189 = vmatpush.msra.mxu0 %v1464
    %5190 = vmatpush.msra.mxu0 %v1452
    %5191 = vmatpush.msra.mxu0 %v1440
    %5192 = vmatpush.msra.mxu0 %v1428
    %5193 = vmatpush.msra.mxu0 %v1416
    %5194 = vmatpush.msra.mxu0 %v1404
    %5195 = vmatpush.msra.mxu0 %v1392
    %5196 = vmatpush.msra.mxu0 %v1380
    %5197 = vmatpush.msra.mxu0 %v1368
    %5198 = vmatpush.msra.mxu0 %v1356
    %5199 = vmatpush.msra.mxu0 %v1344
    %5200 = vmatpush.msra.mxu0 %v1332
    %5201 = vmatpush.msra.mxu0 %v1320
    %5202 = vmatpush.msra.mxu0 %v1308
    %5203 = vmatpush.msra.mxu0 %v1296
    %5204 = vmatpush.msra.mxu0 %v1284
    %5205 = vmatmul.f32.gmra.mxu0 %v4716
    %v5206 = vpop.f32.mrf.mxu0
    %v5207 = vadd.f32 %v5187, %v5206
    %5208 = vdwg.mxu0
    %5209 = vmatpush.msra.mxu0 %v1081
    %5210 = vmatpush.msra.mxu0 %v1069
    %5211 = vmatpush.msra.mxu0 %v1057
    %5212 = vmatpush.msra.mxu0 %v1045
    %5213 = vmatpush.msra.mxu0 %v1033
    %5214 = vmatpush.msra.mxu0 %v1021
    %5215 = vmatpush.msra.mxu0 %v1009
    %5216 = vmatpush.msra.mxu0 %v997
    %5217 = vmatpush.msra.mxu0 %v985
    %5218 = vmatpush.msra.mxu0 %v973
    %5219 = vmatpush.msra.mxu0 %v961
    %5220 = vmatpush.msra.mxu0 %v949
    %5221 = vmatpush.msra.mxu0 %v937
    %5222 = vmatpush.msra.mxu0 %v925
    %5223 = vmatpush.msra.mxu0 %v913
    %5224 = vmatpush.msra.mxu0 %v901
    %5225 = vmatmul.f32.gmra.mxu0 %v4725
    %v5226 = vpop.f32.mrf.mxu0
    %v5227 = vadd.f32 0.0, %v5226
    %5228 = vdwg.mxu0
    %5229 = vmatpush.msra.mxu0 %v1273
    %5230 = vmatpush.msra.mxu0 %v1261
    %5231 = vmatpush.msra.mxu0 %v1249
    %5232 = vmatpush.msra.mxu0 %v1237
    %5233 = vmatpush.msra.mxu0 %v1225
    %5234 = vmatpush.msra.mxu0 %v1213
    %5235 = vmatpush.msra.mxu0 %v1201
    %5236 = vmatpush.msra.mxu0 %v1189
    %5237 = vmatpush.msra.mxu0 %v1177
    %5238 = vmatpush.msra.mxu0 %v1165
    %5239 = vmatpush.msra.mxu0 %v1153
    %5240 = vmatpush.msra.mxu0 %v1141
    %5241 = vmatpush.msra.mxu0 %v1129
    %5242 = vmatpush.msra.mxu0 %v1117
    %5243 = vmatpush.msra.mxu0 %v1105
    %5244 = vmatpush.msra.mxu0 %v1093
    %5245 = vmatmul.f32.gmra.mxu0 %v4726
    %v5246 = vpop.f32.mrf.mxu0
    %v5247 = vadd.f32 %v5227, %v5246
    %5248 = vdwg.mxu0
    %5249 = vmatpush.msra.mxu0 %v1465
    %5250 = vmatpush.msra.mxu0 %v1453
    %5251 = vmatpush.msra.mxu0 %v1441
    %5252 = vmatpush.msra.mxu0 %v1429
    %5253 = vmatpush.msra.mxu0 %v1417
    %5254 = vmatpush.msra.mxu0 %v1405
    %5255 = vmatpush.msra.mxu0 %v1393
    %5256 = vmatpush.msra.mxu0 %v1381
    %5257 = vmatpush.msra.mxu0 %v1369
    %5258 = vmatpush.msra.mxu0 %v1357
    %5259 = vmatpush.msra.mxu0 %v1345
    %5260 = vmatpush.msra.mxu0 %v1333
    %5261 = vmatpush.msra.mxu0 %v1321
    %5262 = vmatpush.msra.mxu0 %v1309
    %5263 = vmatpush.msra.mxu0 %v1297
    %5264 = vmatpush.msra.mxu0 %v1285
    %5265 = vmatmul.f32.gmra.mxu0 %v4716
    %v5266 = vpop.f32.mrf.mxu0
    %v5267 = vadd.f32 %v5247, %v5266
    %5268 = vdwg.mxu0
    %5269 = vmatpush.msra.mxu0 %v1082
    %5270 = vmatpush.msra.mxu0 %v1070
    %5271 = vmatpush.msra.mxu0 %v1058
    %5272 = vmatpush.msra.mxu0 %v1046
    %5273 = vmatpush.msra.mxu0 %v1034
    %5274 = vmatpush.msra.mxu0 %v1022
    %5275 = vmatpush.msra.mxu0 %v1010
    %5276 = vmatpush.msra.mxu0 %v998
    %5277 = vmatpush.msra.mxu0 %v986
    %5278 = vmatpush.msra.mxu0 %v974
    %5279 = vmatpush.msra.mxu0 %v962
    %5280 = vmatpush.msra.mxu0 %v950
    %5281 = vmatpush.msra.mxu0 %v938
    %5282 = vmatpush.msra.mxu0 %v926
    %5283 = vmatpush.msra.mxu0 %v914
    %5284 = vmatpush.msra.mxu0 %v902
    %5285 = vmatmul.f32.gmra.mxu0 %v4725
    %v5286 = vpop.f32.mrf.mxu0
    %v5287 = vadd.f32 0.0, %v5286
    %5288 = vdwg.mxu0
    %5289 = vmatpush.msra.mxu0 %v1274
    %5290 = vmatpush.msra.mxu0 %v1262
    %5291 = vmatpush.msra.mxu0 %v1250
    %5292 = vmatpush.msra.mxu0 %v1238
    %5293 = vmatpush.msra.mxu0 %v1226
    %5294 = vmatpush.msra.mxu0 %v1214
    %5295 = vmatpush.msra.mxu0 %v1202
    %5296 = vmatpush.msra.mxu0 %v1190
    %5297 = vmatpush.msra.mxu0 %v1178
    %5298 = vmatpush.msra.mxu0 %v1166
    %5299 = vmatpush.msra.mxu0 %v1154
    %5300 = vmatpush.msra.mxu0 %v1142
    %5301 = vmatpush.msra.mxu0 %v1130
    %5302 = vmatpush.msra.mxu0 %v1118
    %5303 = vmatpush.msra.mxu0 %v1106
    %5304 = vmatpush.msra.mxu0 %v1094
    %5305 = vmatmul.f32.gmra.mxu0 %v4726
    %v5306 = vpop.f32.mrf.mxu0
    %v5307 = vadd.f32 %v5287, %v5306
    %5308 = vdwg.mxu0
    %5309 = vmatpush.msra.mxu0 %v1466
    %5310 = vmatpush.msra.mxu0 %v1454
    %5311 = vmatpush.msra.mxu0 %v1442
    %5312 = vmatpush.msra.mxu0 %v1430
    %5313 = vmatpush.msra.mxu0 %v1418
    %5314 = vmatpush.msra.mxu0 %v1406
    %5315 = vmatpush.msra.mxu0 %v1394
    %5316 = vmatpush.msra.mxu0 %v1382
    %5317 = vmatpush.msra.mxu0 %v1370
    %5318 = vmatpush.msra.mxu0 %v1358
    %5319 = vmatpush.msra.mxu0 %v1346
    %5320 = vmatpush.msra.mxu0 %v1334
    %5321 = vmatpush.msra.mxu0 %v1322
    %5322 = vmatpush.msra.mxu0 %v1310
    %5323 = vmatpush.msra.mxu0 %v1298
    %5324 = vmatpush.msra.mxu0 %v1286
    %5325 = vmatmul.f32.gmra.mxu0 %v4716
    %v5326 = vpop.f32.mrf.mxu0
    %v5327 = vadd.f32 %v5307, %v5326
    %5328 = vdwg.mxu0
    %5329 = vmatpush.msra.mxu0 %v1083
    %5330 = vmatpush.msra.mxu0 %v1071
    %5331 = vmatpush.msra.mxu0 %v1059
    %5332 = vmatpush.msra.mxu0 %v1047
    %5333 = vmatpush.msra.mxu0 %v1035
    %5334 = vmatpush.msra.mxu0 %v1023
    %5335 = vmatpush.msra.mxu0 %v1011
    %5336 = vmatpush.msra.mxu0 %v999
    %5337 = vmatpush.msra.mxu0 %v987
    %5338 = vmatpush.msra.mxu0 %v975
    %5339 = vmatpush.msra.mxu0 %v963
    %5340 = vmatpush.msra.mxu0 %v951
    %5341 = vmatpush.msra.mxu0 %v939
    %5342 = vmatpush.msra.mxu0 %v927
    %5343 = vmatpush.msra.mxu0 %v915
    %5344 = vmatpush.msra.mxu0 %v903
    %5345 = vmatmul.f32.gmra.mxu0 %v4725
    %v5346 = vpop.f32.mrf.mxu0
    %v5347 = vadd.f32 0.0, %v5346
    %5348 = vdwg.mxu0
    %5349 = vmatpush.msra.mxu0 %v1275
    %5350 = vmatpush.msra.mxu0 %v1263
    %5351 = vmatpush.msra.mxu0 %v1251
    %5352 = vmatpush.msra.mxu0 %v1239
    %5353 = vmatpush.msra.mxu0 %v1227
    %5354 = vmatpush.msra.mxu0 %v1215
    %5355 = vmatpush.msra.mxu0 %v1203
    %5356 = vmatpush.msra.mxu0 %v1191
    %5357 = vmatpush.msra.mxu0 %v1179
    %5358 = vmatpush.msra.mxu0 %v1167
    %5359 = vmatpush.msra.mxu0 %v1155
    %5360 = vmatpush.msra.mxu0 %v1143
    %5361 = vmatpush.msra.mxu0 %v1131
    %5362 = vmatpush.msra.mxu0 %v1119
    %5363 = vmatpush.msra.mxu0 %v1107
    %5364 = vmatpush.msra.mxu0 %v1095
    %5365 = vmatmul.f32.gmra.mxu0 %v4726
    %v5366 = vpop.f32.mrf.mxu0
    %v5367 = vadd.f32 %v5347, %v5366
    %5368 = vdwg.mxu0
    %5369 = vmatpush.msra.mxu0 %v1467
    %5370 = vmatpush.msra.mxu0 %v1455
    %5371 = vmatpush.msra.mxu0 %v1443
    %5372 = vmatpush.msra.mxu0 %v1431
    %5373 = vmatpush.msra.mxu0 %v1419
    %5374 = vmatpush.msra.mxu0 %v1407
    %5375 = vmatpush.msra.mxu0 %v1395
    %5376 = vmatpush.msra.mxu0 %v1383
    %5377 = vmatpush.msra.mxu0 %v1371
    %5378 = vmatpush.msra.mxu0 %v1359
    %5379 = vmatpush.msra.mxu0 %v1347
    %5380 = vmatpush.msra.mxu0 %v1335
    %5381 = vmatpush.msra.mxu0 %v1323
    %5382 = vmatpush.msra.mxu0 %v1311
    %5383 = vmatpush.msra.mxu0 %v1299
    %5384 = vmatpush.msra.mxu0 %v1287
    %5385 = vmatmul.f32.gmra.mxu0 %v4716
    %v5386 = vpop.f32.mrf.mxu0
    %v5387 = vadd.f32 %v5367, %v5386
    %5388 = vdwg.mxu0
    %5389 = vmatpush.msra.mxu0 %v1084
    %5390 = vmatpush.msra.mxu0 %v1072
    %5391 = vmatpush.msra.mxu0 %v1060
    %5392 = vmatpush.msra.mxu0 %v1048
    %5393 = vmatpush.msra.mxu0 %v1036
    %5394 = vmatpush.msra.mxu0 %v1024
    %5395 = vmatpush.msra.mxu0 %v1012
    %5396 = vmatpush.msra.mxu0 %v1000
    %5397 = vmatpush.msra.mxu0 %v988
    %5398 = vmatpush.msra.mxu0 %v976
    %5399 = vmatpush.msra.mxu0 %v964
    %5400 = vmatpush.msra.mxu0 %v952
    %5401 = vmatpush.msra.mxu0 %v940
    %5402 = vmatpush.msra.mxu0 %v928
    %5403 = vmatpush.msra.mxu0 %v916
    %5404 = vmatpush.msra.mxu0 %v904
    %5405 = vmatmul.f32.gmra.mxu0 %v4725
    %v5406 = vpop.f32.mrf.mxu0
    %v5407 = vadd.f32 0.0, %v5406
    %5408 = vdwg.mxu0
    %5409 = vmatpush.msra.mxu0 %v1276
    %5410 = vmatpush.msra.mxu0 %v1264
    %5411 = vmatpush.msra.mxu0 %v1252
    %5412 = vmatpush.msra.mxu0 %v1240
    %5413 = vmatpush.msra.mxu0 %v1228
    %5414 = vmatpush.msra.mxu0 %v1216
    %5415 = vmatpush.msra.mxu0 %v1204
    %5416 = vmatpush.msra.mxu0 %v1192
    %5417 = vmatpush.msra.mxu0 %v1180
    %5418 = vmatpush.msra.mxu0 %v1168
    %5419 = vmatpush.msra.mxu0 %v1156
    %5420 = vmatpush.msra.mxu0 %v1144
    %5421 = vmatpush.msra.mxu0 %v1132
    %5422 = vmatpush.msra.mxu0 %v1120
    %5423 = vmatpush.msra.mxu0 %v1108
    %5424 = vmatpush.msra.mxu0 %v1096
    %5425 = vmatmul.f32.gmra.mxu0 %v4726
    %v5426 = vpop.f32.mrf.mxu0
    %v5427 = vadd.f32 %v5407, %v5426
    %5428 = vdwg.mxu0
    %5429 = vmatpush.msra.mxu0 %v1468
    %5430 = vmatpush.msra.mxu0 %v1456
    %5431 = vmatpush.msra.mxu0 %v1444
    %5432 = vmatpush.msra.mxu0 %v1432
    %5433 = vmatpush.msra.mxu0 %v1420
    %5434 = vmatpush.msra.mxu0 %v1408
    %5435 = vmatpush.msra.mxu0 %v1396
    %5436 = vmatpush.msra.mxu0 %v1384
    %5437 = vmatpush.msra.mxu0 %v1372
    %5438 = vmatpush.msra.mxu0 %v1360
    %5439 = vmatpush.msra.mxu0 %v1348
    %5440 = vmatpush.msra.mxu0 %v1336
    %5441 = vmatpush.msra.mxu0 %v1324
    %5442 = vmatpush.msra.mxu0 %v1312
    %5443 = vmatpush.msra.mxu0 %v1300
    %5444 = vmatpush.msra.mxu0 %v1288
    %5445 = vmatmul.f32.gmra.mxu0 %v4716
    %v5446 = vpop.f32.mrf.mxu0
    %v5447 = vadd.f32 %v5427, %v5446
    %5448 = vdwg.mxu0
    %v5461 = vrot.slane %v4847, 7
    %v5462 = vrot.slane %v4907, 6
    %v5463 = vrot.slane %v4967, 5
    %v5464 = vrot.slane %v5027, 4
    %v5465 = vrot.slane %v5087, 3
    %v5466 = vrot.slane %v5147, 2
    %v5467 = vrot.slane %v5207, 1
    %v5468 = vrot.slane %v5327, 7
    %v5469 = vrot.slane %v5387, 6
    %v5470 = vrot.slane %v5447, 5
    %v5471 = vsel %vm1510, %v4787, %v5461
    %v5472 = vsel %vm2279, %v5462, %v5463
    %v5473 = vsel %vm1512, %v5471, %v5472
    %v5474 = vsel %vm2282, %v5464, %v5465
    %v5475 = vsel %vm2284, %v5466, %v5467
    %v5476 = vsel %vm2286, %v5474, %v5475
    %v5477 = vsel %vm2288, %v5473, %v5476
    %v5478 = vsel %vm1510, %v5267, %v5468
    %v5479 = vsel %vm2279, %v5469, %v5470
    %v5480 = vsel %vm1512, %v5478, %v5479
    %v5483 = vadd.f32 %v4722, %v5477
    %v5484 = vadd.f32 %v4724, %v5480
    %v5485 = vtanh.pop %v5483
    %v5486 = vtanh.pop %v5484
    %v5487 = vmul.f32 %v5485, 0.5
    %v5488 = vmul.f32 %v5486, 0.5
    %v5489 = vadd.f32 %v5487, 0.5
    %v5490 = vadd.f32 %v5488, 0.5
    %v5492 = vrot.slane %v5486, 1
    %v5494 = vmul.f32 %v5489, %v5492
    %v5496 = vrot.slane %v5489, 3
    %v5498 = vmul.f32 %v5496, %v4707
    %v5499 = vadd.f32 %v5498, %v5494
    %v5500 = vtanh.pop %v5499
    %v5502 = vrot.slane %v5489, 6
    %v5503 = vrot.slane %v5490, 6
    %v5504 = vsel %vm1512, %v5502, %v5503
    %v5506 = vmul.f32 %v5504, %v5500
    %v5508 = vperm.slane %v5506, 2
    %5510 = vst [vmem:[#allocation4 + $0x3] sm:$0x1] %v5508
    %s5511 = scalar_lea.vmem [#allocation3], 6
    %v5512 = vld [vmem:[%s5511] ss:$8 sm:$0xf]
    %v5513 = vld [vmem:[%s5511] ss:$8 sm:$0xf0]
    %v5514 = vor.u32 %v5512, %v5513
    %s5515 = scalar_lea.vmem [#allocation3], 70
    %v5516 = vld [vmem:[%s5515] ss:$8 sm:$0xf]
    %v5517 = vperm.slane %v5506, 0
    %v5518 = vperm.slane %v5506, 1
    %5521 = vmatpush.msra.mxu0 %v1073
    %5522 = vmatpush.msra.mxu0 %v1061
    %5523 = vmatpush.msra.mxu0 %v1049
    %5524 = vmatpush.msra.mxu0 %v1037
    %5525 = vmatpush.msra.mxu0 %v1025
    %5526 = vmatpush.msra.mxu0 %v1013
    %5527 = vmatpush.msra.mxu0 %v1001
    %5528 = vmatpush.msra.mxu0 %v989
    %5529 = vmatpush.msra.mxu0 %v977
    %5530 = vmatpush.msra.mxu0 %v965
    %5531 = vmatpush.msra.mxu0 %v953
    %5532 = vmatpush.msra.mxu0 %v941
    %5533 = vmatpush.msra.mxu0 %v929
    %5534 = vmatpush.msra.mxu0 %v917
    %5535 = vmatpush.msra.mxu0 %v905
    %5536 = vmatpush.msra.mxu0 %v893
    %5537 = vmatmul.f32.gmra.mxu0 %v5517
    %v5538 = vpop.f32.mrf.mxu0
    %v5539 = vadd.f32 0.0, %v5538
    %5540 = vdwg.mxu0
    %5541 = vmatpush.msra.mxu0 %v1265
    %5542 = vmatpush.msra.mxu0 %v1253
    %5543 = vmatpush.msra.mxu0 %v1241
    %5544 = vmatpush.msra.mxu0 %v1229
    %5545 = vmatpush.msra.mxu0 %v1217
    %5546 = vmatpush.msra.mxu0 %v1205
    %5547 = vmatpush.msra.mxu0 %v1193
    %5548 = vmatpush.msra.mxu0 %v1181
    %5549 = vmatpush.msra.mxu0 %v1169
    %5550 = vmatpush.msra.mxu0 %v1157
    %5551 = vmatpush.msra.mxu0 %v1145
    %5552 = vmatpush.msra.mxu0 %v1133
    %5553 = vmatpush.msra.mxu0 %v1121
    %5554 = vmatpush.msra.mxu0 %v1109
    %5555 = vmatpush.msra.mxu0 %v1097
    %5556 = vmatpush.msra.mxu0 %v1085
    %5557 = vmatmul.f32.gmra.mxu0 %v5518
    %v5558 = vpop.f32.mrf.mxu0
    %v5559 = vadd.f32 %v5539, %v5558
    %5560 = vdwg.mxu0
    %5561 = vmatpush.msra.mxu0 %v1457
    %5562 = vmatpush.msra.mxu0 %v1445
    %5563 = vmatpush.msra.mxu0 %v1433
    %5564 = vmatpush.msra.mxu0 %v1421
    %5565 = vmatpush.msra.mxu0 %v1409
    %5566 = vmatpush.msra.mxu0 %v1397
    %5567 = vmatpush.msra.mxu0 %v1385
    %5568 = vmatpush.msra.mxu0 %v1373
    %5569 = vmatpush.msra.mxu0 %v1361
    %5570 = vmatpush.msra.mxu0 %v1349
    %5571 = vmatpush.msra.mxu0 %v1337
    %5572 = vmatpush.msra.mxu0 %v1325
    %5573 = vmatpush.msra.mxu0 %v1313
    %5574 = vmatpush.msra.mxu0 %v1301
    %5575 = vmatpush.msra.mxu0 %v1289
    %5576 = vmatpush.msra.mxu0 %v1277
    %5577 = vmatmul.f32.gmra.mxu0 %v5508
    %v5578 = vpop.f32.mrf.mxu0
    %v5579 = vadd.f32 %v5559, %v5578
    %5580 = vdwg.mxu0
    %5581 = vmatpush.msra.mxu0 %v1074
    %5582 = vmatpush.msra.mxu0 %v1062
    %5583 = vmatpush.msra.mxu0 %v1050
    %5584 = vmatpush.msra.mxu0 %v1038
    %5585 = vmatpush.msra.mxu0 %v1026
    %5586 = vmatpush.msra.mxu0 %v1014
    %5587 = vmatpush.msra.mxu0 %v1002
    %5588 = vmatpush.msra.mxu0 %v990
    %5589 = vmatpush.msra.mxu0 %v978
    %5590 = vmatpush.msra.mxu0 %v966
    %5591 = vmatpush.msra.mxu0 %v954
    %5592 = vmatpush.msra.mxu0 %v942
    %5593 = vmatpush.msra.mxu0 %v930
    %5594 = vmatpush.msra.mxu0 %v918
    %5595 = vmatpush.msra.mxu0 %v906
    %5596 = vmatpush.msra.mxu0 %v894
    %5597 = vmatmul.f32.gmra.mxu0 %v5517
    %v5598 = vpop.f32.mrf.mxu0
    %v5599 = vadd.f32 0.0, %v5598
    %5600 = vdwg.mxu0
    %5601 = vmatpush.msra.mxu0 %v1266
    %5602 = vmatpush.msra.mxu0 %v1254
    %5603 = vmatpush.msra.mxu0 %v1242
    %5604 = vmatpush.msra.mxu0 %v1230
    %5605 = vmatpush.msra.mxu0 %v1218
    %5606 = vmatpush.msra.mxu0 %v1206
    %5607 = vmatpush.msra.mxu0 %v1194
    %5608 = vmatpush.msra.mxu0 %v1182
    %5609 = vmatpush.msra.mxu0 %v1170
    %5610 = vmatpush.msra.mxu0 %v1158
    %5611 = vmatpush.msra.mxu0 %v1146
    %5612 = vmatpush.msra.mxu0 %v1134
    %5613 = vmatpush.msra.mxu0 %v1122
    %5614 = vmatpush.msra.mxu0 %v1110
    %5615 = vmatpush.msra.mxu0 %v1098
    %5616 = vmatpush.msra.mxu0 %v1086
    %5617 = vmatmul.f32.gmra.mxu0 %v5518
    %v5618 = vpop.f32.mrf.mxu0
    %v5619 = vadd.f32 %v5599, %v5618
    %5620 = vdwg.mxu0
    %5621 = vmatpush.msra.mxu0 %v1458
    %5622 = vmatpush.msra.mxu0 %v1446
    %5623 = vmatpush.msra.mxu0 %v1434
    %5624 = vmatpush.msra.mxu0 %v1422
    %5625 = vmatpush.msra.mxu0 %v1410
    %5626 = vmatpush.msra.mxu0 %v1398
    %5627 = vmatpush.msra.mxu0 %v1386
    %5628 = vmatpush.msra.mxu0 %v1374
    %5629 = vmatpush.msra.mxu0 %v1362
    %5630 = vmatpush.msra.mxu0 %v1350
    %5631 = vmatpush.msra.mxu0 %v1338
    %5632 = vmatpush.msra.mxu0 %v1326
    %5633 = vmatpush.msra.mxu0 %v1314
    %5634 = vmatpush.msra.mxu0 %v1302
    %5635 = vmatpush.msra.mxu0 %v1290
    %5636 = vmatpush.msra.mxu0 %v1278
    %5637 = vmatmul.f32.gmra.mxu0 %v5508
    %v5638 = vpop.f32.mrf.mxu0
    %v5639 = vadd.f32 %v5619, %v5638
    %5640 = vdwg.mxu0
    %5641 = vmatpush.msra.mxu0 %v1075
    %5642 = vmatpush.msra.mxu0 %v1063
    %5643 = vmatpush.msra.mxu0 %v1051
    %5644 = vmatpush.msra.mxu0 %v1039
    %5645 = vmatpush.msra.mxu0 %v1027
    %5646 = vmatpush.msra.mxu0 %v1015
    %5647 = vmatpush.msra.mxu0 %v1003
    %5648 = vmatpush.msra.mxu0 %v991
    %5649 = vmatpush.msra.mxu0 %v979
    %5650 = vmatpush.msra.mxu0 %v967
    %5651 = vmatpush.msra.mxu0 %v955
    %5652 = vmatpush.msra.mxu0 %v943
    %5653 = vmatpush.msra.mxu0 %v931
    %5654 = vmatpush.msra.mxu0 %v919
    %5655 = vmatpush.msra.mxu0 %v907
    %5656 = vmatpush.msra.mxu0 %v895
    %5657 = vmatmul.f32.gmra.mxu0 %v5517
    %v5658 = vpop.f32.mrf.mxu0
    %v5659 = vadd.f32 0.0, %v5658
    %5660 = vdwg.mxu0
    %5661 = vmatpush.msra.mxu0 %v1267
    %5662 = vmatpush.msra.mxu0 %v1255
    %5663 = vmatpush.msra.mxu0 %v1243
    %5664 = vmatpush.msra.mxu0 %v1231
    %5665 = vmatpush.msra.mxu0 %v1219
    %5666 = vmatpush.msra.mxu0 %v1207
    %5667 = vmatpush.msra.mxu0 %v1195
    %5668 = vmatpush.msra.mxu0 %v1183
    %5669 = vmatpush.msra.mxu0 %v1171
    %5670 = vmatpush.msra.mxu0 %v1159
    %5671 = vmatpush.msra.mxu0 %v1147
    %5672 = vmatpush.msra.mxu0 %v1135
    %5673 = vmatpush.msra.mxu0 %v1123
    %5674 = vmatpush.msra.mxu0 %v1111
    %5675 = vmatpush.msra.mxu0 %v1099
    %5676 = vmatpush.msra.mxu0 %v1087
    %5677 = vmatmul.f32.gmra.mxu0 %v5518
    %v5678 = vpop.f32.mrf.mxu0
    %v5679 = vadd.f32 %v5659, %v5678
    %5680 = vdwg.mxu0
    %5681 = vmatpush.msra.mxu0 %v1459
    %5682 = vmatpush.msra.mxu0 %v1447
    %5683 = vmatpush.msra.mxu0 %v1435
    %5684 = vmatpush.msra.mxu0 %v1423
    %5685 = vmatpush.msra.mxu0 %v1411
    %5686 = vmatpush.msra.mxu0 %v1399
    %5687 = vmatpush.msra.mxu0 %v1387
    %5688 = vmatpush.msra.mxu0 %v1375
    %5689 = vmatpush.msra.mxu0 %v1363
    %5690 = vmatpush.msra.mxu0 %v1351
    %5691 = vmatpush.msra.mxu0 %v1339
    %5692 = vmatpush.msra.mxu0 %v1327
    %5693 = vmatpush.msra.mxu0 %v1315
    %5694 = vmatpush.msra.mxu0 %v1303
    %5695 = vmatpush.msra.mxu0 %v1291
    %5696 = vmatpush.msra.mxu0 %v1279
    %5697 = vmatmul.f32.gmra.mxu0 %v5508
    %v5698 = vpop.f32.mrf.mxu0
    %v5699 = vadd.f32 %v5679, %v5698
    %5700 = vdwg.mxu0
    %5701 = vmatpush.msra.mxu0 %v1076
    %5702 = vmatpush.msra.mxu0 %v1064
    %5703 = vmatpush.msra.mxu0 %v1052
    %5704 = vmatpush.msra.mxu0 %v1040
    %5705 = vmatpush.msra.mxu0 %v1028
    %5706 = vmatpush.msra.mxu0 %v1016
    %5707 = vmatpush.msra.mxu0 %v1004
    %5708 = vmatpush.msra.mxu0 %v992
    %5709 = vmatpush.msra.mxu0 %v980
    %5710 = vmatpush.msra.mxu0 %v968
    %5711 = vmatpush.msra.mxu0 %v956
    %5712 = vmatpush.msra.mxu0 %v944
    %5713 = vmatpush.msra.mxu0 %v932
    %5714 = vmatpush.msra.mxu0 %v920
    %5715 = vmatpush.msra.mxu0 %v908
    %5716 = vmatpush.msra.mxu0 %v896
    %5717 = vmatmul.f32.gmra.mxu0 %v5517
    %v5718 = vpop.f32.mrf.mxu0
    %v5719 = vadd.f32 0.0, %v5718
    %5720 = vdwg.mxu0
    %5721 = vmatpush.msra.mxu0 %v1268
    %5722 = vmatpush.msra.mxu0 %v1256
    %5723 = vmatpush.msra.mxu0 %v1244
    %5724 = vmatpush.msra.mxu0 %v1232
    %5725 = vmatpush.msra.mxu0 %v1220
    %5726 = vmatpush.msra.mxu0 %v1208
    %5727 = vmatpush.msra.mxu0 %v1196
    %5728 = vmatpush.msra.mxu0 %v1184
    %5729 = vmatpush.msra.mxu0 %v1172
    %5730 = vmatpush.msra.mxu0 %v1160
    %5731 = vmatpush.msra.mxu0 %v1148
    %5732 = vmatpush.msra.mxu0 %v1136
    %5733 = vmatpush.msra.mxu0 %v1124
    %5734 = vmatpush.msra.mxu0 %v1112
    %5735 = vmatpush.msra.mxu0 %v1100
    %5736 = vmatpush.msra.mxu0 %v1088
    %5737 = vmatmul.f32.gmra.mxu0 %v5518
    %v5738 = vpop.f32.mrf.mxu0
    %v5739 = vadd.f32 %v5719, %v5738
    %5740 = vdwg.mxu0
    %5741 = vmatpush.msra.mxu0 %v1460
    %5742 = vmatpush.msra.mxu0 %v1448
    %5743 = vmatpush.msra.mxu0 %v1436
    %5744 = vmatpush.msra.mxu0 %v1424
    %5745 = vmatpush.msra.mxu0 %v1412
    %5746 = vmatpush.msra.mxu0 %v1400
    %5747 = vmatpush.msra.mxu0 %v1388
    %5748 = vmatpush.msra.mxu0 %v1376
    %5749 = vmatpush.msra.mxu0 %v1364
    %5750 = vmatpush.msra.mxu0 %v1352
    %5751 = vmatpush.msra.mxu0 %v1340
    %5752 = vmatpush.msra.mxu0 %v1328
    %5753 = vmatpush.msra.mxu0 %v1316
    %5754 = vmatpush.msra.mxu0 %v1304
    %5755 = vmatpush.msra.mxu0 %v1292
    %5756 = vmatpush.msra.mxu0 %v1280
    %5757 = vmatmul.f32.gmra.mxu0 %v5508
    %v5758 = vpop.f32.mrf.mxu0
    %v5759 = vadd.f32 %v5739, %v5758
    %5760 = vdwg.mxu0
    %5761 = vmatpush.msra.mxu0 %v1077
    %5762 = vmatpush.msra.mxu0 %v1065
    %5763 = vmatpush.msra.mxu0 %v1053
    %5764 = vmatpush.msra.mxu0 %v1041
    %5765 = vmatpush.msra.mxu0 %v1029
    %5766 = vmatpush.msra.mxu0 %v1017
    %5767 = vmatpush.msra.mxu0 %v1005
    %5768 = vmatpush.msra.mxu0 %v993
    %5769 = vmatpush.msra.mxu0 %v981
    %5770 = vmatpush.msra.mxu0 %v969
    %5771 = vmatpush.msra.mxu0 %v957
    %5772 = vmatpush.msra.mxu0 %v945
    %5773 = vmatpush.msra.mxu0 %v933
    %5774 = vmatpush.msra.mxu0 %v921
    %5775 = vmatpush.msra.mxu0 %v909
    %5776 = vmatpush.msra.mxu0 %v897
    %5777 = vmatmul.f32.gmra.mxu0 %v5517
    %v5778 = vpop.f32.mrf.mxu0
    %v5779 = vadd.f32 0.0, %v5778
    %5780 = vdwg.mxu0
    %5781 = vmatpush.msra.mxu0 %v1269
    %5782 = vmatpush.msra.mxu0 %v1257
    %5783 = vmatpush.msra.mxu0 %v1245
    %5784 = vmatpush.msra.mxu0 %v1233
    %5785 = vmatpush.msra.mxu0 %v1221
    %5786 = vmatpush.msra.mxu0 %v1209
    %5787 = vmatpush.msra.mxu0 %v1197
    %5788 = vmatpush.msra.mxu0 %v1185
    %5789 = vmatpush.msra.mxu0 %v1173
    %5790 = vmatpush.msra.mxu0 %v1161
    %5791 = vmatpush.msra.mxu0 %v1149
    %5792 = vmatpush.msra.mxu0 %v1137
    %5793 = vmatpush.msra.mxu0 %v1125
    %5794 = vmatpush.msra.mxu0 %v1113
    %5795 = vmatpush.msra.mxu0 %v1101
    %5796 = vmatpush.msra.mxu0 %v1089
    %5797 = vmatmul.f32.gmra.mxu0 %v5518
    %v5798 = vpop.f32.mrf.mxu0
    %v5799 = vadd.f32 %v5779, %v5798
    %5800 = vdwg.mxu0
    %5801 = vmatpush.msra.mxu0 %v1461
    %5802 = vmatpush.msra.mxu0 %v1449
    %5803 = vmatpush.msra.mxu0 %v1437
    %5804 = vmatpush.msra.mxu0 %v1425
    %5805 = vmatpush.msra.mxu0 %v1413
    %5806 = vmatpush.msra.mxu0 %v1401
    %5807 = vmatpush.msra.mxu0 %v1389
    %5808 = vmatpush.msra.mxu0 %v1377
    %5809 = vmatpush.msra.mxu0 %v1365
    %5810 = vmatpush.msra.mxu0 %v1353
    %5811 = vmatpush.msra.mxu0 %v1341
    %5812 = vmatpush.msra.mxu0 %v1329
    %5813 = vmatpush.msra.mxu0 %v1317
    %5814 = vmatpush.msra.mxu0 %v1305
    %5815 = vmatpush.msra.mxu0 %v1293
    %5816 = vmatpush.msra.mxu0 %v1281
    %5817 = vmatmul.f32.gmra.mxu0 %v5508
    %v5818 = vpop.f32.mrf.mxu0
    %v5819 = vadd.f32 %v5799, %v5818
    %5820 = vdwg.mxu0
    %5821 = vmatpush.msra.mxu0 %v1078
    %5822 = vmatpush.msra.mxu0 %v1066
    %5823 = vmatpush.msra.mxu0 %v1054
    %5824 = vmatpush.msra.mxu0 %v1042
    %5825 = vmatpush.msra.mxu0 %v1030
    %5826 = vmatpush.msra.mxu0 %v1018
    %5827 = vmatpush.msra.mxu0 %v1006
    %5828 = vmatpush.msra.mxu0 %v994
    %5829 = vmatpush.msra.mxu0 %v982
    %5830 = vmatpush.msra.mxu0 %v970
    %5831 = vmatpush.msra.mxu0 %v958
    %5832 = vmatpush.msra.mxu0 %v946
    %5833 = vmatpush.msra.mxu0 %v934
    %5834 = vmatpush.msra.mxu0 %v922
    %5835 = vmatpush.msra.mxu0 %v910
    %5836 = vmatpush.msra.mxu0 %v898
    %5837 = vmatmul.f32.gmra.mxu0 %v5517
    %v5838 = vpop.f32.mrf.mxu0
    %v5839 = vadd.f32 0.0, %v5838
    %5840 = vdwg.mxu0
    %5841 = vmatpush.msra.mxu0 %v1270
    %5842 = vmatpush.msra.mxu0 %v1258
    %5843 = vmatpush.msra.mxu0 %v1246
    %5844 = vmatpush.msra.mxu0 %v1234
    %5845 = vmatpush.msra.mxu0 %v1222
    %5846 = vmatpush.msra.mxu0 %v1210
    %5847 = vmatpush.msra.mxu0 %v1198
    %5848 = vmatpush.msra.mxu0 %v1186
    %5849 = vmatpush.msra.mxu0 %v1174
    %5850 = vmatpush.msra.mxu0 %v1162
    %5851 = vmatpush.msra.mxu0 %v1150
    %5852 = vmatpush.msra.mxu0 %v1138
    %5853 = vmatpush.msra.mxu0 %v1126
    %5854 = vmatpush.msra.mxu0 %v1114
    %5855 = vmatpush.msra.mxu0 %v1102
    %5856 = vmatpush.msra.mxu0 %v1090
    %5857 = vmatmul.f32.gmra.mxu0 %v5518
    %v5858 = vpop.f32.mrf.mxu0
    %v5859 = vadd.f32 %v5839, %v5858
    %5860 = vdwg.mxu0
    %5861 = vmatpush.msra.mxu0 %v1462
    %5862 = vmatpush.msra.mxu0 %v1450
    %5863 = vmatpush.msra.mxu0 %v1438
    %5864 = vmatpush.msra.mxu0 %v1426
    %5865 = vmatpush.msra.mxu0 %v1414
    %5866 = vmatpush.msra.mxu0 %v1402
    %5867 = vmatpush.msra.mxu0 %v1390
    %5868 = vmatpush.msra.mxu0 %v1378
    %5869 = vmatpush.msra.mxu0 %v1366
    %5870 = vmatpush.msra.mxu0 %v1354
    %5871 = vmatpush.msra.mxu0 %v1342
    %5872 = vmatpush.msra.mxu0 %v1330
    %5873 = vmatpush.msra.mxu0 %v1318
    %5874 = vmatpush.msra.mxu0 %v1306
    %5875 = vmatpush.msra.mxu0 %v1294
    %5876 = vmatpush.msra.mxu0 %v1282
    %5877 = vmatmul.f32.gmra.mxu0 %v5508
    %v5878 = vpop.f32.mrf.mxu0
    %v5879 = vadd.f32 %v5859, %v5878
    %5880 = vdwg.mxu0
    %5881 = vmatpush.msra.mxu0 %v1079
    %5882 = vmatpush.msra.mxu0 %v1067
    %5883 = vmatpush.msra.mxu0 %v1055
    %5884 = vmatpush.msra.mxu0 %v1043
    %5885 = vmatpush.msra.mxu0 %v1031
    %5886 = vmatpush.msra.mxu0 %v1019
    %5887 = vmatpush.msra.mxu0 %v1007
    %5888 = vmatpush.msra.mxu0 %v995
    %5889 = vmatpush.msra.mxu0 %v983
    %5890 = vmatpush.msra.mxu0 %v971
    %5891 = vmatpush.msra.mxu0 %v959
    %5892 = vmatpush.msra.mxu0 %v947
    %5893 = vmatpush.msra.mxu0 %v935
    %5894 = vmatpush.msra.mxu0 %v923
    %5895 = vmatpush.msra.mxu0 %v911
    %5896 = vmatpush.msra.mxu0 %v899
    %5897 = vmatmul.f32.gmra.mxu0 %v5517
    %v5898 = vpop.f32.mrf.mxu0
    %v5899 = vadd.f32 0.0, %v5898
    %5900 = vdwg.mxu0
    %5901 = vmatpush.msra.mxu0 %v1271
    %5902 = vmatpush.msra.mxu0 %v1259
    %5903 = vmatpush.msra.mxu0 %v1247
    %5904 = vmatpush.msra.mxu0 %v1235
    %5905 = vmatpush.msra.mxu0 %v1223
    %5906 = vmatpush.msra.mxu0 %v1211
    %5907 = vmatpush.msra.mxu0 %v1199
    %5908 = vmatpush.msra.mxu0 %v1187
    %5909 = vmatpush.msra.mxu0 %v1175
    %5910 = vmatpush.msra.mxu0 %v1163
    %5911 = vmatpush.msra.mxu0 %v1151
    %5912 = vmatpush.msra.mxu0 %v1139
    %5913 = vmatpush.msra.mxu0 %v1127
    %5914 = vmatpush.msra.mxu0 %v1115
    %5915 = vmatpush.msra.mxu0 %v1103
    %5916 = vmatpush.msra.mxu0 %v1091
    %5917 = vmatmul.f32.gmra.mxu0 %v5518
    %v5918 = vpop.f32.mrf.mxu0
    %v5919 = vadd.f32 %v5899, %v5918
    %5920 = vdwg.mxu0
    %5921 = vmatpush.msra.mxu0 %v1463
    %5922 = vmatpush.msra.mxu0 %v1451
    %5923 = vmatpush.msra.mxu0 %v1439
    %5924 = vmatpush.msra.mxu0 %v1427
    %5925 = vmatpush.msra.mxu0 %v1415
    %5926 = vmatpush.msra.mxu0 %v1403
    %5927 = vmatpush.msra.mxu0 %v1391
    %5928 = vmatpush.msra.mxu0 %v1379
    %5929 = vmatpush.msra.mxu0 %v1367
    %5930 = vmatpush.msra.mxu0 %v1355
    %5931 = vmatpush.msra.mxu0 %v1343
    %5932 = vmatpush.msra.mxu0 %v1331
    %5933 = vmatpush.msra.mxu0 %v1319
    %5934 = vmatpush.msra.mxu0 %v1307
    %5935 = vmatpush.msra.mxu0 %v1295
    %5936 = vmatpush.msra.mxu0 %v1283
    %5937 = vmatmul.f32.gmra.mxu0 %v5508
    %v5938 = vpop.f32.mrf.mxu0
    %v5939 = vadd.f32 %v5919, %v5938
    %5940 = vdwg.mxu0
    %5941 = vmatpush.msra.mxu0 %v1080
    %5942 = vmatpush.msra.mxu0 %v1068
    %5943 = vmatpush.msra.mxu0 %v1056
    %5944 = vmatpush.msra.mxu0 %v1044
    %5945 = vmatpush.msra.mxu0 %v1032
    %5946 = vmatpush.msra.mxu0 %v1020
    %5947 = vmatpush.msra.mxu0 %v1008
    %5948 = vmatpush.msra.mxu0 %v996
    %5949 = vmatpush.msra.mxu0 %v984
    %5950 = vmatpush.msra.mxu0 %v972
    %5951 = vmatpush.msra.mxu0 %v960
    %5952 = vmatpush.msra.mxu0 %v948
    %5953 = vmatpush.msra.mxu0 %v936
    %5954 = vmatpush.msra.mxu0 %v924
    %5955 = vmatpush.msra.mxu0 %v912
    %5956 = vmatpush.msra.mxu0 %v900
    %5957 = vmatmul.f32.gmra.mxu0 %v5517
    %v5958 = vpop.f32.mrf.mxu0
    %v5959 = vadd.f32 0.0, %v5958
    %5960 = vdwg.mxu0
    %5961 = vmatpush.msra.mxu0 %v1272
    %5962 = vmatpush.msra.mxu0 %v1260
    %5963 = vmatpush.msra.mxu0 %v1248
    %5964 = vmatpush.msra.mxu0 %v1236
    %5965 = vmatpush.msra.mxu0 %v1224
    %5966 = vmatpush.msra.mxu0 %v1212
    %5967 = vmatpush.msra.mxu0 %v1200
    %5968 = vmatpush.msra.mxu0 %v1188
    %5969 = vmatpush.msra.mxu0 %v1176
    %5970 = vmatpush.msra.mxu0 %v1164
    %5971 = vmatpush.msra.mxu0 %v1152
    %5972 = vmatpush.msra.mxu0 %v1140
    %5973 = vmatpush.msra.mxu0 %v1128
    %5974 = vmatpush.msra.mxu0 %v1116
    %5975 = vmatpush.msra.mxu0 %v1104
    %5976 = vmatpush.msra.mxu0 %v1092
    %5977 = vmatmul.f32.gmra.mxu0 %v5518
    %v5978 = vpop.f32.mrf.mxu0
    %v5979 = vadd.f32 %v5959, %v5978
    %5980 = vdwg.mxu0
    %5981 = vmatpush.msra.mxu0 %v1464
    %5982 = vmatpush.msra.mxu0 %v1452
    %5983 = vmatpush.msra.mxu0 %v1440
    %5984 = vmatpush.msra.mxu0 %v1428
    %5985 = vmatpush.msra.mxu0 %v1416
    %5986 = vmatpush.msra.mxu0 %v1404
    %5987 = vmatpush.msra.mxu0 %v1392
    %5988 = vmatpush.msra.mxu0 %v1380
    %5989 = vmatpush.msra.mxu0 %v1368
    %5990 = vmatpush.msra.mxu0 %v1356
    %5991 = vmatpush.msra.mxu0 %v1344
    %5992 = vmatpush.msra.mxu0 %v1332
    %5993 = vmatpush.msra.mxu0 %v1320
    %5994 = vmatpush.msra.mxu0 %v1308
    %5995 = vmatpush.msra.mxu0 %v1296
    %5996 = vmatpush.msra.mxu0 %v1284
    %5997 = vmatmul.f32.gmra.mxu0 %v5508
    %v5998 = vpop.f32.mrf.mxu0
    %v5999 = vadd.f32 %v5979, %v5998
    %6000 = vdwg.mxu0
    %6001 = vmatpush.msra.mxu0 %v1081
    %6002 = vmatpush.msra.mxu0 %v1069
    %6003 = vmatpush.msra.mxu0 %v1057
    %6004 = vmatpush.msra.mxu0 %v1045
    %6005 = vmatpush.msra.mxu0 %v1033
    %6006 = vmatpush.msra.mxu0 %v1021
    %6007 = vmatpush.msra.mxu0 %v1009
    %6008 = vmatpush.msra.mxu0 %v997
    %6009 = vmatpush.msra.mxu0 %v985
    %6010 = vmatpush.msra.mxu0 %v973
    %6011 = vmatpush.msra.mxu0 %v961
    %6012 = vmatpush.msra.mxu0 %v949
    %6013 = vmatpush.msra.mxu0 %v937
    %6014 = vmatpush.msra.mxu0 %v925
    %6015 = vmatpush.msra.mxu0 %v913
    %6016 = vmatpush.msra.mxu0 %v901
    %6017 = vmatmul.f32.gmra.mxu0 %v5517
    %v6018 = vpop.f32.mrf.mxu0
    %v6019 = vadd.f32 0.0, %v6018
    %6020 = vdwg.mxu0
    %6021 = vmatpush.msra.mxu0 %v1273
    %6022 = vmatpush.msra.mxu0 %v1261
    %6023 = vmatpush.msra.mxu0 %v1249
    %6024 = vmatpush.msra.mxu0 %v1237
    %6025 = vmatpush.msra.mxu0 %v1225
    %6026 = vmatpush.msra.mxu0 %v1213
    %6027 = vmatpush.msra.mxu0 %v1201
    %6028 = vmatpush.msra.mxu0 %v1189
    %6029 = vmatpush.msra.mxu0 %v1177
    %6030 = vmatpush.msra.mxu0 %v1165
    %6031 = vmatpush.msra.mxu0 %v1153
    %6032 = vmatpush.msra.mxu0 %v1141
    %6033 = vmatpush.msra.mxu0 %v1129
    %6034 = vmatpush.msra.mxu0 %v1117
    %6035 = vmatpush.msra.mxu0 %v1105
    %6036 = vmatpush.msra.mxu0 %v1093
    %6037 = vmatmul.f32.gmra.mxu0 %v5518
    %v6038 = vpop.f32.mrf.mxu0
    %v6039 = vadd.f32 %v6019, %v6038
    %6040 = vdwg.mxu0
    %6041 = vmatpush.msra.mxu0 %v1465
    %6042 = vmatpush.msra.mxu0 %v1453
    %6043 = vmatpush.msra.mxu0 %v1441
    %6044 = vmatpush.msra.mxu0 %v1429
    %6045 = vmatpush.msra.mxu0 %v1417
    %6046 = vmatpush.msra.mxu0 %v1405
    %6047 = vmatpush.msra.mxu0 %v1393
    %6048 = vmatpush.msra.mxu0 %v1381
    %6049 = vmatpush.msra.mxu0 %v1369
    %6050 = vmatpush.msra.mxu0 %v1357
    %6051 = vmatpush.msra.mxu0 %v1345
    %6052 = vmatpush.msra.mxu0 %v1333
    %6053 = vmatpush.msra.mxu0 %v1321
    %6054 = vmatpush.msra.mxu0 %v1309
    %6055 = vmatpush.msra.mxu0 %v1297
    %6056 = vmatpush.msra.mxu0 %v1285
    %6057 = vmatmul.f32.gmra.mxu0 %v5508
    %v6058 = vpop.f32.mrf.mxu0
    %v6059 = vadd.f32 %v6039, %v6058
    %6060 = vdwg.mxu0
    %6061 = vmatpush.msra.mxu0 %v1082
    %6062 = vmatpush.msra.mxu0 %v1070
    %6063 = vmatpush.msra.mxu0 %v1058
    %6064 = vmatpush.msra.mxu0 %v1046
    %6065 = vmatpush.msra.mxu0 %v1034
    %6066 = vmatpush.msra.mxu0 %v1022
    %6067 = vmatpush.msra.mxu0 %v1010
    %6068 = vmatpush.msra.mxu0 %v998
    %6069 = vmatpush.msra.mxu0 %v986
    %6070 = vmatpush.msra.mxu0 %v974
    %6071 = vmatpush.msra.mxu0 %v962
    %6072 = vmatpush.msra.mxu0 %v950
    %6073 = vmatpush.msra.mxu0 %v938
    %6074 = vmatpush.msra.mxu0 %v926
    %6075 = vmatpush.msra.mxu0 %v914
    %6076 = vmatpush.msra.mxu0 %v902
    %6077 = vmatmul.f32.gmra.mxu0 %v5517
    %v6078 = vpop.f32.mrf.mxu0
    %v6079 = vadd.f32 0.0, %v6078
    %6080 = vdwg.mxu0
    %6081 = vmatpush.msra.mxu0 %v1274
    %6082 = vmatpush.msra.mxu0 %v1262
    %6083 = vmatpush.msra.mxu0 %v1250
    %6084 = vmatpush.msra.mxu0 %v1238
    %6085 = vmatpush.msra.mxu0 %v1226
    %6086 = vmatpush.msra.mxu0 %v1214
    %6087 = vmatpush.msra.mxu0 %v1202
    %6088 = vmatpush.msra.mxu0 %v1190
    %6089 = vmatpush.msra.mxu0 %v1178
    %6090 = vmatpush.msra.mxu0 %v1166
    %6091 = vmatpush.msra.mxu0 %v1154
    %6092 = vmatpush.msra.mxu0 %v1142
    %6093 = vmatpush.msra.mxu0 %v1130
    %6094 = vmatpush.msra.mxu0 %v1118
    %6095 = vmatpush.msra.mxu0 %v1106
    %6096 = vmatpush.msra.mxu0 %v1094
    %6097 = vmatmul.f32.gmra.mxu0 %v5518
    %v6098 = vpop.f32.mrf.mxu0
    %v6099 = vadd.f32 %v6079, %v6098
    %6100 = vdwg.mxu0
    %6101 = vmatpush.msra.mxu0 %v1466
    %6102 = vmatpush.msra.mxu0 %v1454
    %6103 = vmatpush.msra.mxu0 %v1442
    %6104 = vmatpush.msra.mxu0 %v1430
    %6105 = vmatpush.msra.mxu0 %v1418
    %6106 = vmatpush.msra.mxu0 %v1406
    %6107 = vmatpush.msra.mxu0 %v1394
    %6108 = vmatpush.msra.mxu0 %v1382
    %6109 = vmatpush.msra.mxu0 %v1370
    %6110 = vmatpush.msra.mxu0 %v1358
    %6111 = vmatpush.msra.mxu0 %v1346
    %6112 = vmatpush.msra.mxu0 %v1334
    %6113 = vmatpush.msra.mxu0 %v1322
    %6114 = vmatpush.msra.mxu0 %v1310
    %6115 = vmatpush.msra.mxu0 %v1298
    %6116 = vmatpush.msra.mxu0 %v1286
    %6117 = vmatmul.f32.gmra.mxu0 %v5508
    %v6118 = vpop.f32.mrf.mxu0
    %v6119 = vadd.f32 %v6099, %v6118
    %6120 = vdwg.mxu0
    %6121 = vmatpush.msra.mxu0 %v1083
    %6122 = vmatpush.msra.mxu0 %v1071
    %6123 = vmatpush.msra.mxu0 %v1059
    %6124 = vmatpush.msra.mxu0 %v1047
    %6125 = vmatpush.msra.mxu0 %v1035
    %6126 = vmatpush.msra.mxu0 %v1023
    %6127 = vmatpush.msra.mxu0 %v1011
    %6128 = vmatpush.msra.mxu0 %v999
    %6129 = vmatpush.msra.mxu0 %v987
    %6130 = vmatpush.msra.mxu0 %v975
    %6131 = vmatpush.msra.mxu0 %v963
    %6132 = vmatpush.msra.mxu0 %v951
    %6133 = vmatpush.msra.mxu0 %v939
    %6134 = vmatpush.msra.mxu0 %v927
    %6135 = vmatpush.msra.mxu0 %v915
    %6136 = vmatpush.msra.mxu0 %v903
    %6137 = vmatmul.f32.gmra.mxu0 %v5517
    %v6138 = vpop.f32.mrf.mxu0
    %v6139 = vadd.f32 0.0, %v6138
    %6140 = vdwg.mxu0
    %6141 = vmatpush.msra.mxu0 %v1275
    %6142 = vmatpush.msra.mxu0 %v1263
    %6143 = vmatpush.msra.mxu0 %v1251
    %6144 = vmatpush.msra.mxu0 %v1239
    %6145 = vmatpush.msra.mxu0 %v1227
    %6146 = vmatpush.msra.mxu0 %v1215
    %6147 = vmatpush.msra.mxu0 %v1203
    %6148 = vmatpush.msra.mxu0 %v1191
    %6149 = vmatpush.msra.mxu0 %v1179
    %6150 = vmatpush.msra.mxu0 %v1167
    %6151 = vmatpush.msra.mxu0 %v1155
    %6152 = vmatpush.msra.mxu0 %v1143
    %6153 = vmatpush.msra.mxu0 %v1131
    %6154 = vmatpush.msra.mxu0 %v1119
    %6155 = vmatpush.msra.mxu0 %v1107
    %6156 = vmatpush.msra.mxu0 %v1095
    %6157 = vmatmul.f32.gmra.mxu0 %v5518
    %v6158 = vpop.f32.mrf.mxu0
    %v6159 = vadd.f32 %v6139, %v6158
    %6160 = vdwg.mxu0
    %6161 = vmatpush.msra.mxu0 %v1467
    %6162 = vmatpush.msra.mxu0 %v1455
    %6163 = vmatpush.msra.mxu0 %v1443
    %6164 = vmatpush.msra.mxu0 %v1431
    %6165 = vmatpush.msra.mxu0 %v1419
    %6166 = vmatpush.msra.mxu0 %v1407
    %6167 = vmatpush.msra.mxu0 %v1395
    %6168 = vmatpush.msra.mxu0 %v1383
    %6169 = vmatpush.msra.mxu0 %v1371
    %6170 = vmatpush.msra.mxu0 %v1359
    %6171 = vmatpush.msra.mxu0 %v1347
    %6172 = vmatpush.msra.mxu0 %v1335
    %6173 = vmatpush.msra.mxu0 %v1323
    %6174 = vmatpush.msra.mxu0 %v1311
    %6175 = vmatpush.msra.mxu0 %v1299
    %6176 = vmatpush.msra.mxu0 %v1287
    %6177 = vmatmul.f32.gmra.mxu0 %v5508
    %v6178 = vpop.f32.mrf.mxu0
    %v6179 = vadd.f32 %v6159, %v6178
    %6180 = vdwg.mxu0
    %6181 = vmatpush.msra.mxu0 %v1084
    %6182 = vmatpush.msra.mxu0 %v1072
    %6183 = vmatpush.msra.mxu0 %v1060
    %6184 = vmatpush.msra.mxu0 %v1048
    %6185 = vmatpush.msra.mxu0 %v1036
    %6186 = vmatpush.msra.mxu0 %v1024
    %6187 = vmatpush.msra.mxu0 %v1012
    %6188 = vmatpush.msra.mxu0 %v1000
    %6189 = vmatpush.msra.mxu0 %v988
    %6190 = vmatpush.msra.mxu0 %v976
    %6191 = vmatpush.msra.mxu0 %v964
    %6192 = vmatpush.msra.mxu0 %v952
    %6193 = vmatpush.msra.mxu0 %v940
    %6194 = vmatpush.msra.mxu0 %v928
    %6195 = vmatpush.msra.mxu0 %v916
    %6196 = vmatpush.msra.mxu0 %v904
    %6197 = vmatmul.f32.gmra.mxu0 %v5517
    %v6198 = vpop.f32.mrf.mxu0
    %v6199 = vadd.f32 0.0, %v6198
    %6200 = vdwg.mxu0
    %6201 = vmatpush.msra.mxu0 %v1276
    %6202 = vmatpush.msra.mxu0 %v1264
    %6203 = vmatpush.msra.mxu0 %v1252
    %6204 = vmatpush.msra.mxu0 %v1240
    %6205 = vmatpush.msra.mxu0 %v1228
    %6206 = vmatpush.msra.mxu0 %v1216
    %6207 = vmatpush.msra.mxu0 %v1204
    %6208 = vmatpush.msra.mxu0 %v1192
    %6209 = vmatpush.msra.mxu0 %v1180
    %6210 = vmatpush.msra.mxu0 %v1168
    %6211 = vmatpush.msra.mxu0 %v1156
    %6212 = vmatpush.msra.mxu0 %v1144
    %6213 = vmatpush.msra.mxu0 %v1132
    %6214 = vmatpush.msra.mxu0 %v1120
    %6215 = vmatpush.msra.mxu0 %v1108
    %6216 = vmatpush.msra.mxu0 %v1096
    %6217 = vmatmul.f32.gmra.mxu0 %v5518
    %v6218 = vpop.f32.mrf.mxu0
    %v6219 = vadd.f32 %v6199, %v6218
    %6220 = vdwg.mxu0
    %6221 = vmatpush.msra.mxu0 %v1468
    %6222 = vmatpush.msra.mxu0 %v1456
    %6223 = vmatpush.msra.mxu0 %v1444
    %6224 = vmatpush.msra.mxu0 %v1432
    %6225 = vmatpush.msra.mxu0 %v1420
    %6226 = vmatpush.msra.mxu0 %v1408
    %6227 = vmatpush.msra.mxu0 %v1396
    %6228 = vmatpush.msra.mxu0 %v1384
    %6229 = vmatpush.msra.mxu0 %v1372
    %6230 = vmatpush.msra.mxu0 %v1360
    %6231 = vmatpush.msra.mxu0 %v1348
    %6232 = vmatpush.msra.mxu0 %v1336
    %6233 = vmatpush.msra.mxu0 %v1324
    %6234 = vmatpush.msra.mxu0 %v1312
    %6235 = vmatpush.msra.mxu0 %v1300
    %6236 = vmatpush.msra.mxu0 %v1288
    %6237 = vmatmul.f32.gmra.mxu0 %v5508
    %v6238 = vpop.f32.mrf.mxu0
    %v6239 = vadd.f32 %v6219, %v6238
    %6240 = vdwg.mxu0
    %v6253 = vrot.slane %v5639, 7
    %v6254 = vrot.slane %v5699, 6
    %v6255 = vrot.slane %v5759, 5
    %v6256 = vrot.slane %v5819, 4
    %v6257 = vrot.slane %v5879, 3
    %v6258 = vrot.slane %v5939, 2
    %v6259 = vrot.slane %v5999, 1
    %v6260 = vrot.slane %v6119, 7
    %v6261 = vrot.slane %v6179, 6
    %v6262 = vrot.slane %v6239, 5
    %v6263 = vsel %vm1510, %v5579, %v6253
    %v6264 = vsel %vm2279, %v6254, %v6255
    %v6265 = vsel %vm1512, %v6263, %v6264
    %v6266 = vsel %vm2282, %v6256, %v6257
    %v6267 = vsel %vm2284, %v6258, %v6259
    %v6268 = vsel %vm2286, %v6266, %v6267
    %v6269 = vsel %vm2288, %v6265, %v6268
    %v6270 = vsel %vm1510, %v6059, %v6260
    %v6271 = vsel %vm2279, %v6261, %v6262
    %v6272 = vsel %vm1512, %v6270, %v6271
    %v6275 = vadd.f32 %v5514, %v6269
    %v6276 = vadd.f32 %v5516, %v6272
    %v6277 = vtanh.pop %v6275
    %v6278 = vtanh.pop %v6276
    %v6279 = vmul.f32 %v6277, 0.5
    %v6280 = vmul.f32 %v6278, 0.5
    %v6281 = vadd.f32 %v6279, 0.5
    %v6282 = vadd.f32 %v6280, 0.5
    %v6284 = vrot.slane %v6278, 1
    %v6286 = vmul.f32 %v6281, %v6284
    %v6288 = vrot.slane %v6281, 3
    %v6290 = vmul.f32 %v6288, %v5499
    %v6291 = vadd.f32 %v6290, %v6286
    %v6292 = vtanh.pop %v6291
    %v6294 = vrot.slane %v6281, 6
    %v6295 = vrot.slane %v6282, 6
    %v6296 = vsel %vm1512, %v6294, %v6295
    %v6298 = vmul.f32 %v6296, %v6292
    %v6300 = vperm.slane %v6298, 2
    %6302 = vst [vmem:[#allocation4 + $0x4] sm:$0x1] %v6300
    %s6303 = scalar_lea.vmem [#allocation3], 7
    %v6304 = vld [vmem:[%s6303] ss:$8 sm:$0xf]
    %v6305 = vld [vmem:[%s6303] ss:$8 sm:$0xf0]
    %v6306 = vor.u32 %v6304, %v6305
    %s6307 = scalar_lea.vmem [#allocation3], 71
    %v6308 = vld [vmem:[%s6307] ss:$8 sm:$0xf]
    %v6309 = vperm.slane %v6298, 0
    %v6310 = vperm.slane %v6298, 1
    %6313 = vmatpush.msra.mxu0 %v1073
    %6314 = vmatpush.msra.mxu0 %v1061
    %6315 = vmatpush.msra.mxu0 %v1049
    %6316 = vmatpush.msra.mxu0 %v1037
    %6317 = vmatpush.msra.mxu0 %v1025
    %6318 = vmatpush.msra.mxu0 %v1013
    %6319 = vmatpush.msra.mxu0 %v1001
    %6320 = vmatpush.msra.mxu0 %v989
    %6321 = vmatpush.msra.mxu0 %v977
    %6322 = vmatpush.msra.mxu0 %v965
    %6323 = vmatpush.msra.mxu0 %v953
    %6324 = vmatpush.msra.mxu0 %v941
    %6325 = vmatpush.msra.mxu0 %v929
    %6326 = vmatpush.msra.mxu0 %v917
    %6327 = vmatpush.msra.mxu0 %v905
    %6328 = vmatpush.msra.mxu0 %v893
    %6329 = vmatmul.f32.gmra.mxu0 %v6309
    %v6330 = vpop.f32.mrf.mxu0
    %v6331 = vadd.f32 0.0, %v6330
    %6332 = vdwg.mxu0
    %6333 = vmatpush.msra.mxu0 %v1265
    %6334 = vmatpush.msra.mxu0 %v1253
    %6335 = vmatpush.msra.mxu0 %v1241
    %6336 = vmatpush.msra.mxu0 %v1229
    %6337 = vmatpush.msra.mxu0 %v1217
    %6338 = vmatpush.msra.mxu0 %v1205
    %6339 = vmatpush.msra.mxu0 %v1193
    %6340 = vmatpush.msra.mxu0 %v1181
    %6341 = vmatpush.msra.mxu0 %v1169
    %6342 = vmatpush.msra.mxu0 %v1157
    %6343 = vmatpush.msra.mxu0 %v1145
    %6344 = vmatpush.msra.mxu0 %v1133
    %6345 = vmatpush.msra.mxu0 %v1121
    %6346 = vmatpush.msra.mxu0 %v1109
    %6347 = vmatpush.msra.mxu0 %v1097
    %6348 = vmatpush.msra.mxu0 %v1085
    %6349 = vmatmul.f32.gmra.mxu0 %v6310
    %v6350 = vpop.f32.mrf.mxu0
    %v6351 = vadd.f32 %v6331, %v6350
    %6352 = vdwg.mxu0
    %6353 = vmatpush.msra.mxu0 %v1457
    %6354 = vmatpush.msra.mxu0 %v1445
    %6355 = vmatpush.msra.mxu0 %v1433
    %6356 = vmatpush.msra.mxu0 %v1421
    %6357 = vmatpush.msra.mxu0 %v1409
    %6358 = vmatpush.msra.mxu0 %v1397
    %6359 = vmatpush.msra.mxu0 %v1385
    %6360 = vmatpush.msra.mxu0 %v1373
    %6361 = vmatpush.msra.mxu0 %v1361
    %6362 = vmatpush.msra.mxu0 %v1349
    %6363 = vmatpush.msra.mxu0 %v1337
    %6364 = vmatpush.msra.mxu0 %v1325
    %6365 = vmatpush.msra.mxu0 %v1313
    %6366 = vmatpush.msra.mxu0 %v1301
    %6367 = vmatpush.msra.mxu0 %v1289
    %6368 = vmatpush.msra.mxu0 %v1277
    %6369 = vmatmul.f32.gmra.mxu0 %v6300
    %v6370 = vpop.f32.mrf.mxu0
    %v6371 = vadd.f32 %v6351, %v6370
    %6372 = vdwg.mxu0
    %6373 = vmatpush.msra.mxu0 %v1074
    %6374 = vmatpush.msra.mxu0 %v1062
    %6375 = vmatpush.msra.mxu0 %v1050
    %6376 = vmatpush.msra.mxu0 %v1038
    %6377 = vmatpush.msra.mxu0 %v1026
    %6378 = vmatpush.msra.mxu0 %v1014
    %6379 = vmatpush.msra.mxu0 %v1002
    %6380 = vmatpush.msra.mxu0 %v990
    %6381 = vmatpush.msra.mxu0 %v978
    %6382 = vmatpush.msra.mxu0 %v966
    %6383 = vmatpush.msra.mxu0 %v954
    %6384 = vmatpush.msra.mxu0 %v942
    %6385 = vmatpush.msra.mxu0 %v930
    %6386 = vmatpush.msra.mxu0 %v918
    %6387 = vmatpush.msra.mxu0 %v906
    %6388 = vmatpush.msra.mxu0 %v894
    %6389 = vmatmul.f32.gmra.mxu0 %v6309
    %v6390 = vpop.f32.mrf.mxu0
    %v6391 = vadd.f32 0.0, %v6390
    %6392 = vdwg.mxu0
    %6393 = vmatpush.msra.mxu0 %v1266
    %6394 = vmatpush.msra.mxu0 %v1254
    %6395 = vmatpush.msra.mxu0 %v1242
    %6396 = vmatpush.msra.mxu0 %v1230
    %6397 = vmatpush.msra.mxu0 %v1218
    %6398 = vmatpush.msra.mxu0 %v1206
    %6399 = vmatpush.msra.mxu0 %v1194
    %6400 = vmatpush.msra.mxu0 %v1182
    %6401 = vmatpush.msra.mxu0 %v1170
    %6402 = vmatpush.msra.mxu0 %v1158
    %6403 = vmatpush.msra.mxu0 %v1146
    %6404 = vmatpush.msra.mxu0 %v1134
    %6405 = vmatpush.msra.mxu0 %v1122
    %6406 = vmatpush.msra.mxu0 %v1110
    %6407 = vmatpush.msra.mxu0 %v1098
    %6408 = vmatpush.msra.mxu0 %v1086
    %6409 = vmatmul.f32.gmra.mxu0 %v6310
    %v6410 = vpop.f32.mrf.mxu0
    %v6411 = vadd.f32 %v6391, %v6410
    %6412 = vdwg.mxu0
    %6413 = vmatpush.msra.mxu0 %v1458
    %6414 = vmatpush.msra.mxu0 %v1446
    %6415 = vmatpush.msra.mxu0 %v1434
    %6416 = vmatpush.msra.mxu0 %v1422
    %6417 = vmatpush.msra.mxu0 %v1410
    %6418 = vmatpush.msra.mxu0 %v1398
    %6419 = vmatpush.msra.mxu0 %v1386
    %6420 = vmatpush.msra.mxu0 %v1374
    %6421 = vmatpush.msra.mxu0 %v1362
    %6422 = vmatpush.msra.mxu0 %v1350
    %6423 = vmatpush.msra.mxu0 %v1338
    %6424 = vmatpush.msra.mxu0 %v1326
    %6425 = vmatpush.msra.mxu0 %v1314
    %6426 = vmatpush.msra.mxu0 %v1302
    %6427 = vmatpush.msra.mxu0 %v1290
    %6428 = vmatpush.msra.mxu0 %v1278
    %6429 = vmatmul.f32.gmra.mxu0 %v6300
    %v6430 = vpop.f32.mrf.mxu0
    %v6431 = vadd.f32 %v6411, %v6430
    %6432 = vdwg.mxu0
    %6433 = vmatpush.msra.mxu0 %v1075
    %6434 = vmatpush.msra.mxu0 %v1063
    %6435 = vmatpush.msra.mxu0 %v1051
    %6436 = vmatpush.msra.mxu0 %v1039
    %6437 = vmatpush.msra.mxu0 %v1027
    %6438 = vmatpush.msra.mxu0 %v1015
    %6439 = vmatpush.msra.mxu0 %v1003
    %6440 = vmatpush.msra.mxu0 %v991
    %6441 = vmatpush.msra.mxu0 %v979
    %6442 = vmatpush.msra.mxu0 %v967
    %6443 = vmatpush.msra.mxu0 %v955
    %6444 = vmatpush.msra.mxu0 %v943
    %6445 = vmatpush.msra.mxu0 %v931
    %6446 = vmatpush.msra.mxu0 %v919
    %6447 = vmatpush.msra.mxu0 %v907
    %6448 = vmatpush.msra.mxu0 %v895
    %6449 = vmatmul.f32.gmra.mxu0 %v6309
    %v6450 = vpop.f32.mrf.mxu0
    %v6451 = vadd.f32 0.0, %v6450
    %6452 = vdwg.mxu0
    %6453 = vmatpush.msra.mxu0 %v1267
    %6454 = vmatpush.msra.mxu0 %v1255
    %6455 = vmatpush.msra.mxu0 %v1243
    %6456 = vmatpush.msra.mxu0 %v1231
    %6457 = vmatpush.msra.mxu0 %v1219
    %6458 = vmatpush.msra.mxu0 %v1207
    %6459 = vmatpush.msra.mxu0 %v1195
    %6460 = vmatpush.msra.mxu0 %v1183
    %6461 = vmatpush.msra.mxu0 %v1171
    %6462 = vmatpush.msra.mxu0 %v1159
    %6463 = vmatpush.msra.mxu0 %v1147
    %6464 = vmatpush.msra.mxu0 %v1135
    %6465 = vmatpush.msra.mxu0 %v1123
    %6466 = vmatpush.msra.mxu0 %v1111
    %6467 = vmatpush.msra.mxu0 %v1099
    %6468 = vmatpush.msra.mxu0 %v1087
    %6469 = vmatmul.f32.gmra.mxu0 %v6310
    %v6470 = vpop.f32.mrf.mxu0
    %v6471 = vadd.f32 %v6451, %v6470
    %6472 = vdwg.mxu0
    %6473 = vmatpush.msra.mxu0 %v1459
    %6474 = vmatpush.msra.mxu0 %v1447
    %6475 = vmatpush.msra.mxu0 %v1435
    %6476 = vmatpush.msra.mxu0 %v1423
    %6477 = vmatpush.msra.mxu0 %v1411
    %6478 = vmatpush.msra.mxu0 %v1399
    %6479 = vmatpush.msra.mxu0 %v1387
    %6480 = vmatpush.msra.mxu0 %v1375
    %6481 = vmatpush.msra.mxu0 %v1363
    %6482 = vmatpush.msra.mxu0 %v1351
    %6483 = vmatpush.msra.mxu0 %v1339
    %6484 = vmatpush.msra.mxu0 %v1327
    %6485 = vmatpush.msra.mxu0 %v1315
    %6486 = vmatpush.msra.mxu0 %v1303
    %6487 = vmatpush.msra.mxu0 %v1291
    %6488 = vmatpush.msra.mxu0 %v1279
    %6489 = vmatmul.f32.gmra.mxu0 %v6300
    %v6490 = vpop.f32.mrf.mxu0
    %v6491 = vadd.f32 %v6471, %v6490
    %6492 = vdwg.mxu0
    %6493 = vmatpush.msra.mxu0 %v1076
    %6494 = vmatpush.msra.mxu0 %v1064
    %6495 = vmatpush.msra.mxu0 %v1052
    %6496 = vmatpush.msra.mxu0 %v1040
    %6497 = vmatpush.msra.mxu0 %v1028
    %6498 = vmatpush.msra.mxu0 %v1016
    %6499 = vmatpush.msra.mxu0 %v1004
    %6500 = vmatpush.msra.mxu0 %v992
    %6501 = vmatpush.msra.mxu0 %v980
    %6502 = vmatpush.msra.mxu0 %v968
    %6503 = vmatpush.msra.mxu0 %v956
    %6504 = vmatpush.msra.mxu0 %v944
    %6505 = vmatpush.msra.mxu0 %v932
    %6506 = vmatpush.msra.mxu0 %v920
    %6507 = vmatpush.msra.mxu0 %v908
    %6508 = vmatpush.msra.mxu0 %v896
    %6509 = vmatmul.f32.gmra.mxu0 %v6309
    %v6510 = vpop.f32.mrf.mxu0
    %v6511 = vadd.f32 0.0, %v6510
    %6512 = vdwg.mxu0
    %6513 = vmatpush.msra.mxu0 %v1268
    %6514 = vmatpush.msra.mxu0 %v1256
    %6515 = vmatpush.msra.mxu0 %v1244
    %6516 = vmatpush.msra.mxu0 %v1232
    %6517 = vmatpush.msra.mxu0 %v1220
    %6518 = vmatpush.msra.mxu0 %v1208
    %6519 = vmatpush.msra.mxu0 %v1196
    %6520 = vmatpush.msra.mxu0 %v1184
    %6521 = vmatpush.msra.mxu0 %v1172
    %6522 = vmatpush.msra.mxu0 %v1160
    %6523 = vmatpush.msra.mxu0 %v1148
    %6524 = vmatpush.msra.mxu0 %v1136
    %6525 = vmatpush.msra.mxu0 %v1124
    %6526 = vmatpush.msra.mxu0 %v1112
    %6527 = vmatpush.msra.mxu0 %v1100
    %6528 = vmatpush.msra.mxu0 %v1088
    %6529 = vmatmul.f32.gmra.mxu0 %v6310
    %v6530 = vpop.f32.mrf.mxu0
    %v6531 = vadd.f32 %v6511, %v6530
    %6532 = vdwg.mxu0
    %6533 = vmatpush.msra.mxu0 %v1460
    %6534 = vmatpush.msra.mxu0 %v1448
    %6535 = vmatpush.msra.mxu0 %v1436
    %6536 = vmatpush.msra.mxu0 %v1424
    %6537 = vmatpush.msra.mxu0 %v1412
    %6538 = vmatpush.msra.mxu0 %v1400
    %6539 = vmatpush.msra.mxu0 %v1388
    %6540 = vmatpush.msra.mxu0 %v1376
    %6541 = vmatpush.msra.mxu0 %v1364
    %6542 = vmatpush.msra.mxu0 %v1352
    %6543 = vmatpush.msra.mxu0 %v1340
    %6544 = vmatpush.msra.mxu0 %v1328
    %6545 = vmatpush.msra.mxu0 %v1316
    %6546 = vmatpush.msra.mxu0 %v1304
    %6547 = vmatpush.msra.mxu0 %v1292
    %6548 = vmatpush.msra.mxu0 %v1280
    %6549 = vmatmul.f32.gmra.mxu0 %v6300
    %v6550 = vpop.f32.mrf.mxu0
    %v6551 = vadd.f32 %v6531, %v6550
    %6552 = vdwg.mxu0
    %6553 = vmatpush.msra.mxu0 %v1077
    %6554 = vmatpush.msra.mxu0 %v1065
    %6555 = vmatpush.msra.mxu0 %v1053
    %6556 = vmatpush.msra.mxu0 %v1041
    %6557 = vmatpush.msra.mxu0 %v1029
    %6558 = vmatpush.msra.mxu0 %v1017
    %6559 = vmatpush.msra.mxu0 %v1005
    %6560 = vmatpush.msra.mxu0 %v993
    %6561 = vmatpush.msra.mxu0 %v981
    %6562 = vmatpush.msra.mxu0 %v969
    %6563 = vmatpush.msra.mxu0 %v957
    %6564 = vmatpush.msra.mxu0 %v945
    %6565 = vmatpush.msra.mxu0 %v933
    %6566 = vmatpush.msra.mxu0 %v921
    %6567 = vmatpush.msra.mxu0 %v909
    %6568 = vmatpush.msra.mxu0 %v897
    %6569 = vmatmul.f32.gmra.mxu0 %v6309
    %v6570 = vpop.f32.mrf.mxu0
    %v6571 = vadd.f32 0.0, %v6570
    %6572 = vdwg.mxu0
    %6573 = vmatpush.msra.mxu0 %v1269
    %6574 = vmatpush.msra.mxu0 %v1257
    %6575 = vmatpush.msra.mxu0 %v1245
    %6576 = vmatpush.msra.mxu0 %v1233
    %6577 = vmatpush.msra.mxu0 %v1221
    %6578 = vmatpush.msra.mxu0 %v1209
    %6579 = vmatpush.msra.mxu0 %v1197
    %6580 = vmatpush.msra.mxu0 %v1185
    %6581 = vmatpush.msra.mxu0 %v1173
    %6582 = vmatpush.msra.mxu0 %v1161
    %6583 = vmatpush.msra.mxu0 %v1149
    %6584 = vmatpush.msra.mxu0 %v1137
    %6585 = vmatpush.msra.mxu0 %v1125
    %6586 = vmatpush.msra.mxu0 %v1113
    %6587 = vmatpush.msra.mxu0 %v1101
    %6588 = vmatpush.msra.mxu0 %v1089
    %6589 = vmatmul.f32.gmra.mxu0 %v6310
    %v6590 = vpop.f32.mrf.mxu0
    %v6591 = vadd.f32 %v6571, %v6590
    %6592 = vdwg.mxu0
    %6593 = vmatpush.msra.mxu0 %v1461
    %6594 = vmatpush.msra.mxu0 %v1449
    %6595 = vmatpush.msra.mxu0 %v1437
    %6596 = vmatpush.msra.mxu0 %v1425
    %6597 = vmatpush.msra.mxu0 %v1413
    %6598 = vmatpush.msra.mxu0 %v1401
    %6599 = vmatpush.msra.mxu0 %v1389
    %6600 = vmatpush.msra.mxu0 %v1377
    %6601 = vmatpush.msra.mxu0 %v1365
    %6602 = vmatpush.msra.mxu0 %v1353
    %6603 = vmatpush.msra.mxu0 %v1341
    %6604 = vmatpush.msra.mxu0 %v1329
    %6605 = vmatpush.msra.mxu0 %v1317
    %6606 = vmatpush.msra.mxu0 %v1305
    %6607 = vmatpush.msra.mxu0 %v1293
    %6608 = vmatpush.msra.mxu0 %v1281
    %6609 = vmatmul.f32.gmra.mxu0 %v6300
    %v6610 = vpop.f32.mrf.mxu0
    %v6611 = vadd.f32 %v6591, %v6610
    %6612 = vdwg.mxu0
    %6613 = vmatpush.msra.mxu0 %v1078
    %6614 = vmatpush.msra.mxu0 %v1066
    %6615 = vmatpush.msra.mxu0 %v1054
    %6616 = vmatpush.msra.mxu0 %v1042
    %6617 = vmatpush.msra.mxu0 %v1030
    %6618 = vmatpush.msra.mxu0 %v1018
    %6619 = vmatpush.msra.mxu0 %v1006
    %6620 = vmatpush.msra.mxu0 %v994
    %6621 = vmatpush.msra.mxu0 %v982
    %6622 = vmatpush.msra.mxu0 %v970
    %6623 = vmatpush.msra.mxu0 %v958
    %6624 = vmatpush.msra.mxu0 %v946
    %6625 = vmatpush.msra.mxu0 %v934
    %6626 = vmatpush.msra.mxu0 %v922
    %6627 = vmatpush.msra.mxu0 %v910
    %6628 = vmatpush.msra.mxu0 %v898
    %6629 = vmatmul.f32.gmra.mxu0 %v6309
    %v6630 = vpop.f32.mrf.mxu0
    %v6631 = vadd.f32 0.0, %v6630
    %6632 = vdwg.mxu0
    %6633 = vmatpush.msra.mxu0 %v1270
    %6634 = vmatpush.msra.mxu0 %v1258
    %6635 = vmatpush.msra.mxu0 %v1246
    %6636 = vmatpush.msra.mxu0 %v1234
    %6637 = vmatpush.msra.mxu0 %v1222
    %6638 = vmatpush.msra.mxu0 %v1210
    %6639 = vmatpush.msra.mxu0 %v1198
    %6640 = vmatpush.msra.mxu0 %v1186
    %6641 = vmatpush.msra.mxu0 %v1174
    %6642 = vmatpush.msra.mxu0 %v1162
    %6643 = vmatpush.msra.mxu0 %v1150
    %6644 = vmatpush.msra.mxu0 %v1138
    %6645 = vmatpush.msra.mxu0 %v1126
    %6646 = vmatpush.msra.mxu0 %v1114
    %6647 = vmatpush.msra.mxu0 %v1102
    %6648 = vmatpush.msra.mxu0 %v1090
    %6649 = vmatmul.f32.gmra.mxu0 %v6310
    %v6650 = vpop.f32.mrf.mxu0
    %v6651 = vadd.f32 %v6631, %v6650
    %6652 = vdwg.mxu0
    %6653 = vmatpush.msra.mxu0 %v1462
    %6654 = vmatpush.msra.mxu0 %v1450
    %6655 = vmatpush.msra.mxu0 %v1438
    %6656 = vmatpush.msra.mxu0 %v1426
    %6657 = vmatpush.msra.mxu0 %v1414
    %6658 = vmatpush.msra.mxu0 %v1402
    %6659 = vmatpush.msra.mxu0 %v1390
    %6660 = vmatpush.msra.mxu0 %v1378
    %6661 = vmatpush.msra.mxu0 %v1366
    %6662 = vmatpush.msra.mxu0 %v1354
    %6663 = vmatpush.msra.mxu0 %v1342
    %6664 = vmatpush.msra.mxu0 %v1330
    %6665 = vmatpush.msra.mxu0 %v1318
    %6666 = vmatpush.msra.mxu0 %v1306
    %6667 = vmatpush.msra.mxu0 %v1294
    %6668 = vmatpush.msra.mxu0 %v1282
    %6669 = vmatmul.f32.gmra.mxu0 %v6300
    %v6670 = vpop.f32.mrf.mxu0
    %v6671 = vadd.f32 %v6651, %v6670
    %6672 = vdwg.mxu0
    %6673 = vmatpush.msra.mxu0 %v1079
    %6674 = vmatpush.msra.mxu0 %v1067
    %6675 = vmatpush.msra.mxu0 %v1055
    %6676 = vmatpush.msra.mxu0 %v1043
    %6677 = vmatpush.msra.mxu0 %v1031
    %6678 = vmatpush.msra.mxu0 %v1019
    %6679 = vmatpush.msra.mxu0 %v1007
    %6680 = vmatpush.msra.mxu0 %v995
    %6681 = vmatpush.msra.mxu0 %v983
    %6682 = vmatpush.msra.mxu0 %v971
    %6683 = vmatpush.msra.mxu0 %v959
    %6684 = vmatpush.msra.mxu0 %v947
    %6685 = vmatpush.msra.mxu0 %v935
    %6686 = vmatpush.msra.mxu0 %v923
    %6687 = vmatpush.msra.mxu0 %v911
    %6688 = vmatpush.msra.mxu0 %v899
    %6689 = vmatmul.f32.gmra.mxu0 %v6309
    %v6690 = vpop.f32.mrf.mxu0
    %v6691 = vadd.f32 0.0, %v6690
    %6692 = vdwg.mxu0
    %6693 = vmatpush.msra.mxu0 %v1271
    %6694 = vmatpush.msra.mxu0 %v1259
    %6695 = vmatpush.msra.mxu0 %v1247
    %6696 = vmatpush.msra.mxu0 %v1235
    %6697 = vmatpush.msra.mxu0 %v1223
    %6698 = vmatpush.msra.mxu0 %v1211
    %6699 = vmatpush.msra.mxu0 %v1199
    %6700 = vmatpush.msra.mxu0 %v1187
    %6701 = vmatpush.msra.mxu0 %v1175
    %6702 = vmatpush.msra.mxu0 %v1163
    %6703 = vmatpush.msra.mxu0 %v1151
    %6704 = vmatpush.msra.mxu0 %v1139
    %6705 = vmatpush.msra.mxu0 %v1127
    %6706 = vmatpush.msra.mxu0 %v1115
    %6707 = vmatpush.msra.mxu0 %v1103
    %6708 = vmatpush.msra.mxu0 %v1091
    %6709 = vmatmul.f32.gmra.mxu0 %v6310
    %v6710 = vpop.f32.mrf.mxu0
    %v6711 = vadd.f32 %v6691, %v6710
    %6712 = vdwg.mxu0
    %6713 = vmatpush.msra.mxu0 %v1463
    %6714 = vmatpush.msra.mxu0 %v1451
    %6715 = vmatpush.msra.mxu0 %v1439
    %6716 = vmatpush.msra.mxu0 %v1427
    %6717 = vmatpush.msra.mxu0 %v1415
    %6718 = vmatpush.msra.mxu0 %v1403
    %6719 = vmatpush.msra.mxu0 %v1391
    %6720 = vmatpush.msra.mxu0 %v1379
    %6721 = vmatpush.msra.mxu0 %v1367
    %6722 = vmatpush.msra.mxu0 %v1355
    %6723 = vmatpush.msra.mxu0 %v1343
    %6724 = vmatpush.msra.mxu0 %v1331
    %6725 = vmatpush.msra.mxu0 %v1319
    %6726 = vmatpush.msra.mxu0 %v1307
    %6727 = vmatpush.msra.mxu0 %v1295
    %6728 = vmatpush.msra.mxu0 %v1283
    %6729 = vmatmul.f32.gmra.mxu0 %v6300
    %v6730 = vpop.f32.mrf.mxu0
    %v6731 = vadd.f32 %v6711, %v6730
    %6732 = vdwg.mxu0
    %6733 = vmatpush.msra.mxu0 %v1080
    %6734 = vmatpush.msra.mxu0 %v1068
    %6735 = vmatpush.msra.mxu0 %v1056
    %6736 = vmatpush.msra.mxu0 %v1044
    %6737 = vmatpush.msra.mxu0 %v1032
    %6738 = vmatpush.msra.mxu0 %v1020
    %6739 = vmatpush.msra.mxu0 %v1008
    %6740 = vmatpush.msra.mxu0 %v996
    %6741 = vmatpush.msra.mxu0 %v984
    %6742 = vmatpush.msra.mxu0 %v972
    %6743 = vmatpush.msra.mxu0 %v960
    %6744 = vmatpush.msra.mxu0 %v948
    %6745 = vmatpush.msra.mxu0 %v936
    %6746 = vmatpush.msra.mxu0 %v924
    %6747 = vmatpush.msra.mxu0 %v912
    %6748 = vmatpush.msra.mxu0 %v900
    %6749 = vmatmul.f32.gmra.mxu0 %v6309
    %v6750 = vpop.f32.mrf.mxu0
    %v6751 = vadd.f32 0.0, %v6750
    %6752 = vdwg.mxu0
    %6753 = vmatpush.msra.mxu0 %v1272
    %6754 = vmatpush.msra.mxu0 %v1260
    %6755 = vmatpush.msra.mxu0 %v1248
    %6756 = vmatpush.msra.mxu0 %v1236
    %6757 = vmatpush.msra.mxu0 %v1224
    %6758 = vmatpush.msra.mxu0 %v1212
    %6759 = vmatpush.msra.mxu0 %v1200
    %6760 = vmatpush.msra.mxu0 %v1188
    %6761 = vmatpush.msra.mxu0 %v1176
    %6762 = vmatpush.msra.mxu0 %v1164
    %6763 = vmatpush.msra.mxu0 %v1152
    %6764 = vmatpush.msra.mxu0 %v1140
    %6765 = vmatpush.msra.mxu0 %v1128
    %6766 = vmatpush.msra.mxu0 %v1116
    %6767 = vmatpush.msra.mxu0 %v1104
    %6768 = vmatpush.msra.mxu0 %v1092
    %6769 = vmatmul.f32.gmra.mxu0 %v6310
    %v6770 = vpop.f32.mrf.mxu0
    %v6771 = vadd.f32 %v6751, %v6770
    %6772 = vdwg.mxu0
    %6773 = vmatpush.msra.mxu0 %v1464
    %6774 = vmatpush.msra.mxu0 %v1452
    %6775 = vmatpush.msra.mxu0 %v1440
    %6776 = vmatpush.msra.mxu0 %v1428
    %6777 = vmatpush.msra.mxu0 %v1416
    %6778 = vmatpush.msra.mxu0 %v1404
    %6779 = vmatpush.msra.mxu0 %v1392
    %6780 = vmatpush.msra.mxu0 %v1380
    %6781 = vmatpush.msra.mxu0 %v1368
    %6782 = vmatpush.msra.mxu0 %v1356
    %6783 = vmatpush.msra.mxu0 %v1344
    %6784 = vmatpush.msra.mxu0 %v1332
    %6785 = vmatpush.msra.mxu0 %v1320
    %6786 = vmatpush.msra.mxu0 %v1308
    %6787 = vmatpush.msra.mxu0 %v1296
    %6788 = vmatpush.msra.mxu0 %v1284
    %6789 = vmatmul.f32.gmra.mxu0 %v6300
    %v6790 = vpop.f32.mrf.mxu0
    %v6791 = vadd.f32 %v6771, %v6790
    %6792 = vdwg.mxu0
    %6793 = vmatpush.msra.mxu0 %v1081
    %6794 = vmatpush.msra.mxu0 %v1069
    %6795 = vmatpush.msra.mxu0 %v1057
    %6796 = vmatpush.msra.mxu0 %v1045
    %6797 = vmatpush.msra.mxu0 %v1033
    %6798 = vmatpush.msra.mxu0 %v1021
    %6799 = vmatpush.msra.mxu0 %v1009
    %6800 = vmatpush.msra.mxu0 %v997
    %6801 = vmatpush.msra.mxu0 %v985
    %6802 = vmatpush.msra.mxu0 %v973
    %6803 = vmatpush.msra.mxu0 %v961
    %6804 = vmatpush.msra.mxu0 %v949
    %6805 = vmatpush.msra.mxu0 %v937
    %6806 = vmatpush.msra.mxu0 %v925
    %6807 = vmatpush.msra.mxu0 %v913
    %6808 = vmatpush.msra.mxu0 %v901
    %6809 = vmatmul.f32.gmra.mxu0 %v6309
    %v6810 = vpop.f32.mrf.mxu0
    %v6811 = vadd.f32 0.0, %v6810
    %6812 = vdwg.mxu0
    %6813 = vmatpush.msra.mxu0 %v1273
    %6814 = vmatpush.msra.mxu0 %v1261
    %6815 = vmatpush.msra.mxu0 %v1249
    %6816 = vmatpush.msra.mxu0 %v1237
    %6817 = vmatpush.msra.mxu0 %v1225
    %6818 = vmatpush.msra.mxu0 %v1213
    %6819 = vmatpush.msra.mxu0 %v1201
    %6820 = vmatpush.msra.mxu0 %v1189
    %6821 = vmatpush.msra.mxu0 %v1177
    %6822 = vmatpush.msra.mxu0 %v1165
    %6823 = vmatpush.msra.mxu0 %v1153
    %6824 = vmatpush.msra.mxu0 %v1141
    %6825 = vmatpush.msra.mxu0 %v1129
    %6826 = vmatpush.msra.mxu0 %v1117
    %6827 = vmatpush.msra.mxu0 %v1105
    %6828 = vmatpush.msra.mxu0 %v1093
    %6829 = vmatmul.f32.gmra.mxu0 %v6310
    %v6830 = vpop.f32.mrf.mxu0
    %v6831 = vadd.f32 %v6811, %v6830
    %6832 = vdwg.mxu0
    %6833 = vmatpush.msra.mxu0 %v1465
    %6834 = vmatpush.msra.mxu0 %v1453
    %6835 = vmatpush.msra.mxu0 %v1441
    %6836 = vmatpush.msra.mxu0 %v1429
    %6837 = vmatpush.msra.mxu0 %v1417
    %6838 = vmatpush.msra.mxu0 %v1405
    %6839 = vmatpush.msra.mxu0 %v1393
    %6840 = vmatpush.msra.mxu0 %v1381
    %6841 = vmatpush.msra.mxu0 %v1369
    %6842 = vmatpush.msra.mxu0 %v1357
    %6843 = vmatpush.msra.mxu0 %v1345
    %6844 = vmatpush.msra.mxu0 %v1333
    %6845 = vmatpush.msra.mxu0 %v1321
    %6846 = vmatpush.msra.mxu0 %v1309
    %6847 = vmatpush.msra.mxu0 %v1297
    %6848 = vmatpush.msra.mxu0 %v1285
    %6849 = vmatmul.f32.gmra.mxu0 %v6300
    %v6850 = vpop.f32.mrf.mxu0
    %v6851 = vadd.f32 %v6831, %v6850
    %6852 = vdwg.mxu0
    %6853 = vmatpush.msra.mxu0 %v1082
    %6854 = vmatpush.msra.mxu0 %v1070
    %6855 = vmatpush.msra.mxu0 %v1058
    %6856 = vmatpush.msra.mxu0 %v1046
    %6857 = vmatpush.msra.mxu0 %v1034
    %6858 = vmatpush.msra.mxu0 %v1022
    %6859 = vmatpush.msra.mxu0 %v1010
    %6860 = vmatpush.msra.mxu0 %v998
    %6861 = vmatpush.msra.mxu0 %v986
    %6862 = vmatpush.msra.mxu0 %v974
    %6863 = vmatpush.msra.mxu0 %v962
    %6864 = vmatpush.msra.mxu0 %v950
    %6865 = vmatpush.msra.mxu0 %v938
    %6866 = vmatpush.msra.mxu0 %v926
    %6867 = vmatpush.msra.mxu0 %v914
    %6868 = vmatpush.msra.mxu0 %v902
    %6869 = vmatmul.f32.gmra.mxu0 %v6309
    %v6870 = vpop.f32.mrf.mxu0
    %v6871 = vadd.f32 0.0, %v6870
    %6872 = vdwg.mxu0
    %6873 = vmatpush.msra.mxu0 %v1274
    %6874 = vmatpush.msra.mxu0 %v1262
    %6875 = vmatpush.msra.mxu0 %v1250
    %6876 = vmatpush.msra.mxu0 %v1238
    %6877 = vmatpush.msra.mxu0 %v1226
    %6878 = vmatpush.msra.mxu0 %v1214
    %6879 = vmatpush.msra.mxu0 %v1202
    %6880 = vmatpush.msra.mxu0 %v1190
    %6881 = vmatpush.msra.mxu0 %v1178
    %6882 = vmatpush.msra.mxu0 %v1166
    %6883 = vmatpush.msra.mxu0 %v1154
    %6884 = vmatpush.msra.mxu0 %v1142
    %6885 = vmatpush.msra.mxu0 %v1130
    %6886 = vmatpush.msra.mxu0 %v1118
    %6887 = vmatpush.msra.mxu0 %v1106
    %6888 = vmatpush.msra.mxu0 %v1094
    %6889 = vmatmul.f32.gmra.mxu0 %v6310
    %v6890 = vpop.f32.mrf.mxu0
    %v6891 = vadd.f32 %v6871, %v6890
    %6892 = vdwg.mxu0
    %6893 = vmatpush.msra.mxu0 %v1466
    %6894 = vmatpush.msra.mxu0 %v1454
    %6895 = vmatpush.msra.mxu0 %v1442
    %6896 = vmatpush.msra.mxu0 %v1430
    %6897 = vmatpush.msra.mxu0 %v1418
    %6898 = vmatpush.msra.mxu0 %v1406
    %6899 = vmatpush.msra.mxu0 %v1394
    %6900 = vmatpush.msra.mxu0 %v1382
    %6901 = vmatpush.msra.mxu0 %v1370
    %6902 = vmatpush.msra.mxu0 %v1358
    %6903 = vmatpush.msra.mxu0 %v1346
    %6904 = vmatpush.msra.mxu0 %v1334
    %6905 = vmatpush.msra.mxu0 %v1322
    %6906 = vmatpush.msra.mxu0 %v1310
    %6907 = vmatpush.msra.mxu0 %v1298
    %6908 = vmatpush.msra.mxu0 %v1286
    %6909 = vmatmul.f32.gmra.mxu0 %v6300
    %v6910 = vpop.f32.mrf.mxu0
    %v6911 = vadd.f32 %v6891, %v6910
    %6912 = vdwg.mxu0
    %6913 = vmatpush.msra.mxu0 %v1083
    %6914 = vmatpush.msra.mxu0 %v1071
    %6915 = vmatpush.msra.mxu0 %v1059
    %6916 = vmatpush.msra.mxu0 %v1047
    %6917 = vmatpush.msra.mxu0 %v1035
    %6918 = vmatpush.msra.mxu0 %v1023
    %6919 = vmatpush.msra.mxu0 %v1011
    %6920 = vmatpush.msra.mxu0 %v999
    %6921 = vmatpush.msra.mxu0 %v987
    %6922 = vmatpush.msra.mxu0 %v975
    %6923 = vmatpush.msra.mxu0 %v963
    %6924 = vmatpush.msra.mxu0 %v951
    %6925 = vmatpush.msra.mxu0 %v939
    %6926 = vmatpush.msra.mxu0 %v927
    %6927 = vmatpush.msra.mxu0 %v915
    %6928 = vmatpush.msra.mxu0 %v903
    %6929 = vmatmul.f32.gmra.mxu0 %v6309
    %v6930 = vpop.f32.mrf.mxu0
    %v6931 = vadd.f32 0.0, %v6930
    %6932 = vdwg.mxu0
    %6933 = vmatpush.msra.mxu0 %v1275
    %6934 = vmatpush.msra.mxu0 %v1263
    %6935 = vmatpush.msra.mxu0 %v1251
    %6936 = vmatpush.msra.mxu0 %v1239
    %6937 = vmatpush.msra.mxu0 %v1227
    %6938 = vmatpush.msra.mxu0 %v1215
    %6939 = vmatpush.msra.mxu0 %v1203
    %6940 = vmatpush.msra.mxu0 %v1191
    %6941 = vmatpush.msra.mxu0 %v1179
    %6942 = vmatpush.msra.mxu0 %v1167
    %6943 = vmatpush.msra.mxu0 %v1155
    %6944 = vmatpush.msra.mxu0 %v1143
    %6945 = vmatpush.msra.mxu0 %v1131
    %6946 = vmatpush.msra.mxu0 %v1119
    %6947 = vmatpush.msra.mxu0 %v1107
    %6948 = vmatpush.msra.mxu0 %v1095
    %6949 = vmatmul.f32.gmra.mxu0 %v6310
    %v6950 = vpop.f32.mrf.mxu0
    %v6951 = vadd.f32 %v6931, %v6950
    %6952 = vdwg.mxu0
    %6953 = vmatpush.msra.mxu0 %v1467
    %6954 = vmatpush.msra.mxu0 %v1455
    %6955 = vmatpush.msra.mxu0 %v1443
    %6956 = vmatpush.msra.mxu0 %v1431
    %6957 = vmatpush.msra.mxu0 %v1419
    %6958 = vmatpush.msra.mxu0 %v1407
    %6959 = vmatpush.msra.mxu0 %v1395
    %6960 = vmatpush.msra.mxu0 %v1383
    %6961 = vmatpush.msra.mxu0 %v1371
    %6962 = vmatpush.msra.mxu0 %v1359
    %6963 = vmatpush.msra.mxu0 %v1347
    %6964 = vmatpush.msra.mxu0 %v1335
    %6965 = vmatpush.msra.mxu0 %v1323
    %6966 = vmatpush.msra.mxu0 %v1311
    %6967 = vmatpush.msra.mxu0 %v1299
    %6968 = vmatpush.msra.mxu0 %v1287
    %6969 = vmatmul.f32.gmra.mxu0 %v6300
    %v6970 = vpop.f32.mrf.mxu0
    %v6971 = vadd.f32 %v6951, %v6970
    %6972 = vdwg.mxu0
    %6973 = vmatpush.msra.mxu0 %v1084
    %6974 = vmatpush.msra.mxu0 %v1072
    %6975 = vmatpush.msra.mxu0 %v1060
    %6976 = vmatpush.msra.mxu0 %v1048
    %6977 = vmatpush.msra.mxu0 %v1036
    %6978 = vmatpush.msra.mxu0 %v1024
    %6979 = vmatpush.msra.mxu0 %v1012
    %6980 = vmatpush.msra.mxu0 %v1000
    %6981 = vmatpush.msra.mxu0 %v988
    %6982 = vmatpush.msra.mxu0 %v976
    %6983 = vmatpush.msra.mxu0 %v964
    %6984 = vmatpush.msra.mxu0 %v952
    %6985 = vmatpush.msra.mxu0 %v940
    %6986 = vmatpush.msra.mxu0 %v928
    %6987 = vmatpush.msra.mxu0 %v916
    %6988 = vmatpush.msra.mxu0 %v904
    %6989 = vmatmul.f32.gmra.mxu0 %v6309
    %v6990 = vpop.f32.mrf.mxu0
    %v6991 = vadd.f32 0.0, %v6990
    %6992 = vdwg.mxu0
    %6993 = vmatpush.msra.mxu0 %v1276
    %6994 = vmatpush.msra.mxu0 %v1264
    %6995 = vmatpush.msra.mxu0 %v1252
    %6996 = vmatpush.msra.mxu0 %v1240
    %6997 = vmatpush.msra.mxu0 %v1228
    %6998 = vmatpush.msra.mxu0 %v1216
    %6999 = vmatpush.msra.mxu0 %v1204
    %7000 = vmatpush.msra.mxu0 %v1192
    %7001 = vmatpush.msra.mxu0 %v1180
    %7002 = vmatpush.msra.mxu0 %v1168
    %7003 = vmatpush.msra.mxu0 %v1156
    %7004 = vmatpush.msra.mxu0 %v1144
    %7005 = vmatpush.msra.mxu0 %v1132
    %7006 = vmatpush.msra.mxu0 %v1120
    %7007 = vmatpush.msra.mxu0 %v1108
    %7008 = vmatpush.msra.mxu0 %v1096
    %7009 = vmatmul.f32.gmra.mxu0 %v6310
    %v7010 = vpop.f32.mrf.mxu0
    %v7011 = vadd.f32 %v6991, %v7010
    %7012 = vdwg.mxu0
    %7013 = vmatpush.msra.mxu0 %v1468
    %7014 = vmatpush.msra.mxu0 %v1456
    %7015 = vmatpush.msra.mxu0 %v1444
    %7016 = vmatpush.msra.mxu0 %v1432
    %7017 = vmatpush.msra.mxu0 %v1420
    %7018 = vmatpush.msra.mxu0 %v1408
    %7019 = vmatpush.msra.mxu0 %v1396
    %7020 = vmatpush.msra.mxu0 %v1384
    %7021 = vmatpush.msra.mxu0 %v1372
    %7022 = vmatpush.msra.mxu0 %v1360
    %7023 = vmatpush.msra.mxu0 %v1348
    %7024 = vmatpush.msra.mxu0 %v1336
    %7025 = vmatpush.msra.mxu0 %v1324
    %7026 = vmatpush.msra.mxu0 %v1312
    %7027 = vmatpush.msra.mxu0 %v1300
    %7028 = vmatpush.msra.mxu0 %v1288
    %7029 = vmatmul.f32.gmra.mxu0 %v6300
    %v7030 = vpop.f32.mrf.mxu0
    %v7031 = vadd.f32 %v7011, %v7030
    %7032 = vdwg.mxu0
    %v7045 = vrot.slane %v6431, 7
    %v7046 = vrot.slane %v6491, 6
    %v7047 = vrot.slane %v6551, 5
    %v7048 = vrot.slane %v6611, 4
    %v7049 = vrot.slane %v6671, 3
    %v7050 = vrot.slane %v6731, 2
    %v7051 = vrot.slane %v6791, 1
    %v7052 = vrot.slane %v6911, 7
    %v7053 = vrot.slane %v6971, 6
    %v7054 = vrot.slane %v7031, 5
    %v7055 = vsel %vm1510, %v6371, %v7045
    %v7056 = vsel %vm2279, %v7046, %v7047
    %v7057 = vsel %vm1512, %v7055, %v7056
    %v7058 = vsel %vm2282, %v7048, %v7049
    %v7059 = vsel %vm2284, %v7050, %v7051
    %v7060 = vsel %vm2286, %v7058, %v7059
    %v7061 = vsel %vm2288, %v7057, %v7060
    %v7062 = vsel %vm1510, %v6851, %v7052
    %v7063 = vsel %vm2279, %v7053, %v7054
    %v7064 = vsel %vm1512, %v7062, %v7063
    %v7067 = vadd.f32 %v6306, %v7061
    %v7068 = vadd.f32 %v6308, %v7064
    %v7069 = vtanh.pop %v7067
    %v7070 = vtanh.pop %v7068
    %v7071 = vmul.f32 %v7069, 0.5
    %v7072 = vmul.f32 %v7070, 0.5
    %v7073 = vadd.f32 %v7071, 0.5
    %v7074 = vadd.f32 %v7072, 0.5
    %v7076 = vrot.slane %v7070, 1
    %v7078 = vmul.f32 %v7073, %v7076
    %v7080 = vrot.slane %v7073, 3
    %v7082 = vmul.f32 %v7080, %v6291
    %v7083 = vadd.f32 %v7082, %v7078
    %v7084 = vtanh.pop %v7083
    %v7086 = vrot.slane %v7073, 6
    %v7087 = vrot.slane %v7074, 6
    %v7088 = vsel %vm1512, %v7086, %v7087
    %v7090 = vmul.f32 %v7088, %v7084
    %v7092 = vperm.slane %v7090, 2
    %7094 = vst [vmem:[#allocation4 + $0x5] sm:$0x1] %v7092
    %v7095 = vld [vmem:[%s3] sm:$0xff]
    %v7096 = vld [vmem:[%s3 + $0x8] sm:$0xf]
    %v7097 = vperm.slane %v7090, 0
    %v7098 = vperm.slane %v7090, 1
    %7101 = vmatpush.msra.mxu0 %v1073
    %7102 = vmatpush.msra.mxu0 %v1061
    %7103 = vmatpush.msra.mxu0 %v1049
    %7104 = vmatpush.msra.mxu0 %v1037
    %7105 = vmatpush.msra.mxu0 %v1025
    %7106 = vmatpush.msra.mxu0 %v1013
    %7107 = vmatpush.msra.mxu0 %v1001
    %7108 = vmatpush.msra.mxu0 %v989
    %7109 = vmatpush.msra.mxu0 %v977
    %7110 = vmatpush.msra.mxu0 %v965
    %7111 = vmatpush.msra.mxu0 %v953
    %7112 = vmatpush.msra.mxu0 %v941
    %7113 = vmatpush.msra.mxu0 %v929
    %7114 = vmatpush.msra.mxu0 %v917
    %7115 = vmatpush.msra.mxu0 %v905
    %7116 = vmatpush.msra.mxu0 %v893
    %7117 = vmatmul.f32.gmra.mxu0 %v7097
    %v7118 = vpop.f32.mrf.mxu0
    %v7119 = vadd.f32 0.0, %v7118
    %7120 = vdwg.mxu0
    %7121 = vmatpush.msra.mxu0 %v1265
    %7122 = vmatpush.msra.mxu0 %v1253
    %7123 = vmatpush.msra.mxu0 %v1241
    %7124 = vmatpush.msra.mxu0 %v1229
    %7125 = vmatpush.msra.mxu0 %v1217
    %7126 = vmatpush.msra.mxu0 %v1205
    %7127 = vmatpush.msra.mxu0 %v1193
    %7128 = vmatpush.msra.mxu0 %v1181
    %7129 = vmatpush.msra.mxu0 %v1169
    %7130 = vmatpush.msra.mxu0 %v1157
    %7131 = vmatpush.msra.mxu0 %v1145
    %7132 = vmatpush.msra.mxu0 %v1133
    %7133 = vmatpush.msra.mxu0 %v1121
    %7134 = vmatpush.msra.mxu0 %v1109
    %7135 = vmatpush.msra.mxu0 %v1097
    %7136 = vmatpush.msra.mxu0 %v1085
    %7137 = vmatmul.f32.gmra.mxu0 %v7098
    %v7138 = vpop.f32.mrf.mxu0
    %v7139 = vadd.f32 %v7119, %v7138
    %7140 = vdwg.mxu0
    %7141 = vmatpush.msra.mxu0 %v1457
    %7142 = vmatpush.msra.mxu0 %v1445
    %7143 = vmatpush.msra.mxu0 %v1433
    %7144 = vmatpush.msra.mxu0 %v1421
    %7145 = vmatpush.msra.mxu0 %v1409
    %7146 = vmatpush.msra.mxu0 %v1397
    %7147 = vmatpush.msra.mxu0 %v1385
    %7148 = vmatpush.msra.mxu0 %v1373
    %7149 = vmatpush.msra.mxu0 %v1361
    %7150 = vmatpush.msra.mxu0 %v1349
    %7151 = vmatpush.msra.mxu0 %v1337
    %7152 = vmatpush.msra.mxu0 %v1325
    %7153 = vmatpush.msra.mxu0 %v1313
    %7154 = vmatpush.msra.mxu0 %v1301
    %7155 = vmatpush.msra.mxu0 %v1289
    %7156 = vmatpush.msra.mxu0 %v1277
    %7157 = vmatmul.f32.gmra.mxu0 %v7092
    %v7158 = vpop.f32.mrf.mxu0
    %v7159 = vadd.f32 %v7139, %v7158
    %7160 = vdwg.mxu0
    %7161 = vmatpush.msra.mxu0 %v1074
    %7162 = vmatpush.msra.mxu0 %v1062
    %7163 = vmatpush.msra.mxu0 %v1050
    %7164 = vmatpush.msra.mxu0 %v1038
    %7165 = vmatpush.msra.mxu0 %v1026
    %7166 = vmatpush.msra.mxu0 %v1014
    %7167 = vmatpush.msra.mxu0 %v1002
    %7168 = vmatpush.msra.mxu0 %v990
    %7169 = vmatpush.msra.mxu0 %v978
    %7170 = vmatpush.msra.mxu0 %v966
    %7171 = vmatpush.msra.mxu0 %v954
    %7172 = vmatpush.msra.mxu0 %v942
    %7173 = vmatpush.msra.mxu0 %v930
    %7174 = vmatpush.msra.mxu0 %v918
    %7175 = vmatpush.msra.mxu0 %v906
    %7176 = vmatpush.msra.mxu0 %v894
    %7177 = vmatmul.f32.gmra.mxu0 %v7097
    %v7178 = vpop.f32.mrf.mxu0
    %v7179 = vadd.f32 0.0, %v7178
    %7180 = vdwg.mxu0
    %7181 = vmatpush.msra.mxu0 %v1266
    %7182 = vmatpush.msra.mxu0 %v1254
    %7183 = vmatpush.msra.mxu0 %v1242
    %7184 = vmatpush.msra.mxu0 %v1230
    %7185 = vmatpush.msra.mxu0 %v1218
    %7186 = vmatpush.msra.mxu0 %v1206
    %7187 = vmatpush.msra.mxu0 %v1194
    %7188 = vmatpush.msra.mxu0 %v1182
    %7189 = vmatpush.msra.mxu0 %v1170
    %7190 = vmatpush.msra.mxu0 %v1158
    %7191 = vmatpush.msra.mxu0 %v1146
    %7192 = vmatpush.msra.mxu0 %v1134
    %7193 = vmatpush.msra.mxu0 %v1122
    %7194 = vmatpush.msra.mxu0 %v1110
    %7195 = vmatpush.msra.mxu0 %v1098
    %7196 = vmatpush.msra.mxu0 %v1086
    %7197 = vmatmul.f32.gmra.mxu0 %v7098
    %v7198 = vpop.f32.mrf.mxu0
    %v7199 = vadd.f32 %v7179, %v7198
    %7200 = vdwg.mxu0
    %7201 = vmatpush.msra.mxu0 %v1458
    %7202 = vmatpush.msra.mxu0 %v1446
    %7203 = vmatpush.msra.mxu0 %v1434
    %7204 = vmatpush.msra.mxu0 %v1422
    %7205 = vmatpush.msra.mxu0 %v1410
    %7206 = vmatpush.msra.mxu0 %v1398
    %7207 = vmatpush.msra.mxu0 %v1386
    %7208 = vmatpush.msra.mxu0 %v1374
    %7209 = vmatpush.msra.mxu0 %v1362
    %7210 = vmatpush.msra.mxu0 %v1350
    %7211 = vmatpush.msra.mxu0 %v1338
    %7212 = vmatpush.msra.mxu0 %v1326
    %7213 = vmatpush.msra.mxu0 %v1314
    %7214 = vmatpush.msra.mxu0 %v1302
    %7215 = vmatpush.msra.mxu0 %v1290
    %7216 = vmatpush.msra.mxu0 %v1278
    %7217 = vmatmul.f32.gmra.mxu0 %v7092
    %v7218 = vpop.f32.mrf.mxu0
    %v7219 = vadd.f32 %v7199, %v7218
    %7220 = vdwg.mxu0
    %7221 = vmatpush.msra.mxu0 %v1075
    %7222 = vmatpush.msra.mxu0 %v1063
    %7223 = vmatpush.msra.mxu0 %v1051
    %7224 = vmatpush.msra.mxu0 %v1039
    %7225 = vmatpush.msra.mxu0 %v1027
    %7226 = vmatpush.msra.mxu0 %v1015
    %7227 = vmatpush.msra.mxu0 %v1003
    %7228 = vmatpush.msra.mxu0 %v991
    %7229 = vmatpush.msra.mxu0 %v979
    %7230 = vmatpush.msra.mxu0 %v967
    %7231 = vmatpush.msra.mxu0 %v955
    %7232 = vmatpush.msra.mxu0 %v943
    %7233 = vmatpush.msra.mxu0 %v931
    %7234 = vmatpush.msra.mxu0 %v919
    %7235 = vmatpush.msra.mxu0 %v907
    %7236 = vmatpush.msra.mxu0 %v895
    %7237 = vmatmul.f32.gmra.mxu0 %v7097
    %v7238 = vpop.f32.mrf.mxu0
    %v7239 = vadd.f32 0.0, %v7238
    %7240 = vdwg.mxu0
    %7241 = vmatpush.msra.mxu0 %v1267
    %7242 = vmatpush.msra.mxu0 %v1255
    %7243 = vmatpush.msra.mxu0 %v1243
    %7244 = vmatpush.msra.mxu0 %v1231
    %7245 = vmatpush.msra.mxu0 %v1219
    %7246 = vmatpush.msra.mxu0 %v1207
    %7247 = vmatpush.msra.mxu0 %v1195
    %7248 = vmatpush.msra.mxu0 %v1183
    %7249 = vmatpush.msra.mxu0 %v1171
    %7250 = vmatpush.msra.mxu0 %v1159
    %7251 = vmatpush.msra.mxu0 %v1147
    %7252 = vmatpush.msra.mxu0 %v1135
    %7253 = vmatpush.msra.mxu0 %v1123
    %7254 = vmatpush.msra.mxu0 %v1111
    %7255 = vmatpush.msra.mxu0 %v1099
    %7256 = vmatpush.msra.mxu0 %v1087
    %7257 = vmatmul.f32.gmra.mxu0 %v7098
    %v7258 = vpop.f32.mrf.mxu0
    %v7259 = vadd.f32 %v7239, %v7258
    %7260 = vdwg.mxu0
    %7261 = vmatpush.msra.mxu0 %v1459
    %7262 = vmatpush.msra.mxu0 %v1447
    %7263 = vmatpush.msra.mxu0 %v1435
    %7264 = vmatpush.msra.mxu0 %v1423
    %7265 = vmatpush.msra.mxu0 %v1411
    %7266 = vmatpush.msra.mxu0 %v1399
    %7267 = vmatpush.msra.mxu0 %v1387
    %7268 = vmatpush.msra.mxu0 %v1375
    %7269 = vmatpush.msra.mxu0 %v1363
    %7270 = vmatpush.msra.mxu0 %v1351
    %7271 = vmatpush.msra.mxu0 %v1339
    %7272 = vmatpush.msra.mxu0 %v1327
    %7273 = vmatpush.msra.mxu0 %v1315
    %7274 = vmatpush.msra.mxu0 %v1303
    %7275 = vmatpush.msra.mxu0 %v1291
    %7276 = vmatpush.msra.mxu0 %v1279
    %7277 = vmatmul.f32.gmra.mxu0 %v7092
    %v7278 = vpop.f32.mrf.mxu0
    %v7279 = vadd.f32 %v7259, %v7278
    %7280 = vdwg.mxu0
    %7281 = vmatpush.msra.mxu0 %v1076
    %7282 = vmatpush.msra.mxu0 %v1064
    %7283 = vmatpush.msra.mxu0 %v1052
    %7284 = vmatpush.msra.mxu0 %v1040
    %7285 = vmatpush.msra.mxu0 %v1028
    %7286 = vmatpush.msra.mxu0 %v1016
    %7287 = vmatpush.msra.mxu0 %v1004
    %7288 = vmatpush.msra.mxu0 %v992
    %7289 = vmatpush.msra.mxu0 %v980
    %7290 = vmatpush.msra.mxu0 %v968
    %7291 = vmatpush.msra.mxu0 %v956
    %7292 = vmatpush.msra.mxu0 %v944
    %7293 = vmatpush.msra.mxu0 %v932
    %7294 = vmatpush.msra.mxu0 %v920
    %7295 = vmatpush.msra.mxu0 %v908
    %7296 = vmatpush.msra.mxu0 %v896
    %7297 = vmatmul.f32.gmra.mxu0 %v7097
    %v7298 = vpop.f32.mrf.mxu0
    %v7299 = vadd.f32 0.0, %v7298
    %7300 = vdwg.mxu0
    %7301 = vmatpush.msra.mxu0 %v1268
    %7302 = vmatpush.msra.mxu0 %v1256
    %7303 = vmatpush.msra.mxu0 %v1244
    %7304 = vmatpush.msra.mxu0 %v1232
    %7305 = vmatpush.msra.mxu0 %v1220
    %7306 = vmatpush.msra.mxu0 %v1208
    %7307 = vmatpush.msra.mxu0 %v1196
    %7308 = vmatpush.msra.mxu0 %v1184
    %7309 = vmatpush.msra.mxu0 %v1172
    %7310 = vmatpush.msra.mxu0 %v1160
    %7311 = vmatpush.msra.mxu0 %v1148
    %7312 = vmatpush.msra.mxu0 %v1136
    %7313 = vmatpush.msra.mxu0 %v1124
    %7314 = vmatpush.msra.mxu0 %v1112
    %7315 = vmatpush.msra.mxu0 %v1100
    %7316 = vmatpush.msra.mxu0 %v1088
    %7317 = vmatmul.f32.gmra.mxu0 %v7098
    %v7318 = vpop.f32.mrf.mxu0
    %v7319 = vadd.f32 %v7299, %v7318
    %7320 = vdwg.mxu0
    %7321 = vmatpush.msra.mxu0 %v1460
    %7322 = vmatpush.msra.mxu0 %v1448
    %7323 = vmatpush.msra.mxu0 %v1436
    %7324 = vmatpush.msra.mxu0 %v1424
    %7325 = vmatpush.msra.mxu0 %v1412
    %7326 = vmatpush.msra.mxu0 %v1400
    %7327 = vmatpush.msra.mxu0 %v1388
    %7328 = vmatpush.msra.mxu0 %v1376
    %7329 = vmatpush.msra.mxu0 %v1364
    %7330 = vmatpush.msra.mxu0 %v1352
    %7331 = vmatpush.msra.mxu0 %v1340
    %7332 = vmatpush.msra.mxu0 %v1328
    %7333 = vmatpush.msra.mxu0 %v1316
    %7334 = vmatpush.msra.mxu0 %v1304
    %7335 = vmatpush.msra.mxu0 %v1292
    %7336 = vmatpush.msra.mxu0 %v1280
    %7337 = vmatmul.f32.gmra.mxu0 %v7092
    %v7338 = vpop.f32.mrf.mxu0
    %v7339 = vadd.f32 %v7319, %v7338
    %7340 = vdwg.mxu0
    %7341 = vmatpush.msra.mxu0 %v1077
    %7342 = vmatpush.msra.mxu0 %v1065
    %7343 = vmatpush.msra.mxu0 %v1053
    %7344 = vmatpush.msra.mxu0 %v1041
    %7345 = vmatpush.msra.mxu0 %v1029
    %7346 = vmatpush.msra.mxu0 %v1017
    %7347 = vmatpush.msra.mxu0 %v1005
    %7348 = vmatpush.msra.mxu0 %v993
    %7349 = vmatpush.msra.mxu0 %v981
    %7350 = vmatpush.msra.mxu0 %v969
    %7351 = vmatpush.msra.mxu0 %v957
    %7352 = vmatpush.msra.mxu0 %v945
    %7353 = vmatpush.msra.mxu0 %v933
    %7354 = vmatpush.msra.mxu0 %v921
    %7355 = vmatpush.msra.mxu0 %v909
    %7356 = vmatpush.msra.mxu0 %v897
    %7357 = vmatmul.f32.gmra.mxu0 %v7097
    %v7358 = vpop.f32.mrf.mxu0
    %v7359 = vadd.f32 0.0, %v7358
    %7360 = vdwg.mxu0
    %7361 = vmatpush.msra.mxu0 %v1269
    %7362 = vmatpush.msra.mxu0 %v1257
    %7363 = vmatpush.msra.mxu0 %v1245
    %7364 = vmatpush.msra.mxu0 %v1233
    %7365 = vmatpush.msra.mxu0 %v1221
    %7366 = vmatpush.msra.mxu0 %v1209
    %7367 = vmatpush.msra.mxu0 %v1197
    %7368 = vmatpush.msra.mxu0 %v1185
    %7369 = vmatpush.msra.mxu0 %v1173
    %7370 = vmatpush.msra.mxu0 %v1161
    %7371 = vmatpush.msra.mxu0 %v1149
    %7372 = vmatpush.msra.mxu0 %v1137
    %7373 = vmatpush.msra.mxu0 %v1125
    %7374 = vmatpush.msra.mxu0 %v1113
    %7375 = vmatpush.msra.mxu0 %v1101
    %7376 = vmatpush.msra.mxu0 %v1089
    %7377 = vmatmul.f32.gmra.mxu0 %v7098
    %v7378 = vpop.f32.mrf.mxu0
    %v7379 = vadd.f32 %v7359, %v7378
    %7380 = vdwg.mxu0
    %7381 = vmatpush.msra.mxu0 %v1461
    %7382 = vmatpush.msra.mxu0 %v1449
    %7383 = vmatpush.msra.mxu0 %v1437
    %7384 = vmatpush.msra.mxu0 %v1425
    %7385 = vmatpush.msra.mxu0 %v1413
    %7386 = vmatpush.msra.mxu0 %v1401
    %7387 = vmatpush.msra.mxu0 %v1389
    %7388 = vmatpush.msra.mxu0 %v1377
    %7389 = vmatpush.msra.mxu0 %v1365
    %7390 = vmatpush.msra.mxu0 %v1353
    %7391 = vmatpush.msra.mxu0 %v1341
    %7392 = vmatpush.msra.mxu0 %v1329
    %7393 = vmatpush.msra.mxu0 %v1317
    %7394 = vmatpush.msra.mxu0 %v1305
    %7395 = vmatpush.msra.mxu0 %v1293
    %7396 = vmatpush.msra.mxu0 %v1281
    %7397 = vmatmul.f32.gmra.mxu0 %v7092
    %v7398 = vpop.f32.mrf.mxu0
    %v7399 = vadd.f32 %v7379, %v7398
    %7400 = vdwg.mxu0
    %7401 = vmatpush.msra.mxu0 %v1078
    %7402 = vmatpush.msra.mxu0 %v1066
    %7403 = vmatpush.msra.mxu0 %v1054
    %7404 = vmatpush.msra.mxu0 %v1042
    %7405 = vmatpush.msra.mxu0 %v1030
    %7406 = vmatpush.msra.mxu0 %v1018
    %7407 = vmatpush.msra.mxu0 %v1006
    %7408 = vmatpush.msra.mxu0 %v994
    %7409 = vmatpush.msra.mxu0 %v982
    %7410 = vmatpush.msra.mxu0 %v970
    %7411 = vmatpush.msra.mxu0 %v958
    %7412 = vmatpush.msra.mxu0 %v946
    %7413 = vmatpush.msra.mxu0 %v934
    %7414 = vmatpush.msra.mxu0 %v922
    %7415 = vmatpush.msra.mxu0 %v910
    %7416 = vmatpush.msra.mxu0 %v898
    %7417 = vmatmul.f32.gmra.mxu0 %v7097
    %v7418 = vpop.f32.mrf.mxu0
    %v7419 = vadd.f32 0.0, %v7418
    %7420 = vdwg.mxu0
    %7421 = vmatpush.msra.mxu0 %v1270
    %7422 = vmatpush.msra.mxu0 %v1258
    %7423 = vmatpush.msra.mxu0 %v1246
    %7424 = vmatpush.msra.mxu0 %v1234
    %7425 = vmatpush.msra.mxu0 %v1222
    %7426 = vmatpush.msra.mxu0 %v1210
    %7427 = vmatpush.msra.mxu0 %v1198
    %7428 = vmatpush.msra.mxu0 %v1186
    %7429 = vmatpush.msra.mxu0 %v1174
    %7430 = vmatpush.msra.mxu0 %v1162
    %7431 = vmatpush.msra.mxu0 %v1150
    %7432 = vmatpush.msra.mxu0 %v1138
    %7433 = vmatpush.msra.mxu0 %v1126
    %7434 = vmatpush.msra.mxu0 %v1114
    %7435 = vmatpush.msra.mxu0 %v1102
    %7436 = vmatpush.msra.mxu0 %v1090
    %7437 = vmatmul.f32.gmra.mxu0 %v7098
    %v7438 = vpop.f32.mrf.mxu0
    %v7439 = vadd.f32 %v7419, %v7438
    %7440 = vdwg.mxu0
    %7441 = vmatpush.msra.mxu0 %v1462
    %7442 = vmatpush.msra.mxu0 %v1450
    %7443 = vmatpush.msra.mxu0 %v1438
    %7444 = vmatpush.msra.mxu0 %v1426
    %7445 = vmatpush.msra.mxu0 %v1414
    %7446 = vmatpush.msra.mxu0 %v1402
    %7447 = vmatpush.msra.mxu0 %v1390
    %7448 = vmatpush.msra.mxu0 %v1378
    %7449 = vmatpush.msra.mxu0 %v1366
    %7450 = vmatpush.msra.mxu0 %v1354
    %7451 = vmatpush.msra.mxu0 %v1342
    %7452 = vmatpush.msra.mxu0 %v1330
    %7453 = vmatpush.msra.mxu0 %v1318
    %7454 = vmatpush.msra.mxu0 %v1306
    %7455 = vmatpush.msra.mxu0 %v1294
    %7456 = vmatpush.msra.mxu0 %v1282
    %7457 = vmatmul.f32.gmra.mxu0 %v7092
    %v7458 = vpop.f32.mrf.mxu0
    %v7459 = vadd.f32 %v7439, %v7458
    %7460 = vdwg.mxu0
    %7461 = vmatpush.msra.mxu0 %v1079
    %7462 = vmatpush.msra.mxu0 %v1067
    %7463 = vmatpush.msra.mxu0 %v1055
    %7464 = vmatpush.msra.mxu0 %v1043
    %7465 = vmatpush.msra.mxu0 %v1031
    %7466 = vmatpush.msra.mxu0 %v1019
    %7467 = vmatpush.msra.mxu0 %v1007
    %7468 = vmatpush.msra.mxu0 %v995
    %7469 = vmatpush.msra.mxu0 %v983
    %7470 = vmatpush.msra.mxu0 %v971
    %7471 = vmatpush.msra.mxu0 %v959
    %7472 = vmatpush.msra.mxu0 %v947
    %7473 = vmatpush.msra.mxu0 %v935
    %7474 = vmatpush.msra.mxu0 %v923
    %7475 = vmatpush.msra.mxu0 %v911
    %7476 = vmatpush.msra.mxu0 %v899
    %7477 = vmatmul.f32.gmra.mxu0 %v7097
    %v7478 = vpop.f32.mrf.mxu0
    %v7479 = vadd.f32 0.0, %v7478
    %7480 = vdwg.mxu0
    %7481 = vmatpush.msra.mxu0 %v1271
    %7482 = vmatpush.msra.mxu0 %v1259
    %7483 = vmatpush.msra.mxu0 %v1247
    %7484 = vmatpush.msra.mxu0 %v1235
    %7485 = vmatpush.msra.mxu0 %v1223
    %7486 = vmatpush.msra.mxu0 %v1211
    %7487 = vmatpush.msra.mxu0 %v1199
    %7488 = vmatpush.msra.mxu0 %v1187
    %7489 = vmatpush.msra.mxu0 %v1175
    %7490 = vmatpush.msra.mxu0 %v1163
    %7491 = vmatpush.msra.mxu0 %v1151
    %7492 = vmatpush.msra.mxu0 %v1139
    %7493 = vmatpush.msra.mxu0 %v1127
    %7494 = vmatpush.msra.mxu0 %v1115
    %7495 = vmatpush.msra.mxu0 %v1103
    %7496 = vmatpush.msra.mxu0 %v1091
    %7497 = vmatmul.f32.gmra.mxu0 %v7098
    %v7498 = vpop.f32.mrf.mxu0
    %v7499 = vadd.f32 %v7479, %v7498
    %7500 = vdwg.mxu0
    %7501 = vmatpush.msra.mxu0 %v1463
    %7502 = vmatpush.msra.mxu0 %v1451
    %7503 = vmatpush.msra.mxu0 %v1439
    %7504 = vmatpush.msra.mxu0 %v1427
    %7505 = vmatpush.msra.mxu0 %v1415
    %7506 = vmatpush.msra.mxu0 %v1403
    %7507 = vmatpush.msra.mxu0 %v1391
    %7508 = vmatpush.msra.mxu0 %v1379
    %7509 = vmatpush.msra.mxu0 %v1367
    %7510 = vmatpush.msra.mxu0 %v1355
    %7511 = vmatpush.msra.mxu0 %v1343
    %7512 = vmatpush.msra.mxu0 %v1331
    %7513 = vmatpush.msra.mxu0 %v1319
    %7514 = vmatpush.msra.mxu0 %v1307
    %7515 = vmatpush.msra.mxu0 %v1295
    %7516 = vmatpush.msra.mxu0 %v1283
    %7517 = vmatmul.f32.gmra.mxu0 %v7092
    %v7518 = vpop.f32.mrf.mxu0
    %v7519 = vadd.f32 %v7499, %v7518
    %7520 = vdwg.mxu0
    %7521 = vmatpush.msra.mxu0 %v1080
    %7522 = vmatpush.msra.mxu0 %v1068
    %7523 = vmatpush.msra.mxu0 %v1056
    %7524 = vmatpush.msra.mxu0 %v1044
    %7525 = vmatpush.msra.mxu0 %v1032
    %7526 = vmatpush.msra.mxu0 %v1020
    %7527 = vmatpush.msra.mxu0 %v1008
    %7528 = vmatpush.msra.mxu0 %v996
    %7529 = vmatpush.msra.mxu0 %v984
    %7530 = vmatpush.msra.mxu0 %v972
    %7531 = vmatpush.msra.mxu0 %v960
    %7532 = vmatpush.msra.mxu0 %v948
    %7533 = vmatpush.msra.mxu0 %v936
    %7534 = vmatpush.msra.mxu0 %v924
    %7535 = vmatpush.msra.mxu0 %v912
    %7536 = vmatpush.msra.mxu0 %v900
    %7537 = vmatmul.f32.gmra.mxu0 %v7097
    %v7538 = vpop.f32.mrf.mxu0
    %v7539 = vadd.f32 0.0, %v7538
    %7540 = vdwg.mxu0
    %7541 = vmatpush.msra.mxu0 %v1272
    %7542 = vmatpush.msra.mxu0 %v1260
    %7543 = vmatpush.msra.mxu0 %v1248
    %7544 = vmatpush.msra.mxu0 %v1236
    %7545 = vmatpush.msra.mxu0 %v1224
    %7546 = vmatpush.msra.mxu0 %v1212
    %7547 = vmatpush.msra.mxu0 %v1200
    %7548 = vmatpush.msra.mxu0 %v1188
    %7549 = vmatpush.msra.mxu0 %v1176
    %7550 = vmatpush.msra.mxu0 %v1164
    %7551 = vmatpush.msra.mxu0 %v1152
    %7552 = vmatpush.msra.mxu0 %v1140
    %7553 = vmatpush.msra.mxu0 %v1128
    %7554 = vmatpush.msra.mxu0 %v1116
    %7555 = vmatpush.msra.mxu0 %v1104
    %7556 = vmatpush.msra.mxu0 %v1092
    %7557 = vmatmul.f32.gmra.mxu0 %v7098
    %v7558 = vpop.f32.mrf.mxu0
    %v7559 = vadd.f32 %v7539, %v7558
    %7560 = vdwg.mxu0
    %7561 = vmatpush.msra.mxu0 %v1464
    %7562 = vmatpush.msra.mxu0 %v1452
    %7563 = vmatpush.msra.mxu0 %v1440
    %7564 = vmatpush.msra.mxu0 %v1428
    %7565 = vmatpush.msra.mxu0 %v1416
    %7566 = vmatpush.msra.mxu0 %v1404
    %7567 = vmatpush.msra.mxu0 %v1392
    %7568 = vmatpush.msra.mxu0 %v1380
    %7569 = vmatpush.msra.mxu0 %v1368
    %7570 = vmatpush.msra.mxu0 %v1356
    %7571 = vmatpush.msra.mxu0 %v1344
    %7572 = vmatpush.msra.mxu0 %v1332
    %7573 = vmatpush.msra.mxu0 %v1320
    %7574 = vmatpush.msra.mxu0 %v1308
    %7575 = vmatpush.msra.mxu0 %v1296
    %7576 = vmatpush.msra.mxu0 %v1284
    %7577 = vmatmul.f32.gmra.mxu0 %v7092
    %v7578 = vpop.f32.mrf.mxu0
    %v7579 = vadd.f32 %v7559, %v7578
    %7580 = vdwg.mxu0
    %7581 = vmatpush.msra.mxu0 %v1081
    %7582 = vmatpush.msra.mxu0 %v1069
    %7583 = vmatpush.msra.mxu0 %v1057
    %7584 = vmatpush.msra.mxu0 %v1045
    %7585 = vmatpush.msra.mxu0 %v1033
    %7586 = vmatpush.msra.mxu0 %v1021
    %7587 = vmatpush.msra.mxu0 %v1009
    %7588 = vmatpush.msra.mxu0 %v997
    %7589 = vmatpush.msra.mxu0 %v985
    %7590 = vmatpush.msra.mxu0 %v973
    %7591 = vmatpush.msra.mxu0 %v961
    %7592 = vmatpush.msra.mxu0 %v949
    %7593 = vmatpush.msra.mxu0 %v937
    %7594 = vmatpush.msra.mxu0 %v925
    %7595 = vmatpush.msra.mxu0 %v913
    %7596 = vmatpush.msra.mxu0 %v901
    %7597 = vmatmul.f32.gmra.mxu0 %v7097
    %v7598 = vpop.f32.mrf.mxu0
    %v7599 = vadd.f32 0.0, %v7598
    %7600 = vdwg.mxu0
    %7601 = vmatpush.msra.mxu0 %v1273
    %7602 = vmatpush.msra.mxu0 %v1261
    %7603 = vmatpush.msra.mxu0 %v1249
    %7604 = vmatpush.msra.mxu0 %v1237
    %7605 = vmatpush.msra.mxu0 %v1225
    %7606 = vmatpush.msra.mxu0 %v1213
    %7607 = vmatpush.msra.mxu0 %v1201
    %7608 = vmatpush.msra.mxu0 %v1189
    %7609 = vmatpush.msra.mxu0 %v1177
    %7610 = vmatpush.msra.mxu0 %v1165
    %7611 = vmatpush.msra.mxu0 %v1153
    %7612 = vmatpush.msra.mxu0 %v1141
    %7613 = vmatpush.msra.mxu0 %v1129
    %7614 = vmatpush.msra.mxu0 %v1117
    %7615 = vmatpush.msra.mxu0 %v1105
    %7616 = vmatpush.msra.mxu0 %v1093
    %7617 = vmatmul.f32.gmra.mxu0 %v7098
    %v7618 = vpop.f32.mrf.mxu0
    %v7619 = vadd.f32 %v7599, %v7618
    %7620 = vdwg.mxu0
    %7621 = vmatpush.msra.mxu0 %v1465
    %7622 = vmatpush.msra.mxu0 %v1453
    %7623 = vmatpush.msra.mxu0 %v1441
    %7624 = vmatpush.msra.mxu0 %v1429
    %7625 = vmatpush.msra.mxu0 %v1417
    %7626 = vmatpush.msra.mxu0 %v1405
    %7627 = vmatpush.msra.mxu0 %v1393
    %7628 = vmatpush.msra.mxu0 %v1381
    %7629 = vmatpush.msra.mxu0 %v1369
    %7630 = vmatpush.msra.mxu0 %v1357
    %7631 = vmatpush.msra.mxu0 %v1345
    %7632 = vmatpush.msra.mxu0 %v1333
    %7633 = vmatpush.msra.mxu0 %v1321
    %7634 = vmatpush.msra.mxu0 %v1309
    %7635 = vmatpush.msra.mxu0 %v1297
    %7636 = vmatpush.msra.mxu0 %v1285
    %7637 = vmatmul.f32.gmra.mxu0 %v7092
    %v7638 = vpop.f32.mrf.mxu0
    %v7639 = vadd.f32 %v7619, %v7638
    %7640 = vdwg.mxu0
    %7641 = vmatpush.msra.mxu0 %v1082
    %7642 = vmatpush.msra.mxu0 %v1070
    %7643 = vmatpush.msra.mxu0 %v1058
    %7644 = vmatpush.msra.mxu0 %v1046
    %7645 = vmatpush.msra.mxu0 %v1034
    %7646 = vmatpush.msra.mxu0 %v1022
    %7647 = vmatpush.msra.mxu0 %v1010
    %7648 = vmatpush.msra.mxu0 %v998
    %7649 = vmatpush.msra.mxu0 %v986
    %7650 = vmatpush.msra.mxu0 %v974
    %7651 = vmatpush.msra.mxu0 %v962
    %7652 = vmatpush.msra.mxu0 %v950
    %7653 = vmatpush.msra.mxu0 %v938
    %7654 = vmatpush.msra.mxu0 %v926
    %7655 = vmatpush.msra.mxu0 %v914
    %7656 = vmatpush.msra.mxu0 %v902
    %7657 = vmatmul.f32.gmra.mxu0 %v7097
    %v7658 = vpop.f32.mrf.mxu0
    %v7659 = vadd.f32 0.0, %v7658
    %7660 = vdwg.mxu0
    %7661 = vmatpush.msra.mxu0 %v1274
    %7662 = vmatpush.msra.mxu0 %v1262
    %7663 = vmatpush.msra.mxu0 %v1250
    %7664 = vmatpush.msra.mxu0 %v1238
    %7665 = vmatpush.msra.mxu0 %v1226
    %7666 = vmatpush.msra.mxu0 %v1214
    %7667 = vmatpush.msra.mxu0 %v1202
    %7668 = vmatpush.msra.mxu0 %v1190
    %7669 = vmatpush.msra.mxu0 %v1178
    %7670 = vmatpush.msra.mxu0 %v1166
    %7671 = vmatpush.msra.mxu0 %v1154
    %7672 = vmatpush.msra.mxu0 %v1142
    %7673 = vmatpush.msra.mxu0 %v1130
    %7674 = vmatpush.msra.mxu0 %v1118
    %7675 = vmatpush.msra.mxu0 %v1106
    %7676 = vmatpush.msra.mxu0 %v1094
    %7677 = vmatmul.f32.gmra.mxu0 %v7098
    %v7678 = vpop.f32.mrf.mxu0
    %v7679 = vadd.f32 %v7659, %v7678
    %7680 = vdwg.mxu0
    %7681 = vmatpush.msra.mxu0 %v1466
    %7682 = vmatpush.msra.mxu0 %v1454
    %7683 = vmatpush.msra.mxu0 %v1442
    %7684 = vmatpush.msra.mxu0 %v1430
    %7685 = vmatpush.msra.mxu0 %v1418
    %7686 = vmatpush.msra.mxu0 %v1406
    %7687 = vmatpush.msra.mxu0 %v1394
    %7688 = vmatpush.msra.mxu0 %v1382
    %7689 = vmatpush.msra.mxu0 %v1370
    %7690 = vmatpush.msra.mxu0 %v1358
    %7691 = vmatpush.msra.mxu0 %v1346
    %7692 = vmatpush.msra.mxu0 %v1334
    %7693 = vmatpush.msra.mxu0 %v1322
    %7694 = vmatpush.msra.mxu0 %v1310
    %7695 = vmatpush.msra.mxu0 %v1298
    %7696 = vmatpush.msra.mxu0 %v1286
    %7697 = vmatmul.f32.gmra.mxu0 %v7092
    %v7698 = vpop.f32.mrf.mxu0
    %v7699 = vadd.f32 %v7679, %v7698
    %7700 = vdwg.mxu0
    %7701 = vmatpush.msra.mxu0 %v1083
    %7702 = vmatpush.msra.mxu0 %v1071
    %7703 = vmatpush.msra.mxu0 %v1059
    %7704 = vmatpush.msra.mxu0 %v1047
    %7705 = vmatpush.msra.mxu0 %v1035
    %7706 = vmatpush.msra.mxu0 %v1023
    %7707 = vmatpush.msra.mxu0 %v1011
    %7708 = vmatpush.msra.mxu0 %v999
    %7709 = vmatpush.msra.mxu0 %v987
    %7710 = vmatpush.msra.mxu0 %v975
    %7711 = vmatpush.msra.mxu0 %v963
    %7712 = vmatpush.msra.mxu0 %v951
    %7713 = vmatpush.msra.mxu0 %v939
    %7714 = vmatpush.msra.mxu0 %v927
    %7715 = vmatpush.msra.mxu0 %v915
    %7716 = vmatpush.msra.mxu0 %v903
    %7717 = vmatmul.f32.gmra.mxu0 %v7097
    %v7718 = vpop.f32.mrf.mxu0
    %v7719 = vadd.f32 0.0, %v7718
    %7720 = vdwg.mxu0
    %7721 = vmatpush.msra.mxu0 %v1275
    %7722 = vmatpush.msra.mxu0 %v1263
    %7723 = vmatpush.msra.mxu0 %v1251
    %7724 = vmatpush.msra.mxu0 %v1239
    %7725 = vmatpush.msra.mxu0 %v1227
    %7726 = vmatpush.msra.mxu0 %v1215
    %7727 = vmatpush.msra.mxu0 %v1203
    %7728 = vmatpush.msra.mxu0 %v1191
    %7729 = vmatpush.msra.mxu0 %v1179
    %7730 = vmatpush.msra.mxu0 %v1167
    %7731 = vmatpush.msra.mxu0 %v1155
    %7732 = vmatpush.msra.mxu0 %v1143
    %7733 = vmatpush.msra.mxu0 %v1131
    %7734 = vmatpush.msra.mxu0 %v1119
    %7735 = vmatpush.msra.mxu0 %v1107
    %7736 = vmatpush.msra.mxu0 %v1095
    %7737 = vmatmul.f32.gmra.mxu0 %v7098
    %v7738 = vpop.f32.mrf.mxu0
    %v7739 = vadd.f32 %v7719, %v7738
    %7740 = vdwg.mxu0
    %7741 = vmatpush.msra.mxu0 %v1467
    %7742 = vmatpush.msra.mxu0 %v1455
    %7743 = vmatpush.msra.mxu0 %v1443
    %7744 = vmatpush.msra.mxu0 %v1431
    %7745 = vmatpush.msra.mxu0 %v1419
    %7746 = vmatpush.msra.mxu0 %v1407
    %7747 = vmatpush.msra.mxu0 %v1395
    %7748 = vmatpush.msra.mxu0 %v1383
    %7749 = vmatpush.msra.mxu0 %v1371
    %7750 = vmatpush.msra.mxu0 %v1359
    %7751 = vmatpush.msra.mxu0 %v1347
    %7752 = vmatpush.msra.mxu0 %v1335
    %7753 = vmatpush.msra.mxu0 %v1323
    %7754 = vmatpush.msra.mxu0 %v1311
    %7755 = vmatpush.msra.mxu0 %v1299
    %7756 = vmatpush.msra.mxu0 %v1287
    %7757 = vmatmul.f32.gmra.mxu0 %v7092
    %v7758 = vpop.f32.mrf.mxu0
    %v7759 = vadd.f32 %v7739, %v7758
    %7760 = vdwg.mxu0
    %7761 = vmatpush.msra.mxu0 %v1084
    %7762 = vmatpush.msra.mxu0 %v1072
    %7763 = vmatpush.msra.mxu0 %v1060
    %7764 = vmatpush.msra.mxu0 %v1048
    %7765 = vmatpush.msra.mxu0 %v1036
    %7766 = vmatpush.msra.mxu0 %v1024
    %7767 = vmatpush.msra.mxu0 %v1012
    %7768 = vmatpush.msra.mxu0 %v1000
    %7769 = vmatpush.msra.mxu0 %v988
    %7770 = vmatpush.msra.mxu0 %v976
    %7771 = vmatpush.msra.mxu0 %v964
    %7772 = vmatpush.msra.mxu0 %v952
    %7773 = vmatpush.msra.mxu0 %v940
    %7774 = vmatpush.msra.mxu0 %v928
    %7775 = vmatpush.msra.mxu0 %v916
    %7776 = vmatpush.msra.mxu0 %v904
    %7777 = vmatmul.f32.gmra.mxu0 %v7097
    %v7778 = vpop.f32.mrf.mxu0
    %v7779 = vadd.f32 0.0, %v7778
    %7780 = vdwg.mxu0
    %7781 = vmatpush.msra.mxu0 %v1276
    %7782 = vmatpush.msra.mxu0 %v1264
    %7783 = vmatpush.msra.mxu0 %v1252
    %7784 = vmatpush.msra.mxu0 %v1240
    %7785 = vmatpush.msra.mxu0 %v1228
    %7786 = vmatpush.msra.mxu0 %v1216
    %7787 = vmatpush.msra.mxu0 %v1204
    %7788 = vmatpush.msra.mxu0 %v1192
    %7789 = vmatpush.msra.mxu0 %v1180
    %7790 = vmatpush.msra.mxu0 %v1168
    %7791 = vmatpush.msra.mxu0 %v1156
    %7792 = vmatpush.msra.mxu0 %v1144
    %7793 = vmatpush.msra.mxu0 %v1132
    %7794 = vmatpush.msra.mxu0 %v1120
    %7795 = vmatpush.msra.mxu0 %v1108
    %7796 = vmatpush.msra.mxu0 %v1096
    %7797 = vmatmul.f32.gmra.mxu0 %v7098
    %v7798 = vpop.f32.mrf.mxu0
    %v7799 = vadd.f32 %v7779, %v7798
    %7800 = vdwg.mxu0
    %7801 = vmatpush.msra.mxu0 %v1468
    %7802 = vmatpush.msra.mxu0 %v1456
    %7803 = vmatpush.msra.mxu0 %v1444
    %7804 = vmatpush.msra.mxu0 %v1432
    %7805 = vmatpush.msra.mxu0 %v1420
    %7806 = vmatpush.msra.mxu0 %v1408
    %7807 = vmatpush.msra.mxu0 %v1396
    %7808 = vmatpush.msra.mxu0 %v1384
    %7809 = vmatpush.msra.mxu0 %v1372
    %7810 = vmatpush.msra.mxu0 %v1360
    %7811 = vmatpush.msra.mxu0 %v1348
    %7812 = vmatpush.msra.mxu0 %v1336
    %7813 = vmatpush.msra.mxu0 %v1324
    %7814 = vmatpush.msra.mxu0 %v1312
    %7815 = vmatpush.msra.mxu0 %v1300
    %7816 = vmatpush.msra.mxu0 %v1288
    %7817 = vmatmul.f32.gmra.mxu0 %v7092
    %v7818 = vpop.f32.mrf.mxu0
    %v7819 = vadd.f32 %v7799, %v7818
    %7820 = vdwg.mxu0
    %v7833 = vrot.slane %v7219, 7
    %v7834 = vrot.slane %v7279, 6
    %v7835 = vrot.slane %v7339, 5
    %v7836 = vrot.slane %v7399, 4
    %v7837 = vrot.slane %v7459, 3
    %v7838 = vrot.slane %v7519, 2
    %v7839 = vrot.slane %v7579, 1
    %v7840 = vrot.slane %v7699, 7
    %v7841 = vrot.slane %v7759, 6
    %v7842 = vrot.slane %v7819, 5
    %v7843 = vsel %vm1510, %v7159, %v7833
    %v7844 = vsel %vm2279, %v7834, %v7835
    %v7845 = vsel %vm1512, %v7843, %v7844
    %v7846 = vsel %vm2282, %v7836, %v7837
    %v7847 = vsel %vm2284, %v7838, %v7839
    %v7848 = vsel %vm2286, %v7846, %v7847
    %v7849 = vsel %vm2288, %v7845, %v7848
    %v7850 = vsel %vm1510, %v7639, %v7840
    %v7851 = vsel %vm2279, %v7841, %v7842
    %v7852 = vsel %vm1512, %v7850, %v7851
    %v7855 = vadd.f32 %v7095, %v7849
    %v7856 = vadd.f32 %v7096, %v7852
    %v7857 = vtanh.pop %v7855
    %v7858 = vtanh.pop %v7856
    %v7859 = vmul.f32 %v7857, 0.5
    %v7860 = vmul.f32 %v7858, 0.5
    %v7861 = vadd.f32 %v7859, 0.5
    %v7862 = vadd.f32 %v7860, 0.5
    %v7864 = vrot.slane %v7858, 1
    %v7866 = vmul.f32 %v7861, %v7864
    %v7868 = vrot.slane %v7861, 3
    %v7870 = vmul.f32 %v7868, %v7083
    %v7871 = vadd.f32 %v7870, %v7866
    %v7872 = vtanh.pop %v7871
    %v7874 = vrot.slane %v7861, 6
    %v7875 = vrot.slane %v7862, 6
    %v7876 = vsel %vm1512, %v7874, %v7875
    %v7878 = vmul.f32 %v7876, %v7872
    %v7880 = vperm.slane %v7878, 2
    %7882 = vst [vmem:[#allocation4 + $0x6] sm:$0x1] %v7880
    %v7883 = vld [vmem:[%s3] sm:$0xff]
    %v7884 = vld [vmem:[%s3 + $0x8] sm:$0xf]
    %v7885 = vperm.slane %v7878, 0
    %v7886 = vperm.slane %v7878, 1
    %7889 = vmatpush.msra.mxu0 %v1073
    %7890 = vmatpush.msra.mxu0 %v1061
    %7891 = vmatpush.msra.mxu0 %v1049
    %7892 = vmatpush.msra.mxu0 %v1037
    %7893 = vmatpush.msra.mxu0 %v1025
    %7894 = vmatpush.msra.mxu0 %v1013
    %7895 = vmatpush.msra.mxu0 %v1001
    %7896 = vmatpush.msra.mxu0 %v989
    %7897 = vmatpush.msra.mxu0 %v977
    %7898 = vmatpush.msra.mxu0 %v965
    %7899 = vmatpush.msra.mxu0 %v953
    %7900 = vmatpush.msra.mxu0 %v941
    %7901 = vmatpush.msra.mxu0 %v929
    %7902 = vmatpush.msra.mxu0 %v917
    %7903 = vmatpush.msra.mxu0 %v905
    %7904 = vmatpush.msra.mxu0 %v893
    %7905 = vmatmul.f32.gmra.mxu0 %v7885
    %v7906 = vpop.f32.mrf.mxu0
    %v7907 = vadd.f32 0.0, %v7906
    %7908 = vdwg.mxu0
    %7909 = vmatpush.msra.mxu0 %v1265
    %7910 = vmatpush.msra.mxu0 %v1253
    %7911 = vmatpush.msra.mxu0 %v1241
    %7912 = vmatpush.msra.mxu0 %v1229
    %7913 = vmatpush.msra.mxu0 %v1217
    %7914 = vmatpush.msra.mxu0 %v1205
    %7915 = vmatpush.msra.mxu0 %v1193
    %7916 = vmatpush.msra.mxu0 %v1181
    %7917 = vmatpush.msra.mxu0 %v1169
    %7918 = vmatpush.msra.mxu0 %v1157
    %7919 = vmatpush.msra.mxu0 %v1145
    %7920 = vmatpush.msra.mxu0 %v1133
    %7921 = vmatpush.msra.mxu0 %v1121
    %7922 = vmatpush.msra.mxu0 %v1109
    %7923 = vmatpush.msra.mxu0 %v1097
    %7924 = vmatpush.msra.mxu0 %v1085
    %7925 = vmatmul.f32.gmra.mxu0 %v7886
    %v7926 = vpop.f32.mrf.mxu0
    %v7927 = vadd.f32 %v7907, %v7926
    %7928 = vdwg.mxu0
    %7929 = vmatpush.msra.mxu0 %v1457
    %7930 = vmatpush.msra.mxu0 %v1445
    %7931 = vmatpush.msra.mxu0 %v1433
    %7932 = vmatpush.msra.mxu0 %v1421
    %7933 = vmatpush.msra.mxu0 %v1409
    %7934 = vmatpush.msra.mxu0 %v1397
    %7935 = vmatpush.msra.mxu0 %v1385
    %7936 = vmatpush.msra.mxu0 %v1373
    %7937 = vmatpush.msra.mxu0 %v1361
    %7938 = vmatpush.msra.mxu0 %v1349
    %7939 = vmatpush.msra.mxu0 %v1337
    %7940 = vmatpush.msra.mxu0 %v1325
    %7941 = vmatpush.msra.mxu0 %v1313
    %7942 = vmatpush.msra.mxu0 %v1301
    %7943 = vmatpush.msra.mxu0 %v1289
    %7944 = vmatpush.msra.mxu0 %v1277
    %7945 = vmatmul.f32.gmra.mxu0 %v7880
    %v7946 = vpop.f32.mrf.mxu0
    %v7947 = vadd.f32 %v7927, %v7946
    %7948 = vdwg.mxu0
    %7949 = vmatpush.msra.mxu0 %v1074
    %7950 = vmatpush.msra.mxu0 %v1062
    %7951 = vmatpush.msra.mxu0 %v1050
    %7952 = vmatpush.msra.mxu0 %v1038
    %7953 = vmatpush.msra.mxu0 %v1026
    %7954 = vmatpush.msra.mxu0 %v1014
    %7955 = vmatpush.msra.mxu0 %v1002
    %7956 = vmatpush.msra.mxu0 %v990
    %7957 = vmatpush.msra.mxu0 %v978
    %7958 = vmatpush.msra.mxu0 %v966
    %7959 = vmatpush.msra.mxu0 %v954
    %7960 = vmatpush.msra.mxu0 %v942
    %7961 = vmatpush.msra.mxu0 %v930
    %7962 = vmatpush.msra.mxu0 %v918
    %7963 = vmatpush.msra.mxu0 %v906
    %7964 = vmatpush.msra.mxu0 %v894
    %7965 = vmatmul.f32.gmra.mxu0 %v7885
    %v7966 = vpop.f32.mrf.mxu0
    %v7967 = vadd.f32 0.0, %v7966
    %7968 = vdwg.mxu0
    %7969 = vmatpush.msra.mxu0 %v1266
    %7970 = vmatpush.msra.mxu0 %v1254
    %7971 = vmatpush.msra.mxu0 %v1242
    %7972 = vmatpush.msra.mxu0 %v1230
    %7973 = vmatpush.msra.mxu0 %v1218
    %7974 = vmatpush.msra.mxu0 %v1206
    %7975 = vmatpush.msra.mxu0 %v1194
    %7976 = vmatpush.msra.mxu0 %v1182
    %7977 = vmatpush.msra.mxu0 %v1170
    %7978 = vmatpush.msra.mxu0 %v1158
    %7979 = vmatpush.msra.mxu0 %v1146
    %7980 = vmatpush.msra.mxu0 %v1134
    %7981 = vmatpush.msra.mxu0 %v1122
    %7982 = vmatpush.msra.mxu0 %v1110
    %7983 = vmatpush.msra.mxu0 %v1098
    %7984 = vmatpush.msra.mxu0 %v1086
    %7985 = vmatmul.f32.gmra.mxu0 %v7886
    %v7986 = vpop.f32.mrf.mxu0
    %v7987 = vadd.f32 %v7967, %v7986
    %7988 = vdwg.mxu0
    %7989 = vmatpush.msra.mxu0 %v1458
    %7990 = vmatpush.msra.mxu0 %v1446
    %7991 = vmatpush.msra.mxu0 %v1434
    %7992 = vmatpush.msra.mxu0 %v1422
    %7993 = vmatpush.msra.mxu0 %v1410
    %7994 = vmatpush.msra.mxu0 %v1398
    %7995 = vmatpush.msra.mxu0 %v1386
    %7996 = vmatpush.msra.mxu0 %v1374
    %7997 = vmatpush.msra.mxu0 %v1362
    %7998 = vmatpush.msra.mxu0 %v1350
    %7999 = vmatpush.msra.mxu0 %v1338
    %8000 = vmatpush.msra.mxu0 %v1326
    %8001 = vmatpush.msra.mxu0 %v1314
    %8002 = vmatpush.msra.mxu0 %v1302
    %8003 = vmatpush.msra.mxu0 %v1290
    %8004 = vmatpush.msra.mxu0 %v1278
    %8005 = vmatmul.f32.gmra.mxu0 %v7880
    %v8006 = vpop.f32.mrf.mxu0
    %v8007 = vadd.f32 %v7987, %v8006
    %8008 = vdwg.mxu0
    %8009 = vmatpush.msra.mxu0 %v1075
    %8010 = vmatpush.msra.mxu0 %v1063
    %8011 = vmatpush.msra.mxu0 %v1051
    %8012 = vmatpush.msra.mxu0 %v1039
    %8013 = vmatpush.msra.mxu0 %v1027
    %8014 = vmatpush.msra.mxu0 %v1015
    %8015 = vmatpush.msra.mxu0 %v1003
    %8016 = vmatpush.msra.mxu0 %v991
    %8017 = vmatpush.msra.mxu0 %v979
    %8018 = vmatpush.msra.mxu0 %v967
    %8019 = vmatpush.msra.mxu0 %v955
    %8020 = vmatpush.msra.mxu0 %v943
    %8021 = vmatpush.msra.mxu0 %v931
    %8022 = vmatpush.msra.mxu0 %v919
    %8023 = vmatpush.msra.mxu0 %v907
    %8024 = vmatpush.msra.mxu0 %v895
    %8025 = vmatmul.f32.gmra.mxu0 %v7885
    %v8026 = vpop.f32.mrf.mxu0
    %v8027 = vadd.f32 0.0, %v8026
    %8028 = vdwg.mxu0
    %8029 = vmatpush.msra.mxu0 %v1267
    %8030 = vmatpush.msra.mxu0 %v1255
    %8031 = vmatpush.msra.mxu0 %v1243
    %8032 = vmatpush.msra.mxu0 %v1231
    %8033 = vmatpush.msra.mxu0 %v1219
    %8034 = vmatpush.msra.mxu0 %v1207
    %8035 = vmatpush.msra.mxu0 %v1195
    %8036 = vmatpush.msra.mxu0 %v1183
    %8037 = vmatpush.msra.mxu0 %v1171
    %8038 = vmatpush.msra.mxu0 %v1159
    %8039 = vmatpush.msra.mxu0 %v1147
    %8040 = vmatpush.msra.mxu0 %v1135
    %8041 = vmatpush.msra.mxu0 %v1123
    %8042 = vmatpush.msra.mxu0 %v1111
    %8043 = vmatpush.msra.mxu0 %v1099
    %8044 = vmatpush.msra.mxu0 %v1087
    %8045 = vmatmul.f32.gmra.mxu0 %v7886
    %v8046 = vpop.f32.mrf.mxu0
    %v8047 = vadd.f32 %v8027, %v8046
    %8048 = vdwg.mxu0
    %8049 = vmatpush.msra.mxu0 %v1459
    %8050 = vmatpush.msra.mxu0 %v1447
    %8051 = vmatpush.msra.mxu0 %v1435
    %8052 = vmatpush.msra.mxu0 %v1423
    %8053 = vmatpush.msra.mxu0 %v1411
    %8054 = vmatpush.msra.mxu0 %v1399
    %8055 = vmatpush.msra.mxu0 %v1387
    %8056 = vmatpush.msra.mxu0 %v1375
    %8057 = vmatpush.msra.mxu0 %v1363
    %8058 = vmatpush.msra.mxu0 %v1351
    %8059 = vmatpush.msra.mxu0 %v1339
    %8060 = vmatpush.msra.mxu0 %v1327
    %8061 = vmatpush.msra.mxu0 %v1315
    %8062 = vmatpush.msra.mxu0 %v1303
    %8063 = vmatpush.msra.mxu0 %v1291
    %8064 = vmatpush.msra.mxu0 %v1279
    %8065 = vmatmul.f32.gmra.mxu0 %v7880
    %v8066 = vpop.f32.mrf.mxu0
    %v8067 = vadd.f32 %v8047, %v8066
    %8068 = vdwg.mxu0
    %8069 = vmatpush.msra.mxu0 %v1076
    %8070 = vmatpush.msra.mxu0 %v1064
    %8071 = vmatpush.msra.mxu0 %v1052
    %8072 = vmatpush.msra.mxu0 %v1040
    %8073 = vmatpush.msra.mxu0 %v1028
    %8074 = vmatpush.msra.mxu0 %v1016
    %8075 = vmatpush.msra.mxu0 %v1004
    %8076 = vmatpush.msra.mxu0 %v992
    %8077 = vmatpush.msra.mxu0 %v980
    %8078 = vmatpush.msra.mxu0 %v968
    %8079 = vmatpush.msra.mxu0 %v956
    %8080 = vmatpush.msra.mxu0 %v944
    %8081 = vmatpush.msra.mxu0 %v932
    %8082 = vmatpush.msra.mxu0 %v920
    %8083 = vmatpush.msra.mxu0 %v908
    %8084 = vmatpush.msra.mxu0 %v896
    %8085 = vmatmul.f32.gmra.mxu0 %v7885
    %v8086 = vpop.f32.mrf.mxu0
    %v8087 = vadd.f32 0.0, %v8086
    %8088 = vdwg.mxu0
    %8089 = vmatpush.msra.mxu0 %v1268
    %8090 = vmatpush.msra.mxu0 %v1256
    %8091 = vmatpush.msra.mxu0 %v1244
    %8092 = vmatpush.msra.mxu0 %v1232
    %8093 = vmatpush.msra.mxu0 %v1220
    %8094 = vmatpush.msra.mxu0 %v1208
    %8095 = vmatpush.msra.mxu0 %v1196
    %8096 = vmatpush.msra.mxu0 %v1184
    %8097 = vmatpush.msra.mxu0 %v1172
    %8098 = vmatpush.msra.mxu0 %v1160
    %8099 = vmatpush.msra.mxu0 %v1148
    %8100 = vmatpush.msra.mxu0 %v1136
    %8101 = vmatpush.msra.mxu0 %v1124
    %8102 = vmatpush.msra.mxu0 %v1112
    %8103 = vmatpush.msra.mxu0 %v1100
    %8104 = vmatpush.msra.mxu0 %v1088
    %8105 = vmatmul.f32.gmra.mxu0 %v7886
    %v8106 = vpop.f32.mrf.mxu0
    %v8107 = vadd.f32 %v8087, %v8106
    %8108 = vdwg.mxu0
    %8109 = vmatpush.msra.mxu0 %v1460
    %8110 = vmatpush.msra.mxu0 %v1448
    %8111 = vmatpush.msra.mxu0 %v1436
    %8112 = vmatpush.msra.mxu0 %v1424
    %8113 = vmatpush.msra.mxu0 %v1412
    %8114 = vmatpush.msra.mxu0 %v1400
    %8115 = vmatpush.msra.mxu0 %v1388
    %8116 = vmatpush.msra.mxu0 %v1376
    %8117 = vmatpush.msra.mxu0 %v1364
    %8118 = vmatpush.msra.mxu0 %v1352
    %8119 = vmatpush.msra.mxu0 %v1340
    %8120 = vmatpush.msra.mxu0 %v1328
    %8121 = vmatpush.msra.mxu0 %v1316
    %8122 = vmatpush.msra.mxu0 %v1304
    %8123 = vmatpush.msra.mxu0 %v1292
    %8124 = vmatpush.msra.mxu0 %v1280
    %8125 = vmatmul.f32.gmra.mxu0 %v7880
    %v8126 = vpop.f32.mrf.mxu0
    %v8127 = vadd.f32 %v8107, %v8126
    %8128 = vdwg.mxu0
    %8129 = vmatpush.msra.mxu0 %v1077
    %8130 = vmatpush.msra.mxu0 %v1065
    %8131 = vmatpush.msra.mxu0 %v1053
    %8132 = vmatpush.msra.mxu0 %v1041
    %8133 = vmatpush.msra.mxu0 %v1029
    %8134 = vmatpush.msra.mxu0 %v1017
    %8135 = vmatpush.msra.mxu0 %v1005
    %8136 = vmatpush.msra.mxu0 %v993
    %8137 = vmatpush.msra.mxu0 %v981
    %8138 = vmatpush.msra.mxu0 %v969
    %8139 = vmatpush.msra.mxu0 %v957
    %8140 = vmatpush.msra.mxu0 %v945
    %8141 = vmatpush.msra.mxu0 %v933
    %8142 = vmatpush.msra.mxu0 %v921
    %8143 = vmatpush.msra.mxu0 %v909
    %8144 = vmatpush.msra.mxu0 %v897
    %8145 = vmatmul.f32.gmra.mxu0 %v7885
    %v8146 = vpop.f32.mrf.mxu0
    %v8147 = vadd.f32 0.0, %v8146
    %8148 = vdwg.mxu0
    %8149 = vmatpush.msra.mxu0 %v1269
    %8150 = vmatpush.msra.mxu0 %v1257
    %8151 = vmatpush.msra.mxu0 %v1245
    %8152 = vmatpush.msra.mxu0 %v1233
    %8153 = vmatpush.msra.mxu0 %v1221
    %8154 = vmatpush.msra.mxu0 %v1209
    %8155 = vmatpush.msra.mxu0 %v1197
    %8156 = vmatpush.msra.mxu0 %v1185
    %8157 = vmatpush.msra.mxu0 %v1173
    %8158 = vmatpush.msra.mxu0 %v1161
    %8159 = vmatpush.msra.mxu0 %v1149
    %8160 = vmatpush.msra.mxu0 %v1137
    %8161 = vmatpush.msra.mxu0 %v1125
    %8162 = vmatpush.msra.mxu0 %v1113
    %8163 = vmatpush.msra.mxu0 %v1101
    %8164 = vmatpush.msra.mxu0 %v1089
    %8165 = vmatmul.f32.gmra.mxu0 %v7886
    %v8166 = vpop.f32.mrf.mxu0
    %v8167 = vadd.f32 %v8147, %v8166
    %8168 = vdwg.mxu0
    %8169 = vmatpush.msra.mxu0 %v1461
    %8170 = vmatpush.msra.mxu0 %v1449
    %8171 = vmatpush.msra.mxu0 %v1437
    %8172 = vmatpush.msra.mxu0 %v1425
    %8173 = vmatpush.msra.mxu0 %v1413
    %8174 = vmatpush.msra.mxu0 %v1401
    %8175 = vmatpush.msra.mxu0 %v1389
    %8176 = vmatpush.msra.mxu0 %v1377
    %8177 = vmatpush.msra.mxu0 %v1365
    %8178 = vmatpush.msra.mxu0 %v1353
    %8179 = vmatpush.msra.mxu0 %v1341
    %8180 = vmatpush.msra.mxu0 %v1329
    %8181 = vmatpush.msra.mxu0 %v1317
    %8182 = vmatpush.msra.mxu0 %v1305
    %8183 = vmatpush.msra.mxu0 %v1293
    %8184 = vmatpush.msra.mxu0 %v1281
    %8185 = vmatmul.f32.gmra.mxu0 %v7880
    %v8186 = vpop.f32.mrf.mxu0
    %v8187 = vadd.f32 %v8167, %v8186
    %8188 = vdwg.mxu0
    %8189 = vmatpush.msra.mxu0 %v1078
    %8190 = vmatpush.msra.mxu0 %v1066
    %8191 = vmatpush.msra.mxu0 %v1054
    %8192 = vmatpush.msra.mxu0 %v1042
    %8193 = vmatpush.msra.mxu0 %v1030
    %8194 = vmatpush.msra.mxu0 %v1018
    %8195 = vmatpush.msra.mxu0 %v1006
    %8196 = vmatpush.msra.mxu0 %v994
    %8197 = vmatpush.msra.mxu0 %v982
    %8198 = vmatpush.msra.mxu0 %v970
    %8199 = vmatpush.msra.mxu0 %v958
    %8200 = vmatpush.msra.mxu0 %v946
    %8201 = vmatpush.msra.mxu0 %v934
    %8202 = vmatpush.msra.mxu0 %v922
    %8203 = vmatpush.msra.mxu0 %v910
    %8204 = vmatpush.msra.mxu0 %v898
    %8205 = vmatmul.f32.gmra.mxu0 %v7885
    %v8206 = vpop.f32.mrf.mxu0
    %v8207 = vadd.f32 0.0, %v8206
    %8208 = vdwg.mxu0
    %8209 = vmatpush.msra.mxu0 %v1270
    %8210 = vmatpush.msra.mxu0 %v1258
    %8211 = vmatpush.msra.mxu0 %v1246
    %8212 = vmatpush.msra.mxu0 %v1234
    %8213 = vmatpush.msra.mxu0 %v1222
    %8214 = vmatpush.msra.mxu0 %v1210
    %8215 = vmatpush.msra.mxu0 %v1198
    %8216 = vmatpush.msra.mxu0 %v1186
    %8217 = vmatpush.msra.mxu0 %v1174
    %8218 = vmatpush.msra.mxu0 %v1162
    %8219 = vmatpush.msra.mxu0 %v1150
    %8220 = vmatpush.msra.mxu0 %v1138
    %8221 = vmatpush.msra.mxu0 %v1126
    %8222 = vmatpush.msra.mxu0 %v1114
    %8223 = vmatpush.msra.mxu0 %v1102
    %8224 = vmatpush.msra.mxu0 %v1090
    %8225 = vmatmul.f32.gmra.mxu0 %v7886
    %v8226 = vpop.f32.mrf.mxu0
    %v8227 = vadd.f32 %v8207, %v8226
    %8228 = vdwg.mxu0
    %8229 = vmatpush.msra.mxu0 %v1462
    %8230 = vmatpush.msra.mxu0 %v1450
    %8231 = vmatpush.msra.mxu0 %v1438
    %8232 = vmatpush.msra.mxu0 %v1426
    %8233 = vmatpush.msra.mxu0 %v1414
    %8234 = vmatpush.msra.mxu0 %v1402
    %8235 = vmatpush.msra.mxu0 %v1390
    %8236 = vmatpush.msra.mxu0 %v1378
    %8237 = vmatpush.msra.mxu0 %v1366
    %8238 = vmatpush.msra.mxu0 %v1354
    %8239 = vmatpush.msra.mxu0 %v1342
    %8240 = vmatpush.msra.mxu0 %v1330
    %8241 = vmatpush.msra.mxu0 %v1318
    %8242 = vmatpush.msra.mxu0 %v1306
    %8243 = vmatpush.msra.mxu0 %v1294
    %8244 = vmatpush.msra.mxu0 %v1282
    %8245 = vmatmul.f32.gmra.mxu0 %v7880
    %v8246 = vpop.f32.mrf.mxu0
    %v8247 = vadd.f32 %v8227, %v8246
    %8248 = vdwg.mxu0
    %8249 = vmatpush.msra.mxu0 %v1079
    %8250 = vmatpush.msra.mxu0 %v1067
    %8251 = vmatpush.msra.mxu0 %v1055
    %8252 = vmatpush.msra.mxu0 %v1043
    %8253 = vmatpush.msra.mxu0 %v1031
    %8254 = vmatpush.msra.mxu0 %v1019
    %8255 = vmatpush.msra.mxu0 %v1007
    %8256 = vmatpush.msra.mxu0 %v995
    %8257 = vmatpush.msra.mxu0 %v983
    %8258 = vmatpush.msra.mxu0 %v971
    %8259 = vmatpush.msra.mxu0 %v959
    %8260 = vmatpush.msra.mxu0 %v947
    %8261 = vmatpush.msra.mxu0 %v935
    %8262 = vmatpush.msra.mxu0 %v923
    %8263 = vmatpush.msra.mxu0 %v911
    %8264 = vmatpush.msra.mxu0 %v899
    %8265 = vmatmul.f32.gmra.mxu0 %v7885
    %v8266 = vpop.f32.mrf.mxu0
    %v8267 = vadd.f32 0.0, %v8266
    %8268 = vdwg.mxu0
    %8269 = vmatpush.msra.mxu0 %v1271
    %8270 = vmatpush.msra.mxu0 %v1259
    %8271 = vmatpush.msra.mxu0 %v1247
    %8272 = vmatpush.msra.mxu0 %v1235
    %8273 = vmatpush.msra.mxu0 %v1223
    %8274 = vmatpush.msra.mxu0 %v1211
    %8275 = vmatpush.msra.mxu0 %v1199
    %8276 = vmatpush.msra.mxu0 %v1187
    %8277 = vmatpush.msra.mxu0 %v1175
    %8278 = vmatpush.msra.mxu0 %v1163
    %8279 = vmatpush.msra.mxu0 %v1151
    %8280 = vmatpush.msra.mxu0 %v1139
    %8281 = vmatpush.msra.mxu0 %v1127
    %8282 = vmatpush.msra.mxu0 %v1115
    %8283 = vmatpush.msra.mxu0 %v1103
    %8284 = vmatpush.msra.mxu0 %v1091
    %8285 = vmatmul.f32.gmra.mxu0 %v7886
    %v8286 = vpop.f32.mrf.mxu0
    %v8287 = vadd.f32 %v8267, %v8286
    %8288 = vdwg.mxu0
    %8289 = vmatpush.msra.mxu0 %v1463
    %8290 = vmatpush.msra.mxu0 %v1451
    %8291 = vmatpush.msra.mxu0 %v1439
    %8292 = vmatpush.msra.mxu0 %v1427
    %8293 = vmatpush.msra.mxu0 %v1415
    %8294 = vmatpush.msra.mxu0 %v1403
    %8295 = vmatpush.msra.mxu0 %v1391
    %8296 = vmatpush.msra.mxu0 %v1379
    %8297 = vmatpush.msra.mxu0 %v1367
    %8298 = vmatpush.msra.mxu0 %v1355
    %8299 = vmatpush.msra.mxu0 %v1343
    %8300 = vmatpush.msra.mxu0 %v1331
    %8301 = vmatpush.msra.mxu0 %v1319
    %8302 = vmatpush.msra.mxu0 %v1307
    %8303 = vmatpush.msra.mxu0 %v1295
    %8304 = vmatpush.msra.mxu0 %v1283
    %8305 = vmatmul.f32.gmra.mxu0 %v7880
    %v8306 = vpop.f32.mrf.mxu0
    %v8307 = vadd.f32 %v8287, %v8306
    %8308 = vdwg.mxu0
    %8309 = vmatpush.msra.mxu0 %v1080
    %8310 = vmatpush.msra.mxu0 %v1068
    %8311 = vmatpush.msra.mxu0 %v1056
    %8312 = vmatpush.msra.mxu0 %v1044
    %8313 = vmatpush.msra.mxu0 %v1032
    %8314 = vmatpush.msra.mxu0 %v1020
    %8315 = vmatpush.msra.mxu0 %v1008
    %8316 = vmatpush.msra.mxu0 %v996
    %8317 = vmatpush.msra.mxu0 %v984
    %8318 = vmatpush.msra.mxu0 %v972
    %8319 = vmatpush.msra.mxu0 %v960
    %8320 = vmatpush.msra.mxu0 %v948
    %8321 = vmatpush.msra.mxu0 %v936
    %8322 = vmatpush.msra.mxu0 %v924
    %8323 = vmatpush.msra.mxu0 %v912
    %8324 = vmatpush.msra.mxu0 %v900
    %8325 = vmatmul.f32.gmra.mxu0 %v7885
    %v8326 = vpop.f32.mrf.mxu0
    %v8327 = vadd.f32 0.0, %v8326
    %8328 = vdwg.mxu0
    %8329 = vmatpush.msra.mxu0 %v1272
    %8330 = vmatpush.msra.mxu0 %v1260
    %8331 = vmatpush.msra.mxu0 %v1248
    %8332 = vmatpush.msra.mxu0 %v1236
    %8333 = vmatpush.msra.mxu0 %v1224
    %8334 = vmatpush.msra.mxu0 %v1212
    %8335 = vmatpush.msra.mxu0 %v1200
    %8336 = vmatpush.msra.mxu0 %v1188
    %8337 = vmatpush.msra.mxu0 %v1176
    %8338 = vmatpush.msra.mxu0 %v1164
    %8339 = vmatpush.msra.mxu0 %v1152
    %8340 = vmatpush.msra.mxu0 %v1140
    %8341 = vmatpush.msra.mxu0 %v1128
    %8342 = vmatpush.msra.mxu0 %v1116
    %8343 = vmatpush.msra.mxu0 %v1104
    %8344 = vmatpush.msra.mxu0 %v1092
    %8345 = vmatmul.f32.gmra.mxu0 %v7886
    %v8346 = vpop.f32.mrf.mxu0
    %v8347 = vadd.f32 %v8327, %v8346
    %8348 = vdwg.mxu0
    %8349 = vmatpush.msra.mxu0 %v1464
    %8350 = vmatpush.msra.mxu0 %v1452
    %8351 = vmatpush.msra.mxu0 %v1440
    %8352 = vmatpush.msra.mxu0 %v1428
    %8353 = vmatpush.msra.mxu0 %v1416
    %8354 = vmatpush.msra.mxu0 %v1404
    %8355 = vmatpush.msra.mxu0 %v1392
    %8356 = vmatpush.msra.mxu0 %v1380
    %8357 = vmatpush.msra.mxu0 %v1368
    %8358 = vmatpush.msra.mxu0 %v1356
    %8359 = vmatpush.msra.mxu0 %v1344
    %8360 = vmatpush.msra.mxu0 %v1332
    %8361 = vmatpush.msra.mxu0 %v1320
    %8362 = vmatpush.msra.mxu0 %v1308
    %8363 = vmatpush.msra.mxu0 %v1296
    %8364 = vmatpush.msra.mxu0 %v1284
    %8365 = vmatmul.f32.gmra.mxu0 %v7880
    %v8366 = vpop.f32.mrf.mxu0
    %v8367 = vadd.f32 %v8347, %v8366
    %8368 = vdwg.mxu0
    %8369 = vmatpush.msra.mxu0 %v1081
    %8370 = vmatpush.msra.mxu0 %v1069
    %8371 = vmatpush.msra.mxu0 %v1057
    %8372 = vmatpush.msra.mxu0 %v1045
    %8373 = vmatpush.msra.mxu0 %v1033
    %8374 = vmatpush.msra.mxu0 %v1021
    %8375 = vmatpush.msra.mxu0 %v1009
    %8376 = vmatpush.msra.mxu0 %v997
    %8377 = vmatpush.msra.mxu0 %v985
    %8378 = vmatpush.msra.mxu0 %v973
    %8379 = vmatpush.msra.mxu0 %v961
    %8380 = vmatpush.msra.mxu0 %v949
    %8381 = vmatpush.msra.mxu0 %v937
    %8382 = vmatpush.msra.mxu0 %v925
    %8383 = vmatpush.msra.mxu0 %v913
    %8384 = vmatpush.msra.mxu0 %v901
    %8385 = vmatmul.f32.gmra.mxu0 %v7885
    %v8386 = vpop.f32.mrf.mxu0
    %v8387 = vadd.f32 0.0, %v8386
    %8388 = vdwg.mxu0
    %8389 = vmatpush.msra.mxu0 %v1273
    %8390 = vmatpush.msra.mxu0 %v1261
    %8391 = vmatpush.msra.mxu0 %v1249
    %8392 = vmatpush.msra.mxu0 %v1237
    %8393 = vmatpush.msra.mxu0 %v1225
    %8394 = vmatpush.msra.mxu0 %v1213
    %8395 = vmatpush.msra.mxu0 %v1201
    %8396 = vmatpush.msra.mxu0 %v1189
    %8397 = vmatpush.msra.mxu0 %v1177
    %8398 = vmatpush.msra.mxu0 %v1165
    %8399 = vmatpush.msra.mxu0 %v1153
    %8400 = vmatpush.msra.mxu0 %v1141
    %8401 = vmatpush.msra.mxu0 %v1129
    %8402 = vmatpush.msra.mxu0 %v1117
    %8403 = vmatpush.msra.mxu0 %v1105
    %8404 = vmatpush.msra.mxu0 %v1093
    %8405 = vmatmul.f32.gmra.mxu0 %v7886
    %v8406 = vpop.f32.mrf.mxu0
    %v8407 = vadd.f32 %v8387, %v8406
    %8408 = vdwg.mxu0
    %8409 = vmatpush.msra.mxu0 %v1465
    %8410 = vmatpush.msra.mxu0 %v1453
    %8411 = vmatpush.msra.mxu0 %v1441
    %8412 = vmatpush.msra.mxu0 %v1429
    %8413 = vmatpush.msra.mxu0 %v1417
    %8414 = vmatpush.msra.mxu0 %v1405
    %8415 = vmatpush.msra.mxu0 %v1393
    %8416 = vmatpush.msra.mxu0 %v1381
    %8417 = vmatpush.msra.mxu0 %v1369
    %8418 = vmatpush.msra.mxu0 %v1357
    %8419 = vmatpush.msra.mxu0 %v1345
    %8420 = vmatpush.msra.mxu0 %v1333
    %8421 = vmatpush.msra.mxu0 %v1321
    %8422 = vmatpush.msra.mxu0 %v1309
    %8423 = vmatpush.msra.mxu0 %v1297
    %8424 = vmatpush.msra.mxu0 %v1285
    %8425 = vmatmul.f32.gmra.mxu0 %v7880
    %v8426 = vpop.f32.mrf.mxu0
    %v8427 = vadd.f32 %v8407, %v8426
    %8428 = vdwg.mxu0
    %8429 = vmatpush.msra.mxu0 %v1082
    %8430 = vmatpush.msra.mxu0 %v1070
    %8431 = vmatpush.msra.mxu0 %v1058
    %8432 = vmatpush.msra.mxu0 %v1046
    %8433 = vmatpush.msra.mxu0 %v1034
    %8434 = vmatpush.msra.mxu0 %v1022
    %8435 = vmatpush.msra.mxu0 %v1010
    %8436 = vmatpush.msra.mxu0 %v998
    %8437 = vmatpush.msra.mxu0 %v986
    %8438 = vmatpush.msra.mxu0 %v974
    %8439 = vmatpush.msra.mxu0 %v962
    %8440 = vmatpush.msra.mxu0 %v950
    %8441 = vmatpush.msra.mxu0 %v938
    %8442 = vmatpush.msra.mxu0 %v926
    %8443 = vmatpush.msra.mxu0 %v914
    %8444 = vmatpush.msra.mxu0 %v902
    %8445 = vmatmul.f32.gmra.mxu0 %v7885
    %v8446 = vpop.f32.mrf.mxu0
    %v8447 = vadd.f32 0.0, %v8446
    %8448 = vdwg.mxu0
    %8449 = vmatpush.msra.mxu0 %v1274
    %8450 = vmatpush.msra.mxu0 %v1262
    %8451 = vmatpush.msra.mxu0 %v1250
    %8452 = vmatpush.msra.mxu0 %v1238
    %8453 = vmatpush.msra.mxu0 %v1226
    %8454 = vmatpush.msra.mxu0 %v1214
    %8455 = vmatpush.msra.mxu0 %v1202
    %8456 = vmatpush.msra.mxu0 %v1190
    %8457 = vmatpush.msra.mxu0 %v1178
    %8458 = vmatpush.msra.mxu0 %v1166
    %8459 = vmatpush.msra.mxu0 %v1154
    %8460 = vmatpush.msra.mxu0 %v1142
    %8461 = vmatpush.msra.mxu0 %v1130
    %8462 = vmatpush.msra.mxu0 %v1118
    %8463 = vmatpush.msra.mxu0 %v1106
    %8464 = vmatpush.msra.mxu0 %v1094
    %8465 = vmatmul.f32.gmra.mxu0 %v7886
    %v8466 = vpop.f32.mrf.mxu0
    %v8467 = vadd.f32 %v8447, %v8466
    %8468 = vdwg.mxu0
    %8469 = vmatpush.msra.mxu0 %v1466
    %8470 = vmatpush.msra.mxu0 %v1454
    %8471 = vmatpush.msra.mxu0 %v1442
    %8472 = vmatpush.msra.mxu0 %v1430
    %8473 = vmatpush.msra.mxu0 %v1418
    %8474 = vmatpush.msra.mxu0 %v1406
    %8475 = vmatpush.msra.mxu0 %v1394
    %8476 = vmatpush.msra.mxu0 %v1382
    %8477 = vmatpush.msra.mxu0 %v1370
    %8478 = vmatpush.msra.mxu0 %v1358
    %8479 = vmatpush.msra.mxu0 %v1346
    %8480 = vmatpush.msra.mxu0 %v1334
    %8481 = vmatpush.msra.mxu0 %v1322
    %8482 = vmatpush.msra.mxu0 %v1310
    %8483 = vmatpush.msra.mxu0 %v1298
    %8484 = vmatpush.msra.mxu0 %v1286
    %8485 = vmatmul.f32.gmra.mxu0 %v7880
    %v8486 = vpop.f32.mrf.mxu0
    %v8487 = vadd.f32 %v8467, %v8486
    %8488 = vdwg.mxu0
    %8489 = vmatpush.msra.mxu0 %v1083
    %8490 = vmatpush.msra.mxu0 %v1071
    %8491 = vmatpush.msra.mxu0 %v1059
    %8492 = vmatpush.msra.mxu0 %v1047
    %8493 = vmatpush.msra.mxu0 %v1035
    %8494 = vmatpush.msra.mxu0 %v1023
    %8495 = vmatpush.msra.mxu0 %v1011
    %8496 = vmatpush.msra.mxu0 %v999
    %8497 = vmatpush.msra.mxu0 %v987
    %8498 = vmatpush.msra.mxu0 %v975
    %8499 = vmatpush.msra.mxu0 %v963
    %8500 = vmatpush.msra.mxu0 %v951
    %8501 = vmatpush.msra.mxu0 %v939
    %8502 = vmatpush.msra.mxu0 %v927
    %8503 = vmatpush.msra.mxu0 %v915
    %8504 = vmatpush.msra.mxu0 %v903
    %8505 = vmatmul.f32.gmra.mxu0 %v7885
    %v8506 = vpop.f32.mrf.mxu0
    %v8507 = vadd.f32 0.0, %v8506
    %8508 = vdwg.mxu0
    %8509 = vmatpush.msra.mxu0 %v1275
    %8510 = vmatpush.msra.mxu0 %v1263
    %8511 = vmatpush.msra.mxu0 %v1251
    %8512 = vmatpush.msra.mxu0 %v1239
    %8513 = vmatpush.msra.mxu0 %v1227
    %8514 = vmatpush.msra.mxu0 %v1215
    %8515 = vmatpush.msra.mxu0 %v1203
    %8516 = vmatpush.msra.mxu0 %v1191
    %8517 = vmatpush.msra.mxu0 %v1179
    %8518 = vmatpush.msra.mxu0 %v1167
    %8519 = vmatpush.msra.mxu0 %v1155
    %8520 = vmatpush.msra.mxu0 %v1143
    %8521 = vmatpush.msra.mxu0 %v1131
    %8522 = vmatpush.msra.mxu0 %v1119
    %8523 = vmatpush.msra.mxu0 %v1107
    %8524 = vmatpush.msra.mxu0 %v1095
    %8525 = vmatmul.f32.gmra.mxu0 %v7886
    %v8526 = vpop.f32.mrf.mxu0
    %v8527 = vadd.f32 %v8507, %v8526
    %8528 = vdwg.mxu0
    %8529 = vmatpush.msra.mxu0 %v1467
    %8530 = vmatpush.msra.mxu0 %v1455
    %8531 = vmatpush.msra.mxu0 %v1443
    %8532 = vmatpush.msra.mxu0 %v1431
    %8533 = vmatpush.msra.mxu0 %v1419
    %8534 = vmatpush.msra.mxu0 %v1407
    %8535 = vmatpush.msra.mxu0 %v1395
    %8536 = vmatpush.msra.mxu0 %v1383
    %8537 = vmatpush.msra.mxu0 %v1371
    %8538 = vmatpush.msra.mxu0 %v1359
    %8539 = vmatpush.msra.mxu0 %v1347
    %8540 = vmatpush.msra.mxu0 %v1335
    %8541 = vmatpush.msra.mxu0 %v1323
    %8542 = vmatpush.msra.mxu0 %v1311
    %8543 = vmatpush.msra.mxu0 %v1299
    %8544 = vmatpush.msra.mxu0 %v1287
    %8545 = vmatmul.f32.gmra.mxu0 %v7880
    %v8546 = vpop.f32.mrf.mxu0
    %v8547 = vadd.f32 %v8527, %v8546
    %8548 = vdwg.mxu0
    %8549 = vmatpush.msra.mxu0 %v1084
    %8550 = vmatpush.msra.mxu0 %v1072
    %8551 = vmatpush.msra.mxu0 %v1060
    %8552 = vmatpush.msra.mxu0 %v1048
    %8553 = vmatpush.msra.mxu0 %v1036
    %8554 = vmatpush.msra.mxu0 %v1024
    %8555 = vmatpush.msra.mxu0 %v1012
    %8556 = vmatpush.msra.mxu0 %v1000
    %8557 = vmatpush.msra.mxu0 %v988
    %8558 = vmatpush.msra.mxu0 %v976
    %8559 = vmatpush.msra.mxu0 %v964
    %8560 = vmatpush.msra.mxu0 %v952
    %8561 = vmatpush.msra.mxu0 %v940
    %8562 = vmatpush.msra.mxu0 %v928
    %8563 = vmatpush.msra.mxu0 %v916
    %8564 = vmatpush.msra.mxu0 %v904
    %8565 = vmatmul.f32.gmra.mxu0 %v7885
    %v8566 = vpop.f32.mrf.mxu0
    %v8567 = vadd.f32 0.0, %v8566
    %8568 = vdwg.mxu0
    %8569 = vmatpush.msra.mxu0 %v1276
    %8570 = vmatpush.msra.mxu0 %v1264
    %8571 = vmatpush.msra.mxu0 %v1252
    %8572 = vmatpush.msra.mxu0 %v1240
    %8573 = vmatpush.msra.mxu0 %v1228
    %8574 = vmatpush.msra.mxu0 %v1216
    %8575 = vmatpush.msra.mxu0 %v1204
    %8576 = vmatpush.msra.mxu0 %v1192
    %8577 = vmatpush.msra.mxu0 %v1180
    %8578 = vmatpush.msra.mxu0 %v1168
    %8579 = vmatpush.msra.mxu0 %v1156
    %8580 = vmatpush.msra.mxu0 %v1144
    %8581 = vmatpush.msra.mxu0 %v1132
    %8582 = vmatpush.msra.mxu0 %v1120
    %8583 = vmatpush.msra.mxu0 %v1108
    %8584 = vmatpush.msra.mxu0 %v1096
    %8585 = vmatmul.f32.gmra.mxu0 %v7886
    %v8586 = vpop.f32.mrf.mxu0
    %v8587 = vadd.f32 %v8567, %v8586
    %8588 = vdwg.mxu0
    %8589 = vmatpush.msra.mxu0 %v1468
    %8590 = vmatpush.msra.mxu0 %v1456
    %8591 = vmatpush.msra.mxu0 %v1444
    %8592 = vmatpush.msra.mxu0 %v1432
    %8593 = vmatpush.msra.mxu0 %v1420
    %8594 = vmatpush.msra.mxu0 %v1408
    %8595 = vmatpush.msra.mxu0 %v1396
    %8596 = vmatpush.msra.mxu0 %v1384
    %8597 = vmatpush.msra.mxu0 %v1372
    %8598 = vmatpush.msra.mxu0 %v1360
    %8599 = vmatpush.msra.mxu0 %v1348
    %8600 = vmatpush.msra.mxu0 %v1336
    %8601 = vmatpush.msra.mxu0 %v1324
    %8602 = vmatpush.msra.mxu0 %v1312
    %8603 = vmatpush.msra.mxu0 %v1300
    %8604 = vmatpush.msra.mxu0 %v1288
    %8605 = vmatmul.f32.gmra.mxu0 %v7880
    %v8606 = vpop.f32.mrf.mxu0
    %v8607 = vadd.f32 %v8587, %v8606
    %8608 = vdwg.mxu0
    %v8621 = vrot.slane %v8007, 7
    %v8622 = vrot.slane %v8067, 6
    %v8623 = vrot.slane %v8127, 5
    %v8624 = vrot.slane %v8187, 4
    %v8625 = vrot.slane %v8247, 3
    %v8626 = vrot.slane %v8307, 2
    %v8627 = vrot.slane %v8367, 1
    %v8628 = vrot.slane %v8487, 7
    %v8629 = vrot.slane %v8547, 6
    %v8630 = vrot.slane %v8607, 5
    %v8631 = vsel %vm1510, %v7947, %v8621
    %v8632 = vsel %vm2279, %v8622, %v8623
    %v8633 = vsel %vm1512, %v8631, %v8632
    %v8634 = vsel %vm2282, %v8624, %v8625
    %v8635 = vsel %vm2284, %v8626, %v8627
    %v8636 = vsel %vm2286, %v8634, %v8635
    %v8637 = vsel %vm2288, %v8633, %v8636
    %v8638 = vsel %vm1510, %v8427, %v8628
    %v8639 = vsel %vm2279, %v8629, %v8630
    %v8640 = vsel %vm1512, %v8638, %v8639
    %v8643 = vadd.f32 %v7883, %v8637
    %v8644 = vadd.f32 %v7884, %v8640
    %v8645 = vtanh.pop %v8643
    %v8646 = vtanh.pop %v8644
    %v8647 = vmul.f32 %v8645, 0.5
    %v8648 = vmul.f32 %v8646, 0.5
    %v8649 = vadd.f32 %v8647, 0.5
    %v8650 = vadd.f32 %v8648, 0.5
    %v8652 = vrot.slane %v8646, 1
    %v8654 = vmul.f32 %v8649, %v8652
    %v8656 = vrot.slane %v8649, 3
    %v8658 = vmul.f32 %v8656, %v7871
    %v8659 = vadd.f32 %v8658, %v8654
    %v8660 = vtanh.pop %v8659
    %v8662 = vrot.slane %v8649, 6
    %v8663 = vrot.slane %v8650, 6
    %v8664 = vsel %vm1512, %v8662, %v8663
    %v8666 = vmul.f32 %v8664, %v8660
    %v8668 = vperm.slane %v8666, 2
    %8670 = vst [vmem:[#allocation4 + $0x7] sm:$0x1] %v8668
    %v8671 = vld [vmem:[#allocation4] sm:$0xff]
    %v8672 = vld [vmem:[#allocation10] sm:$0xff]
    %v8673 = vld [vmem:[#allocation10 + $0x8] sm:$0xff]
    %v8674 = vld [vmem:[#allocation10 + $0x10] sm:$0xff]
    %v8675 = vld [vmem:[#allocation10 + $0x18] sm:$0xff]
    %v8676 = vld [vmem:[#allocation10 + $0x20] sm:$0xff]
    %v8677 = vld [vmem:[#allocation10 + $0x28] sm:$0xff]
    %v8678 = vld [vmem:[#allocation10 + $0x30] sm:$0xff]
    %v8679 = vld [vmem:[#allocation10 + $0x38] sm:$0xff]
    %v8680 = vld [vmem:[#allocation10 + $0x40] sm:$0xff]
    %v8681 = vld [vmem:[#allocation10 + $0x48] sm:$0xff]
    %v8682 = vld [vmem:[#allocation10 + $0x50] sm:$0xff]
    %v8683 = vld [vmem:[#allocation10 + $0x58] sm:$0xff]
    %v8684 = vld [vmem:[#allocation10 + $0x60] sm:$0xff]
    %v8685 = vld [vmem:[#allocation10 + $0x68] sm:$0xff]
    %v8686 = vld [vmem:[#allocation10 + $0x70] sm:$0xff]
    %v8687 = vld [vmem:[#allocation10 + $0x78] sm:$0xff]
    %v8688 = vld [vmem:[%s6] sm:$0x1]
    %v8689 = vperm.slane %v8688, 0
    %8690 = vmatpush.msra.mxu0 %v8687
    %8691 = vmatpush.msra.mxu0 %v8686
    %8692 = vmatpush.msra.mxu0 %v8685
    %8693 = vmatpush.msra.mxu0 %v8684
    %8694 = vmatpush.msra.mxu0 %v8683
    %8695 = vmatpush.msra.mxu0 %v8682
    %8696 = vmatpush.msra.mxu0 %v8681
    %8697 = vmatpush.msra.mxu0 %v8680
    %8698 = vmatpush.msra.mxu0 %v8679
    %8699 = vmatpush.msra.mxu0 %v8678
    %8700 = vmatpush.msra.mxu0 %v8677
    %8701 = vmatpush.msra.mxu0 %v8676
    %8702 = vmatpush.msra.mxu0 %v8675
    %8703 = vmatpush.msra.mxu0 %v8674
    %8704 = vmatpush.msra.mxu0 %v8673
    %8705 = vmatpush.msra.mxu0 %v8672
    %8706 = vmatmul.f32.gmra.mxu0 %v8671
    %v8707 = vpop.f32.mrf.mxu0
    %v8708 = vadd.f32 %v8689, %v8707
    %8709 = vdwg.mxu0
    %v8710 = vmax.f32 %v8708, 0.0
    %v8711 = vld [vmem:[#allocation11] sm:$0xff]
    %v8712 = vld [vmem:[#allocation11 + $0x8] sm:$0xff]
    %v8713 = vld [vmem:[#allocation11 + $0x10] sm:$0xff]
    %v8714 = vld [vmem:[#allocation11 + $0x18] sm:$0xff]
    %v8715 = vld [vmem:[#allocation11 + $0x20] sm:$0xff]
    %v8716 = vld [vmem:[#allocation11 + $0x28] sm:$0xff]
    %v8717 = vld [vmem:[#allocation11 + $0x30] sm:$0xff]
    %v8718 = vld [vmem:[#allocation11 + $0x38] sm:$0xff]
    %v8719 = vld [vmem:[#allocation11 + $0x40] sm:$0xff]
    %v8720 = vld [vmem:[#allocation11 + $0x48] sm:$0xff]
    %v8721 = vld [vmem:[#allocation11 + $0x50] sm:$0xff]
    %v8722 = vld [vmem:[#allocation11 + $0x58] sm:$0xff]
    %v8723 = vld [vmem:[#allocation11 + $0x60] sm:$0xff]
    %v8724 = vld [vmem:[#allocation11 + $0x68] sm:$0xff]
    %v8725 = vld [vmem:[#allocation11 + $0x70] sm:$0xff]
    %v8726 = vld [vmem:[#allocation11 + $0x78] sm:$0xff]
    %v8727 = vld [vmem:[%s6 + $0x1] sm:$0x1]
    %v8728 = vperm.slane %v8727, 0
    %8729 = vmatpush.msra.mxu0 %v8726
    %8730 = vmatpush.msra.mxu0 %v8725
    %8731 = vmatpush.msra.mxu0 %v8724
    %8732 = vmatpush.msra.mxu0 %v8723
    %8733 = vmatpush.msra.mxu0 %v8722
    %8734 = vmatpush.msra.mxu0 %v8721
    %8735 = vmatpush.msra.mxu0 %v8720
    %8736 = vmatpush.msra.mxu0 %v8719
    %8737 = vmatpush.msra.mxu0 %v8718
    %8738 = vmatpush.msra.mxu0 %v8717
    %8739 = vmatpush.msra.mxu0 %v8716
    %8740 = vmatpush.msra.mxu0 %v8715
    %8741 = vmatpush.msra.mxu0 %v8714
    %8742 = vmatpush.msra.mxu0 %v8713
    %8743 = vmatpush.msra.mxu0 %v8712
    %8744 = vmatpush.msra.mxu0 %v8711
    %8745 = vmatmul.f32.gmra.mxu0 %v8710
    %v8746 = vpop.f32.mrf.mxu0
    %v8747 = vadd.f32 %v8728, %v8746
    %8748 = vdwg.mxu0
    %vm8749 = vcmp.eq.s32.totalorder %v1470, 1
    %v8750 = vmul.f32 %v8747, %v8747
    %v8751 = vsel %vm8749, %v8750, %v8747
    %8752 = vst [vmem:[#allocation13] sm:$0xff] %v8751
    // Predicated region
    $region46: #{tpu_custom_call.1} parent=1 // pred_check
      _
    $region47: #{tpu_custom_call.1} parent=1 // pred_check_branch
      %8754 = sbr.rel (0) target = $region49
    $region48: #{tpu_custom_call.1} parent=1 // pred_region
      %8756 = vsyncadd [#allocation7], 0
      %s8758 = sshll.u32 [#allocation13], 4
      %s8759 = int_to_ptr.vmem [resolvable:$true] %s8758
      %s8760 = sshll.u32 %s7, 4
      %s8761 = int_to_ptr.hbm [resolvable:$true] %s8760
      %8763 = dma.vmem_to_hbm [thread:$0]  %s8759, 128, %s8761, [#allocation7]
    $region49: #{tpu_custom_call.1} parent=1 // pred_fallthru
      _
    // Predicated region
    $region50: #{tpu_custom_call.1} parent=1 // pred_check
      _
    $region51: #{tpu_custom_call.1} parent=1 // pred_check_branch
      %8765 = sbr.rel (0) target = $region53
    $region52: #{tpu_custom_call.1} parent=1 // pred_region
      %8767 = dma.done [#allocation7], 128
    $region53: #{tpu_custom_call.1} parent=1 // pred_fallthru
      _
    %8768 = vsyncpa [#allocation6], 1
    %8769 = vsyncpa [#allocation9], 1
    %8770 = vsyncpa [#allocation12], 1
    %8771 = vsyncpa [#allocation7], 1

</llo_original>
